<compile_context>
chip_gen: v7x
topology: tpu7x:2x2x1
jax: 0.10.0
libtpu: 0.0.40
codegen_flags: <defaults>
</compile_context>

<pallas_src>
import functools

import jax
import jax.numpy as jnp
from jax import lax
from jax.experimental import pallas as pl
from jax.experimental.pallas import tpu as pltpu


# --------------------------------------------------------------------------
# Pallas kernel: embed MLP -> 2-layer bidirectional GRU -> classifier MLP
# --------------------------------------------------------------------------
def _kgru_kernel(x_ref, w1_ref, b1_ref, w2_ref, b2_ref,
                 wih0_ref, bih0_ref, whh0f_ref, whh0b_ref, bn0f_ref, bn0b_ref,
                 wih1_ref, bih1_ref, whh1f_ref, whh1b_ref, bn1f_ref, bn1b_ref,
                 wc1_ref, bc1_ref, wc2_ref, bc2_ref,
                 out_ref,
                 seq1_ref,
                 *, B, T, GP):
    f32 = jnp.float32
    G = GP  # padded gate width (128 lanes per gate)

    # ---- keypoint_embed: Linear ReLU [Dropout] Linear ReLU, whole slab ----
    x = x_ref[...]                                                     # (T*B, 170)
    e1 = jnp.maximum(
        jnp.dot(x, w1_ref[...], preferred_element_type=f32) + b1_ref[...], 0.0)
    e2 = jnp.maximum(
        jnp.dot(e1, w2_ref[...], preferred_element_type=f32) + b2_ref[...], 0.0)
    # e2: (T*B, 128), time-major row blocks of size B

    # ---- GRU cell (PyTorch gate order r, z, n; biases pre-folded) ----
    def gru_cell(h, gx, whh_ref, bn):
        # h  : (B, G)   hidden state, lanes H:G are zero
        # gx : (B, 3*G) hoisted input projection (+ folded r/z hidden biases)
        gh = jnp.dot(h, whh_ref[...], preferred_element_type=f32)      # (B, 3G)
        r = jax.nn.sigmoid(gx[:, 0:G] + gh[:, 0:G])
        z = jax.nn.sigmoid(gx[:, G:2 * G] + gh[:, G:2 * G])
        n = jnp.tanh(gx[:, 2 * G:3 * G] + r * (gh[:, 2 * G:3 * G] + bn))
        return (1.0 - z) * n + z * h

    def run_layer(gx_all, whhf_ref, whhb_ref, bn_f, bn_b, store):
        # gx_all: (T*B, 6G) -- fwd gates in lanes [0,3G), bwd gates in [3G,6G)
        h_f = jnp.zeros((B, G), f32)
        h_b = jnp.zeros((B, G), f32)
        hb_at_T_minus_1 = None
        for s in range(T):                       # fully unrolled, both directions
            tf = s
            tb = T - 1 - s
            gx_f = gx_all[tf * B:(tf + 1) * B, 0:3 * G]
            gx_b = gx_all[tb * B:(tb + 1) * B, 3 * G:6 * G]
            h_f = gru_cell(h_f, gx_f, whhf_ref, bn_f)
            h_b = gru_cell(h_b, gx_b, whhb_ref, bn_b)
            if s == 0:
                hb_at_T_minus_1 = h_b            # backward output at time T-1
            if store is not None:
                store(tf, tb, h_f, h_b)
        return h_f, hb_at_T_minus_1

    # ---- layer 0: hoisted gate projection (one matmul, both directions) ----
    gx0 = jnp.dot(e2, wih0_ref[...], preferred_element_type=f32) + bih0_ref[...]

    def store0(tf, tb, h_f, h_b):
        seq1_ref[tf * B:(tf + 1) * B, 0:G] = h_f        # fwd at lane offset 0
        seq1_ref[tb * B:(tb + 1) * B, G:2 * G] = h_b    # bwd at lane offset G

    run_layer(gx0, whh0f_ref, whh0b_ref, bn0f_ref[...], bn0b_ref[...], store0)

    # ---- layer 1: input is the pre-laid-out (T*B, 2G) slab ----
    gx1 = (jnp.dot(seq1_ref[...], wih1_ref[...], preferred_element_type=f32)
           + bih1_ref[...])
    hf1, hb1 = run_layer(gx1, whh1f_ref, whh1b_ref,
                         bn1f_ref[...], bn1b_ref[...], None)

    # last_output = [h_fwd(T-1), h_bwd(T-1)] in padded lane layout
    last = jnp.concatenate([hf1, hb1], axis=1)                          # (B, 2G)

    # ---- classifier: Linear ReLU [Dropout] Linear (output lane-padded) ----
    c1 = jnp.maximum(
        jnp.dot(last, wc1_ref[...], preferred_element_type=f32) + bc1_ref[...], 0.0)
    out_ref[...] = (jnp.dot(c1, wc2_ref[...], preferred_element_type=f32)
                    + bc2_ref[...])


# --------------------------------------------------------------------------
# Parameter packing: logical (PyTorch-layout) weights -> padded kernel layout
# --------------------------------------------------------------------------
def _pack_params(params, *, H, num_classes, GP=128):
    (W1, b1, W2, b2,
     Wih0, Whh0, bih0, bhh0,
     Wih1, Whh1, bih1, bhh1,
     Wc1, bc1, Wc2, bc2) = params
    f32 = jnp.float32
    assert H <= GP

    def pad_gates_cols(W):
        # (in, 3H) -> (in, 3*GP): gate g occupies lanes [g*GP, g*GP + H)
        ind = W.shape[0]
        out = jnp.zeros((ind, 3 * GP), f32)
        for g in range(3):
            out = out.at[:, g * GP:g * GP + H].set(W[:, g * H:(g + 1) * H])
        return out

    def pad_gates_row(v):
        v = v.reshape(3 * H)
        out = jnp.zeros((1, 3 * GP), f32)
        for g in range(3):
            out = out.at[0, g * GP:g * GP + H].set(v[g * H:(g + 1) * H])
        return out

    def pad_whh(W):
        # (H, 3H) -> (GP, 3*GP), rows H:GP zero (carried h is lane-padded)
        return jnp.zeros((GP, 3 * GP), f32).at[:H, :].set(pad_gates_cols(W))

    def pad_wih_l1(W):
        # (2H, 3H) -> (2*GP, 3*GP): fwd-h rows at [0,H), bwd-h rows at [GP,GP+H)
        pg = pad_gates_cols(W)
        out = jnp.zeros((2 * GP, 3 * GP), f32)
        out = out.at[:H, :].set(pg[:H, :])
        out = out.at[GP:GP + H, :].set(pg[H:2 * H, :])
        return out

    def fold_bias(bih_d, bhh_d):
        # fold bhh into bih for r/z; n keeps only bih (bhh_n applied in-cell)
        bi = bih_d.reshape(3 * H)
        bh = bhh_d.reshape(3 * H)
        folded = jnp.concatenate([bi[:2 * H] + bh[:2 * H], bi[2 * H:]])
        return pad_gates_row(folded)

    def bhh_n(bhh_d):
        return jnp.zeros((1, GP), f32).at[0, :H].set(bhh_d.reshape(3 * H)[2 * H:])

    # GRU layer 0 (input dim 128, already lane aligned)
    wih0_both = jnp.concatenate(
        [pad_gates_cols(Wih0[0]), pad_gates_cols(Wih0[1])], axis=1)
    bih0_fold = jnp.concatenate(
        [fold_bias(bih0[0], bhh0[0]), fold_bias(bih0[1], bhh0[1])], axis=1)
    whh0f, whh0b = pad_whh(Whh0[0]), pad_whh(Whh0[1])
    bn0f, bn0b = bhh_n(bhh0[0]), bhh_n(bhh0[1])

    # GRU layer 1 (input = concat(h_fwd, h_bwd), presented lane-padded to 2*GP)
    wih1_both = jnp.concatenate([pad_wih_l1(Wih1[0]), pad_wih_l1(Wih1[1])], axis=1)
    bih1_fold = jnp.concatenate(
        [fold_bias(bih1[0], bhh1[0]), fold_bias(bih1[1], bhh1[1])], axis=1)
    whh1f, whh1b = pad_whh(Whh1[0]), pad_whh(Whh1[1])
    bn1f, bn1b = bhh_n(bhh1[0]), bhh_n(bhh1[1])

    # Classifier: input rows laid out like the padded hidden concat; output padded
    wc1_pad = jnp.zeros((2 * GP, Wc1.shape[1]), f32)
    wc1_pad = wc1_pad.at[:H, :].set(Wc1[:H, :]).at[GP:GP + H, :].set(Wc1[H:2 * H, :])
    OC = ((num_classes + GP - 1) // GP) * GP
    wc2_pad = jnp.zeros((Wc2.shape[0], OC), f32).at[:, :num_classes].set(Wc2)
    bc2_pad = jnp.zeros((1, OC), f32).at[0, :num_classes].set(bc2.reshape(-1))

    packed = [W1.astype(f32), b1.reshape(1, -1).astype(f32),
              W2.astype(f32), b2.reshape(1, -1).astype(f32),
              wih0_both, bih0_fold, whh0f, whh0b, bn0f, bn0b,
              wih1_both, bih1_fold, whh1f, whh1b, bn1f, bn1b,
              wc1_pad, bc1.reshape(1, -1).astype(f32), wc2_pad, bc2_pad]
    return packed, OC


# --------------------------------------------------------------------------
# Wrapper
# --------------------------------------------------------------------------
def keypoint_gru_forward(x, params, *, hidden_size, num_classes):
    B, T = x.shape[:2]
    H = hidden_size
    GP = 128
    feat = 1
    for s in x.shape[2:]:
        feat *= s

    # time-major (T*B, feat) slab so every timestep is a contiguous row block
    x2 = x.reshape(B, T, feat).transpose(1, 0, 2).reshape(T * B, feat)
    x2 = x2.astype(jnp.float32)

    packed, OC = _pack_params(params, H=H, num_classes=num_classes, GP=GP)
    inputs = [x2] + packed

    def full_spec(shape):
        nd = len(shape)
        return pl.BlockSpec(shape, lambda i, _nd=nd: (0,) * _nd)

    out_pad = pl.pallas_call(
        functools.partial(_kgru_kernel, B=B, T=T, GP=GP),
        out_shape=jax.ShapeDtypeStruct((B, OC), jnp.float32),
        grid=(1,),
        in_specs=[full_spec(a.shape) for a in inputs],
        out_specs=full_spec((B, OC)),
        scratch_shapes=[
            pltpu.VMEM((T * B, 2 * GP), jnp.float32),   # layer-0 output slab
        ],
        compiler_params=pltpu.CompilerParams(
            dimension_semantics=("arbitrary",),
            vmem_limit_bytes=64 * 1024 * 1024,
        ),
    )(*inputs)
    return out_pad[:, :num_classes]


# --------------------------------------------------------------------------
# Deterministic parameter init (shapes match the PyTorch module, stored (in,out))
# --------------------------------------------------------------------------
def init_params(key, *, num_classes, max_persons, hidden_size):
    IN = max_persons * 17 * 2
    H = hidden_size
    keys = iter(jax.random.split(key, 16))

    def lin(fan_in, fan_out):
        bound = 1.0 / (fan_in ** 0.5)
        W = jax.random.uniform(next(keys), (fan_in, fan_out), jnp.float32, -bound, bound)
        b = jax.random.uniform(next(keys), (1, fan_out), jnp.float32, -bound, bound)
        return W, b

    params = []
    W1, b1 = lin(IN, 256)
    W2, b2 = lin(256, 128)
    params += [W1, b1, W2, b2]

    def gru_layer(in_dim):
        bound = 1.0 / (H ** 0.5)
        Wih = jax.random.uniform(next(keys), (2, in_dim, 3 * H), jnp.float32, -bound, bound)
        Whh = jax.random.uniform(next(keys), (2, H, 3 * H), jnp.float32, -bound, bound)
        bih = jax.random.uniform(next(keys), (2, 1, 3 * H), jnp.float32, -bound, bound)
        bhh = jax.random.uniform(next(keys), (2, 1, 3 * H), jnp.float32, -bound, bound)
        return [Wih, Whh, bih, bhh]

    params += gru_layer(128)        # GRU layer 0 (input 128)
    params += gru_layer(2 * H)      # GRU layer 1 (input 2H, bidirectional concat)

    Wc1, bc1 = lin(2 * H, 64)
    Wc2, bc2 = lin(64, num_classes)
    params += [Wc1, bc1, Wc2, bc2]
    return params


# --------------------------------------------------------------------------
# Pure-JAX reference (for numerical check)
# --------------------------------------------------------------------------
def reference_forward(x, params, *, hidden_size, num_classes):
    (W1, b1, W2, b2,
     Wih0, Whh0, bih0, bhh0,
     Wih1, Whh1, bih1, bhh1,
     Wc1, bc1, Wc2, bc2) = params
    B, T = x.shape[:2]
    H = hidden_size
    xf = x.reshape(B, T, -1).astype(jnp.float32)
    e = jax.nn.relu(xf @ W1 + b1[0])
    e = jax.nn.relu(e @ W2 + b2[0])                  # (B, T, 128)

    def gru_dir(seq, Wih, Whh, bih, bhh, reverse):
        s = seq[::-1] if reverse else seq            # (T, B, in)

        def step(h, x_t):
            gx = x_t @ Wih + bih[0]
            gh = h @ Whh + bhh[0]
            r = jax.nn.sigmoid(gx[:, :H] + gh[:, :H])
            z = jax.nn.sigmoid(gx[:, H:2 * H] + gh[:, H:2 * H])
            n = jnp.tanh(gx[:, 2 * H:] + r * gh[:, 2 * H:])
            h_new = (1.0 - z) * n + z * h
            return h_new, h_new

        _, outs = lax.scan(step, jnp.zeros((B, H), jnp.float32), s)
        return outs[::-1] if reverse else outs

    seq0 = e.transpose(1, 0, 2)
    f0 = gru_dir(seq0, Wih0[0], Whh0[0], bih0[0], bhh0[0], False)
    r0 = gru_dir(seq0, Wih0[1], Whh0[1], bih0[1], bhh0[1], True)
    seq1 = jnp.concatenate([f0, r0], axis=-1)
    f1 = gru_dir(seq1, Wih1[0], Whh1[0], bih1[0], bhh1[0], False)
    r1 = gru_dir(seq1, Wih1[1], Whh1[1], bih1[1], bhh1[1], True)
    last = jnp.concatenate([f1[-1], r1[-1]], axis=-1)  # (B, 2H)
    c = jax.nn.relu(last @ Wc1 + bc1[0])
    return c @ Wc2 + bc2[0]


# --------------------------------------------------------------------------
if __name__ == "__main__":
    num_classes = 6
    max_persons = 5
    hidden_size = 32
    B, T = 2, 8

    key = jax.random.PRNGKey(0)
    kx, kp = jax.random.split(key)
    x = jax.random.normal(kx, (B, T, max_persons, 17, 2), jnp.float32)
    params = init_params(kp, num_classes=num_classes,
                         max_persons=max_persons, hidden_size=hidden_size)

    out = keypoint_gru_forward(x, params, hidden_size=hidden_size,
                               num_classes=num_classes)
    out = jax.block_until_ready(out)

    ref = reference_forward(x, params, hidden_size=hidden_size,
                            num_classes=num_classes)

    assert out.shape == (B, num_classes)
    assert bool(jnp.all(jnp.isfinite(out)))
    assert bool(jnp.allclose(out, ref, rtol=5e-2, atol=5e-2)), (out, ref)
    print("KERNEL_OK")
</pallas_src>

<mosaic_0001>
module attributes {stable_mosaic.version = 11 : i64} {
  func.func @_kgru_kernel(%arg0: i32, %arg1: memref<16x170xf32, #tpu.memory_space<vmem>>, %arg2: memref<170x256xf32, #tpu.memory_space<vmem>>, %arg3: memref<1x256xf32, #tpu.memory_space<vmem>>, %arg4: memref<256x128xf32, #tpu.memory_space<vmem>>, %arg5: memref<1x128xf32, #tpu.memory_space<vmem>>, %arg6: memref<128x768xf32, #tpu.memory_space<vmem>>, %arg7: memref<1x768xf32, #tpu.memory_space<vmem>>, %arg8: memref<128x384xf32, #tpu.memory_space<vmem>>, %arg9: memref<128x384xf32, #tpu.memory_space<vmem>>, %arg10: memref<1x128xf32, #tpu.memory_space<vmem>>, %arg11: memref<1x128xf32, #tpu.memory_space<vmem>>, %arg12: memref<256x768xf32, #tpu.memory_space<vmem>>, %arg13: memref<1x768xf32, #tpu.memory_space<vmem>>, %arg14: memref<128x384xf32, #tpu.memory_space<vmem>>, %arg15: memref<128x384xf32, #tpu.memory_space<vmem>>, %arg16: memref<1x128xf32, #tpu.memory_space<vmem>>, %arg17: memref<1x128xf32, #tpu.memory_space<vmem>>, %arg18: memref<256x64xf32, #tpu.memory_space<vmem>>, %arg19: memref<1x64xf32, #tpu.memory_space<vmem>>, %arg20: memref<64x128xf32, #tpu.memory_space<vmem>>, %arg21: memref<1x128xf32, #tpu.memory_space<vmem>>, %arg22: memref<2x128xf32, #tpu.memory_space<vmem>>, %arg23: memref<16x256xf32, #tpu.memory_space<vmem>>) attributes {dimension_semantics = [#tpu.dimension_semantics<arbitrary>], iteration_bounds = array<i64: 1>, scalar_prefetch = 0 : i64, scratch_operands = 1 : i64, tpu.core_type = #tpu.core_type<tc>, window_params = [{pipeline_mode = #tpu.pipeline_mode<synchronous>, transform_indices = @transform_0, window_bounds = array<i64: 16, 170>}, {pipeline_mode = #tpu.pipeline_mode<synchronous>, transform_indices = @transform_1, window_bounds = array<i64: 170, 256>}, {pipeline_mode = #tpu.pipeline_mode<synchronous>, transform_indices = @transform_2, window_bounds = array<i64: 1, 256>}, {pipeline_mode = #tpu.pipeline_mode<synchronous>, transform_indices = @transform_3, window_bounds = array<i64: 256, 128>}, {pipeline_mode = #tpu.pipeline_mode<synchronous>, transform_indices = @transform_4, window_bounds = array<i64: 1, 128>}, {pipeline_mode = #tpu.pipeline_mode<synchronous>, transform_indices = @transform_5, window_bounds = array<i64: 128, 768>}, {pipeline_mode = #tpu.pipeline_mode<synchronous>, transform_indices = @transform_6, window_bounds = array<i64: 1, 768>}, {pipeline_mode = #tpu.pipeline_mode<synchronous>, transform_indices = @transform_7, window_bounds = array<i64: 128, 384>}, {pipeline_mode = #tpu.pipeline_mode<synchronous>, transform_indices = @transform_8, window_bounds = array<i64: 128, 384>}, {pipeline_mode = #tpu.pipeline_mode<synchronous>, transform_indices = @transform_9, window_bounds = array<i64: 1, 128>}, {pipeline_mode = #tpu.pipeline_mode<synchronous>, transform_indices = @transform_10, window_bounds = array<i64: 1, 128>}, {pipeline_mode = #tpu.pipeline_mode<synchronous>, transform_indices = @transform_11, window_bounds = array<i64: 256, 768>}, {pipeline_mode = #tpu.pipeline_mode<synchronous>, transform_indices = @transform_12, window_bounds = array<i64: 1, 768>}, {pipeline_mode = #tpu.pipeline_mode<synchronous>, transform_indices = @transform_13, window_bounds = array<i64: 128, 384>}, {pipeline_mode = #tpu.pipeline_mode<synchronous>, transform_indices = @transform_14, window_bounds = array<i64: 128, 384>}, {pipeline_mode = #tpu.pipeline_mode<synchronous>, transform_indices = @transform_15, window_bounds = array<i64: 1, 128>}, {pipeline_mode = #tpu.pipeline_mode<synchronous>, transform_indices = @transform_16, window_bounds = array<i64: 1, 128>}, {pipeline_mode = #tpu.pipeline_mode<synchronous>, transform_indices = @transform_17, window_bounds = array<i64: 256, 64>}, {pipeline_mode = #tpu.pipeline_mode<synchronous>, transform_indices = @transform_18, window_bounds = array<i64: 1, 64>}, {pipeline_mode = #tpu.pipeline_mode<synchronous>, transform_indices = @transform_19, window_bounds = array<i64: 64, 128>}, {pipeline_mode = #tpu.pipeline_mode<synchronous>, transform_indices = @transform_20, window_bounds = array<i64: 1, 128>}, {pipeline_mode = #tpu.pipeline_mode<synchronous>, transform_indices = @transform_21, window_bounds = array<i64: 2, 128>}]} {
    %c0 = arith.constant 0 : index
    %c0_0 = arith.constant 0 : index
    %0 = vector.load %arg1[%c0, %c0_0] : memref<16x170xf32, #tpu.memory_space<vmem>>, vector<16x170xf32>
    %c0_1 = arith.constant 0 : index
    %c0_2 = arith.constant 0 : index
    %1 = vector.load %arg2[%c0_1, %c0_2] : memref<170x256xf32, #tpu.memory_space<vmem>>, vector<170x256xf32>
    %cst = arith.constant dense<0.000000e+00> : vector<16x256xf32>
    %2 = tpu.matmul %0, %1, %cst {dimension_numbers = #tpu.dot_dimension_numbers<[1], [0], [0], [1], [0, 0, 1, 1], [], []>} : vector<16x170xf32>, vector<170x256xf32>, vector<16x256xf32> -> vector<16x256xf32>
    %c0_3 = arith.constant 0 : index
    %c0_4 = arith.constant 0 : index
    %3 = vector.load %arg3[%c0_3, %c0_4] : memref<1x256xf32, #tpu.memory_space<vmem>>, vector<1x256xf32>
    %4 = vector.broadcast %3 : vector<1x256xf32> to vector<16x256xf32>
    %5 = arith.addf %2, %4 : vector<16x256xf32>
    %cst_5 = arith.constant 0.000000e+00 : f32
    %6 = vector.broadcast %cst_5 : f32 to vector<16x256xf32>
    %7 = arith.maximumf %5, %6 : vector<16x256xf32>
    %c0_6 = arith.constant 0 : index
    %c0_7 = arith.constant 0 : index
    %8 = vector.load %arg4[%c0_6, %c0_7] : memref<256x128xf32, #tpu.memory_space<vmem>>, vector<256x128xf32>
    %cst_8 = arith.constant dense<0.000000e+00> : vector<16x128xf32>
    %9 = tpu.matmul %7, %8, %cst_8 {dimension_numbers = #tpu.dot_dimension_numbers<[1], [0], [0], [1], [0, 0, 1, 1], [], []>} : vector<16x256xf32>, vector<256x128xf32>, vector<16x128xf32> -> vector<16x128xf32>
    %c0_9 = arith.constant 0 : index
    %c0_10 = arith.constant 0 : index
    %10 = vector.load %arg5[%c0_9, %c0_10] : memref<1x128xf32, #tpu.memory_space<vmem>>, vector<1x128xf32>
    %11 = vector.broadcast %10 : vector<1x128xf32> to vector<16x128xf32>
    %12 = arith.addf %9, %11 : vector<16x128xf32>
    %cst_11 = arith.constant 0.000000e+00 : f32
    %13 = vector.broadcast %cst_11 : f32 to vector<16x128xf32>
    %14 = arith.maximumf %12, %13 : vector<16x128xf32>
    %c0_12 = arith.constant 0 : index
    %c0_13 = arith.constant 0 : index
    %15 = vector.load %arg6[%c0_12, %c0_13] : memref<128x768xf32, #tpu.memory_space<vmem>>, vector<128x768xf32>
    %cst_14 = arith.constant dense<0.000000e+00> : vector<16x768xf32>
    %16 = tpu.matmul %14, %15, %cst_14 {dimension_numbers = #tpu.dot_dimension_numbers<[1], [0], [0], [1], [0, 0, 1, 1], [], []>} : vector<16x128xf32>, vector<128x768xf32>, vector<16x768xf32> -> vector<16x768xf32>
    %c0_15 = arith.constant 0 : index
    %c0_16 = arith.constant 0 : index
    %17 = vector.load %arg7[%c0_15, %c0_16] : memref<1x768xf32, #tpu.memory_space<vmem>>, vector<1x768xf32>
    %18 = vector.broadcast %17 : vector<1x768xf32> to vector<16x768xf32>
    %19 = arith.addf %16, %18 : vector<16x768xf32>
    %c0_17 = arith.constant 0 : index
    %c0_18 = arith.constant 0 : index
    %20 = vector.load %arg10[%c0_17, %c0_18] : memref<1x128xf32, #tpu.memory_space<vmem>>, vector<1x128xf32>
    %c0_19 = arith.constant 0 : index
    %c0_20 = arith.constant 0 : index
    %21 = vector.load %arg11[%c0_19, %c0_20] : memref<1x128xf32, #tpu.memory_space<vmem>>, vector<1x128xf32>
    %cst_21 = arith.constant 0.000000e+00 : f32
    %22 = vector.broadcast %cst_21 : f32 to vector<2x128xf32>
    %cst_22 = arith.constant 0.000000e+00 : f32
    %23 = vector.broadcast %cst_22 : f32 to vector<2x128xf32>
    %24 = vector.extract_strided_slice %19 {offsets = [0, 0], sizes = [2, 384], strides = [1, 1]} : vector<16x768xf32> to vector<2x384xf32>
    %25 = vector.extract_strided_slice %19 {offsets = [14, 384], sizes = [2, 384], strides = [1, 1]} : vector<16x768xf32> to vector<2x384xf32>
    %c0_23 = arith.constant 0 : index
    %c0_24 = arith.constant 0 : index
    %26 = vector.load %arg8[%c0_23, %c0_24] : memref<128x384xf32, #tpu.memory_space<vmem>>, vector<128x384xf32>
    %cst_25 = arith.constant dense<0.000000e+00> : vector<2x384xf32>
    %27 = tpu.matmul %22, %26, %cst_25 {dimension_numbers = #tpu.dot_dimension_numbers<[1], [0], [0], [1], [0, 0, 1, 1], [], []>} : vector<2x128xf32>, vector<128x384xf32>, vector<2x384xf32> -> vector<2x384xf32>
    %28 = vector.extract_strided_slice %24 {offsets = [0, 0], sizes = [2, 128], strides = [1, 1]} : vector<2x384xf32> to vector<2x128xf32>
    %29 = vector.extract_strided_slice %27 {offsets = [0, 0], sizes = [2, 128], strides = [1, 1]} : vector<2x384xf32> to vector<2x128xf32>
    %30 = arith.addf %28, %29 : vector<2x128xf32>
    %31 = arith.negf %30 : vector<2x128xf32>
    %32 = math.exp %31 : vector<2x128xf32>
    %cst_26 = arith.constant 1.000000e+00 : f32
    %33 = vector.broadcast %cst_26 : f32 to vector<2x128xf32>
    %34 = arith.addf %33, %32 : vector<2x128xf32>
    %35 = arith.divf %33, %34 : vector<2x128xf32>
    %36 = vector.extract_strided_slice %24 {offsets = [0, 128], sizes = [2, 128], strides = [1, 1]} : vector<2x384xf32> to vector<2x128xf32>
    %37 = vector.extract_strided_slice %27 {offsets = [0, 128], sizes = [2, 128], strides = [1, 1]} : vector<2x384xf32> to vector<2x128xf32>
    %38 = arith.addf %36, %37 : vector<2x128xf32>
    %39 = arith.negf %38 : vector<2x128xf32>
    %40 = math.exp %39 : vector<2x128xf32>
    %cst_27 = arith.constant 1.000000e+00 : f32
    %41 = vector.broadcast %cst_27 : f32 to vector<2x128xf32>
    %42 = arith.addf %41, %40 : vector<2x128xf32>
    %43 = arith.divf %41, %42 : vector<2x128xf32>
    %44 = vector.extract_strided_slice %24 {offsets = [0, 256], sizes = [2, 128], strides = [1, 1]} : vector<2x384xf32> to vector<2x128xf32>
    %45 = vector.extract_strided_slice %27 {offsets = [0, 256], sizes = [2, 128], strides = [1, 1]} : vector<2x384xf32> to vector<2x128xf32>
    %46 = vector.broadcast %20 : vector<1x128xf32> to vector<2x128xf32>
    %47 = arith.addf %45, %46 : vector<2x128xf32>
    %48 = arith.mulf %35, %47 : vector<2x128xf32>
    %49 = arith.addf %44, %48 : vector<2x128xf32>
    %50 = math.tanh %49 : vector<2x128xf32>
    %cst_28 = arith.constant 1.000000e+00 : f32
    %51 = vector.broadcast %cst_28 : f32 to vector<2x128xf32>
    %52 = arith.subf %51, %43 : vector<2x128xf32>
    %53 = arith.mulf %52, %50 : vector<2x128xf32>
    %54 = arith.mulf %43, %22 : vector<2x128xf32>
    %55 = arith.addf %53, %54 : vector<2x128xf32>
    %c0_29 = arith.constant 0 : index
    %c0_30 = arith.constant 0 : index
    %56 = vector.load %arg9[%c0_29, %c0_30] : memref<128x384xf32, #tpu.memory_space<vmem>>, vector<128x384xf32>
    %cst_31 = arith.constant dense<0.000000e+00> : vector<2x384xf32>
    %57 = tpu.matmul %23, %56, %cst_31 {dimension_numbers = #tpu.dot_dimension_numbers<[1], [0], [0], [1], [0, 0, 1, 1], [], []>} : vector<2x128xf32>, vector<128x384xf32>, vector<2x384xf32> -> vector<2x384xf32>
    %58 = vector.extract_strided_slice %25 {offsets = [0, 0], sizes = [2, 128], strides = [1, 1]} : vector<2x384xf32> to vector<2x128xf32>
    %59 = vector.extract_strided_slice %57 {offsets = [0, 0], sizes = [2, 128], strides = [1, 1]} : vector<2x384xf32> to vector<2x128xf32>
    %60 = arith.addf %58, %59 : vector<2x128xf32>
    %61 = arith.negf %60 : vector<2x128xf32>
    %62 = math.exp %61 : vector<2x128xf32>
    %cst_32 = arith.constant 1.000000e+00 : f32
    %63 = vector.broadcast %cst_32 : f32 to vector<2x128xf32>
    %64 = arith.addf %63, %62 : vector<2x128xf32>
    %65 = arith.divf %63, %64 : vector<2x128xf32>
    %66 = vector.extract_strided_slice %25 {offsets = [0, 128], sizes = [2, 128], strides = [1, 1]} : vector<2x384xf32> to vector<2x128xf32>
    %67 = vector.extract_strided_slice %57 {offsets = [0, 128], sizes = [2, 128], strides = [1, 1]} : vector<2x384xf32> to vector<2x128xf32>
    %68 = arith.addf %66, %67 : vector<2x128xf32>
    %69 = arith.negf %68 : vector<2x128xf32>
    %70 = math.exp %69 : vector<2x128xf32>
    %cst_33 = arith.constant 1.000000e+00 : f32
    %71 = vector.broadcast %cst_33 : f32 to vector<2x128xf32>
    %72 = arith.addf %71, %70 : vector<2x128xf32>
    %73 = arith.divf %71, %72 : vector<2x128xf32>
    %74 = vector.extract_strided_slice %25 {offsets = [0, 256], sizes = [2, 128], strides = [1, 1]} : vector<2x384xf32> to vector<2x128xf32>
    %75 = vector.extract_strided_slice %57 {offsets = [0, 256], sizes = [2, 128], strides = [1, 1]} : vector<2x384xf32> to vector<2x128xf32>
    %76 = vector.broadcast %21 : vector<1x128xf32> to vector<2x128xf32>
    %77 = arith.addf %75, %76 : vector<2x128xf32>
    %78 = arith.mulf %65, %77 : vector<2x128xf32>
    %79 = arith.addf %74, %78 : vector<2x128xf32>
    %80 = math.tanh %79 : vector<2x128xf32>
    %cst_34 = arith.constant 1.000000e+00 : f32
    %81 = vector.broadcast %cst_34 : f32 to vector<2x128xf32>
    %82 = arith.subf %81, %73 : vector<2x128xf32>
    %83 = arith.mulf %82, %80 : vector<2x128xf32>
    %84 = arith.mulf %73, %23 : vector<2x128xf32>
    %85 = arith.addf %83, %84 : vector<2x128xf32>
    %c0_35 = arith.constant 0 : index
    %c0_36 = arith.constant 0 : index
    %86 = vector.load %arg23[%c0_35, %c0_36] : memref<16x256xf32, #tpu.memory_space<vmem>>, vector<2x128xf32>
    tpu.vector_store %arg23[%c0_35, %c0_36], %55 {strides = array<i32>} : memref<16x256xf32, #tpu.memory_space<vmem>>, vector<2x128xf32>,
    %c14 = arith.constant 14 : index
    %c128 = arith.constant 128 : index
    %87 = vector.load %arg23[%c14, %c128] : memref<16x256xf32, #tpu.memory_space<vmem>>, vector<2x128xf32>
    tpu.vector_store %arg23[%c14, %c128], %85 {strides = array<i32>} : memref<16x256xf32, #tpu.memory_space<vmem>>, vector<2x128xf32>,
    %88 = vector.extract_strided_slice %19 {offsets = [2, 0], sizes = [2, 384], strides = [1, 1]} : vector<16x768xf32> to vector<2x384xf32>
    %89 = vector.extract_strided_slice %19 {offsets = [12, 384], sizes = [2, 384], strides = [1, 1]} : vector<16x768xf32> to vector<2x384xf32>
    %c0_37 = arith.constant 0 : index
    %c0_38 = arith.constant 0 : index
    %90 = vector.load %arg8[%c0_37, %c0_38] : memref<128x384xf32, #tpu.memory_space<vmem>>, vector<128x384xf32>
    %cst_39 = arith.constant dense<0.000000e+00> : vector<2x384xf32>
    %91 = tpu.matmul %55, %90, %cst_39 {dimension_numbers = #tpu.dot_dimension_numbers<[1], [0], [0], [1], [0, 0, 1, 1], [], []>} : vector<2x128xf32>, vector<128x384xf32>, vector<2x384xf32> -> vector<2x384xf32>
    %92 = vector.extract_strided_slice %88 {offsets = [0, 0], sizes = [2, 128], strides = [1, 1]} : vector<2x384xf32> to vector<2x128xf32>
    %93 = vector.extract_strided_slice %91 {offsets = [0, 0], sizes = [2, 128], strides = [1, 1]} : vector<2x384xf32> to vector<2x128xf32>
    %94 = arith.addf %92, %93 : vector<2x128xf32>
    %95 = arith.negf %94 : vector<2x128xf32>
    %96 = math.exp %95 : vector<2x128xf32>
    %cst_40 = arith.constant 1.000000e+00 : f32
    %97 = vector.broadcast %cst_40 : f32 to vector<2x128xf32>
    %98 = arith.addf %97, %96 : vector<2x128xf32>
    %99 = arith.divf %97, %98 : vector<2x128xf32>
    %100 = vector.extract_strided_slice %88 {offsets = [0, 128], sizes = [2, 128], strides = [1, 1]} : vector<2x384xf32> to vector<2x128xf32>
    %101 = vector.extract_strided_slice %91 {offsets = [0, 128], sizes = [2, 128], strides = [1, 1]} : vector<2x384xf32> to vector<2x128xf32>
    %102 = arith.addf %100, %101 : vector<2x128xf32>
    %103 = arith.negf %102 : vector<2x128xf32>
    %104 = math.exp %103 : vector<2x128xf32>
    %cst_41 = arith.constant 1.000000e+00 : f32
    %105 = vector.broadcast %cst_41 : f32 to vector<2x128xf32>
    %106 = arith.addf %105, %104 : vector<2x128xf32>
    %107 = arith.divf %105, %106 : vector<2x128xf32>
    %108 = vector.extract_strided_slice %88 {offsets = [0, 256], sizes = [2, 128], strides = [1, 1]} : vector<2x384xf32> to vector<2x128xf32>
    %109 = vector.extract_strided_slice %91 {offsets = [0, 256], sizes = [2, 128], strides = [1, 1]} : vector<2x384xf32> to vector<2x128xf32>
    %110 = vector.broadcast %20 : vector<1x128xf32> to vector<2x128xf32>
    %111 = arith.addf %109, %110 : vector<2x128xf32>
    %112 = arith.mulf %99, %111 : vector<2x128xf32>
    %113 = arith.addf %108, %112 : vector<2x128xf32>
    %114 = math.tanh %113 : vector<2x128xf32>
    %cst_42 = arith.constant 1.000000e+00 : f32
    %115 = vector.broadcast %cst_42 : f32 to vector<2x128xf32>
    %116 = arith.subf %115, %107 : vector<2x128xf32>
    %117 = arith.mulf %116, %114 : vector<2x128xf32>
    %118 = arith.mulf %107, %55 : vector<2x128xf32>
    %119 = arith.addf %117, %118 : vector<2x128xf32>
    %c0_43 = arith.constant 0 : index
    %c0_44 = arith.constant 0 : index
    %120 = vector.load %arg9[%c0_43, %c0_44] : memref<128x384xf32, #tpu.memory_space<vmem>>, vector<128x384xf32>
    %cst_45 = arith.constant dense<0.000000e+00> : vector<2x384xf32>
    %121 = tpu.matmul %85, %120, %cst_45 {dimension_numbers = #tpu.dot_dimension_numbers<[1], [0], [0], [1], [0, 0, 1, 1], [], []>} : vector<2x128xf32>, vector<128x384xf32>, vector<2x384xf32> -> vector<2x384xf32>
    %122 = vector.extract_strided_slice %89 {offsets = [0, 0], sizes = [2, 128], strides = [1, 1]} : vector<2x384xf32> to vector<2x128xf32>
    %123 = vector.extract_strided_slice %121 {offsets = [0, 0], sizes = [2, 128], strides = [1, 1]} : vector<2x384xf32> to vector<2x128xf32>
    %124 = arith.addf %122, %123 : vector<2x128xf32>
    %125 = arith.negf %124 : vector<2x128xf32>
    %126 = math.exp %125 : vector<2x128xf32>
    %cst_46 = arith.constant 1.000000e+00 : f32
    %127 = vector.broadcast %cst_46 : f32 to vector<2x128xf32>
    %128 = arith.addf %127, %126 : vector<2x128xf32>
    %129 = arith.divf %127, %128 : vector<2x128xf32>
    %130 = vector.extract_strided_slice %89 {offsets = [0, 128], sizes = [2, 128], strides = [1, 1]} : vector<2x384xf32> to vector<2x128xf32>
    %131 = vector.extract_strided_slice %121 {offsets = [0, 128], sizes = [2, 128], strides = [1, 1]} : vector<2x384xf32> to vector<2x128xf32>
    %132 = arith.addf %130, %131 : vector<2x128xf32>
    %133 = arith.negf %132 : vector<2x128xf32>
    %134 = math.exp %133 : vector<2x128xf32>
    %cst_47 = arith.constant 1.000000e+00 : f32
    %135 = vector.broadcast %cst_47 : f32 to vector<2x128xf32>
    %136 = arith.addf %135, %134 : vector<2x128xf32>
    %137 = arith.divf %135, %136 : vector<2x128xf32>
    %138 = vector.extract_strided_slice %89 {offsets = [0, 256], sizes = [2, 128], strides = [1, 1]} : vector<2x384xf32> to vector<2x128xf32>
    %139 = vector.extract_strided_slice %121 {offsets = [0, 256], sizes = [2, 128], strides = [1, 1]} : vector<2x384xf32> to vector<2x128xf32>
    %140 = vector.broadcast %21 : vector<1x128xf32> to vector<2x128xf32>
    %141 = arith.addf %139, %140 : vector<2x128xf32>
    %142 = arith.mulf %129, %141 : vector<2x128xf32>
    %143 = arith.addf %138, %142 : vector<2x128xf32>
    %144 = math.tanh %143 : vector<2x128xf32>
    %cst_48 = arith.constant 1.000000e+00 : f32
    %145 = vector.broadcast %cst_48 : f32 to vector<2x128xf32>
    %146 = arith.subf %145, %137 : vector<2x128xf32>
    %147 = arith.mulf %146, %144 : vector<2x128xf32>
    %148 = arith.mulf %137, %85 : vector<2x128xf32>
    %149 = arith.addf %147, %148 : vector<2x128xf32>
    %c2 = arith.constant 2 : index
    %c0_49 = arith.constant 0 : index
    %150 = vector.load %arg23[%c2, %c0_49] : memref<16x256xf32, #tpu.memory_space<vmem>>, vector<2x128xf32>
    tpu.vector_store %arg23[%c2, %c0_49], %119 {strides = array<i32>} : memref<16x256xf32, #tpu.memory_space<vmem>>, vector<2x128xf32>,
    %c12 = arith.constant 12 : index
    %c128_50 = arith.constant 128 : index
    %151 = vector.load %arg23[%c12, %c128_50] : memref<16x256xf32, #tpu.memory_space<vmem>>, vector<2x128xf32>
    tpu.vector_store %arg23[%c12, %c128_50], %149 {strides = array<i32>} : memref<16x256xf32, #tpu.memory_space<vmem>>, vector<2x128xf32>,
    %152 = vector.extract_strided_slice %19 {offsets = [4, 0], sizes = [2, 384], strides = [1, 1]} : vector<16x768xf32> to vector<2x384xf32>
    %153 = vector.extract_strided_slice %19 {offsets = [10, 384], sizes = [2, 384], strides = [1, 1]} : vector<16x768xf32> to vector<2x384xf32>
    %c0_51 = arith.constant 0 : index
    %c0_52 = arith.constant 0 : index
    %154 = vector.load %arg8[%c0_51, %c0_52] : memref<128x384xf32, #tpu.memory_space<vmem>>, vector<128x384xf32>
    %cst_53 = arith.constant dense<0.000000e+00> : vector<2x384xf32>
    %155 = tpu.matmul %119, %154, %cst_53 {dimension_numbers = #tpu.dot_dimension_numbers<[1], [0], [0], [1], [0, 0, 1, 1], [], []>} : vector<2x128xf32>, vector<128x384xf32>, vector<2x384xf32> -> vector<2x384xf32>
    %156 = vector.extract_strided_slice %152 {offsets = [0, 0], sizes = [2, 128], strides = [1, 1]} : vector<2x384xf32> to vector<2x128xf32>
    %157 = vector.extract_strided_slice %155 {offsets = [0, 0], sizes = [2, 128], strides = [1, 1]} : vector<2x384xf32> to vector<2x128xf32>
    %158 = arith.addf %156, %157 : vector<2x128xf32>
    %159 = arith.negf %158 : vector<2x128xf32>
    %160 = math.exp %159 : vector<2x128xf32>
    %cst_54 = arith.constant 1.000000e+00 : f32
    %161 = vector.broadcast %cst_54 : f32 to vector<2x128xf32>
    %162 = arith.addf %161, %160 : vector<2x128xf32>
    %163 = arith.divf %161, %162 : vector<2x128xf32>
    %164 = vector.extract_strided_slice %152 {offsets = [0, 128], sizes = [2, 128], strides = [1, 1]} : vector<2x384xf32> to vector<2x128xf32>
    %165 = vector.extract_strided_slice %155 {offsets = [0, 128], sizes = [2, 128], strides = [1, 1]} : vector<2x384xf32> to vector<2x128xf32>
    %166 = arith.addf %164, %165 : vector<2x128xf32>
    %167 = arith.negf %166 : vector<2x128xf32>
    %168 = math.exp %167 : vector<2x128xf32>
    %cst_55 = arith.constant 1.000000e+00 : f32
    %169 = vector.broadcast %cst_55 : f32 to vector<2x128xf32>
    %170 = arith.addf %169, %168 : vector<2x128xf32>
    %171 = arith.divf %169, %170 : vector<2x128xf32>
    %172 = vector.extract_strided_slice %152 {offsets = [0, 256], sizes = [2, 128], strides = [1, 1]} : vector<2x384xf32> to vector<2x128xf32>
    %173 = vector.extract_strided_slice %155 {offsets = [0, 256], sizes = [2, 128], strides = [1, 1]} : vector<2x384xf32> to vector<2x128xf32>
    %174 = vector.broadcast %20 : vector<1x128xf32> to vector<2x128xf32>
    %175 = arith.addf %173, %174 : vector<2x128xf32>
    %176 = arith.mulf %163, %175 : vector<2x128xf32>
    %177 = arith.addf %172, %176 : vector<2x128xf32>
    %178 = math.tanh %177 : vector<2x128xf32>
    %cst_56 = arith.constant 1.000000e+00 : f32
    %179 = vector.broadcast %cst_56 : f32 to vector<2x128xf32>
    %180 = arith.subf %179, %171 : vector<2x128xf32>
    %181 = arith.mulf %180, %178 : vector<2x128xf32>
    %182 = arith.mulf %171, %119 : vector<2x128xf32>
    %183 = arith.addf %181, %182 : vector<2x128xf32>
    %c0_57 = arith.constant 0 : index
    %c0_58 = arith.constant 0 : index
    %184 = vector.load %arg9[%c0_57, %c0_58] : memref<128x384xf32, #tpu.memory_space<vmem>>, vector<128x384xf32>
    %cst_59 = arith.constant dense<0.000000e+00> : vector<2x384xf32>
    %185 = tpu.matmul %149, %184, %cst_59 {dimension_numbers = #tpu.dot_dimension_numbers<[1], [0], [0], [1], [0, 0, 1, 1], [], []>} : vector<2x128xf32>, vector<128x384xf32>, vector<2x384xf32> -> vector<2x384xf32>
    %186 = vector.extract_strided_slice %153 {offsets = [0, 0], sizes = [2, 128], strides = [1, 1]} : vector<2x384xf32> to vector<2x128xf32>
    %187 = vector.extract_strided_slice %185 {offsets = [0, 0], sizes = [2, 128], strides = [1, 1]} : vector<2x384xf32> to vector<2x128xf32>
    %188 = arith.addf %186, %187 : vector<2x128xf32>
    %189 = arith.negf %188 : vector<2x128xf32>
    %190 = math.exp %189 : vector<2x128xf32>
    %cst_60 = arith.constant 1.000000e+00 : f32
    %191 = vector.broadcast %cst_60 : f32 to vector<2x128xf32>
    %192 = arith.addf %191, %190 : vector<2x128xf32>
    %193 = arith.divf %191, %192 : vector<2x128xf32>
    %194 = vector.extract_strided_slice %153 {offsets = [0, 128], sizes = [2, 128], strides = [1, 1]} : vector<2x384xf32> to vector<2x128xf32>
    %195 = vector.extract_strided_slice %185 {offsets = [0, 128], sizes = [2, 128], strides = [1, 1]} : vector<2x384xf32> to vector<2x128xf32>
    %196 = arith.addf %194, %195 : vector<2x128xf32>
    %197 = arith.negf %196 : vector<2x128xf32>
    %198 = math.exp %197 : vector<2x128xf32>
    %cst_61 = arith.constant 1.000000e+00 : f32
    %199 = vector.broadcast %cst_61 : f32 to vector<2x128xf32>
    %200 = arith.addf %199, %198 : vector<2x128xf32>
    %201 = arith.divf %199, %200 : vector<2x128xf32>
    %202 = vector.extract_strided_slice %153 {offsets = [0, 256], sizes = [2, 128], strides = [1, 1]} : vector<2x384xf32> to vector<2x128xf32>
    %203 = vector.extract_strided_slice %185 {offsets = [0, 256], sizes = [2, 128], strides = [1, 1]} : vector<2x384xf32> to vector<2x128xf32>
    %204 = vector.broadcast %21 : vector<1x128xf32> to vector<2x128xf32>
    %205 = arith.addf %203, %204 : vector<2x128xf32>
    %206 = arith.mulf %193, %205 : vector<2x128xf32>
    %207 = arith.addf %202, %206 : vector<2x128xf32>
    %208 = math.tanh %207 : vector<2x128xf32>
    %cst_62 = arith.constant 1.000000e+00 : f32
    %209 = vector.broadcast %cst_62 : f32 to vector<2x128xf32>
    %210 = arith.subf %209, %201 : vector<2x128xf32>
    %211 = arith.mulf %210, %208 : vector<2x128xf32>
    %212 = arith.mulf %201, %149 : vector<2x128xf32>
    %213 = arith.addf %211, %212 : vector<2x128xf32>
    %c4 = arith.constant 4 : index
    %c0_63 = arith.constant 0 : index
    %214 = vector.load %arg23[%c4, %c0_63] : memref<16x256xf32, #tpu.memory_space<vmem>>, vector<2x128xf32>
    tpu.vector_store %arg23[%c4, %c0_63], %183 {strides = array<i32>} : memref<16x256xf32, #tpu.memory_space<vmem>>, vector<2x128xf32>,
    %c10 = arith.constant 10 : index
    %c128_64 = arith.constant 128 : index
    %215 = vector.load %arg23[%c10, %c128_64] : memref<16x256xf32, #tpu.memory_space<vmem>>, vector<2x128xf32>
    tpu.vector_store %arg23[%c10, %c128_64], %213 {strides = array<i32>} : memref<16x256xf32, #tpu.memory_space<vmem>>, vector<2x128xf32>,
    %216 = vector.extract_strided_slice %19 {offsets = [6, 0], sizes = [2, 384], strides = [1, 1]} : vector<16x768xf32> to vector<2x384xf32>
    %217 = vector.extract_strided_slice %19 {offsets = [8, 384], sizes = [2, 384], strides = [1, 1]} : vector<16x768xf32> to vector<2x384xf32>
    %c0_65 = arith.constant 0 : index
    %c0_66 = arith.constant 0 : index
    %218 = vector.load %arg8[%c0_65, %c0_66] : memref<128x384xf32, #tpu.memory_space<vmem>>, vector<128x384xf32>
    %cst_67 = arith.constant dense<0.000000e+00> : vector<2x384xf32>
    %219 = tpu.matmul %183, %218, %cst_67 {dimension_numbers = #tpu.dot_dimension_numbers<[1], [0], [0], [1], [0, 0, 1, 1], [], []>} : vector<2x128xf32>, vector<128x384xf32>, vector<2x384xf32> -> vector<2x384xf32>
    %220 = vector.extract_strided_slice %216 {offsets = [0, 0], sizes = [2, 128], strides = [1, 1]} : vector<2x384xf32> to vector<2x128xf32>
    %221 = vector.extract_strided_slice %219 {offsets = [0, 0], sizes = [2, 128], strides = [1, 1]} : vector<2x384xf32> to vector<2x128xf32>
    %222 = arith.addf %220, %221 : vector<2x128xf32>
    %223 = arith.negf %222 : vector<2x128xf32>
    %224 = math.exp %223 : vector<2x128xf32>
    %cst_68 = arith.constant 1.000000e+00 : f32
    %225 = vector.broadcast %cst_68 : f32 to vector<2x128xf32>
    %226 = arith.addf %225, %224 : vector<2x128xf32>
    %227 = arith.divf %225, %226 : vector<2x128xf32>
    %228 = vector.extract_strided_slice %216 {offsets = [0, 128], sizes = [2, 128], strides = [1, 1]} : vector<2x384xf32> to vector<2x128xf32>
    %229 = vector.extract_strided_slice %219 {offsets = [0, 128], sizes = [2, 128], strides = [1, 1]} : vector<2x384xf32> to vector<2x128xf32>
    %230 = arith.addf %228, %229 : vector<2x128xf32>
    %231 = arith.negf %230 : vector<2x128xf32>
    %232 = math.exp %231 : vector<2x128xf32>
    %cst_69 = arith.constant 1.000000e+00 : f32
    %233 = vector.broadcast %cst_69 : f32 to vector<2x128xf32>
    %234 = arith.addf %233, %232 : vector<2x128xf32>
    %235 = arith.divf %233, %234 : vector<2x128xf32>
    %236 = vector.extract_strided_slice %216 {offsets = [0, 256], sizes = [2, 128], strides = [1, 1]} : vector<2x384xf32> to vector<2x128xf32>
    %237 = vector.extract_strided_slice %219 {offsets = [0, 256], sizes = [2, 128], strides = [1, 1]} : vector<2x384xf32> to vector<2x128xf32>
    %238 = vector.broadcast %20 : vector<1x128xf32> to vector<2x128xf32>
    %239 = arith.addf %237, %238 : vector<2x128xf32>
    %240 = arith.mulf %227, %239 : vector<2x128xf32>
    %241 = arith.addf %236, %240 : vector<2x128xf32>
    %242 = math.tanh %241 : vector<2x128xf32>
    %cst_70 = arith.constant 1.000000e+00 : f32
    %243 = vector.broadcast %cst_70 : f32 to vector<2x128xf32>
    %244 = arith.subf %243, %235 : vector<2x128xf32>
    %245 = arith.mulf %244, %242 : vector<2x128xf32>
    %246 = arith.mulf %235, %183 : vector<2x128xf32>
    %247 = arith.addf %245, %246 : vector<2x128xf32>
    %c0_71 = arith.constant 0 : index
    %c0_72 = arith.constant 0 : index
    %248 = vector.load %arg9[%c0_71, %c0_72] : memref<128x384xf32, #tpu.memory_space<vmem>>, vector<128x384xf32>
    %cst_73 = arith.constant dense<0.000000e+00> : vector<2x384xf32>
    %249 = tpu.matmul %213, %248, %cst_73 {dimension_numbers = #tpu.dot_dimension_numbers<[1], [0], [0], [1], [0, 0, 1, 1], [], []>} : vector<2x128xf32>, vector<128x384xf32>, vector<2x384xf32> -> vector<2x384xf32>
    %250 = vector.extract_strided_slice %217 {offsets = [0, 0], sizes = [2, 128], strides = [1, 1]} : vector<2x384xf32> to vector<2x128xf32>
    %251 = vector.extract_strided_slice %249 {offsets = [0, 0], sizes = [2, 128], strides = [1, 1]} : vector<2x384xf32> to vector<2x128xf32>
    %252 = arith.addf %250, %251 : vector<2x128xf32>
    %253 = arith.negf %252 : vector<2x128xf32>
    %254 = math.exp %253 : vector<2x128xf32>
    %cst_74 = arith.constant 1.000000e+00 : f32
    %255 = vector.broadcast %cst_74 : f32 to vector<2x128xf32>
    %256 = arith.addf %255, %254 : vector<2x128xf32>
    %257 = arith.divf %255, %256 : vector<2x128xf32>
    %258 = vector.extract_strided_slice %217 {offsets = [0, 128], sizes = [2, 128], strides = [1, 1]} : vector<2x384xf32> to vector<2x128xf32>
    %259 = vector.extract_strided_slice %249 {offsets = [0, 128], sizes = [2, 128], strides = [1, 1]} : vector<2x384xf32> to vector<2x128xf32>
    %260 = arith.addf %258, %259 : vector<2x128xf32>
    %261 = arith.negf %260 : vector<2x128xf32>
    %262 = math.exp %261 : vector<2x128xf32>
    %cst_75 = arith.constant 1.000000e+00 : f32
    %263 = vector.broadcast %cst_75 : f32 to vector<2x128xf32>
    %264 = arith.addf %263, %262 : vector<2x128xf32>
    %265 = arith.divf %263, %264 : vector<2x128xf32>
    %266 = vector.extract_strided_slice %217 {offsets = [0, 256], sizes = [2, 128], strides = [1, 1]} : vector<2x384xf32> to vector<2x128xf32>
    %267 = vector.extract_strided_slice %249 {offsets = [0, 256], sizes = [2, 128], strides = [1, 1]} : vector<2x384xf32> to vector<2x128xf32>
    %268 = vector.broadcast %21 : vector<1x128xf32> to vector<2x128xf32>
    %269 = arith.addf %267, %268 : vector<2x128xf32>
    %270 = arith.mulf %257, %269 : vector<2x128xf32>
    %271 = arith.addf %266, %270 : vector<2x128xf32>
    %272 = math.tanh %271 : vector<2x128xf32>
    %cst_76 = arith.constant 1.000000e+00 : f32
    %273 = vector.broadcast %cst_76 : f32 to vector<2x128xf32>
    %274 = arith.subf %273, %265 : vector<2x128xf32>
    %275 = arith.mulf %274, %272 : vector<2x128xf32>
    %276 = arith.mulf %265, %213 : vector<2x128xf32>
    %277 = arith.addf %275, %276 : vector<2x128xf32>
    %c6 = arith.constant 6 : index
    %c0_77 = arith.constant 0 : index
    %278 = vector.load %arg23[%c6, %c0_77] : memref<16x256xf32, #tpu.memory_space<vmem>>, vector<2x128xf32>
    tpu.vector_store %arg23[%c6, %c0_77], %247 {strides = array<i32>} : memref<16x256xf32, #tpu.memory_space<vmem>>, vector<2x128xf32>,
    %c8 = arith.constant 8 : index
    %c128_78 = arith.constant 128 : index
    %279 = vector.load %arg23[%c8, %c128_78] : memref<16x256xf32, #tpu.memory_space<vmem>>, vector<2x128xf32>
    tpu.vector_store %arg23[%c8, %c128_78], %277 {strides = array<i32>} : memref<16x256xf32, #tpu.memory_space<vmem>>, vector<2x128xf32>,
    %280 = vector.extract_strided_slice %19 {offsets = [8, 0], sizes = [2, 384], strides = [1, 1]} : vector<16x768xf32> to vector<2x384xf32>
    %281 = vector.extract_strided_slice %19 {offsets = [6, 384], sizes = [2, 384], strides = [1, 1]} : vector<16x768xf32> to vector<2x384xf32>
    %c0_79 = arith.constant 0 : index
    %c0_80 = arith.constant 0 : index
    %282 = vector.load %arg8[%c0_79, %c0_80] : memref<128x384xf32, #tpu.memory_space<vmem>>, vector<128x384xf32>
    %cst_81 = arith.constant dense<0.000000e+00> : vector<2x384xf32>
    %283 = tpu.matmul %247, %282, %cst_81 {dimension_numbers = #tpu.dot_dimension_numbers<[1], [0], [0], [1], [0, 0, 1, 1], [], []>} : vector<2x128xf32>, vector<128x384xf32>, vector<2x384xf32> -> vector<2x384xf32>
    %284 = vector.extract_strided_slice %280 {offsets = [0, 0], sizes = [2, 128], strides = [1, 1]} : vector<2x384xf32> to vector<2x128xf32>
    %285 = vector.extract_strided_slice %283 {offsets = [0, 0], sizes = [2, 128], strides = [1, 1]} : vector<2x384xf32> to vector<2x128xf32>
    %286 = arith.addf %284, %285 : vector<2x128xf32>
    %287 = arith.negf %286 : vector<2x128xf32>
    %288 = math.exp %287 : vector<2x128xf32>
    %cst_82 = arith.constant 1.000000e+00 : f32
    %289 = vector.broadcast %cst_82 : f32 to vector<2x128xf32>
    %290 = arith.addf %289, %288 : vector<2x128xf32>
    %291 = arith.divf %289, %290 : vector<2x128xf32>
    %292 = vector.extract_strided_slice %280 {offsets = [0, 128], sizes = [2, 128], strides = [1, 1]} : vector<2x384xf32> to vector<2x128xf32>
    %293 = vector.extract_strided_slice %283 {offsets = [0, 128], sizes = [2, 128], strides = [1, 1]} : vector<2x384xf32> to vector<2x128xf32>
    %294 = arith.addf %292, %293 : vector<2x128xf32>
    %295 = arith.negf %294 : vector<2x128xf32>
    %296 = math.exp %295 : vector<2x128xf32>
    %cst_83 = arith.constant 1.000000e+00 : f32
    %297 = vector.broadcast %cst_83 : f32 to vector<2x128xf32>
    %298 = arith.addf %297, %296 : vector<2x128xf32>
    %299 = arith.divf %297, %298 : vector<2x128xf32>
    %300 = vector.extract_strided_slice %280 {offsets = [0, 256], sizes = [2, 128], strides = [1, 1]} : vector<2x384xf32> to vector<2x128xf32>
    %301 = vector.extract_strided_slice %283 {offsets = [0, 256], sizes = [2, 128], strides = [1, 1]} : vector<2x384xf32> to vector<2x128xf32>
    %302 = vector.broadcast %20 : vector<1x128xf32> to vector<2x128xf32>
    %303 = arith.addf %301, %302 : vector<2x128xf32>
    %304 = arith.mulf %291, %303 : vector<2x128xf32>
    %305 = arith.addf %300, %304 : vector<2x128xf32>
    %306 = math.tanh %305 : vector<2x128xf32>
    %cst_84 = arith.constant 1.000000e+00 : f32
    %307 = vector.broadcast %cst_84 : f32 to vector<2x128xf32>
    %308 = arith.subf %307, %299 : vector<2x128xf32>
    %309 = arith.mulf %308, %306 : vector<2x128xf32>
    %310 = arith.mulf %299, %247 : vector<2x128xf32>
    %311 = arith.addf %309, %310 : vector<2x128xf32>
    %c0_85 = arith.constant 0 : index
    %c0_86 = arith.constant 0 : index
    %312 = vector.load %arg9[%c0_85, %c0_86] : memref<128x384xf32, #tpu.memory_space<vmem>>, vector<128x384xf32>
    %cst_87 = arith.constant dense<0.000000e+00> : vector<2x384xf32>
    %313 = tpu.matmul %277, %312, %cst_87 {dimension_numbers = #tpu.dot_dimension_numbers<[1], [0], [0], [1], [0, 0, 1, 1], [], []>} : vector<2x128xf32>, vector<128x384xf32>, vector<2x384xf32> -> vector<2x384xf32>
    %314 = vector.extract_strided_slice %281 {offsets = [0, 0], sizes = [2, 128], strides = [1, 1]} : vector<2x384xf32> to vector<2x128xf32>
    %315 = vector.extract_strided_slice %313 {offsets = [0, 0], sizes = [2, 128], strides = [1, 1]} : vector<2x384xf32> to vector<2x128xf32>
    %316 = arith.addf %314, %315 : vector<2x128xf32>
    %317 = arith.negf %316 : vector<2x128xf32>
    %318 = math.exp %317 : vector<2x128xf32>
    %cst_88 = arith.constant 1.000000e+00 : f32
    %319 = vector.broadcast %cst_88 : f32 to vector<2x128xf32>
    %320 = arith.addf %319, %318 : vector<2x128xf32>
    %321 = arith.divf %319, %320 : vector<2x128xf32>
    %322 = vector.extract_strided_slice %281 {offsets = [0, 128], sizes = [2, 128], strides = [1, 1]} : vector<2x384xf32> to vector<2x128xf32>
    %323 = vector.extract_strided_slice %313 {offsets = [0, 128], sizes = [2, 128], strides = [1, 1]} : vector<2x384xf32> to vector<2x128xf32>
    %324 = arith.addf %322, %323 : vector<2x128xf32>
    %325 = arith.negf %324 : vector<2x128xf32>
    %326 = math.exp %325 : vector<2x128xf32>
    %cst_89 = arith.constant 1.000000e+00 : f32
    %327 = vector.broadcast %cst_89 : f32 to vector<2x128xf32>
    %328 = arith.addf %327, %326 : vector<2x128xf32>
    %329 = arith.divf %327, %328 : vector<2x128xf32>
    %330 = vector.extract_strided_slice %281 {offsets = [0, 256], sizes = [2, 128], strides = [1, 1]} : vector<2x384xf32> to vector<2x128xf32>
    %331 = vector.extract_strided_slice %313 {offsets = [0, 256], sizes = [2, 128], strides = [1, 1]} : vector<2x384xf32> to vector<2x128xf32>
    %332 = vector.broadcast %21 : vector<1x128xf32> to vector<2x128xf32>
    %333 = arith.addf %331, %332 : vector<2x128xf32>
    %334 = arith.mulf %321, %333 : vector<2x128xf32>
    %335 = arith.addf %330, %334 : vector<2x128xf32>
    %336 = math.tanh %335 : vector<2x128xf32>
    %cst_90 = arith.constant 1.000000e+00 : f32
    %337 = vector.broadcast %cst_90 : f32 to vector<2x128xf32>
    %338 = arith.subf %337, %329 : vector<2x128xf32>
    %339 = arith.mulf %338, %336 : vector<2x128xf32>
    %340 = arith.mulf %329, %277 : vector<2x128xf32>
    %341 = arith.addf %339, %340 : vector<2x128xf32>
    %c8_91 = arith.constant 8 : index
    %c0_92 = arith.constant 0 : index
    %342 = vector.load %arg23[%c8_91, %c0_92] : memref<16x256xf32, #tpu.memory_space<vmem>>, vector<2x128xf32>
    tpu.vector_store %arg23[%c8_91, %c0_92], %311 {strides = array<i32>} : memref<16x256xf32, #tpu.memory_space<vmem>>, vector<2x128xf32>,
    %c6_93 = arith.constant 6 : index
    %c128_94 = arith.constant 128 : index
    %343 = vector.load %arg23[%c6_93, %c128_94] : memref<16x256xf32, #tpu.memory_space<vmem>>, vector<2x128xf32>
    tpu.vector_store %arg23[%c6_93, %c128_94], %341 {strides = array<i32>} : memref<16x256xf32, #tpu.memory_space<vmem>>, vector<2x128xf32>,
    %344 = vector.extract_strided_slice %19 {offsets = [10, 0], sizes = [2, 384], strides = [1, 1]} : vector<16x768xf32> to vector<2x384xf32>
    %345 = vector.extract_strided_slice %19 {offsets = [4, 384], sizes = [2, 384], strides = [1, 1]} : vector<16x768xf32> to vector<2x384xf32>
    %c0_95 = arith.constant 0 : index
    %c0_96 = arith.constant 0 : index
    %346 = vector.load %arg8[%c0_95, %c0_96] : memref<128x384xf32, #tpu.memory_space<vmem>>, vector<128x384xf32>
    %cst_97 = arith.constant dense<0.000000e+00> : vector<2x384xf32>
    %347 = tpu.matmul %311, %346, %cst_97 {dimension_numbers = #tpu.dot_dimension_numbers<[1], [0], [0], [1], [0, 0, 1, 1], [], []>} : vector<2x128xf32>, vector<128x384xf32>, vector<2x384xf32> -> vector<2x384xf32>
    %348 = vector.extract_strided_slice %344 {offsets = [0, 0], sizes = [2, 128], strides = [1, 1]} : vector<2x384xf32> to vector<2x128xf32>
    %349 = vector.extract_strided_slice %347 {offsets = [0, 0], sizes = [2, 128], strides = [1, 1]} : vector<2x384xf32> to vector<2x128xf32>
    %350 = arith.addf %348, %349 : vector<2x128xf32>
    %351 = arith.negf %350 : vector<2x128xf32>
    %352 = math.exp %351 : vector<2x128xf32>
    %cst_98 = arith.constant 1.000000e+00 : f32
    %353 = vector.broadcast %cst_98 : f32 to vector<2x128xf32>
    %354 = arith.addf %353, %352 : vector<2x128xf32>
    %355 = arith.divf %353, %354 : vector<2x128xf32>
    %356 = vector.extract_strided_slice %344 {offsets = [0, 128], sizes = [2, 128], strides = [1, 1]} : vector<2x384xf32> to vector<2x128xf32>
    %357 = vector.extract_strided_slice %347 {offsets = [0, 128], sizes = [2, 128], strides = [1, 1]} : vector<2x384xf32> to vector<2x128xf32>
    %358 = arith.addf %356, %357 : vector<2x128xf32>
    %359 = arith.negf %358 : vector<2x128xf32>
    %360 = math.exp %359 : vector<2x128xf32>
    %cst_99 = arith.constant 1.000000e+00 : f32
    %361 = vector.broadcast %cst_99 : f32 to vector<2x128xf32>
    %362 = arith.addf %361, %360 : vector<2x128xf32>
    %363 = arith.divf %361, %362 : vector<2x128xf32>
    %364 = vector.extract_strided_slice %344 {offsets = [0, 256], sizes = [2, 128], strides = [1, 1]} : vector<2x384xf32> to vector<2x128xf32>
    %365 = vector.extract_strided_slice %347 {offsets = [0, 256], sizes = [2, 128], strides = [1, 1]} : vector<2x384xf32> to vector<2x128xf32>
    %366 = vector.broadcast %20 : vector<1x128xf32> to vector<2x128xf32>
    %367 = arith.addf %365, %366 : vector<2x128xf32>
    %368 = arith.mulf %355, %367 : vector<2x128xf32>
    %369 = arith.addf %364, %368 : vector<2x128xf32>
    %370 = math.tanh %369 : vector<2x128xf32>
    %cst_100 = arith.constant 1.000000e+00 : f32
    %371 = vector.broadcast %cst_100 : f32 to vector<2x128xf32>
    %372 = arith.subf %371, %363 : vector<2x128xf32>
    %373 = arith.mulf %372, %370 : vector<2x128xf32>
    %374 = arith.mulf %363, %311 : vector<2x128xf32>
    %375 = arith.addf %373, %374 : vector<2x128xf32>
    %c0_101 = arith.constant 0 : index
    %c0_102 = arith.constant 0 : index
    %376 = vector.load %arg9[%c0_101, %c0_102] : memref<128x384xf32, #tpu.memory_space<vmem>>, vector<128x384xf32>
    %cst_103 = arith.constant dense<0.000000e+00> : vector<2x384xf32>
    %377 = tpu.matmul %341, %376, %cst_103 {dimension_numbers = #tpu.dot_dimension_numbers<[1], [0], [0], [1], [0, 0, 1, 1], [], []>} : vector<2x128xf32>, vector<128x384xf32>, vector<2x384xf32> -> vector<2x384xf32>
    %378 = vector.extract_strided_slice %345 {offsets = [0, 0], sizes = [2, 128], strides = [1, 1]} : vector<2x384xf32> to vector<2x128xf32>
    %379 = vector.extract_strided_slice %377 {offsets = [0, 0], sizes = [2, 128], strides = [1, 1]} : vector<2x384xf32> to vector<2x128xf32>
    %380 = arith.addf %378, %379 : vector<2x128xf32>
    %381 = arith.negf %380 : vector<2x128xf32>
    %382 = math.exp %381 : vector<2x128xf32>
    %cst_104 = arith.constant 1.000000e+00 : f32
    %383 = vector.broadcast %cst_104 : f32 to vector<2x128xf32>
    %384 = arith.addf %383, %382 : vector<2x128xf32>
    %385 = arith.divf %383, %384 : vector<2x128xf32>
    %386 = vector.extract_strided_slice %345 {offsets = [0, 128], sizes = [2, 128], strides = [1, 1]} : vector<2x384xf32> to vector<2x128xf32>
    %387 = vector.extract_strided_slice %377 {offsets = [0, 128], sizes = [2, 128], strides = [1, 1]} : vector<2x384xf32> to vector<2x128xf32>
    %388 = arith.addf %386, %387 : vector<2x128xf32>
    %389 = arith.negf %388 : vector<2x128xf32>
    %390 = math.exp %389 : vector<2x128xf32>
    %cst_105 = arith.constant 1.000000e+00 : f32
    %391 = vector.broadcast %cst_105 : f32 to vector<2x128xf32>
    %392 = arith.addf %391, %390 : vector<2x128xf32>
    %393 = arith.divf %391, %392 : vector<2x128xf32>
    %394 = vector.extract_strided_slice %345 {offsets = [0, 256], sizes = [2, 128], strides = [1, 1]} : vector<2x384xf32> to vector<2x128xf32>
    %395 = vector.extract_strided_slice %377 {offsets = [0, 256], sizes = [2, 128], strides = [1, 1]} : vector<2x384xf32> to vector<2x128xf32>
    %396 = vector.broadcast %21 : vector<1x128xf32> to vector<2x128xf32>
    %397 = arith.addf %395, %396 : vector<2x128xf32>
    %398 = arith.mulf %385, %397 : vector<2x128xf32>
    %399 = arith.addf %394, %398 : vector<2x128xf32>
    %400 = math.tanh %399 : vector<2x128xf32>
    %cst_106 = arith.constant 1.000000e+00 : f32
    %401 = vector.broadcast %cst_106 : f32 to vector<2x128xf32>
    %402 = arith.subf %401, %393 : vector<2x128xf32>
    %403 = arith.mulf %402, %400 : vector<2x128xf32>
    %404 = arith.mulf %393, %341 : vector<2x128xf32>
    %405 = arith.addf %403, %404 : vector<2x128xf32>
    %c10_107 = arith.constant 10 : index
    %c0_108 = arith.constant 0 : index
    %406 = vector.load %arg23[%c10_107, %c0_108] : memref<16x256xf32, #tpu.memory_space<vmem>>, vector<2x128xf32>
    tpu.vector_store %arg23[%c10_107, %c0_108], %375 {strides = array<i32>} : memref<16x256xf32, #tpu.memory_space<vmem>>, vector<2x128xf32>,
    %c4_109 = arith.constant 4 : index
    %c128_110 = arith.constant 128 : index
    %407 = vector.load %arg23[%c4_109, %c128_110] : memref<16x256xf32, #tpu.memory_space<vmem>>, vector<2x128xf32>
    tpu.vector_store %arg23[%c4_109, %c128_110], %405 {strides = array<i32>} : memref<16x256xf32, #tpu.memory_space<vmem>>, vector<2x128xf32>,
    %408 = vector.extract_strided_slice %19 {offsets = [12, 0], sizes = [2, 384], strides = [1, 1]} : vector<16x768xf32> to vector<2x384xf32>
    %409 = vector.extract_strided_slice %19 {offsets = [2, 384], sizes = [2, 384], strides = [1, 1]} : vector<16x768xf32> to vector<2x384xf32>
    %c0_111 = arith.constant 0 : index
    %c0_112 = arith.constant 0 : index
    %410 = vector.load %arg8[%c0_111, %c0_112] : memref<128x384xf32, #tpu.memory_space<vmem>>, vector<128x384xf32>
    %cst_113 = arith.constant dense<0.000000e+00> : vector<2x384xf32>
    %411 = tpu.matmul %375, %410, %cst_113 {dimension_numbers = #tpu.dot_dimension_numbers<[1], [0], [0], [1], [0, 0, 1, 1], [], []>} : vector<2x128xf32>, vector<128x384xf32>, vector<2x384xf32> -> vector<2x384xf32>
    %412 = vector.extract_strided_slice %408 {offsets = [0, 0], sizes = [2, 128], strides = [1, 1]} : vector<2x384xf32> to vector<2x128xf32>
    %413 = vector.extract_strided_slice %411 {offsets = [0, 0], sizes = [2, 128], strides = [1, 1]} : vector<2x384xf32> to vector<2x128xf32>
    %414 = arith.addf %412, %413 : vector<2x128xf32>
    %415 = arith.negf %414 : vector<2x128xf32>
    %416 = math.exp %415 : vector<2x128xf32>
    %cst_114 = arith.constant 1.000000e+00 : f32
    %417 = vector.broadcast %cst_114 : f32 to vector<2x128xf32>
    %418 = arith.addf %417, %416 : vector<2x128xf32>
    %419 = arith.divf %417, %418 : vector<2x128xf32>
    %420 = vector.extract_strided_slice %408 {offsets = [0, 128], sizes = [2, 128], strides = [1, 1]} : vector<2x384xf32> to vector<2x128xf32>
    %421 = vector.extract_strided_slice %411 {offsets = [0, 128], sizes = [2, 128], strides = [1, 1]} : vector<2x384xf32> to vector<2x128xf32>
    %422 = arith.addf %420, %421 : vector<2x128xf32>
    %423 = arith.negf %422 : vector<2x128xf32>
    %424 = math.exp %423 : vector<2x128xf32>
    %cst_115 = arith.constant 1.000000e+00 : f32
    %425 = vector.broadcast %cst_115 : f32 to vector<2x128xf32>
    %426 = arith.addf %425, %424 : vector<2x128xf32>
    %427 = arith.divf %425, %426 : vector<2x128xf32>
    %428 = vector.extract_strided_slice %408 {offsets = [0, 256], sizes = [2, 128], strides = [1, 1]} : vector<2x384xf32> to vector<2x128xf32>
    %429 = vector.extract_strided_slice %411 {offsets = [0, 256], sizes = [2, 128], strides = [1, 1]} : vector<2x384xf32> to vector<2x128xf32>
    %430 = vector.broadcast %20 : vector<1x128xf32> to vector<2x128xf32>
    %431 = arith.addf %429, %430 : vector<2x128xf32>
    %432 = arith.mulf %419, %431 : vector<2x128xf32>
    %433 = arith.addf %428, %432 : vector<2x128xf32>
    %434 = math.tanh %433 : vector<2x128xf32>
    %cst_116 = arith.constant 1.000000e+00 : f32
    %435 = vector.broadcast %cst_116 : f32 to vector<2x128xf32>
    %436 = arith.subf %435, %427 : vector<2x128xf32>
    %437 = arith.mulf %436, %434 : vector<2x128xf32>
    %438 = arith.mulf %427, %375 : vector<2x128xf32>
    %439 = arith.addf %437, %438 : vector<2x128xf32>
    %c0_117 = arith.constant 0 : index
    %c0_118 = arith.constant 0 : index
    %440 = vector.load %arg9[%c0_117, %c0_118] : memref<128x384xf32, #tpu.memory_space<vmem>>, vector<128x384xf32>
    %cst_119 = arith.constant dense<0.000000e+00> : vector<2x384xf32>
    %441 = tpu.matmul %405, %440, %cst_119 {dimension_numbers = #tpu.dot_dimension_numbers<[1], [0], [0], [1], [0, 0, 1, 1], [], []>} : vector<2x128xf32>, vector<128x384xf32>, vector<2x384xf32> -> vector<2x384xf32>
    %442 = vector.extract_strided_slice %409 {offsets = [0, 0], sizes = [2, 128], strides = [1, 1]} : vector<2x384xf32> to vector<2x128xf32>
    %443 = vector.extract_strided_slice %441 {offsets = [0, 0], sizes = [2, 128], strides = [1, 1]} : vector<2x384xf32> to vector<2x128xf32>
    %444 = arith.addf %442, %443 : vector<2x128xf32>
    %445 = arith.negf %444 : vector<2x128xf32>
    %446 = math.exp %445 : vector<2x128xf32>
    %cst_120 = arith.constant 1.000000e+00 : f32
    %447 = vector.broadcast %cst_120 : f32 to vector<2x128xf32>
    %448 = arith.addf %447, %446 : vector<2x128xf32>
    %449 = arith.divf %447, %448 : vector<2x128xf32>
    %450 = vector.extract_strided_slice %409 {offsets = [0, 128], sizes = [2, 128], strides = [1, 1]} : vector<2x384xf32> to vector<2x128xf32>
    %451 = vector.extract_strided_slice %441 {offsets = [0, 128], sizes = [2, 128], strides = [1, 1]} : vector<2x384xf32> to vector<2x128xf32>
    %452 = arith.addf %450, %451 : vector<2x128xf32>
    %453 = arith.negf %452 : vector<2x128xf32>
    %454 = math.exp %453 : vector<2x128xf32>
    %cst_121 = arith.constant 1.000000e+00 : f32
    %455 = vector.broadcast %cst_121 : f32 to vector<2x128xf32>
    %456 = arith.addf %455, %454 : vector<2x128xf32>
    %457 = arith.divf %455, %456 : vector<2x128xf32>
    %458 = vector.extract_strided_slice %409 {offsets = [0, 256], sizes = [2, 128], strides = [1, 1]} : vector<2x384xf32> to vector<2x128xf32>
    %459 = vector.extract_strided_slice %441 {offsets = [0, 256], sizes = [2, 128], strides = [1, 1]} : vector<2x384xf32> to vector<2x128xf32>
    %460 = vector.broadcast %21 : vector<1x128xf32> to vector<2x128xf32>
    %461 = arith.addf %459, %460 : vector<2x128xf32>
    %462 = arith.mulf %449, %461 : vector<2x128xf32>
    %463 = arith.addf %458, %462 : vector<2x128xf32>
    %464 = math.tanh %463 : vector<2x128xf32>
    %cst_122 = arith.constant 1.000000e+00 : f32
    %465 = vector.broadcast %cst_122 : f32 to vector<2x128xf32>
    %466 = arith.subf %465, %457 : vector<2x128xf32>
    %467 = arith.mulf %466, %464 : vector<2x128xf32>
    %468 = arith.mulf %457, %405 : vector<2x128xf32>
    %469 = arith.addf %467, %468 : vector<2x128xf32>
    %c12_123 = arith.constant 12 : index
    %c0_124 = arith.constant 0 : index
    %470 = vector.load %arg23[%c12_123, %c0_124] : memref<16x256xf32, #tpu.memory_space<vmem>>, vector<2x128xf32>
    tpu.vector_store %arg23[%c12_123, %c0_124], %439 {strides = array<i32>} : memref<16x256xf32, #tpu.memory_space<vmem>>, vector<2x128xf32>,
    %c2_125 = arith.constant 2 : index
    %c128_126 = arith.constant 128 : index
    %471 = vector.load %arg23[%c2_125, %c128_126] : memref<16x256xf32, #tpu.memory_space<vmem>>, vector<2x128xf32>
    tpu.vector_store %arg23[%c2_125, %c128_126], %469 {strides = array<i32>} : memref<16x256xf32, #tpu.memory_space<vmem>>, vector<2x128xf32>,
    %472 = vector.extract_strided_slice %19 {offsets = [14, 0], sizes = [2, 384], strides = [1, 1]} : vector<16x768xf32> to vector<2x384xf32>
    %473 = vector.extract_strided_slice %19 {offsets = [0, 384], sizes = [2, 384], strides = [1, 1]} : vector<16x768xf32> to vector<2x384xf32>
    %c0_127 = arith.constant 0 : index
    %c0_128 = arith.constant 0 : index
    %474 = vector.load %arg8[%c0_127, %c0_128] : memref<128x384xf32, #tpu.memory_space<vmem>>, vector<128x384xf32>
    %cst_129 = arith.constant dense<0.000000e+00> : vector<2x384xf32>
    %475 = tpu.matmul %439, %474, %cst_129 {dimension_numbers = #tpu.dot_dimension_numbers<[1], [0], [0], [1], [0, 0, 1, 1], [], []>} : vector<2x128xf32>, vector<128x384xf32>, vector<2x384xf32> -> vector<2x384xf32>
    %476 = vector.extract_strided_slice %472 {offsets = [0, 0], sizes = [2, 128], strides = [1, 1]} : vector<2x384xf32> to vector<2x128xf32>
    %477 = vector.extract_strided_slice %475 {offsets = [0, 0], sizes = [2, 128], strides = [1, 1]} : vector<2x384xf32> to vector<2x128xf32>
    %478 = arith.addf %476, %477 : vector<2x128xf32>
    %479 = arith.negf %478 : vector<2x128xf32>
    %480 = math.exp %479 : vector<2x128xf32>
    %cst_130 = arith.constant 1.000000e+00 : f32
    %481 = vector.broadcast %cst_130 : f32 to vector<2x128xf32>
    %482 = arith.addf %481, %480 : vector<2x128xf32>
    %483 = arith.divf %481, %482 : vector<2x128xf32>
    %484 = vector.extract_strided_slice %472 {offsets = [0, 128], sizes = [2, 128], strides = [1, 1]} : vector<2x384xf32> to vector<2x128xf32>
    %485 = vector.extract_strided_slice %475 {offsets = [0, 128], sizes = [2, 128], strides = [1, 1]} : vector<2x384xf32> to vector<2x128xf32>
    %486 = arith.addf %484, %485 : vector<2x128xf32>
    %487 = arith.negf %486 : vector<2x128xf32>
    %488 = math.exp %487 : vector<2x128xf32>
    %cst_131 = arith.constant 1.000000e+00 : f32
    %489 = vector.broadcast %cst_131 : f32 to vector<2x128xf32>
    %490 = arith.addf %489, %488 : vector<2x128xf32>
    %491 = arith.divf %489, %490 : vector<2x128xf32>
    %492 = vector.extract_strided_slice %472 {offsets = [0, 256], sizes = [2, 128], strides = [1, 1]} : vector<2x384xf32> to vector<2x128xf32>
    %493 = vector.extract_strided_slice %475 {offsets = [0, 256], sizes = [2, 128], strides = [1, 1]} : vector<2x384xf32> to vector<2x128xf32>
    %494 = vector.broadcast %20 : vector<1x128xf32> to vector<2x128xf32>
    %495 = arith.addf %493, %494 : vector<2x128xf32>
    %496 = arith.mulf %483, %495 : vector<2x128xf32>
    %497 = arith.addf %492, %496 : vector<2x128xf32>
    %498 = math.tanh %497 : vector<2x128xf32>
    %cst_132 = arith.constant 1.000000e+00 : f32
    %499 = vector.broadcast %cst_132 : f32 to vector<2x128xf32>
    %500 = arith.subf %499, %491 : vector<2x128xf32>
    %501 = arith.mulf %500, %498 : vector<2x128xf32>
    %502 = arith.mulf %491, %439 : vector<2x128xf32>
    %503 = arith.addf %501, %502 : vector<2x128xf32>
    %c0_133 = arith.constant 0 : index
    %c0_134 = arith.constant 0 : index
    %504 = vector.load %arg9[%c0_133, %c0_134] : memref<128x384xf32, #tpu.memory_space<vmem>>, vector<128x384xf32>
    %cst_135 = arith.constant dense<0.000000e+00> : vector<2x384xf32>
    %505 = tpu.matmul %469, %504, %cst_135 {dimension_numbers = #tpu.dot_dimension_numbers<[1], [0], [0], [1], [0, 0, 1, 1], [], []>} : vector<2x128xf32>, vector<128x384xf32>, vector<2x384xf32> -> vector<2x384xf32>
    %506 = vector.extract_strided_slice %473 {offsets = [0, 0], sizes = [2, 128], strides = [1, 1]} : vector<2x384xf32> to vector<2x128xf32>
    %507 = vector.extract_strided_slice %505 {offsets = [0, 0], sizes = [2, 128], strides = [1, 1]} : vector<2x384xf32> to vector<2x128xf32>
    %508 = arith.addf %506, %507 : vector<2x128xf32>
    %509 = arith.negf %508 : vector<2x128xf32>
    %510 = math.exp %509 : vector<2x128xf32>
    %cst_136 = arith.constant 1.000000e+00 : f32
    %511 = vector.broadcast %cst_136 : f32 to vector<2x128xf32>
    %512 = arith.addf %511, %510 : vector<2x128xf32>
    %513 = arith.divf %511, %512 : vector<2x128xf32>
    %514 = vector.extract_strided_slice %473 {offsets = [0, 128], sizes = [2, 128], strides = [1, 1]} : vector<2x384xf32> to vector<2x128xf32>
    %515 = vector.extract_strided_slice %505 {offsets = [0, 128], sizes = [2, 128], strides = [1, 1]} : vector<2x384xf32> to vector<2x128xf32>
    %516 = arith.addf %514, %515 : vector<2x128xf32>
    %517 = arith.negf %516 : vector<2x128xf32>
    %518 = math.exp %517 : vector<2x128xf32>
    %cst_137 = arith.constant 1.000000e+00 : f32
    %519 = vector.broadcast %cst_137 : f32 to vector<2x128xf32>
    %520 = arith.addf %519, %518 : vector<2x128xf32>
    %521 = arith.divf %519, %520 : vector<2x128xf32>
    %522 = vector.extract_strided_slice %473 {offsets = [0, 256], sizes = [2, 128], strides = [1, 1]} : vector<2x384xf32> to vector<2x128xf32>
    %523 = vector.extract_strided_slice %505 {offsets = [0, 256], sizes = [2, 128], strides = [1, 1]} : vector<2x384xf32> to vector<2x128xf32>
    %524 = vector.broadcast %21 : vector<1x128xf32> to vector<2x128xf32>
    %525 = arith.addf %523, %524 : vector<2x128xf32>
    %526 = arith.mulf %513, %525 : vector<2x128xf32>
    %527 = arith.addf %522, %526 : vector<2x128xf32>
    %528 = math.tanh %527 : vector<2x128xf32>
    %cst_138 = arith.constant 1.000000e+00 : f32
    %529 = vector.broadcast %cst_138 : f32 to vector<2x128xf32>
    %530 = arith.subf %529, %521 : vector<2x128xf32>
    %531 = arith.mulf %530, %528 : vector<2x128xf32>
    %532 = arith.mulf %521, %469 : vector<2x128xf32>
    %533 = arith.addf %531, %532 : vector<2x128xf32>
    %c14_139 = arith.constant 14 : index
    %c0_140 = arith.constant 0 : index
    %534 = vector.load %arg23[%c14_139, %c0_140] : memref<16x256xf32, #tpu.memory_space<vmem>>, vector<2x128xf32>
    tpu.vector_store %arg23[%c14_139, %c0_140], %503 {strides = array<i32>} : memref<16x256xf32, #tpu.memory_space<vmem>>, vector<2x128xf32>,
    %c0_141 = arith.constant 0 : index
    %c128_142 = arith.constant 128 : index
    %535 = vector.load %arg23[%c0_141, %c128_142] : memref<16x256xf32, #tpu.memory_space<vmem>>, vector<2x128xf32>
    tpu.vector_store %arg23[%c0_141, %c128_142], %533 {strides = array<i32>} : memref<16x256xf32, #tpu.memory_space<vmem>>, vector<2x128xf32>,
    %c0_143 = arith.constant 0 : index
    %c0_144 = arith.constant 0 : index
    %536 = vector.load %arg23[%c0_143, %c0_144] : memref<16x256xf32, #tpu.memory_space<vmem>>, vector<16x256xf32>
    %c0_145 = arith.constant 0 : index
    %c0_146 = arith.constant 0 : index
    %537 = vector.load %arg12[%c0_145, %c0_146] : memref<256x768xf32, #tpu.memory_space<vmem>>, vector<256x768xf32>
    %cst_147 = arith.constant dense<0.000000e+00> : vector<16x768xf32>
    %538 = tpu.matmul %536, %537, %cst_147 {dimension_numbers = #tpu.dot_dimension_numbers<[1], [0], [0], [1], [0, 0, 1, 1], [], []>} : vector<16x256xf32>, vector<256x768xf32>, vector<16x768xf32> -> vector<16x768xf32>
    %c0_148 = arith.constant 0 : index
    %c0_149 = arith.constant 0 : index
    %539 = vector.load %arg13[%c0_148, %c0_149] : memref<1x768xf32, #tpu.memory_space<vmem>>, vector<1x768xf32>
    %540 = vector.broadcast %539 : vector<1x768xf32> to vector<16x768xf32>
    %541 = arith.addf %538, %540 : vector<16x768xf32>
    %c0_150 = arith.constant 0 : index
    %c0_151 = arith.constant 0 : index
    %542 = vector.load %arg16[%c0_150, %c0_151] : memref<1x128xf32, #tpu.memory_space<vmem>>, vector<1x128xf32>
    %c0_152 = arith.constant 0 : index
    %c0_153 = arith.constant 0 : index
    %543 = vector.load %arg17[%c0_152, %c0_153] : memref<1x128xf32, #tpu.memory_space<vmem>>, vector<1x128xf32>
    %cst_154 = arith.constant 0.000000e+00 : f32
    %544 = vector.broadcast %cst_154 : f32 to vector<2x128xf32>
    %cst_155 = arith.constant 0.000000e+00 : f32
    %545 = vector.broadcast %cst_155 : f32 to vector<2x128xf32>
    %546 = vector.extract_strided_slice %541 {offsets = [0, 0], sizes = [2, 384], strides = [1, 1]} : vector<16x768xf32> to vector<2x384xf32>
    %547 = vector.extract_strided_slice %541 {offsets = [14, 384], sizes = [2, 384], strides = [1, 1]} : vector<16x768xf32> to vector<2x384xf32>
    %c0_156 = arith.constant 0 : index
    %c0_157 = arith.constant 0 : index
    %548 = vector.load %arg14[%c0_156, %c0_157] : memref<128x384xf32, #tpu.memory_space<vmem>>, vector<128x384xf32>
    %cst_158 = arith.constant dense<0.000000e+00> : vector<2x384xf32>
    %549 = tpu.matmul %544, %548, %cst_158 {dimension_numbers = #tpu.dot_dimension_numbers<[1], [0], [0], [1], [0, 0, 1, 1], [], []>} : vector<2x128xf32>, vector<128x384xf32>, vector<2x384xf32> -> vector<2x384xf32>
    %550 = vector.extract_strided_slice %546 {offsets = [0, 0], sizes = [2, 128], strides = [1, 1]} : vector<2x384xf32> to vector<2x128xf32>
    %551 = vector.extract_strided_slice %549 {offsets = [0, 0], sizes = [2, 128], strides = [1, 1]} : vector<2x384xf32> to vector<2x128xf32>
    %552 = arith.addf %550, %551 : vector<2x128xf32>
    %553 = arith.negf %552 : vector<2x128xf32>
    %554 = math.exp %553 : vector<2x128xf32>
    %cst_159 = arith.constant 1.000000e+00 : f32
    %555 = vector.broadcast %cst_159 : f32 to vector<2x128xf32>
    %556 = arith.addf %555, %554 : vector<2x128xf32>
    %557 = arith.divf %555, %556 : vector<2x128xf32>
    %558 = vector.extract_strided_slice %546 {offsets = [0, 128], sizes = [2, 128], strides = [1, 1]} : vector<2x384xf32> to vector<2x128xf32>
    %559 = vector.extract_strided_slice %549 {offsets = [0, 128], sizes = [2, 128], strides = [1, 1]} : vector<2x384xf32> to vector<2x128xf32>
    %560 = arith.addf %558, %559 : vector<2x128xf32>
    %561 = arith.negf %560 : vector<2x128xf32>
    %562 = math.exp %561 : vector<2x128xf32>
    %cst_160 = arith.constant 1.000000e+00 : f32
    %563 = vector.broadcast %cst_160 : f32 to vector<2x128xf32>
    %564 = arith.addf %563, %562 : vector<2x128xf32>
    %565 = arith.divf %563, %564 : vector<2x128xf32>
    %566 = vector.extract_strided_slice %546 {offsets = [0, 256], sizes = [2, 128], strides = [1, 1]} : vector<2x384xf32> to vector<2x128xf32>
    %567 = vector.extract_strided_slice %549 {offsets = [0, 256], sizes = [2, 128], strides = [1, 1]} : vector<2x384xf32> to vector<2x128xf32>
    %568 = vector.broadcast %542 : vector<1x128xf32> to vector<2x128xf32>
    %569 = arith.addf %567, %568 : vector<2x128xf32>
    %570 = arith.mulf %557, %569 : vector<2x128xf32>
    %571 = arith.addf %566, %570 : vector<2x128xf32>
    %572 = math.tanh %571 : vector<2x128xf32>
    %cst_161 = arith.constant 1.000000e+00 : f32
    %573 = vector.broadcast %cst_161 : f32 to vector<2x128xf32>
    %574 = arith.subf %573, %565 : vector<2x128xf32>
    %575 = arith.mulf %574, %572 : vector<2x128xf32>
    %576 = arith.mulf %565, %544 : vector<2x128xf32>
    %577 = arith.addf %575, %576 : vector<2x128xf32>
    %c0_162 = arith.constant 0 : index
    %c0_163 = arith.constant 0 : index
    %578 = vector.load %arg15[%c0_162, %c0_163] : memref<128x384xf32, #tpu.memory_space<vmem>>, vector<128x384xf32>
    %cst_164 = arith.constant dense<0.000000e+00> : vector<2x384xf32>
    %579 = tpu.matmul %545, %578, %cst_164 {dimension_numbers = #tpu.dot_dimension_numbers<[1], [0], [0], [1], [0, 0, 1, 1], [], []>} : vector<2x128xf32>, vector<128x384xf32>, vector<2x384xf32> -> vector<2x384xf32>
    %580 = vector.extract_strided_slice %547 {offsets = [0, 0], sizes = [2, 128], strides = [1, 1]} : vector<2x384xf32> to vector<2x128xf32>
    %581 = vector.extract_strided_slice %579 {offsets = [0, 0], sizes = [2, 128], strides = [1, 1]} : vector<2x384xf32> to vector<2x128xf32>
    %582 = arith.addf %580, %581 : vector<2x128xf32>
    %583 = arith.negf %582 : vector<2x128xf32>
    %584 = math.exp %583 : vector<2x128xf32>
    %cst_165 = arith.constant 1.000000e+00 : f32
    %585 = vector.broadcast %cst_165 : f32 to vector<2x128xf32>
    %586 = arith.addf %585, %584 : vector<2x128xf32>
    %587 = arith.divf %585, %586 : vector<2x128xf32>
    %588 = vector.extract_strided_slice %547 {offsets = [0, 128], sizes = [2, 128], strides = [1, 1]} : vector<2x384xf32> to vector<2x128xf32>
    %589 = vector.extract_strided_slice %579 {offsets = [0, 128], sizes = [2, 128], strides = [1, 1]} : vector<2x384xf32> to vector<2x128xf32>
    %590 = arith.addf %588, %589 : vector<2x128xf32>
    %591 = arith.negf %590 : vector<2x128xf32>
    %592 = math.exp %591 : vector<2x128xf32>
    %cst_166 = arith.constant 1.000000e+00 : f32
    %593 = vector.broadcast %cst_166 : f32 to vector<2x128xf32>
    %594 = arith.addf %593, %592 : vector<2x128xf32>
    %595 = arith.divf %593, %594 : vector<2x128xf32>
    %596 = vector.extract_strided_slice %547 {offsets = [0, 256], sizes = [2, 128], strides = [1, 1]} : vector<2x384xf32> to vector<2x128xf32>
    %597 = vector.extract_strided_slice %579 {offsets = [0, 256], sizes = [2, 128], strides = [1, 1]} : vector<2x384xf32> to vector<2x128xf32>
    %598 = vector.broadcast %543 : vector<1x128xf32> to vector<2x128xf32>
    %599 = arith.addf %597, %598 : vector<2x128xf32>
    %600 = arith.mulf %587, %599 : vector<2x128xf32>
    %601 = arith.addf %596, %600 : vector<2x128xf32>
    %602 = math.tanh %601 : vector<2x128xf32>
    %cst_167 = arith.constant 1.000000e+00 : f32
    %603 = vector.broadcast %cst_167 : f32 to vector<2x128xf32>
    %604 = arith.subf %603, %595 : vector<2x128xf32>
    %605 = arith.mulf %604, %602 : vector<2x128xf32>
    %606 = arith.mulf %595, %545 : vector<2x128xf32>
    %607 = arith.addf %605, %606 : vector<2x128xf32>
    %608 = vector.extract_strided_slice %541 {offsets = [2, 0], sizes = [2, 384], strides = [1, 1]} : vector<16x768xf32> to vector<2x384xf32>
    %c0_168 = arith.constant 0 : index
    %c0_169 = arith.constant 0 : index
    %609 = vector.load %arg14[%c0_168, %c0_169] : memref<128x384xf32, #tpu.memory_space<vmem>>, vector<128x384xf32>
    %cst_170 = arith.constant dense<0.000000e+00> : vector<2x384xf32>
    %610 = tpu.matmul %577, %609, %cst_170 {dimension_numbers = #tpu.dot_dimension_numbers<[1], [0], [0], [1], [0, 0, 1, 1], [], []>} : vector<2x128xf32>, vector<128x384xf32>, vector<2x384xf32> -> vector<2x384xf32>
    %611 = vector.extract_strided_slice %608 {offsets = [0, 0], sizes = [2, 128], strides = [1, 1]} : vector<2x384xf32> to vector<2x128xf32>
    %612 = vector.extract_strided_slice %610 {offsets = [0, 0], sizes = [2, 128], strides = [1, 1]} : vector<2x384xf32> to vector<2x128xf32>
    %613 = arith.addf %611, %612 : vector<2x128xf32>
    %614 = arith.negf %613 : vector<2x128xf32>
    %615 = math.exp %614 : vector<2x128xf32>
    %cst_171 = arith.constant 1.000000e+00 : f32
    %616 = vector.broadcast %cst_171 : f32 to vector<2x128xf32>
    %617 = arith.addf %616, %615 : vector<2x128xf32>
    %618 = arith.divf %616, %617 : vector<2x128xf32>
    %619 = vector.extract_strided_slice %608 {offsets = [0, 128], sizes = [2, 128], strides = [1, 1]} : vector<2x384xf32> to vector<2x128xf32>
    %620 = vector.extract_strided_slice %610 {offsets = [0, 128], sizes = [2, 128], strides = [1, 1]} : vector<2x384xf32> to vector<2x128xf32>
    %621 = arith.addf %619, %620 : vector<2x128xf32>
    %622 = arith.negf %621 : vector<2x128xf32>
    %623 = math.exp %622 : vector<2x128xf32>
    %cst_172 = arith.constant 1.000000e+00 : f32
    %624 = vector.broadcast %cst_172 : f32 to vector<2x128xf32>
    %625 = arith.addf %624, %623 : vector<2x128xf32>
    %626 = arith.divf %624, %625 : vector<2x128xf32>
    %627 = vector.extract_strided_slice %608 {offsets = [0, 256], sizes = [2, 128], strides = [1, 1]} : vector<2x384xf32> to vector<2x128xf32>
    %628 = vector.extract_strided_slice %610 {offsets = [0, 256], sizes = [2, 128], strides = [1, 1]} : vector<2x384xf32> to vector<2x128xf32>
    %629 = vector.broadcast %542 : vector<1x128xf32> to vector<2x128xf32>
    %630 = arith.addf %628, %629 : vector<2x128xf32>
    %631 = arith.mulf %618, %630 : vector<2x128xf32>
    %632 = arith.addf %627, %631 : vector<2x128xf32>
    %633 = math.tanh %632 : vector<2x128xf32>
    %cst_173 = arith.constant 1.000000e+00 : f32
    %634 = vector.broadcast %cst_173 : f32 to vector<2x128xf32>
    %635 = arith.subf %634, %626 : vector<2x128xf32>
    %636 = arith.mulf %635, %633 : vector<2x128xf32>
    %637 = arith.mulf %626, %577 : vector<2x128xf32>
    %638 = arith.addf %636, %637 : vector<2x128xf32>
    %639 = vector.extract_strided_slice %541 {offsets = [4, 0], sizes = [2, 384], strides = [1, 1]} : vector<16x768xf32> to vector<2x384xf32>
    %c0_174 = arith.constant 0 : index
    %c0_175 = arith.constant 0 : index
    %640 = vector.load %arg14[%c0_174, %c0_175] : memref<128x384xf32, #tpu.memory_space<vmem>>, vector<128x384xf32>
    %cst_176 = arith.constant dense<0.000000e+00> : vector<2x384xf32>
    %641 = tpu.matmul %638, %640, %cst_176 {dimension_numbers = #tpu.dot_dimension_numbers<[1], [0], [0], [1], [0, 0, 1, 1], [], []>} : vector<2x128xf32>, vector<128x384xf32>, vector<2x384xf32> -> vector<2x384xf32>
    %642 = vector.extract_strided_slice %639 {offsets = [0, 0], sizes = [2, 128], strides = [1, 1]} : vector<2x384xf32> to vector<2x128xf32>
    %643 = vector.extract_strided_slice %641 {offsets = [0, 0], sizes = [2, 128], strides = [1, 1]} : vector<2x384xf32> to vector<2x128xf32>
    %644 = arith.addf %642, %643 : vector<2x128xf32>
    %645 = arith.negf %644 : vector<2x128xf32>
    %646 = math.exp %645 : vector<2x128xf32>
    %cst_177 = arith.constant 1.000000e+00 : f32
    %647 = vector.broadcast %cst_177 : f32 to vector<2x128xf32>
    %648 = arith.addf %647, %646 : vector<2x128xf32>
    %649 = arith.divf %647, %648 : vector<2x128xf32>
    %650 = vector.extract_strided_slice %639 {offsets = [0, 128], sizes = [2, 128], strides = [1, 1]} : vector<2x384xf32> to vector<2x128xf32>
    %651 = vector.extract_strided_slice %641 {offsets = [0, 128], sizes = [2, 128], strides = [1, 1]} : vector<2x384xf32> to vector<2x128xf32>
    %652 = arith.addf %650, %651 : vector<2x128xf32>
    %653 = arith.negf %652 : vector<2x128xf32>
    %654 = math.exp %653 : vector<2x128xf32>
    %cst_178 = arith.constant 1.000000e+00 : f32
    %655 = vector.broadcast %cst_178 : f32 to vector<2x128xf32>
    %656 = arith.addf %655, %654 : vector<2x128xf32>
    %657 = arith.divf %655, %656 : vector<2x128xf32>
    %658 = vector.extract_strided_slice %639 {offsets = [0, 256], sizes = [2, 128], strides = [1, 1]} : vector<2x384xf32> to vector<2x128xf32>
    %659 = vector.extract_strided_slice %641 {offsets = [0, 256], sizes = [2, 128], strides = [1, 1]} : vector<2x384xf32> to vector<2x128xf32>
    %660 = vector.broadcast %542 : vector<1x128xf32> to vector<2x128xf32>
    %661 = arith.addf %659, %660 : vector<2x128xf32>
    %662 = arith.mulf %649, %661 : vector<2x128xf32>
    %663 = arith.addf %658, %662 : vector<2x128xf32>
    %664 = math.tanh %663 : vector<2x128xf32>
    %cst_179 = arith.constant 1.000000e+00 : f32
    %665 = vector.broadcast %cst_179 : f32 to vector<2x128xf32>
    %666 = arith.subf %665, %657 : vector<2x128xf32>
    %667 = arith.mulf %666, %664 : vector<2x128xf32>
    %668 = arith.mulf %657, %638 : vector<2x128xf32>
    %669 = arith.addf %667, %668 : vector<2x128xf32>
    %670 = vector.extract_strided_slice %541 {offsets = [6, 0], sizes = [2, 384], strides = [1, 1]} : vector<16x768xf32> to vector<2x384xf32>
    %c0_180 = arith.constant 0 : index
    %c0_181 = arith.constant 0 : index
    %671 = vector.load %arg14[%c0_180, %c0_181] : memref<128x384xf32, #tpu.memory_space<vmem>>, vector<128x384xf32>
    %cst_182 = arith.constant dense<0.000000e+00> : vector<2x384xf32>
    %672 = tpu.matmul %669, %671, %cst_182 {dimension_numbers = #tpu.dot_dimension_numbers<[1], [0], [0], [1], [0, 0, 1, 1], [], []>} : vector<2x128xf32>, vector<128x384xf32>, vector<2x384xf32> -> vector<2x384xf32>
    %673 = vector.extract_strided_slice %670 {offsets = [0, 0], sizes = [2, 128], strides = [1, 1]} : vector<2x384xf32> to vector<2x128xf32>
    %674 = vector.extract_strided_slice %672 {offsets = [0, 0], sizes = [2, 128], strides = [1, 1]} : vector<2x384xf32> to vector<2x128xf32>
    %675 = arith.addf %673, %674 : vector<2x128xf32>
    %676 = arith.negf %675 : vector<2x128xf32>
    %677 = math.exp %676 : vector<2x128xf32>
    %cst_183 = arith.constant 1.000000e+00 : f32
    %678 = vector.broadcast %cst_183 : f32 to vector<2x128xf32>
    %679 = arith.addf %678, %677 : vector<2x128xf32>
    %680 = arith.divf %678, %679 : vector<2x128xf32>
    %681 = vector.extract_strided_slice %670 {offsets = [0, 128], sizes = [2, 128], strides = [1, 1]} : vector<2x384xf32> to vector<2x128xf32>
    %682 = vector.extract_strided_slice %672 {offsets = [0, 128], sizes = [2, 128], strides = [1, 1]} : vector<2x384xf32> to vector<2x128xf32>
    %683 = arith.addf %681, %682 : vector<2x128xf32>
    %684 = arith.negf %683 : vector<2x128xf32>
    %685 = math.exp %684 : vector<2x128xf32>
    %cst_184 = arith.constant 1.000000e+00 : f32
    %686 = vector.broadcast %cst_184 : f32 to vector<2x128xf32>
    %687 = arith.addf %686, %685 : vector<2x128xf32>
    %688 = arith.divf %686, %687 : vector<2x128xf32>
    %689 = vector.extract_strided_slice %670 {offsets = [0, 256], sizes = [2, 128], strides = [1, 1]} : vector<2x384xf32> to vector<2x128xf32>
    %690 = vector.extract_strided_slice %672 {offsets = [0, 256], sizes = [2, 128], strides = [1, 1]} : vector<2x384xf32> to vector<2x128xf32>
    %691 = vector.broadcast %542 : vector<1x128xf32> to vector<2x128xf32>
    %692 = arith.addf %690, %691 : vector<2x128xf32>
    %693 = arith.mulf %680, %692 : vector<2x128xf32>
    %694 = arith.addf %689, %693 : vector<2x128xf32>
    %695 = math.tanh %694 : vector<2x128xf32>
    %cst_185 = arith.constant 1.000000e+00 : f32
    %696 = vector.broadcast %cst_185 : f32 to vector<2x128xf32>
    %697 = arith.subf %696, %688 : vector<2x128xf32>
    %698 = arith.mulf %697, %695 : vector<2x128xf32>
    %699 = arith.mulf %688, %669 : vector<2x128xf32>
    %700 = arith.addf %698, %699 : vector<2x128xf32>
    %701 = vector.extract_strided_slice %541 {offsets = [8, 0], sizes = [2, 384], strides = [1, 1]} : vector<16x768xf32> to vector<2x384xf32>
    %c0_186 = arith.constant 0 : index
    %c0_187 = arith.constant 0 : index
    %702 = vector.load %arg14[%c0_186, %c0_187] : memref<128x384xf32, #tpu.memory_space<vmem>>, vector<128x384xf32>
    %cst_188 = arith.constant dense<0.000000e+00> : vector<2x384xf32>
    %703 = tpu.matmul %700, %702, %cst_188 {dimension_numbers = #tpu.dot_dimension_numbers<[1], [0], [0], [1], [0, 0, 1, 1], [], []>} : vector<2x128xf32>, vector<128x384xf32>, vector<2x384xf32> -> vector<2x384xf32>
    %704 = vector.extract_strided_slice %701 {offsets = [0, 0], sizes = [2, 128], strides = [1, 1]} : vector<2x384xf32> to vector<2x128xf32>
    %705 = vector.extract_strided_slice %703 {offsets = [0, 0], sizes = [2, 128], strides = [1, 1]} : vector<2x384xf32> to vector<2x128xf32>
    %706 = arith.addf %704, %705 : vector<2x128xf32>
    %707 = arith.negf %706 : vector<2x128xf32>
    %708 = math.exp %707 : vector<2x128xf32>
    %cst_189 = arith.constant 1.000000e+00 : f32
    %709 = vector.broadcast %cst_189 : f32 to vector<2x128xf32>
    %710 = arith.addf %709, %708 : vector<2x128xf32>
    %711 = arith.divf %709, %710 : vector<2x128xf32>
    %712 = vector.extract_strided_slice %701 {offsets = [0, 128], sizes = [2, 128], strides = [1, 1]} : vector<2x384xf32> to vector<2x128xf32>
    %713 = vector.extract_strided_slice %703 {offsets = [0, 128], sizes = [2, 128], strides = [1, 1]} : vector<2x384xf32> to vector<2x128xf32>
    %714 = arith.addf %712, %713 : vector<2x128xf32>
    %715 = arith.negf %714 : vector<2x128xf32>
    %716 = math.exp %715 : vector<2x128xf32>
    %cst_190 = arith.constant 1.000000e+00 : f32
    %717 = vector.broadcast %cst_190 : f32 to vector<2x128xf32>
    %718 = arith.addf %717, %716 : vector<2x128xf32>
    %719 = arith.divf %717, %718 : vector<2x128xf32>
    %720 = vector.extract_strided_slice %701 {offsets = [0, 256], sizes = [2, 128], strides = [1, 1]} : vector<2x384xf32> to vector<2x128xf32>
    %721 = vector.extract_strided_slice %703 {offsets = [0, 256], sizes = [2, 128], strides = [1, 1]} : vector<2x384xf32> to vector<2x128xf32>
    %722 = vector.broadcast %542 : vector<1x128xf32> to vector<2x128xf32>
    %723 = arith.addf %721, %722 : vector<2x128xf32>
    %724 = arith.mulf %711, %723 : vector<2x128xf32>
    %725 = arith.addf %720, %724 : vector<2x128xf32>
    %726 = math.tanh %725 : vector<2x128xf32>
    %cst_191 = arith.constant 1.000000e+00 : f32
    %727 = vector.broadcast %cst_191 : f32 to vector<2x128xf32>
    %728 = arith.subf %727, %719 : vector<2x128xf32>
    %729 = arith.mulf %728, %726 : vector<2x128xf32>
    %730 = arith.mulf %719, %700 : vector<2x128xf32>
    %731 = arith.addf %729, %730 : vector<2x128xf32>
    %732 = vector.extract_strided_slice %541 {offsets = [10, 0], sizes = [2, 384], strides = [1, 1]} : vector<16x768xf32> to vector<2x384xf32>
    %c0_192 = arith.constant 0 : index
    %c0_193 = arith.constant 0 : index
    %733 = vector.load %arg14[%c0_192, %c0_193] : memref<128x384xf32, #tpu.memory_space<vmem>>, vector<128x384xf32>
    %cst_194 = arith.constant dense<0.000000e+00> : vector<2x384xf32>
    %734 = tpu.matmul %731, %733, %cst_194 {dimension_numbers = #tpu.dot_dimension_numbers<[1], [0], [0], [1], [0, 0, 1, 1], [], []>} : vector<2x128xf32>, vector<128x384xf32>, vector<2x384xf32> -> vector<2x384xf32>
    %735 = vector.extract_strided_slice %732 {offsets = [0, 0], sizes = [2, 128], strides = [1, 1]} : vector<2x384xf32> to vector<2x128xf32>
    %736 = vector.extract_strided_slice %734 {offsets = [0, 0], sizes = [2, 128], strides = [1, 1]} : vector<2x384xf32> to vector<2x128xf32>
    %737 = arith.addf %735, %736 : vector<2x128xf32>
    %738 = arith.negf %737 : vector<2x128xf32>
    %739 = math.exp %738 : vector<2x128xf32>
    %cst_195 = arith.constant 1.000000e+00 : f32
    %740 = vector.broadcast %cst_195 : f32 to vector<2x128xf32>
    %741 = arith.addf %740, %739 : vector<2x128xf32>
    %742 = arith.divf %740, %741 : vector<2x128xf32>
    %743 = vector.extract_strided_slice %732 {offsets = [0, 128], sizes = [2, 128], strides = [1, 1]} : vector<2x384xf32> to vector<2x128xf32>
    %744 = vector.extract_strided_slice %734 {offsets = [0, 128], sizes = [2, 128], strides = [1, 1]} : vector<2x384xf32> to vector<2x128xf32>
    %745 = arith.addf %743, %744 : vector<2x128xf32>
    %746 = arith.negf %745 : vector<2x128xf32>
    %747 = math.exp %746 : vector<2x128xf32>
    %cst_196 = arith.constant 1.000000e+00 : f32
    %748 = vector.broadcast %cst_196 : f32 to vector<2x128xf32>
    %749 = arith.addf %748, %747 : vector<2x128xf32>
    %750 = arith.divf %748, %749 : vector<2x128xf32>
    %751 = vector.extract_strided_slice %732 {offsets = [0, 256], sizes = [2, 128], strides = [1, 1]} : vector<2x384xf32> to vector<2x128xf32>
    %752 = vector.extract_strided_slice %734 {offsets = [0, 256], sizes = [2, 128], strides = [1, 1]} : vector<2x384xf32> to vector<2x128xf32>
    %753 = vector.broadcast %542 : vector<1x128xf32> to vector<2x128xf32>
    %754 = arith.addf %752, %753 : vector<2x128xf32>
    %755 = arith.mulf %742, %754 : vector<2x128xf32>
    %756 = arith.addf %751, %755 : vector<2x128xf32>
    %757 = math.tanh %756 : vector<2x128xf32>
    %cst_197 = arith.constant 1.000000e+00 : f32
    %758 = vector.broadcast %cst_197 : f32 to vector<2x128xf32>
    %759 = arith.subf %758, %750 : vector<2x128xf32>
    %760 = arith.mulf %759, %757 : vector<2x128xf32>
    %761 = arith.mulf %750, %731 : vector<2x128xf32>
    %762 = arith.addf %760, %761 : vector<2x128xf32>
    %763 = vector.extract_strided_slice %541 {offsets = [12, 0], sizes = [2, 384], strides = [1, 1]} : vector<16x768xf32> to vector<2x384xf32>
    %c0_198 = arith.constant 0 : index
    %c0_199 = arith.constant 0 : index
    %764 = vector.load %arg14[%c0_198, %c0_199] : memref<128x384xf32, #tpu.memory_space<vmem>>, vector<128x384xf32>
    %cst_200 = arith.constant dense<0.000000e+00> : vector<2x384xf32>
    %765 = tpu.matmul %762, %764, %cst_200 {dimension_numbers = #tpu.dot_dimension_numbers<[1], [0], [0], [1], [0, 0, 1, 1], [], []>} : vector<2x128xf32>, vector<128x384xf32>, vector<2x384xf32> -> vector<2x384xf32>
    %766 = vector.extract_strided_slice %763 {offsets = [0, 0], sizes = [2, 128], strides = [1, 1]} : vector<2x384xf32> to vector<2x128xf32>
    %767 = vector.extract_strided_slice %765 {offsets = [0, 0], sizes = [2, 128], strides = [1, 1]} : vector<2x384xf32> to vector<2x128xf32>
    %768 = arith.addf %766, %767 : vector<2x128xf32>
    %769 = arith.negf %768 : vector<2x128xf32>
    %770 = math.exp %769 : vector<2x128xf32>
    %cst_201 = arith.constant 1.000000e+00 : f32
    %771 = vector.broadcast %cst_201 : f32 to vector<2x128xf32>
    %772 = arith.addf %771, %770 : vector<2x128xf32>
    %773 = arith.divf %771, %772 : vector<2x128xf32>
    %774 = vector.extract_strided_slice %763 {offsets = [0, 128], sizes = [2, 128], strides = [1, 1]} : vector<2x384xf32> to vector<2x128xf32>
    %775 = vector.extract_strided_slice %765 {offsets = [0, 128], sizes = [2, 128], strides = [1, 1]} : vector<2x384xf32> to vector<2x128xf32>
    %776 = arith.addf %774, %775 : vector<2x128xf32>
    %777 = arith.negf %776 : vector<2x128xf32>
    %778 = math.exp %777 : vector<2x128xf32>
    %cst_202 = arith.constant 1.000000e+00 : f32
    %779 = vector.broadcast %cst_202 : f32 to vector<2x128xf32>
    %780 = arith.addf %779, %778 : vector<2x128xf32>
    %781 = arith.divf %779, %780 : vector<2x128xf32>
    %782 = vector.extract_strided_slice %763 {offsets = [0, 256], sizes = [2, 128], strides = [1, 1]} : vector<2x384xf32> to vector<2x128xf32>
    %783 = vector.extract_strided_slice %765 {offsets = [0, 256], sizes = [2, 128], strides = [1, 1]} : vector<2x384xf32> to vector<2x128xf32>
    %784 = vector.broadcast %542 : vector<1x128xf32> to vector<2x128xf32>
    %785 = arith.addf %783, %784 : vector<2x128xf32>
    %786 = arith.mulf %773, %785 : vector<2x128xf32>
    %787 = arith.addf %782, %786 : vector<2x128xf32>
    %788 = math.tanh %787 : vector<2x128xf32>
    %cst_203 = arith.constant 1.000000e+00 : f32
    %789 = vector.broadcast %cst_203 : f32 to vector<2x128xf32>
    %790 = arith.subf %789, %781 : vector<2x128xf32>
    %791 = arith.mulf %790, %788 : vector<2x128xf32>
    %792 = arith.mulf %781, %762 : vector<2x128xf32>
    %793 = arith.addf %791, %792 : vector<2x128xf32>
    %794 = vector.extract_strided_slice %541 {offsets = [14, 0], sizes = [2, 384], strides = [1, 1]} : vector<16x768xf32> to vector<2x384xf32>
    %c0_204 = arith.constant 0 : index
    %c0_205 = arith.constant 0 : index
    %795 = vector.load %arg14[%c0_204, %c0_205] : memref<128x384xf32, #tpu.memory_space<vmem>>, vector<128x384xf32>
    %cst_206 = arith.constant dense<0.000000e+00> : vector<2x384xf32>
    %796 = tpu.matmul %793, %795, %cst_206 {dimension_numbers = #tpu.dot_dimension_numbers<[1], [0], [0], [1], [0, 0, 1, 1], [], []>} : vector<2x128xf32>, vector<128x384xf32>, vector<2x384xf32> -> vector<2x384xf32>
    %797 = vector.extract_strided_slice %794 {offsets = [0, 0], sizes = [2, 128], strides = [1, 1]} : vector<2x384xf32> to vector<2x128xf32>
    %798 = vector.extract_strided_slice %796 {offsets = [0, 0], sizes = [2, 128], strides = [1, 1]} : vector<2x384xf32> to vector<2x128xf32>
    %799 = arith.addf %797, %798 : vector<2x128xf32>
    %800 = arith.negf %799 : vector<2x128xf32>
    %801 = math.exp %800 : vector<2x128xf32>
    %cst_207 = arith.constant 1.000000e+00 : f32
    %802 = vector.broadcast %cst_207 : f32 to vector<2x128xf32>
    %803 = arith.addf %802, %801 : vector<2x128xf32>
    %804 = arith.divf %802, %803 : vector<2x128xf32>
    %805 = vector.extract_strided_slice %794 {offsets = [0, 128], sizes = [2, 128], strides = [1, 1]} : vector<2x384xf32> to vector<2x128xf32>
    %806 = vector.extract_strided_slice %796 {offsets = [0, 128], sizes = [2, 128], strides = [1, 1]} : vector<2x384xf32> to vector<2x128xf32>
    %807 = arith.addf %805, %806 : vector<2x128xf32>
    %808 = arith.negf %807 : vector<2x128xf32>
    %809 = math.exp %808 : vector<2x128xf32>
    %cst_208 = arith.constant 1.000000e+00 : f32
    %810 = vector.broadcast %cst_208 : f32 to vector<2x128xf32>
    %811 = arith.addf %810, %809 : vector<2x128xf32>
    %812 = arith.divf %810, %811 : vector<2x128xf32>
    %813 = vector.extract_strided_slice %794 {offsets = [0, 256], sizes = [2, 128], strides = [1, 1]} : vector<2x384xf32> to vector<2x128xf32>
    %814 = vector.extract_strided_slice %796 {offsets = [0, 256], sizes = [2, 128], strides = [1, 1]} : vector<2x384xf32> to vector<2x128xf32>
    %815 = vector.broadcast %542 : vector<1x128xf32> to vector<2x128xf32>
    %816 = arith.addf %814, %815 : vector<2x128xf32>
    %817 = arith.mulf %804, %816 : vector<2x128xf32>
    %818 = arith.addf %813, %817 : vector<2x128xf32>
    %819 = math.tanh %818 : vector<2x128xf32>
    %cst_209 = arith.constant 1.000000e+00 : f32
    %820 = vector.broadcast %cst_209 : f32 to vector<2x128xf32>
    %821 = arith.subf %820, %812 : vector<2x128xf32>
    %822 = arith.mulf %821, %819 : vector<2x128xf32>
    %823 = arith.mulf %812, %793 : vector<2x128xf32>
    %824 = arith.addf %822, %823 : vector<2x128xf32>
    %825 = tpu.concatenate %824, %607 in 1 : vector<2x128xf32>, vector<2x128xf32> -> vector<2x256xf32>
    %c0_210 = arith.constant 0 : index
    %c0_211 = arith.constant 0 : index
    %826 = vector.load %arg18[%c0_210, %c0_211] : memref<256x64xf32, #tpu.memory_space<vmem>>, vector<256x64xf32>
    %cst_212 = arith.constant dense<0.000000e+00> : vector<2x64xf32>
    %827 = tpu.matmul %825, %826, %cst_212 {dimension_numbers = #tpu.dot_dimension_numbers<[1], [0], [0], [1], [0, 0, 1, 1], [], []>} : vector<2x256xf32>, vector<256x64xf32>, vector<2x64xf32> -> vector<2x64xf32>
    %c0_213 = arith.constant 0 : index
    %c0_214 = arith.constant 0 : index
    %828 = vector.load %arg19[%c0_213, %c0_214] : memref<1x64xf32, #tpu.memory_space<vmem>>, vector<1x64xf32>
    %829 = vector.broadcast %828 : vector<1x64xf32> to vector<2x64xf32>
    %830 = arith.addf %827, %829 : vector<2x64xf32>
    %cst_215 = arith.constant 0.000000e+00 : f32
    %831 = vector.broadcast %cst_215 : f32 to vector<2x64xf32>
    %832 = arith.maximumf %830, %831 : vector<2x64xf32>
    %c0_216 = arith.constant 0 : index
    %c0_217 = arith.constant 0 : index
    %833 = vector.load %arg20[%c0_216, %c0_217] : memref<64x128xf32, #tpu.memory_space<vmem>>, vector<64x128xf32>
    %cst_218 = arith.constant dense<0.000000e+00> : vector<2x128xf32>
    %834 = tpu.matmul %832, %833, %cst_218 {dimension_numbers = #tpu.dot_dimension_numbers<[1], [0], [0], [1], [0, 0, 1, 1], [], []>} : vector<2x64xf32>, vector<64x128xf32>, vector<2x128xf32> -> vector<2x128xf32>
    %c0_219 = arith.constant 0 : index
    %c0_220 = arith.constant 0 : index
    %835 = vector.load %arg21[%c0_219, %c0_220] : memref<1x128xf32, #tpu.memory_space<vmem>>, vector<1x128xf32>
    %836 = vector.broadcast %835 : vector<1x128xf32> to vector<2x128xf32>
    %837 = arith.addf %834, %836 : vector<2x128xf32>
    %c0_221 = arith.constant 0 : index
    %c0_222 = arith.constant 0 : index
    %838 = vector.load %arg22[%c0_221, %c0_222] : memref<2x128xf32, #tpu.memory_space<vmem>>, vector<2x128xf32>
    tpu.vector_store %arg22[%c0_221, %c0_222], %837 {strides = array<i32>} : memref<2x128xf32, #tpu.memory_space<vmem>>, vector<2x128xf32>,
    return
  }
  func.func @transform_0(%arg0: i32) -> (i32, i32) {
    %c0_i32 = arith.constant 0 : i32
    %c0_i32_0 = arith.constant 0 : i32
    %c0_i32_1 = arith.constant 0 : i32
    return %c0_i32, %c0_i32_0 : i32, i32
  }
  func.func @transform_1(%arg0: i32) -> (i32, i32) {
    %c0_i32 = arith.constant 0 : i32
    %c0_i32_0 = arith.constant 0 : i32
    %c0_i32_1 = arith.constant 0 : i32
    return %c0_i32, %c0_i32_0 : i32, i32
  }
  func.func @transform_2(%arg0: i32) -> (i32, i32) {
    %c0_i32 = arith.constant 0 : i32
    %c0_i32_0 = arith.constant 0 : i32
    %c0_i32_1 = arith.constant 0 : i32
    return %c0_i32, %c0_i32_0 : i32, i32
  }
  func.func @transform_3(%arg0: i32) -> (i32, i32) {
    %c0_i32 = arith.constant 0 : i32
    %c0_i32_0 = arith.constant 0 : i32
    %c0_i32_1 = arith.constant 0 : i32
    return %c0_i32, %c0_i32_0 : i32, i32
  }
  func.func @transform_4(%arg0: i32) -> (i32, i32) {
    %c0_i32 = arith.constant 0 : i32
    %c0_i32_0 = arith.constant 0 : i32
    %c0_i32_1 = arith.constant 0 : i32
    return %c0_i32, %c0_i32_0 : i32, i32
  }
  func.func @transform_5(%arg0: i32) -> (i32, i32) {
    %c0_i32 = arith.constant 0 : i32
    %c0_i32_0 = arith.constant 0 : i32
    %c0_i32_1 = arith.constant 0 : i32
    return %c0_i32, %c0_i32_0 : i32, i32
  }
  func.func @transform_6(%arg0: i32) -> (i32, i32) {
    %c0_i32 = arith.constant 0 : i32
    %c0_i32_0 = arith.constant 0 : i32
    %c0_i32_1 = arith.constant 0 : i32
    return %c0_i32, %c0_i32_0 : i32, i32
  }
  func.func @transform_7(%arg0: i32) -> (i32, i32) {
    %c0_i32 = arith.constant 0 : i32
    %c0_i32_0 = arith.constant 0 : i32
    %c0_i32_1 = arith.constant 0 : i32
    return %c0_i32, %c0_i32_0 : i32, i32
  }
  func.func @transform_8(%arg0: i32) -> (i32, i32) {
    %c0_i32 = arith.constant 0 : i32
    %c0_i32_0 = arith.constant 0 : i32
    %c0_i32_1 = arith.constant 0 : i32
    return %c0_i32, %c0_i32_0 : i32, i32
  }
  func.func @transform_9(%arg0: i32) -> (i32, i32) {
    %c0_i32 = arith.constant 0 : i32
    %c0_i32_0 = arith.constant 0 : i32
    %c0_i32_1 = arith.constant 0 : i32
    return %c0_i32, %c0_i32_0 : i32, i32
  }
  func.func @transform_10(%arg0: i32) -> (i32, i32) {
    %c0_i32 = arith.constant 0 : i32
    %c0_i32_0 = arith.constant 0 : i32
    %c0_i32_1 = arith.constant 0 : i32
    return %c0_i32, %c0_i32_0 : i32, i32
  }
  func.func @transform_11(%arg0: i32) -> (i32, i32) {
    %c0_i32 = arith.constant 0 : i32
    %c0_i32_0 = arith.constant 0 : i32
    %c0_i32_1 = arith.constant 0 : i32
    return %c0_i32, %c0_i32_0 : i32, i32
  }
  func.func @transform_12(%arg0: i32) -> (i32, i32) {
    %c0_i32 = arith.constant 0 : i32
    %c0_i32_0 = arith.constant 0 : i32
    %c0_i32_1 = arith.constant 0 : i32
    return %c0_i32, %c0_i32_0 : i32, i32
  }
  func.func @transform_13(%arg0: i32) -> (i32, i32) {
    %c0_i32 = arith.constant 0 : i32
    %c0_i32_0 = arith.constant 0 : i32
    %c0_i32_1 = arith.constant 0 : i32
    return %c0_i32, %c0_i32_0 : i32, i32
  }
  func.func @transform_14(%arg0: i32) -> (i32, i32) {
    %c0_i32 = arith.constant 0 : i32
    %c0_i32_0 = arith.constant 0 : i32
    %c0_i32_1 = arith.constant 0 : i32
    return %c0_i32, %c0_i32_0 : i32, i32
  }
  func.func @transform_15(%arg0: i32) -> (i32, i32) {
    %c0_i32 = arith.constant 0 : i32
    %c0_i32_0 = arith.constant 0 : i32
    %c0_i32_1 = arith.constant 0 : i32
    return %c0_i32, %c0_i32_0 : i32, i32
  }
  func.func @transform_16(%arg0: i32) -> (i32, i32) {
    %c0_i32 = arith.constant 0 : i32
    %c0_i32_0 = arith.constant 0 : i32
    %c0_i32_1 = arith.constant 0 : i32
    return %c0_i32, %c0_i32_0 : i32, i32
  }
  func.func @transform_17(%arg0: i32) -> (i32, i32) {
    %c0_i32 = arith.constant 0 : i32
    %c0_i32_0 = arith.constant 0 : i32
    %c0_i32_1 = arith.constant 0 : i32
    return %c0_i32, %c0_i32_0 : i32, i32
  }
  func.func @transform_18(%arg0: i32) -> (i32, i32) {
    %c0_i32 = arith.constant 0 : i32
    %c0_i32_0 = arith.constant 0 : i32
    %c0_i32_1 = arith.constant 0 : i32
    return %c0_i32, %c0_i32_0 : i32, i32
  }
  func.func @transform_19(%arg0: i32) -> (i32, i32) {
    %c0_i32 = arith.constant 0 : i32
    %c0_i32_0 = arith.constant 0 : i32
    %c0_i32_1 = arith.constant 0 : i32
    return %c0_i32, %c0_i32_0 : i32, i32
  }
  func.func @transform_20(%arg0: i32) -> (i32, i32) {
    %c0_i32 = arith.constant 0 : i32
    %c0_i32_0 = arith.constant 0 : i32
    %c0_i32_1 = arith.constant 0 : i32
    return %c0_i32, %c0_i32_0 : i32, i32
  }
  func.func @transform_21(%arg0: i32) -> (i32, i32) {
    %c0_i32 = arith.constant 0 : i32
    %c0_i32_0 = arith.constant 0 : i32
    %c0_i32_1 = arith.constant 0 : i32
    return %c0_i32, %c0_i32_0 : i32, i32
  }
}

</mosaic_0001>

<llo_original>
// kernel: tpu_custom_call.1
$region0: #{tpu_custom_call.1}
  #allocation0 [shape = 'u32[]', space=smem, size = 0x4, offset = 0x4, fixed_abs, tag = 'smem constant byte address 0x4 - core index']
  #allocation1 [shape = 'u32[144,128]{1,0:T(1,128)}', space=vmem, size = 0x12000, scoped, tag = 'internal scratch']
  #allocation2 [shape = 'f32[16,256]{1,0:T(8,128)}', space=vmem, size = 0x4000, scoped, tag = 'scratch operand']
  %s0 = inlined_call_operand.hbm [shape: f32[16,170], index: 0, kind: input, shape index: {}]
  %s1 = inlined_call_operand.hbm [shape: f32[170,256], index: 1, kind: input, shape index: {}]
  %s2 = inlined_call_operand.hbm [shape: f32[1,256], index: 2, kind: input, shape index: {}]
  %s3 = inlined_call_operand.hbm [shape: f32[256,128], index: 3, kind: input, shape index: {}]
  %s4 = inlined_call_operand.hbm [shape: f32[1,128], index: 4, kind: input, shape index: {}]
  %s5 = inlined_call_operand.hbm [shape: f32[128,768], index: 5, kind: input, shape index: {}]
  %s6 = inlined_call_operand.hbm [shape: f32[1,768], index: 6, kind: input, shape index: {}]
  %s7 = inlined_call_operand.hbm [shape: f32[128,384], index: 7, kind: input, shape index: {}]
  %s8 = inlined_call_operand.hbm [shape: f32[128,384], index: 8, kind: input, shape index: {}]
  %s9 = inlined_call_operand.hbm [shape: f32[1,128], index: 9, kind: input, shape index: {}]
  %s10 = inlined_call_operand.hbm [shape: f32[1,128], index: 10, kind: input, shape index: {}]
  %s11 = inlined_call_operand.hbm [shape: f32[256,768], index: 11, kind: input, shape index: {}]
  %s12 = inlined_call_operand.hbm [shape: f32[1,768], index: 12, kind: input, shape index: {}]
  %s13 = inlined_call_operand.hbm [shape: f32[128,384], index: 13, kind: input, shape index: {}]
  %s14 = inlined_call_operand.hbm [shape: f32[128,384], index: 14, kind: input, shape index: {}]
  %s15 = inlined_call_operand.hbm [shape: f32[1,128], index: 15, kind: input, shape index: {}]
  %s16 = inlined_call_operand.hbm [shape: f32[1,128], index: 16, kind: input, shape index: {}]
  %s17 = inlined_call_operand.hbm [shape: f32[256,64], index: 17, kind: input, shape index: {}]
  %s18 = inlined_call_operand.hbm [shape: f32[1,64], index: 18, kind: input, shape index: {}]
  %s19 = inlined_call_operand.hbm [shape: f32[64,128], index: 19, kind: input, shape index: {}]
  %s20 = inlined_call_operand.hbm [shape: f32[1,128], index: 20, kind: input, shape index: {}]
  %s21 = inlined_call_operand.hbm [shape: f32[2,128], index: 21, kind: output, shape index: {}]
  %s22 = sld [smem:[#allocation0]]
  $region178: #{tpu_custom_call.1} parent=0
    _
  %s24 = ssub.s32 1, %s22
  %s25 = scalar_select 0, %s24, %s22
  $region1: #{tpu_custom_call.1} parent=0
    #allocation3 [shape = 'u8[16384]{0}', space=vmem, size = 0x4000, scoped, tag = 'input window, operand 0, single buffered']
    #allocation4 [shape = 's32[1]{0}', space=sflag, size = 0x4, scoped, tag = 'scoped memory for tpu_custom_call.1']
    #allocation5 [shape = 's32[1]{0}', space=sflag, size = 0x4, scoped, tag = 'scoped memory for tpu_custom_call.1']
    #allocation6 [shape = 'u8[180224]{0}', space=vmem, size = 0x2c000, scoped, tag = 'input window, operand 1, single buffered']
    #allocation7 [shape = 's32[1]{0}', space=sflag, size = 0x4, scoped, tag = 'scoped memory for tpu_custom_call.1']
    #allocation8 [shape = 'u8[1024]{0}', space=vmem, size = 0x400, scoped, tag = 'input window, operand 2, single buffered']
    #allocation9 [shape = 'u8[131072]{0}', space=vmem, size = 0x20000, scoped, tag = 'input window, operand 3, single buffered']
    #allocation10 [shape = 's32[1]{0}', space=sflag, size = 0x4, scoped, tag = 'scoped memory for tpu_custom_call.1']
    #allocation11 [shape = 'u8[512]{0}', space=vmem, size = 0x400, scoped, tag = 'input window, operand 4, single buffered']
    #allocation12 [shape = 'u8[393216]{0}', space=vmem, size = 0x60000, scoped, tag = 'input window, operand 5, single buffered']
    #allocation13 [shape = 's32[1]{0}', space=sflag, size = 0x4, scoped, tag = 'scoped memory for tpu_custom_call.1']
    #allocation14 [shape = 'u8[3072]{0}', space=vmem, size = 0xc00, scoped, tag = 'input window, operand 6, single buffered']
    #allocation15 [shape = 'u8[196608]{0}', space=vmem, size = 0x30000, scoped, tag = 'input window, operand 7, single buffered']
    #allocation16 [shape = 's32[1]{0}', space=sflag, size = 0x4, scoped, tag = 'scoped memory for tpu_custom_call.1']
    #allocation17 [shape = 'u8[196608]{0}', space=vmem, size = 0x30000, scoped, tag = 'input window, operand 8, single buffered']
    #allocation18 [shape = 'u8[512]{0}', space=vmem, size = 0x400, scoped, tag = 'input window, operand 9, single buffered']
    #allocation19 [shape = 's32[1]{0}', space=sflag, size = 0x4, scoped, tag = 'scoped memory for tpu_custom_call.1']
    #allocation20 [shape = 'u8[512]{0}', space=vmem, size = 0x400, scoped, tag = 'input window, operand 10, single buffered']
    #allocation21 [shape = 'u8[786432]{0}', space=vmem, size = 0xc0000, scoped, tag = 'input window, operand 11, single buffered']
    #allocation22 [shape = 's32[1]{0}', space=sflag, size = 0x4, scoped, tag = 'scoped memory for tpu_custom_call.1']
    #allocation23 [shape = 'u8[3072]{0}', space=vmem, size = 0xc00, scoped, tag = 'input window, operand 12, single buffered']
    #allocation24 [shape = 'u8[196608]{0}', space=vmem, size = 0x30000, scoped, tag = 'input window, operand 13, single buffered']
    #allocation25 [shape = 's32[1]{0}', space=sflag, size = 0x4, scoped, tag = 'scoped memory for tpu_custom_call.1']
    #allocation26 [shape = 'u8[196608]{0}', space=vmem, size = 0x30000, scoped, tag = 'input window, operand 14, single buffered']
    #allocation27 [shape = 'u8[512]{0}', space=vmem, size = 0x400, scoped, tag = 'input window, operand 15, single buffered']
    #allocation28 [shape = 's32[1]{0}', space=sflag, size = 0x4, scoped, tag = 'scoped memory for tpu_custom_call.1']
    #allocation29 [shape = 'u8[512]{0}', space=vmem, size = 0x400, scoped, tag = 'input window, operand 16, single buffered']
    #allocation30 [shape = 'u8[131072]{0}', space=vmem, size = 0x20000, scoped, tag = 'input window, operand 17, single buffered']
    #allocation31 [shape = 's32[1]{0}', space=sflag, size = 0x4, scoped, tag = 'scoped memory for tpu_custom_call.1']
    #allocation32 [shape = 'u8[512]{0}', space=vmem, size = 0x400, scoped, tag = 'input window, operand 18, single buffered']
    #allocation33 [shape = 'u8[32768]{0}', space=vmem, size = 0x8000, scoped, tag = 'input window, operand 19, single buffered']
    #allocation34 [shape = 's32[1]{0}', space=sflag, size = 0x4, scoped, tag = 'scoped memory for tpu_custom_call.1']
    #allocation35 [shape = 'u8[512]{0}', space=vmem, size = 0x400, scoped, tag = 'input window, operand 20, single buffered']
    #allocation36 [shape = 'u8[1024]{0}', space=vmem, size = 0x400, scoped, tag = 'output window, operand 0, single buffered']
    %26 = vsyncpa [#allocation4], 0
    %27 = vsyncpa [#allocation7], 0
    %28 = vsyncpa [#allocation10], 0
    %29 = vsyncpa [#allocation13], 0
    %30 = vsyncpa [#allocation16], 0
    %31 = vsyncpa [#allocation19], 0
    %32 = vsyncpa [#allocation22], 0
    %33 = vsyncpa [#allocation25], 0
    %34 = vsyncpa [#allocation28], 0
    %35 = vsyncpa [#allocation31], 0
    %36 = vsyncpa [#allocation34], 0
    %37 = vsyncpa [#allocation5], 0
    // Predicated region
    $region2: #{tpu_custom_call.1} parent=1 // pred_check
      _
    $region3: #{tpu_custom_call.1} parent=1 // pred_check_branch
      %39 = sbr.rel (0) target = $region5
    $region4: #{tpu_custom_call.1} parent=1 // pred_region
      %s41 = ssub.s32 512, 512
      %42 = vsyncadd [#allocation4], %s41
      %s43 = sshll.u32 [#allocation3], 4
      %s44 = int_to_ptr.vmem [resolvable:$true] %s43
      %49 = dma.hbm_to_vmem [thread:$0]  %s0, 512, %s44, [#allocation4], 256, 256, 16
    $region5: #{tpu_custom_call.1} parent=1 // pred_fallthru
      _
    // Predicated region
    $region6: #{tpu_custom_call.1} parent=1 // pred_check
      _
    $region7: #{tpu_custom_call.1} parent=1 // pred_check_branch
      %51 = sbr.rel (0) target = $region9
    $region8: #{tpu_custom_call.1} parent=1 // pred_region
      %s53 = ssub.s32 5632, 5632
      %54 = vsyncadd [#allocation7], %s53
      %s55 = sshll.u32 [#allocation6], 4
      %s56 = int_to_ptr.vmem [resolvable:$true] %s55
      %61 = dma.hbm_to_vmem [thread:$0]  %s1, 5632, %s56, [#allocation7], 256, 256, 16
    $region9: #{tpu_custom_call.1} parent=1 // pred_fallthru
      _
    // Predicated region
    $region10: #{tpu_custom_call.1} parent=1 // pred_check
      _
    $region11: #{tpu_custom_call.1} parent=1 // pred_check_branch
      %63 = sbr.rel (0) target = $region13
    $region12: #{tpu_custom_call.1} parent=1 // pred_region
      %s65 = ssub.s32 32, 32
      %66 = vsyncadd [#allocation7], %s65
      %s68 = sshll.u32 [#allocation8], 4
      %s69 = int_to_ptr.vmem [resolvable:$true] %s68
      %71 = dma.hbm_to_vmem [thread:$0]  %s2, 32, %s69, [#allocation7]
    $region13: #{tpu_custom_call.1} parent=1 // pred_fallthru
      _
    // Predicated region
    $region14: #{tpu_custom_call.1} parent=1 // pred_check
      _
    $region15: #{tpu_custom_call.1} parent=1 // pred_check_branch
      %73 = sbr.rel (0) target = $region17
    $region16: #{tpu_custom_call.1} parent=1 // pred_region
      %s75 = ssub.s32 4096, 4096
      %76 = vsyncadd [#allocation10], %s75
      %s77 = sshll.u32 [#allocation9], 4
      %s78 = int_to_ptr.vmem [resolvable:$true] %s77
      %83 = dma.hbm_to_vmem [thread:$0]  %s3, 4096, %s78, [#allocation10], 128, 128, 8
    $region17: #{tpu_custom_call.1} parent=1 // pred_fallthru
      _
    // Predicated region
    $region18: #{tpu_custom_call.1} parent=1 // pred_check
      _
    $region19: #{tpu_custom_call.1} parent=1 // pred_check_branch
      %85 = sbr.rel (0) target = $region21
    $region20: #{tpu_custom_call.1} parent=1 // pred_region
      %s87 = ssub.s32 16, 16
      %88 = vsyncadd [#allocation10], %s87
      %s90 = sshll.u32 [#allocation11], 4
      %s91 = int_to_ptr.vmem [resolvable:$true] %s90
      %93 = dma.hbm_to_vmem [thread:$0]  %s4, 16, %s91, [#allocation10]
    $region21: #{tpu_custom_call.1} parent=1 // pred_fallthru
      _
    // Predicated region
    $region22: #{tpu_custom_call.1} parent=1 // pred_check
      _
    $region23: #{tpu_custom_call.1} parent=1 // pred_check_branch
      %95 = sbr.rel (0) target = $region25
    $region24: #{tpu_custom_call.1} parent=1 // pred_region
      %s97 = ssub.s32 12288, 12288
      %98 = vsyncadd [#allocation13], %s97
      %s99 = sshll.u32 [#allocation12], 4
      %s100 = int_to_ptr.vmem [resolvable:$true] %s99
      %105 = dma.hbm_to_vmem [thread:$0]  %s5, 12288, %s100, [#allocation13], 768, 768, 48
    $region25: #{tpu_custom_call.1} parent=1 // pred_fallthru
      _
    // Predicated region
    $region26: #{tpu_custom_call.1} parent=1 // pred_check
      _
    $region27: #{tpu_custom_call.1} parent=1 // pred_check_branch
      %107 = sbr.rel (0) target = $region29
    $region28: #{tpu_custom_call.1} parent=1 // pred_region
      %s109 = ssub.s32 96, 96
      %110 = vsyncadd [#allocation13], %s109
      %s112 = sshll.u32 [#allocation14], 4
      %s113 = int_to_ptr.vmem [resolvable:$true] %s112
      %115 = dma.hbm_to_vmem [thread:$0]  %s6, 96, %s113, [#allocation13]
    $region29: #{tpu_custom_call.1} parent=1 // pred_fallthru
      _
    // Predicated region
    $region30: #{tpu_custom_call.1} parent=1 // pred_check
      _
    $region31: #{tpu_custom_call.1} parent=1 // pred_check_branch
      %117 = sbr.rel (0) target = $region33
    $region32: #{tpu_custom_call.1} parent=1 // pred_region
      %s119 = ssub.s32 6144, 6144
      %120 = vsyncadd [#allocation16], %s119
      %s121 = sshll.u32 [#allocation15], 4
      %s122 = int_to_ptr.vmem [resolvable:$true] %s121
      %127 = dma.hbm_to_vmem [thread:$0]  %s7, 6144, %s122, [#allocation16], 384, 384, 24
    $region33: #{tpu_custom_call.1} parent=1 // pred_fallthru
      _
    // Predicated region
    $region34: #{tpu_custom_call.1} parent=1 // pred_check
      _
    $region35: #{tpu_custom_call.1} parent=1 // pred_check_branch
      %129 = sbr.rel (0) target = $region37
    $region36: #{tpu_custom_call.1} parent=1 // pred_region
      %s131 = ssub.s32 6144, 6144
      %132 = vsyncadd [#allocation16], %s131
      %s133 = sshll.u32 [#allocation17], 4
      %s134 = int_to_ptr.vmem [resolvable:$true] %s133
      %139 = dma.hbm_to_vmem [thread:$0]  %s8, 6144, %s134, [#allocation16], 384, 384, 24
    $region37: #{tpu_custom_call.1} parent=1 // pred_fallthru
      _
    // Predicated region
    $region38: #{tpu_custom_call.1} parent=1 // pred_check
      _
    $region39: #{tpu_custom_call.1} parent=1 // pred_check_branch
      %141 = sbr.rel (0) target = $region41
    $region40: #{tpu_custom_call.1} parent=1 // pred_region
      %s143 = ssub.s32 16, 16
      %144 = vsyncadd [#allocation19], %s143
      %s146 = sshll.u32 [#allocation18], 4
      %s147 = int_to_ptr.vmem [resolvable:$true] %s146
      %149 = dma.hbm_to_vmem [thread:$0]  %s9, 16, %s147, [#allocation19]
    $region41: #{tpu_custom_call.1} parent=1 // pred_fallthru
      _
    // Predicated region
    $region42: #{tpu_custom_call.1} parent=1 // pred_check
      _
    $region43: #{tpu_custom_call.1} parent=1 // pred_check_branch
      %151 = sbr.rel (0) target = $region45
    $region44: #{tpu_custom_call.1} parent=1 // pred_region
      %s153 = ssub.s32 16, 16
      %154 = vsyncadd [#allocation19], %s153
      %s156 = sshll.u32 [#allocation20], 4
      %s157 = int_to_ptr.vmem [resolvable:$true] %s156
      %159 = dma.hbm_to_vmem [thread:$0]  %s10, 16, %s157, [#allocation19]
    $region45: #{tpu_custom_call.1} parent=1 // pred_fallthru
      _
    // Predicated region
    $region46: #{tpu_custom_call.1} parent=1 // pred_check
      _
    $region47: #{tpu_custom_call.1} parent=1 // pred_check_branch
      %161 = sbr.rel (0) target = $region49
    $region48: #{tpu_custom_call.1} parent=1 // pred_region
      %s163 = ssub.s32 24576, 24576
      %164 = vsyncadd [#allocation22], %s163
      %s165 = sshll.u32 [#allocation21], 4
      %s166 = int_to_ptr.vmem [resolvable:$true] %s165
      %171 = dma.hbm_to_vmem [thread:$0]  %s11, 24576, %s166, [#allocation22], 768, 768, 48
    $region49: #{tpu_custom_call.1} parent=1 // pred_fallthru
      _
    // Predicated region
    $region50: #{tpu_custom_call.1} parent=1 // pred_check
      _
    $region51: #{tpu_custom_call.1} parent=1 // pred_check_branch
      %173 = sbr.rel (0) target = $region53
    $region52: #{tpu_custom_call.1} parent=1 // pred_region
      %s175 = ssub.s32 96, 96
      %176 = vsyncadd [#allocation22], %s175
      %s178 = sshll.u32 [#allocation23], 4
      %s179 = int_to_ptr.vmem [resolvable:$true] %s178
      %181 = dma.hbm_to_vmem [thread:$0]  %s12, 96, %s179, [#allocation22]
    $region53: #{tpu_custom_call.1} parent=1 // pred_fallthru
      _
    // Predicated region
    $region54: #{tpu_custom_call.1} parent=1 // pred_check
      _
    $region55: #{tpu_custom_call.1} parent=1 // pred_check_branch
      %183 = sbr.rel (0) target = $region57
    $region56: #{tpu_custom_call.1} parent=1 // pred_region
      %s185 = ssub.s32 6144, 6144
      %186 = vsyncadd [#allocation25], %s185
      %s187 = sshll.u32 [#allocation24], 4
      %s188 = int_to_ptr.vmem [resolvable:$true] %s187
      %193 = dma.hbm_to_vmem [thread:$0]  %s13, 6144, %s188, [#allocation25], 384, 384, 24
    $region57: #{tpu_custom_call.1} parent=1 // pred_fallthru
      _
    // Predicated region
    $region58: #{tpu_custom_call.1} parent=1 // pred_check
      _
    $region59: #{tpu_custom_call.1} parent=1 // pred_check_branch
      %195 = sbr.rel (0) target = $region61
    $region60: #{tpu_custom_call.1} parent=1 // pred_region
      %s197 = ssub.s32 6144, 6144
      %198 = vsyncadd [#allocation25], %s197
      %s199 = sshll.u32 [#allocation26], 4
      %s200 = int_to_ptr.vmem [resolvable:$true] %s199
      %205 = dma.hbm_to_vmem [thread:$0]  %s14, 6144, %s200, [#allocation25], 384, 384, 24
    $region61: #{tpu_custom_call.1} parent=1 // pred_fallthru
      _
    // Predicated region
    $region62: #{tpu_custom_call.1} parent=1 // pred_check
      _
    $region63: #{tpu_custom_call.1} parent=1 // pred_check_branch
      %207 = sbr.rel (0) target = $region65
    $region64: #{tpu_custom_call.1} parent=1 // pred_region
      %s209 = ssub.s32 16, 16
      %210 = vsyncadd [#allocation28], %s209
      %s212 = sshll.u32 [#allocation27], 4
      %s213 = int_to_ptr.vmem [resolvable:$true] %s212
      %215 = dma.hbm_to_vmem [thread:$0]  %s15, 16, %s213, [#allocation28]
    $region65: #{tpu_custom_call.1} parent=1 // pred_fallthru
      _
    // Predicated region
    $region66: #{tpu_custom_call.1} parent=1 // pred_check
      _
    $region67: #{tpu_custom_call.1} parent=1 // pred_check_branch
      %217 = sbr.rel (0) target = $region69
    $region68: #{tpu_custom_call.1} parent=1 // pred_region
      %s219 = ssub.s32 16, 16
      %220 = vsyncadd [#allocation28], %s219
      %s222 = sshll.u32 [#allocation29], 4
      %s223 = int_to_ptr.vmem [resolvable:$true] %s222
      %225 = dma.hbm_to_vmem [thread:$0]  %s16, 16, %s223, [#allocation28]
    $region69: #{tpu_custom_call.1} parent=1 // pred_fallthru
      _
    // Predicated region
    $region70: #{tpu_custom_call.1} parent=1 // pred_check
      _
    $region71: #{tpu_custom_call.1} parent=1 // pred_check_branch
      %227 = sbr.rel (0) target = $region73
    $region72: #{tpu_custom_call.1} parent=1 // pred_region
      %s229 = ssub.s32 4096, 4096
      %230 = vsyncadd [#allocation31], %s229
      %s231 = sshll.u32 [#allocation30], 4
      %s232 = int_to_ptr.vmem [resolvable:$true] %s231
      %237 = dma.hbm_to_vmem [thread:$0]  %s17, 4096, %s232, [#allocation31], 128, 128, 8
    $region73: #{tpu_custom_call.1} parent=1 // pred_fallthru
      _
    // Predicated region
    $region74: #{tpu_custom_call.1} parent=1 // pred_check
      _
    $region75: #{tpu_custom_call.1} parent=1 // pred_check_branch
      %239 = sbr.rel (0) target = $region77
    $region76: #{tpu_custom_call.1} parent=1 // pred_region
      %s241 = ssub.s32 16, 16
      %242 = vsyncadd [#allocation31], %s241
      %s244 = sshll.u32 [#allocation32], 4
      %s245 = int_to_ptr.vmem [resolvable:$true] %s244
      %247 = dma.hbm_to_vmem [thread:$0]  %s18, 16, %s245, [#allocation31]
    $region77: #{tpu_custom_call.1} parent=1 // pred_fallthru
      _
    // Predicated region
    $region78: #{tpu_custom_call.1} parent=1 // pred_check
      _
    $region79: #{tpu_custom_call.1} parent=1 // pred_check_branch
      %249 = sbr.rel (0) target = $region81
    $region80: #{tpu_custom_call.1} parent=1 // pred_region
      %s251 = ssub.s32 1024, 1024
      %252 = vsyncadd [#allocation34], %s251
      %s253 = sshll.u32 [#allocation33], 4
      %s254 = int_to_ptr.vmem [resolvable:$true] %s253
      %259 = dma.hbm_to_vmem [thread:$0]  %s19, 1024, %s254, [#allocation34], 128, 128, 8
    $region81: #{tpu_custom_call.1} parent=1 // pred_fallthru
      _
    // Predicated region
    $region82: #{tpu_custom_call.1} parent=1 // pred_check
      _
    $region83: #{tpu_custom_call.1} parent=1 // pred_check_branch
      %261 = sbr.rel (0) target = $region85
    $region84: #{tpu_custom_call.1} parent=1 // pred_region
      %s263 = ssub.s32 16, 16
      %264 = vsyncadd [#allocation34], %s263
      %s266 = sshll.u32 [#allocation35], 4
      %s267 = int_to_ptr.vmem [resolvable:$true] %s266
      %269 = dma.hbm_to_vmem [thread:$0]  %s20, 16, %s267, [#allocation34]
    $region85: #{tpu_custom_call.1} parent=1 // pred_fallthru
      _
    // Predicated region
    $region86: #{tpu_custom_call.1} parent=1 // pred_check
      _
    $region87: #{tpu_custom_call.1} parent=1 // pred_check_branch
      %271 = sbr.rel (0) target = $region89
    $region88: #{tpu_custom_call.1} parent=1 // pred_region
      %272 = dma.done [#allocation4], 512
    $region89: #{tpu_custom_call.1} parent=1 // pred_fallthru
      _
    // Predicated region
    $region90: #{tpu_custom_call.1} parent=1 // pred_check
      _
    $region91: #{tpu_custom_call.1} parent=1 // pred_check_branch
      %274 = sbr.rel (0) target = $region93
    $region92: #{tpu_custom_call.1} parent=1 // pred_region
      %275 = dma.done [#allocation7], 5632
    $region93: #{tpu_custom_call.1} parent=1 // pred_fallthru
      _
    // Predicated region
    $region94: #{tpu_custom_call.1} parent=1 // pred_check
      _
    $region95: #{tpu_custom_call.1} parent=1 // pred_check_branch
      %277 = sbr.rel (0) target = $region97
    $region96: #{tpu_custom_call.1} parent=1 // pred_region
      %278 = dma.done [#allocation7], 32
    $region97: #{tpu_custom_call.1} parent=1 // pred_fallthru
      _
    // Predicated region
    $region98: #{tpu_custom_call.1} parent=1 // pred_check
      _
    $region99: #{tpu_custom_call.1} parent=1 // pred_check_branch
      %280 = sbr.rel (0) target = $region101
    $region100: #{tpu_custom_call.1} parent=1 // pred_region
      %281 = dma.done [#allocation10], 4096
    $region101: #{tpu_custom_call.1} parent=1 // pred_fallthru
      _
    // Predicated region
    $region102: #{tpu_custom_call.1} parent=1 // pred_check
      _
    $region103: #{tpu_custom_call.1} parent=1 // pred_check_branch
      %283 = sbr.rel (0) target = $region105
    $region104: #{tpu_custom_call.1} parent=1 // pred_region
      %284 = dma.done [#allocation10], 16
    $region105: #{tpu_custom_call.1} parent=1 // pred_fallthru
      _
    // Predicated region
    $region106: #{tpu_custom_call.1} parent=1 // pred_check
      _
    $region107: #{tpu_custom_call.1} parent=1 // pred_check_branch
      %286 = sbr.rel (0) target = $region109
    $region108: #{tpu_custom_call.1} parent=1 // pred_region
      %287 = dma.done [#allocation13], 12288
    $region109: #{tpu_custom_call.1} parent=1 // pred_fallthru
      _
    // Predicated region
    $region110: #{tpu_custom_call.1} parent=1 // pred_check
      _
    $region111: #{tpu_custom_call.1} parent=1 // pred_check_branch
      %289 = sbr.rel (0) target = $region113
    $region112: #{tpu_custom_call.1} parent=1 // pred_region
      %290 = dma.done [#allocation13], 96
    $region113: #{tpu_custom_call.1} parent=1 // pred_fallthru
      _
    // Predicated region
    $region114: #{tpu_custom_call.1} parent=1 // pred_check
      _
    $region115: #{tpu_custom_call.1} parent=1 // pred_check_branch
      %292 = sbr.rel (0) target = $region117
    $region116: #{tpu_custom_call.1} parent=1 // pred_region
      %293 = dma.done [#allocation16], 6144
    $region117: #{tpu_custom_call.1} parent=1 // pred_fallthru
      _
    // Predicated region
    $region118: #{tpu_custom_call.1} parent=1 // pred_check
      _
    $region119: #{tpu_custom_call.1} parent=1 // pred_check_branch
      %295 = sbr.rel (0) target = $region121
    $region120: #{tpu_custom_call.1} parent=1 // pred_region
      %296 = dma.done [#allocation16], 6144
    $region121: #{tpu_custom_call.1} parent=1 // pred_fallthru
      _
    // Predicated region
    $region122: #{tpu_custom_call.1} parent=1 // pred_check
      _
    $region123: #{tpu_custom_call.1} parent=1 // pred_check_branch
      %298 = sbr.rel (0) target = $region125
    $region124: #{tpu_custom_call.1} parent=1 // pred_region
      %299 = dma.done [#allocation19], 16
    $region125: #{tpu_custom_call.1} parent=1 // pred_fallthru
      _
    // Predicated region
    $region126: #{tpu_custom_call.1} parent=1 // pred_check
      _
    $region127: #{tpu_custom_call.1} parent=1 // pred_check_branch
      %301 = sbr.rel (0) target = $region129
    $region128: #{tpu_custom_call.1} parent=1 // pred_region
      %302 = dma.done [#allocation19], 16
    $region129: #{tpu_custom_call.1} parent=1 // pred_fallthru
      _
    // Predicated region
    $region130: #{tpu_custom_call.1} parent=1 // pred_check
      _
    $region131: #{tpu_custom_call.1} parent=1 // pred_check_branch
      %304 = sbr.rel (0) target = $region133
    $region132: #{tpu_custom_call.1} parent=1 // pred_region
      %305 = dma.done [#allocation22], 24576
    $region133: #{tpu_custom_call.1} parent=1 // pred_fallthru
      _
    // Predicated region
    $region134: #{tpu_custom_call.1} parent=1 // pred_check
      _
    $region135: #{tpu_custom_call.1} parent=1 // pred_check_branch
      %307 = sbr.rel (0) target = $region137
    $region136: #{tpu_custom_call.1} parent=1 // pred_region
      %308 = dma.done [#allocation22], 96
    $region137: #{tpu_custom_call.1} parent=1 // pred_fallthru
      _
    // Predicated region
    $region138: #{tpu_custom_call.1} parent=1 // pred_check
      _
    $region139: #{tpu_custom_call.1} parent=1 // pred_check_branch
      %310 = sbr.rel (0) target = $region141
    $region140: #{tpu_custom_call.1} parent=1 // pred_region
      %311 = dma.done [#allocation25], 6144
    $region141: #{tpu_custom_call.1} parent=1 // pred_fallthru
      _
    // Predicated region
    $region142: #{tpu_custom_call.1} parent=1 // pred_check
      _
    $region143: #{tpu_custom_call.1} parent=1 // pred_check_branch
      %313 = sbr.rel (0) target = $region145
    $region144: #{tpu_custom_call.1} parent=1 // pred_region
      %314 = dma.done [#allocation25], 6144
    $region145: #{tpu_custom_call.1} parent=1 // pred_fallthru
      _
    // Predicated region
    $region146: #{tpu_custom_call.1} parent=1 // pred_check
      _
    $region147: #{tpu_custom_call.1} parent=1 // pred_check_branch
      %316 = sbr.rel (0) target = $region149
    $region148: #{tpu_custom_call.1} parent=1 // pred_region
      %317 = dma.done [#allocation28], 16
    $region149: #{tpu_custom_call.1} parent=1 // pred_fallthru
      _
    // Predicated region
    $region150: #{tpu_custom_call.1} parent=1 // pred_check
      _
    $region151: #{tpu_custom_call.1} parent=1 // pred_check_branch
      %319 = sbr.rel (0) target = $region153
    $region152: #{tpu_custom_call.1} parent=1 // pred_region
      %320 = dma.done [#allocation28], 16
    $region153: #{tpu_custom_call.1} parent=1 // pred_fallthru
      _
    // Predicated region
    $region154: #{tpu_custom_call.1} parent=1 // pred_check
      _
    $region155: #{tpu_custom_call.1} parent=1 // pred_check_branch
      %322 = sbr.rel (0) target = $region157
    $region156: #{tpu_custom_call.1} parent=1 // pred_region
      %323 = dma.done [#allocation31], 4096
    $region157: #{tpu_custom_call.1} parent=1 // pred_fallthru
      _
    // Predicated region
    $region158: #{tpu_custom_call.1} parent=1 // pred_check
      _
    $region159: #{tpu_custom_call.1} parent=1 // pred_check_branch
      %325 = sbr.rel (0) target = $region161
    $region160: #{tpu_custom_call.1} parent=1 // pred_region
      %326 = dma.done [#allocation31], 16
    $region161: #{tpu_custom_call.1} parent=1 // pred_fallthru
      _
    // Predicated region
    $region162: #{tpu_custom_call.1} parent=1 // pred_check
      _
    $region163: #{tpu_custom_call.1} parent=1 // pred_check_branch
      %328 = sbr.rel (0) target = $region165
    $region164: #{tpu_custom_call.1} parent=1 // pred_region
      %329 = dma.done [#allocation34], 1024
    $region165: #{tpu_custom_call.1} parent=1 // pred_fallthru
      _
    // Predicated region
    $region166: #{tpu_custom_call.1} parent=1 // pred_check
      _
    $region167: #{tpu_custom_call.1} parent=1 // pred_check_branch
      %331 = sbr.rel (0) target = $region169
    $region168: #{tpu_custom_call.1} parent=1 // pred_region
      %332 = dma.done [#allocation34], 16
    $region169: #{tpu_custom_call.1} parent=1 // pred_fallthru
      _
    %v333 = vld [vmem:[#allocation3] sm:$0xff]
    %v334 = vld [vmem:[#allocation3 + $0x8] sm:$0xff]
    %v335 = vld [vmem:[#allocation3 + $0x10] sm:$0xff]
    %v336 = vld [vmem:[#allocation3 + $0x18] sm:$0xff]
    %v337 = vld [vmem:[#allocation6] sm:$0xff]
    %v338 = vld [vmem:[#allocation6 + $0x8] sm:$0xff]
    %v339 = vld [vmem:[#allocation6 + $0x10] sm:$0xff]
    %v340 = vld [vmem:[#allocation6 + $0x18] sm:$0xff]
    %v341 = vld [vmem:[#allocation6 + $0x20] sm:$0xff]
    %v342 = vld [vmem:[#allocation6 + $0x28] sm:$0xff]
    %v343 = vld [vmem:[#allocation6 + $0x30] sm:$0xff]
    %v344 = vld [vmem:[#allocation6 + $0x38] sm:$0xff]
    %v345 = vld [vmem:[#allocation6 + $0x40] sm:$0xff]
    %v346 = vld [vmem:[#allocation6 + $0x48] sm:$0xff]
    %v347 = vld [vmem:[#allocation6 + $0x50] sm:$0xff]
    %v348 = vld [vmem:[#allocation6 + $0x58] sm:$0xff]
    %v349 = vld [vmem:[#allocation6 + $0x60] sm:$0xff]
    %v350 = vld [vmem:[#allocation6 + $0x68] sm:$0xff]
    %v351 = vld [vmem:[#allocation6 + $0x70] sm:$0xff]
    %v352 = vld [vmem:[#allocation6 + $0x78] sm:$0xff]
    %v353 = vld [vmem:[#allocation6 + $0x80] sm:$0xff]
    %v354 = vld [vmem:[#allocation6 + $0x88] sm:$0xff]
    %v355 = vld [vmem:[#allocation6 + $0x90] sm:$0xff]
    %v356 = vld [vmem:[#allocation6 + $0x98] sm:$0xff]
    %v357 = vld [vmem:[#allocation6 + $0xa0] sm:$0xff]
    %v358 = vld [vmem:[#allocation6 + $0xa8] sm:$0xff]
    %v359 = vld [vmem:[#allocation6 + $0xb0] sm:$0xff]
    %v360 = vld [vmem:[#allocation6 + $0xb8] sm:$0xff]
    %v361 = vld [vmem:[#allocation6 + $0xc0] sm:$0xff]
    %v362 = vld [vmem:[#allocation6 + $0xc8] sm:$0xff]
    %v363 = vld [vmem:[#allocation6 + $0xd0] sm:$0xff]
    %v364 = vld [vmem:[#allocation6 + $0xd8] sm:$0xff]
    %v365 = vld [vmem:[#allocation6 + $0xe0] sm:$0xff]
    %v366 = vld [vmem:[#allocation6 + $0xe8] sm:$0xff]
    %v367 = vld [vmem:[#allocation6 + $0xf0] sm:$0xff]
    %v368 = vld [vmem:[#allocation6 + $0xf8] sm:$0xff]
    %v369 = vld [vmem:[#allocation6 + $0x100] sm:$0xff]
    %v370 = vld [vmem:[#allocation6 + $0x108] sm:$0xff]
    %v371 = vld [vmem:[#allocation6 + $0x110] sm:$0xff]
    %v372 = vld [vmem:[#allocation6 + $0x118] sm:$0xff]
    %v373 = vld [vmem:[#allocation6 + $0x120] sm:$0xff]
    %v374 = vld [vmem:[#allocation6 + $0x128] sm:$0xff]
    %v375 = vld [vmem:[#allocation6 + $0x130] sm:$0xff]
    %v376 = vld [vmem:[#allocation6 + $0x138] sm:$0xff]
    %v377 = vld [vmem:[#allocation6 + $0x140] sm:$0xff]
    %v378 = vld [vmem:[#allocation6 + $0x148] sm:$0xff]
    %v379 = vld [vmem:[#allocation6 + $0x150] sm:$0x3]
    %v380 = vld [vmem:[#allocation6 + $0x158] sm:$0x3]
    %v381 = vld [vmem:[#allocation8] sm:$0x3]
    %v383 = vlaneseq
    %v384 = vshrl.u32 %v383, 7
    %v385 = vsub.s32 0, %v384
    %v386 = vrot.slane %v381, %v385
    %v387 = vlaneseq
    %v388 = vshrl.u32 %v387, 7
    %v389 = vsub.s32 1, %v388
    %v390 = vrot.slane %v381, %v389
    %vm393 = vcmask 343040
    %v395 = vsel %vm393, %v334, 0
    %v398 = vsel %vm393, %v336, 0
    %vm400 = vcmask 1041408
    %v402 = vsel %vm400, %v379, 0
    %v405 = vsel %vm400, %v380, 0
    %407 = vmatprep.subr.mxu0 %v338
    %408 = vmatpush1.msra.mxu0 %v337
    %409 = vmatprep.subr.mxu0 %v340
    %410 = vmatpush1.msra.mxu0 %v339
    %411 = vmatprep.subr.mxu0 %v342
    %412 = vmatpush1.msra.mxu0 %v341
    %413 = vmatprep.subr.mxu0 %v344
    %414 = vmatpush1.msra.mxu0 %v343
    %415 = vmatprep.subr.mxu0 %v346
    %416 = vmatpush1.msra.mxu0 %v345
    %417 = vmatprep.subr.mxu0 %v348
    %418 = vmatpush1.msra.mxu0 %v347
    %419 = vmatprep.subr.mxu0 %v350
    %420 = vmatpush1.msra.mxu0 %v349
    %421 = vmatprep.subr.mxu0 %v352
    %422 = vmatpush1.msra.mxu0 %v351
    %423 = vmatprep.subr.mxu0 %v354
    %424 = vmatpush1.msra.mxu0 %v353
    %425 = vmatprep.subr.mxu0 %v356
    %426 = vmatpush1.msra.mxu0 %v355
    %427 = vmatprep.subr.mxu0 %v358
    %428 = vmatpush1.msra.mxu0 %v357
    %429 = vmatprep.subr.mxu0 %v360
    %430 = vmatpush1.msra.mxu0 %v359
    %431 = vmatprep.subr.mxu0 %v362
    %432 = vmatpush1.msra.mxu0 %v361
    %433 = vmatprep.subr.mxu0 %v364
    %434 = vmatpush1.msra.mxu0 %v363
    %435 = vmatprep.subr.mxu0 %v366
    %436 = vmatpush1.msra.mxu0 %v365
    %437 = vmatprep.subr.mxu0 %v368
    %438 = vmatpush1.msra.mxu0 %v367
    %439 = vmatprep.subr.mxu0 %v370
    %440 = vmatpush1.msra.mxu0 %v369
    %441 = vmatprep.subr.mxu0 %v372
    %442 = vmatpush1.msra.mxu0 %v371
    %443 = vmatprep.subr.mxu0 %v374
    %444 = vmatpush1.msra.mxu0 %v373
    %445 = vmatprep.subr.mxu0 %v376
    %446 = vmatpush1.msra.mxu0 %v375
    %447 = vmatprep.subr.mxu0 %v378
    %448 = vmatpush1.msra.mxu0 %v377
    %449 = vmatprep.subr.mxu0 %v405
    %450 = vmatpush1.msra.mxu0 %v402
    %451 = vmatprep.subr.mxu0 0.0
    %452 = vmatpush1.msra.mxu0 0.0
    %453 = vmatprep.subr.mxu0 0.0
    %454 = vmatpush1.msra.mxu0 0.0
    %455 = vmatprep.subr.mxu0 0.0
    %456 = vmatpush1.msra.mxu0 0.0
    %457 = vmatprep.subr.mxu0 0.0
    %458 = vmatpush1.msra.mxu0 0.0
    %459 = vmatprep.subr.mxu0 0.0
    %460 = vmatpush1.msra.mxu0 0.0
    %461 = vmatprep.subr.mxu0 0.0
    %462 = vmatpush1.msra.mxu0 0.0
    %463 = vmatprep.subr.mxu0 0.0
    %464 = vmatpush1.msra.mxu0 0.0
    %465 = vmatprep.subr.mxu0 0.0
    %466 = vmatpush1.msra.mxu0 0.0
    %467 = vmatprep.subr.mxu0 0.0
    %468 = vmatpush1.msra.mxu0 0.0
    %469 = vmatprep.subr.mxu0 0.0
    %470 = vmatpush1.msra.mxu0 0.0
    %471 = vmatprep.mubr.f32.mxu0 %v395
    %472 = vmatmul.mubr.f32.gmra.mrb[0].mxu0 %v333
    %v473 = vpop.f32.mrb[0].mxu0
    %v474 = vadd.f32 %v386, %v473
    %v475 = vpop.f32.mrb[0].mxu0
    %v476 = vadd.f32 %v390, %v475
    %477 = vmatprep.mubr.f32.mxu0 %v398
    %478 = vmatmul.mubr.f32.gmra.mrb[0].mxu0 %v335
    %v479 = vpop.f32.mrb[0].mxu0
    %v480 = vadd.f32 %v386, %v479
    %v481 = vpop.f32.mrb[0].mxu0
    %v482 = vadd.f32 %v390, %v481
    %483 = vdwg.mxu0
    %v484 = vmax.f32 %v474, 0.0
    %v485 = vmax.f32 %v476, 0.0
    %v486 = vmax.f32 %v480, 0.0
    %v487 = vmax.f32 %v482, 0.0
    %v488 = vld [vmem:[#allocation9] sm:$0xff]
    %v489 = vld [vmem:[#allocation9 + $0x8] sm:$0xff]
    %v490 = vld [vmem:[#allocation9 + $0x10] sm:$0xff]
    %v491 = vld [vmem:[#allocation9 + $0x18] sm:$0xff]
    %v492 = vld [vmem:[#allocation9 + $0x20] sm:$0xff]
    %v493 = vld [vmem:[#allocation9 + $0x28] sm:$0xff]
    %v494 = vld [vmem:[#allocation9 + $0x30] sm:$0xff]
    %v495 = vld [vmem:[#allocation9 + $0x38] sm:$0xff]
    %v496 = vld [vmem:[#allocation9 + $0x40] sm:$0xff]
    %v497 = vld [vmem:[#allocation9 + $0x48] sm:$0xff]
    %v498 = vld [vmem:[#allocation9 + $0x50] sm:$0xff]
    %v499 = vld [vmem:[#allocation9 + $0x58] sm:$0xff]
    %v500 = vld [vmem:[#allocation9 + $0x60] sm:$0xff]
    %v501 = vld [vmem:[#allocation9 + $0x68] sm:$0xff]
    %v502 = vld [vmem:[#allocation9 + $0x70] sm:$0xff]
    %v503 = vld [vmem:[#allocation9 + $0x78] sm:$0xff]
    %v504 = vld [vmem:[#allocation9 + $0x80] sm:$0xff]
    %v505 = vld [vmem:[#allocation9 + $0x88] sm:$0xff]
    %v506 = vld [vmem:[#allocation9 + $0x90] sm:$0xff]
    %v507 = vld [vmem:[#allocation9 + $0x98] sm:$0xff]
    %v508 = vld [vmem:[#allocation9 + $0xa0] sm:$0xff]
    %v509 = vld [vmem:[#allocation9 + $0xa8] sm:$0xff]
    %v510 = vld [vmem:[#allocation9 + $0xb0] sm:$0xff]
    %v511 = vld [vmem:[#allocation9 + $0xb8] sm:$0xff]
    %v512 = vld [vmem:[#allocation9 + $0xc0] sm:$0xff]
    %v513 = vld [vmem:[#allocation9 + $0xc8] sm:$0xff]
    %v514 = vld [vmem:[#allocation9 + $0xd0] sm:$0xff]
    %v515 = vld [vmem:[#allocation9 + $0xd8] sm:$0xff]
    %v516 = vld [vmem:[#allocation9 + $0xe0] sm:$0xff]
    %v517 = vld [vmem:[#allocation9 + $0xe8] sm:$0xff]
    %v518 = vld [vmem:[#allocation9 + $0xf0] sm:$0xff]
    %v519 = vld [vmem:[#allocation9 + $0xf8] sm:$0xff]
    %v520 = vld [vmem:[#allocation11] sm:$0x1]
    %v522 = vlaneseq
    %v523 = vshrl.u32 %v522, 7
    %v524 = vsub.s32 0, %v523
    %v525 = vrot.slane %v520, %v524
    %527 = vmatprep.subr.mxu0 0.0
    %528 = vmatpush1.msra.mxu0 %v488
    %529 = vmatprep.subr.mxu0 0.0
    %530 = vmatpush1.msra.mxu0 %v489
    %531 = vmatprep.subr.mxu0 0.0
    %532 = vmatpush1.msra.mxu0 %v490
    %533 = vmatprep.subr.mxu0 0.0
    %534 = vmatpush1.msra.mxu0 %v491
    %535 = vmatprep.subr.mxu0 0.0
    %536 = vmatpush1.msra.mxu0 %v492
    %537 = vmatprep.subr.mxu0 0.0
    %538 = vmatpush1.msra.mxu0 %v493
    %539 = vmatprep.subr.mxu0 0.0
    %540 = vmatpush1.msra.mxu0 %v494
    %541 = vmatprep.subr.mxu0 0.0
    %542 = vmatpush1.msra.mxu0 %v495
    %543 = vmatprep.subr.mxu0 0.0
    %544 = vmatpush1.msra.mxu0 %v496
    %545 = vmatprep.subr.mxu0 0.0
    %546 = vmatpush1.msra.mxu0 %v497
    %547 = vmatprep.subr.mxu0 0.0
    %548 = vmatpush1.msra.mxu0 %v498
    %549 = vmatprep.subr.mxu0 0.0
    %550 = vmatpush1.msra.mxu0 %v499
    %551 = vmatprep.subr.mxu0 0.0
    %552 = vmatpush1.msra.mxu0 %v500
    %553 = vmatprep.subr.mxu0 0.0
    %554 = vmatpush1.msra.mxu0 %v501
    %555 = vmatprep.subr.mxu0 0.0
    %556 = vmatpush1.msra.mxu0 %v502
    %557 = vmatprep.subr.mxu0 0.0
    %558 = vmatpush1.msra.mxu0 %v503
    %559 = vmatprep.subr.mxu0 0.0
    %560 = vmatpush1.msra.mxu0 %v504
    %561 = vmatprep.subr.mxu0 0.0
    %562 = vmatpush1.msra.mxu0 %v505
    %563 = vmatprep.subr.mxu0 0.0
    %564 = vmatpush1.msra.mxu0 %v506
    %565 = vmatprep.subr.mxu0 0.0
    %566 = vmatpush1.msra.mxu0 %v507
    %567 = vmatprep.subr.mxu0 0.0
    %568 = vmatpush1.msra.mxu0 %v508
    %569 = vmatprep.subr.mxu0 0.0
    %570 = vmatpush1.msra.mxu0 %v509
    %571 = vmatprep.subr.mxu0 0.0
    %572 = vmatpush1.msra.mxu0 %v510
    %573 = vmatprep.subr.mxu0 0.0
    %574 = vmatpush1.msra.mxu0 %v511
    %575 = vmatprep.subr.mxu0 0.0
    %576 = vmatpush1.msra.mxu0 %v512
    %577 = vmatprep.subr.mxu0 0.0
    %578 = vmatpush1.msra.mxu0 %v513
    %579 = vmatprep.subr.mxu0 0.0
    %580 = vmatpush1.msra.mxu0 %v514
    %581 = vmatprep.subr.mxu0 0.0
    %582 = vmatpush1.msra.mxu0 %v515
    %583 = vmatprep.subr.mxu0 0.0
    %584 = vmatpush1.msra.mxu0 %v516
    %585 = vmatprep.subr.mxu0 0.0
    %586 = vmatpush1.msra.mxu0 %v517
    %587 = vmatprep.subr.mxu0 0.0
    %588 = vmatpush1.msra.mxu0 %v518
    %589 = vmatprep.subr.mxu0 0.0
    %590 = vmatpush1.msra.mxu0 %v519
    %591 = vmatprep.mubr.f32.mxu0 %v485
    %592 = vmatmul.mubr.f32.gmra.mrb[0].mxu0 %v484
    %v593 = vpop.f32.mrb[0].mxu0
    %v594 = vadd.f32 %v525, %v593
    %v595 = vpop.f32.mrb[0].mxu0
    %596 = vmatprep.mubr.f32.mxu0 %v487
    %597 = vmatmul.mubr.f32.gmra.mrb[0].mxu0 %v486
    %v598 = vpop.f32.mrb[0].mxu0
    %v599 = vadd.f32 %v525, %v598
    %v600 = vpop.f32.mrb[0].mxu0
    %601 = vdwg.mxu0
    %v602 = vmax.f32 %v594, 0.0
    %v603 = vmax.f32 %v599, 0.0
    %v604 = vld [vmem:[#allocation12] sm:$0xff]
    %v605 = vld [vmem:[#allocation12 + $0x8] sm:$0xff]
    %v606 = vld [vmem:[#allocation12 + $0x10] sm:$0xff]
    %v607 = vld [vmem:[#allocation12 + $0x18] sm:$0xff]
    %v608 = vld [vmem:[#allocation12 + $0x20] sm:$0xff]
    %v609 = vld [vmem:[#allocation12 + $0x28] sm:$0xff]
    %v610 = vld [vmem:[#allocation12 + $0x30] sm:$0xff]
    %v611 = vld [vmem:[#allocation12 + $0x38] sm:$0xff]
    %v612 = vld [vmem:[#allocation12 + $0x40] sm:$0xff]
    %v613 = vld [vmem:[#allocation12 + $0x48] sm:$0xff]
    %v614 = vld [vmem:[#allocation12 + $0x50] sm:$0xff]
    %v615 = vld [vmem:[#allocation12 + $0x58] sm:$0xff]
    %v616 = vld [vmem:[#allocation12 + $0x60] sm:$0xff]
    %v617 = vld [vmem:[#allocation12 + $0x68] sm:$0xff]
    %v618 = vld [vmem:[#allocation12 + $0x70] sm:$0xff]
    %v619 = vld [vmem:[#allocation12 + $0x78] sm:$0xff]
    %v620 = vld [vmem:[#allocation12 + $0x80] sm:$0xff]
    %v621 = vld [vmem:[#allocation12 + $0x88] sm:$0xff]
    %v622 = vld [vmem:[#allocation12 + $0x90] sm:$0xff]
    %v623 = vld [vmem:[#allocation12 + $0x98] sm:$0xff]
    %v624 = vld [vmem:[#allocation12 + $0xa0] sm:$0xff]
    %v625 = vld [vmem:[#allocation12 + $0xa8] sm:$0xff]
    %v626 = vld [vmem:[#allocation12 + $0xb0] sm:$0xff]
    %v627 = vld [vmem:[#allocation12 + $0xb8] sm:$0xff]
    %v628 = vld [vmem:[#allocation12 + $0xc0] sm:$0xff]
    %v629 = vld [vmem:[#allocation12 + $0xc8] sm:$0xff]
    %v630 = vld [vmem:[#allocation12 + $0xd0] sm:$0xff]
    %v631 = vld [vmem:[#allocation12 + $0xd8] sm:$0xff]
    %v632 = vld [vmem:[#allocation12 + $0xe0] sm:$0xff]
    %v633 = vld [vmem:[#allocation12 + $0xe8] sm:$0xff]
    %v634 = vld [vmem:[#allocation12 + $0xf0] sm:$0xff]
    %v635 = vld [vmem:[#allocation12 + $0xf8] sm:$0xff]
    %v636 = vld [vmem:[#allocation12 + $0x100] sm:$0xff]
    %v637 = vld [vmem:[#allocation12 + $0x108] sm:$0xff]
    %v638 = vld [vmem:[#allocation12 + $0x110] sm:$0xff]
    %v639 = vld [vmem:[#allocation12 + $0x118] sm:$0xff]
    %v640 = vld [vmem:[#allocation12 + $0x120] sm:$0xff]
    %v641 = vld [vmem:[#allocation12 + $0x128] sm:$0xff]
    %v642 = vld [vmem:[#allocation12 + $0x130] sm:$0xff]
    %v643 = vld [vmem:[#allocation12 + $0x138] sm:$0xff]
    %v644 = vld [vmem:[#allocation12 + $0x140] sm:$0xff]
    %v645 = vld [vmem:[#allocation12 + $0x148] sm:$0xff]
    %v646 = vld [vmem:[#allocation12 + $0x150] sm:$0xff]
    %v647 = vld [vmem:[#allocation12 + $0x158] sm:$0xff]
    %v648 = vld [vmem:[#allocation12 + $0x160] sm:$0xff]
    %v649 = vld [vmem:[#allocation12 + $0x168] sm:$0xff]
    %v650 = vld [vmem:[#allocation12 + $0x170] sm:$0xff]
    %v651 = vld [vmem:[#allocation12 + $0x178] sm:$0xff]
    %v652 = vld [vmem:[#allocation12 + $0x180] sm:$0xff]
    %v653 = vld [vmem:[#allocation12 + $0x188] sm:$0xff]
    %v654 = vld [vmem:[#allocation12 + $0x190] sm:$0xff]
    %v655 = vld [vmem:[#allocation12 + $0x198] sm:$0xff]
    %v656 = vld [vmem:[#allocation12 + $0x1a0] sm:$0xff]
    %v657 = vld [vmem:[#allocation12 + $0x1a8] sm:$0xff]
    %v658 = vld [vmem:[#allocation12 + $0x1b0] sm:$0xff]
    %v659 = vld [vmem:[#allocation12 + $0x1b8] sm:$0xff]
    %v660 = vld [vmem:[#allocation12 + $0x1c0] sm:$0xff]
    %v661 = vld [vmem:[#allocation12 + $0x1c8] sm:$0xff]
    %v662 = vld [vmem:[#allocation12 + $0x1d0] sm:$0xff]
    %v663 = vld [vmem:[#allocation12 + $0x1d8] sm:$0xff]
    %v664 = vld [vmem:[#allocation12 + $0x1e0] sm:$0xff]
    %v665 = vld [vmem:[#allocation12 + $0x1e8] sm:$0xff]
    %v666 = vld [vmem:[#allocation12 + $0x1f0] sm:$0xff]
    %v667 = vld [vmem:[#allocation12 + $0x1f8] sm:$0xff]
    %v668 = vld [vmem:[#allocation12 + $0x200] sm:$0xff]
    %v669 = vld [vmem:[#allocation12 + $0x208] sm:$0xff]
    %v670 = vld [vmem:[#allocation12 + $0x210] sm:$0xff]
    %v671 = vld [vmem:[#allocation12 + $0x218] sm:$0xff]
    %v672 = vld [vmem:[#allocation12 + $0x220] sm:$0xff]
    %v673 = vld [vmem:[#allocation12 + $0x228] sm:$0xff]
    %v674 = vld [vmem:[#allocation12 + $0x230] sm:$0xff]
    %v675 = vld [vmem:[#allocation12 + $0x238] sm:$0xff]
    %v676 = vld [vmem:[#allocation12 + $0x240] sm:$0xff]
    %v677 = vld [vmem:[#allocation12 + $0x248] sm:$0xff]
    %v678 = vld [vmem:[#allocation12 + $0x250] sm:$0xff]
    %v679 = vld [vmem:[#allocation12 + $0x258] sm:$0xff]
    %v680 = vld [vmem:[#allocation12 + $0x260] sm:$0xff]
    %v681 = vld [vmem:[#allocation12 + $0x268] sm:$0xff]
    %v682 = vld [vmem:[#allocation12 + $0x270] sm:$0xff]
    %v683 = vld [vmem:[#allocation12 + $0x278] sm:$0xff]
    %v684 = vld [vmem:[#allocation12 + $0x280] sm:$0xff]
    %v685 = vld [vmem:[#allocation12 + $0x288] sm:$0xff]
    %v686 = vld [vmem:[#allocation12 + $0x290] sm:$0xff]
    %v687 = vld [vmem:[#allocation12 + $0x298] sm:$0xff]
    %v688 = vld [vmem:[#allocation12 + $0x2a0] sm:$0xff]
    %v689 = vld [vmem:[#allocation12 + $0x2a8] sm:$0xff]
    %v690 = vld [vmem:[#allocation12 + $0x2b0] sm:$0xff]
    %v691 = vld [vmem:[#allocation12 + $0x2b8] sm:$0xff]
    %v692 = vld [vmem:[#allocation12 + $0x2c0] sm:$0xff]
    %v693 = vld [vmem:[#allocation12 + $0x2c8] sm:$0xff]
    %v694 = vld [vmem:[#allocation12 + $0x2d0] sm:$0xff]
    %v695 = vld [vmem:[#allocation12 + $0x2d8] sm:$0xff]
    %v696 = vld [vmem:[#allocation12 + $0x2e0] sm:$0xff]
    %v697 = vld [vmem:[#allocation12 + $0x2e8] sm:$0xff]
    %v698 = vld [vmem:[#allocation12 + $0x2f0] sm:$0xff]
    %v699 = vld [vmem:[#allocation12 + $0x2f8] sm:$0xff]
    %v700 = vld [vmem:[#allocation14] sm:$0x3f]
    %v702 = vlaneseq
    %v703 = vshrl.u32 %v702, 7
    %v704 = vsub.s32 0, %v703
    %v705 = vrot.slane %v700, %v704
    %v706 = vlaneseq
    %v707 = vshrl.u32 %v706, 7
    %v708 = vsub.s32 1, %v707
    %v709 = vrot.slane %v700, %v708
    %v710 = vlaneseq
    %v711 = vshrl.u32 %v710, 7
    %v712 = vsub.s32 2, %v711
    %v713 = vrot.slane %v700, %v712
    %v714 = vlaneseq
    %v715 = vshrl.u32 %v714, 7
    %v716 = vsub.s32 3, %v715
    %v717 = vrot.slane %v700, %v716
    %v718 = vlaneseq
    %v719 = vshrl.u32 %v718, 7
    %v720 = vsub.s32 4, %v719
    %v721 = vrot.slane %v700, %v720
    %v722 = vlaneseq
    %v723 = vshrl.u32 %v722, 7
    %v724 = vsub.s32 5, %v723
    %v725 = vrot.slane %v700, %v724
    %732 = vmatprep.subr.mxu0 %v605
    %733 = vmatpush1.msra.mxu0 %v604
    %734 = vmatprep.subr.mxu0 %v611
    %735 = vmatpush1.msra.mxu0 %v610
    %736 = vmatprep.subr.mxu0 %v617
    %737 = vmatpush1.msra.mxu0 %v616
    %738 = vmatprep.subr.mxu0 %v623
    %739 = vmatpush1.msra.mxu0 %v622
    %740 = vmatprep.subr.mxu0 %v629
    %741 = vmatpush1.msra.mxu0 %v628
    %742 = vmatprep.subr.mxu0 %v635
    %743 = vmatpush1.msra.mxu0 %v634
    %744 = vmatprep.subr.mxu0 %v641
    %745 = vmatpush1.msra.mxu0 %v640
    %746 = vmatprep.subr.mxu0 %v647
    %747 = vmatpush1.msra.mxu0 %v646
    %748 = vmatprep.subr.mxu0 %v653
    %749 = vmatpush1.msra.mxu0 %v652
    %750 = vmatprep.subr.mxu0 %v659
    %751 = vmatpush1.msra.mxu0 %v658
    %752 = vmatprep.subr.mxu0 %v665
    %753 = vmatpush1.msra.mxu0 %v664
    %754 = vmatprep.subr.mxu0 %v671
    %755 = vmatpush1.msra.mxu0 %v670
    %756 = vmatprep.subr.mxu0 %v677
    %757 = vmatpush1.msra.mxu0 %v676
    %758 = vmatprep.subr.mxu0 %v683
    %759 = vmatpush1.msra.mxu0 %v682
    %760 = vmatprep.subr.mxu0 %v689
    %761 = vmatpush1.msra.mxu0 %v688
    %762 = vmatprep.subr.mxu0 %v695
    %763 = vmatpush1.msra.mxu0 %v694
    %764 = vmatprep.subr.mxu0 0.0
    %765 = vmatpush1.msra.mxu0 0.0
    %766 = vmatprep.subr.mxu0 0.0
    %767 = vmatpush1.msra.mxu0 0.0
    %768 = vmatprep.subr.mxu0 0.0
    %769 = vmatpush1.msra.mxu0 0.0
    %770 = vmatprep.subr.mxu0 0.0
    %771 = vmatpush1.msra.mxu0 0.0
    %772 = vmatprep.subr.mxu0 0.0
    %773 = vmatpush1.msra.mxu0 0.0
    %774 = vmatprep.subr.mxu0 0.0
    %775 = vmatpush1.msra.mxu0 0.0
    %776 = vmatprep.subr.mxu0 0.0
    %777 = vmatpush1.msra.mxu0 0.0
    %778 = vmatprep.subr.mxu0 0.0
    %779 = vmatpush1.msra.mxu0 0.0
    %780 = vmatprep.subr.mxu0 0.0
    %781 = vmatpush1.msra.mxu0 0.0
    %782 = vmatprep.subr.mxu0 0.0
    %783 = vmatpush1.msra.mxu0 0.0
    %784 = vmatprep.subr.mxu0 0.0
    %785 = vmatpush1.msra.mxu0 0.0
    %786 = vmatprep.subr.mxu0 0.0
    %787 = vmatpush1.msra.mxu0 0.0
    %788 = vmatprep.subr.mxu0 0.0
    %789 = vmatpush1.msra.mxu0 0.0
    %790 = vmatprep.subr.mxu0 0.0
    %791 = vmatpush1.msra.mxu0 0.0
    %792 = vmatprep.subr.mxu0 0.0
    %793 = vmatpush1.msra.mxu0 0.0
    %794 = vmatprep.subr.mxu0 0.0
    %795 = vmatpush1.msra.mxu0 0.0
    %796 = vmatprep.mubr.f32.mxu0 0.0
    %797 = vmatmul.mubr.f32.gmra.mrb[0].mxu0 %v602
    %v798 = vpop.f32.mrb[0].mxu0
    %v799 = vadd.f32 %v705, %v798
    %v800 = vpop.f32.mrb[0].mxu0
    %v801 = vadd.f32 %v709, %v800
    %802 = vmatprep.mubr.f32.mxu0 0.0
    %803 = vmatmul.mubr.f32.gmra.mrb[0].mxu0 %v603
    %v804 = vpop.f32.mrb[0].mxu0
    %v805 = vadd.f32 %v705, %v804
    %v806 = vpop.f32.mrb[0].mxu0
    %v807 = vadd.f32 %v709, %v806
    %808 = vdwg.mxu0
    %809 = vmatprep.subr.mxu0 %v607
    %810 = vmatpush1.msra.mxu0 %v606
    %811 = vmatprep.subr.mxu0 %v613
    %812 = vmatpush1.msra.mxu0 %v612
    %813 = vmatprep.subr.mxu0 %v619
    %814 = vmatpush1.msra.mxu0 %v618
    %815 = vmatprep.subr.mxu0 %v625
    %816 = vmatpush1.msra.mxu0 %v624
    %817 = vmatprep.subr.mxu0 %v631
    %818 = vmatpush1.msra.mxu0 %v630
    %819 = vmatprep.subr.mxu0 %v637
    %820 = vmatpush1.msra.mxu0 %v636
    %821 = vmatprep.subr.mxu0 %v643
    %822 = vmatpush1.msra.mxu0 %v642
    %823 = vmatprep.subr.mxu0 %v649
    %824 = vmatpush1.msra.mxu0 %v648
    %825 = vmatprep.subr.mxu0 %v655
    %826 = vmatpush1.msra.mxu0 %v654
    %827 = vmatprep.subr.mxu0 %v661
    %828 = vmatpush1.msra.mxu0 %v660
    %829 = vmatprep.subr.mxu0 %v667
    %830 = vmatpush1.msra.mxu0 %v666
    %831 = vmatprep.subr.mxu0 %v673
    %832 = vmatpush1.msra.mxu0 %v672
    %833 = vmatprep.subr.mxu0 %v679
    %834 = vmatpush1.msra.mxu0 %v678
    %835 = vmatprep.subr.mxu0 %v685
    %836 = vmatpush1.msra.mxu0 %v684
    %837 = vmatprep.subr.mxu0 %v691
    %838 = vmatpush1.msra.mxu0 %v690
    %839 = vmatprep.subr.mxu0 %v697
    %840 = vmatpush1.msra.mxu0 %v696
    %841 = vmatprep.subr.mxu0 0.0
    %842 = vmatpush1.msra.mxu0 0.0
    %843 = vmatprep.subr.mxu0 0.0
    %844 = vmatpush1.msra.mxu0 0.0
    %845 = vmatprep.subr.mxu0 0.0
    %846 = vmatpush1.msra.mxu0 0.0
    %847 = vmatprep.subr.mxu0 0.0
    %848 = vmatpush1.msra.mxu0 0.0
    %849 = vmatprep.subr.mxu0 0.0
    %850 = vmatpush1.msra.mxu0 0.0
    %851 = vmatprep.subr.mxu0 0.0
    %852 = vmatpush1.msra.mxu0 0.0
    %853 = vmatprep.subr.mxu0 0.0
    %854 = vmatpush1.msra.mxu0 0.0
    %855 = vmatprep.subr.mxu0 0.0
    %856 = vmatpush1.msra.mxu0 0.0
    %857 = vmatprep.subr.mxu0 0.0
    %858 = vmatpush1.msra.mxu0 0.0
    %859 = vmatprep.subr.mxu0 0.0
    %860 = vmatpush1.msra.mxu0 0.0
    %861 = vmatprep.subr.mxu0 0.0
    %862 = vmatpush1.msra.mxu0 0.0
    %863 = vmatprep.subr.mxu0 0.0
    %864 = vmatpush1.msra.mxu0 0.0
    %865 = vmatprep.subr.mxu0 0.0
    %866 = vmatpush1.msra.mxu0 0.0
    %867 = vmatprep.subr.mxu0 0.0
    %868 = vmatpush1.msra.mxu0 0.0
    %869 = vmatprep.subr.mxu0 0.0
    %870 = vmatpush1.msra.mxu0 0.0
    %871 = vmatprep.subr.mxu0 0.0
    %872 = vmatpush1.msra.mxu0 0.0
    %873 = vmatprep.mubr.f32.mxu0 0.0
    %874 = vmatmul.mubr.f32.gmra.mrb[0].mxu0 %v602
    %v875 = vpop.f32.mrb[0].mxu0
    %v876 = vadd.f32 %v713, %v875
    %v877 = vpop.f32.mrb[0].mxu0
    %v878 = vadd.f32 %v717, %v877
    %879 = vmatprep.mubr.f32.mxu0 0.0
    %880 = vmatmul.mubr.f32.gmra.mrb[0].mxu0 %v603
    %v881 = vpop.f32.mrb[0].mxu0
    %v882 = vadd.f32 %v713, %v881
    %v883 = vpop.f32.mrb[0].mxu0
    %v884 = vadd.f32 %v717, %v883
    %885 = vdwg.mxu0
    %886 = vmatprep.subr.mxu0 %v609
    %887 = vmatpush1.msra.mxu0 %v608
    %888 = vmatprep.subr.mxu0 %v615
    %889 = vmatpush1.msra.mxu0 %v614
    %890 = vmatprep.subr.mxu0 %v621
    %891 = vmatpush1.msra.mxu0 %v620
    %892 = vmatprep.subr.mxu0 %v627
    %893 = vmatpush1.msra.mxu0 %v626
    %894 = vmatprep.subr.mxu0 %v633
    %895 = vmatpush1.msra.mxu0 %v632
    %896 = vmatprep.subr.mxu0 %v639
    %897 = vmatpush1.msra.mxu0 %v638
    %898 = vmatprep.subr.mxu0 %v645
    %899 = vmatpush1.msra.mxu0 %v644
    %900 = vmatprep.subr.mxu0 %v651
    %901 = vmatpush1.msra.mxu0 %v650
    %902 = vmatprep.subr.mxu0 %v657
    %903 = vmatpush1.msra.mxu0 %v656
    %904 = vmatprep.subr.mxu0 %v663
    %905 = vmatpush1.msra.mxu0 %v662
    %906 = vmatprep.subr.mxu0 %v669
    %907 = vmatpush1.msra.mxu0 %v668
    %908 = vmatprep.subr.mxu0 %v675
    %909 = vmatpush1.msra.mxu0 %v674
    %910 = vmatprep.subr.mxu0 %v681
    %911 = vmatpush1.msra.mxu0 %v680
    %912 = vmatprep.subr.mxu0 %v687
    %913 = vmatpush1.msra.mxu0 %v686
    %914 = vmatprep.subr.mxu0 %v693
    %915 = vmatpush1.msra.mxu0 %v692
    %916 = vmatprep.subr.mxu0 %v699
    %917 = vmatpush1.msra.mxu0 %v698
    %918 = vmatprep.subr.mxu0 0.0
    %919 = vmatpush1.msra.mxu0 0.0
    %920 = vmatprep.subr.mxu0 0.0
    %921 = vmatpush1.msra.mxu0 0.0
    %922 = vmatprep.subr.mxu0 0.0
    %923 = vmatpush1.msra.mxu0 0.0
    %924 = vmatprep.subr.mxu0 0.0
    %925 = vmatpush1.msra.mxu0 0.0
    %926 = vmatprep.subr.mxu0 0.0
    %927 = vmatpush1.msra.mxu0 0.0
    %928 = vmatprep.subr.mxu0 0.0
    %929 = vmatpush1.msra.mxu0 0.0
    %930 = vmatprep.subr.mxu0 0.0
    %931 = vmatpush1.msra.mxu0 0.0
    %932 = vmatprep.subr.mxu0 0.0
    %933 = vmatpush1.msra.mxu0 0.0
    %934 = vmatprep.subr.mxu0 0.0
    %935 = vmatpush1.msra.mxu0 0.0
    %936 = vmatprep.subr.mxu0 0.0
    %937 = vmatpush1.msra.mxu0 0.0
    %938 = vmatprep.subr.mxu0 0.0
    %939 = vmatpush1.msra.mxu0 0.0
    %940 = vmatprep.subr.mxu0 0.0
    %941 = vmatpush1.msra.mxu0 0.0
    %942 = vmatprep.subr.mxu0 0.0
    %943 = vmatpush1.msra.mxu0 0.0
    %944 = vmatprep.subr.mxu0 0.0
    %945 = vmatpush1.msra.mxu0 0.0
    %946 = vmatprep.subr.mxu0 0.0
    %947 = vmatpush1.msra.mxu0 0.0
    %948 = vmatprep.subr.mxu0 0.0
    %949 = vmatpush1.msra.mxu0 0.0
    %950 = vmatprep.mubr.f32.mxu0 0.0
    %951 = vmatmul.mubr.f32.gmra.mrb[0].mxu0 %v602
    %v952 = vpop.f32.mrb[0].mxu0
    %v953 = vadd.f32 %v721, %v952
    %v954 = vpop.f32.mrb[0].mxu0
    %v955 = vadd.f32 %v725, %v954
    %956 = vmatprep.mubr.f32.mxu0 0.0
    %957 = vmatmul.mubr.f32.gmra.mrb[0].mxu0 %v603
    %v958 = vpop.f32.mrb[0].mxu0
    %v959 = vadd.f32 %v721, %v958
    %v960 = vpop.f32.mrb[0].mxu0
    %v961 = vadd.f32 %v725, %v960
    %962 = vdwg.mxu0
    %v963 = vld [vmem:[#allocation18] sm:$0x1]
    %v964 = vld [vmem:[#allocation20] sm:$0x1]
    %v965 = vld [vmem:[#allocation15] sm:$0xff]
    %v966 = vld [vmem:[#allocation15 + $0x8] sm:$0xff]
    %v967 = vld [vmem:[#allocation15 + $0x10] sm:$0xff]
    %v968 = vld [vmem:[#allocation15 + $0x18] sm:$0xff]
    %v969 = vld [vmem:[#allocation15 + $0x20] sm:$0xff]
    %v970 = vld [vmem:[#allocation15 + $0x28] sm:$0xff]
    %v971 = vld [vmem:[#allocation15 + $0x30] sm:$0xff]
    %v972 = vld [vmem:[#allocation15 + $0x38] sm:$0xff]
    %v973 = vld [vmem:[#allocation15 + $0x40] sm:$0xff]
    %v974 = vld [vmem:[#allocation15 + $0x48] sm:$0xff]
    %v975 = vld [vmem:[#allocation15 + $0x50] sm:$0xff]
    %v976 = vld [vmem:[#allocation15 + $0x58] sm:$0xff]
    %v977 = vld [vmem:[#allocation15 + $0x60] sm:$0xff]
    %v978 = vld [vmem:[#allocation15 + $0x68] sm:$0xff]
    %v979 = vld [vmem:[#allocation15 + $0x70] sm:$0xff]
    %v980 = vld [vmem:[#allocation15 + $0x78] sm:$0xff]
    %v981 = vld [vmem:[#allocation15 + $0x80] sm:$0xff]
    %v982 = vld [vmem:[#allocation15 + $0x88] sm:$0xff]
    %v983 = vld [vmem:[#allocation15 + $0x90] sm:$0xff]
    %v984 = vld [vmem:[#allocation15 + $0x98] sm:$0xff]
    %v985 = vld [vmem:[#allocation15 + $0xa0] sm:$0xff]
    %v986 = vld [vmem:[#allocation15 + $0xa8] sm:$0xff]
    %v987 = vld [vmem:[#allocation15 + $0xb0] sm:$0xff]
    %v988 = vld [vmem:[#allocation15 + $0xb8] sm:$0xff]
    %v989 = vld [vmem:[#allocation15 + $0xc0] sm:$0xff]
    %v990 = vld [vmem:[#allocation15 + $0xc8] sm:$0xff]
    %v991 = vld [vmem:[#allocation15 + $0xd0] sm:$0xff]
    %v992 = vld [vmem:[#allocation15 + $0xd8] sm:$0xff]
    %v993 = vld [vmem:[#allocation15 + $0xe0] sm:$0xff]
    %v994 = vld [vmem:[#allocation15 + $0xe8] sm:$0xff]
    %v995 = vld [vmem:[#allocation15 + $0xf0] sm:$0xff]
    %v996 = vld [vmem:[#allocation15 + $0xf8] sm:$0xff]
    %v997 = vld [vmem:[#allocation15 + $0x100] sm:$0xff]
    %v998 = vld [vmem:[#allocation15 + $0x108] sm:$0xff]
    %v999 = vld [vmem:[#allocation15 + $0x110] sm:$0xff]
    %v1000 = vld [vmem:[#allocation15 + $0x118] sm:$0xff]
    %v1001 = vld [vmem:[#allocation15 + $0x120] sm:$0xff]
    %v1002 = vld [vmem:[#allocation15 + $0x128] sm:$0xff]
    %v1003 = vld [vmem:[#allocation15 + $0x130] sm:$0xff]
    %v1004 = vld [vmem:[#allocation15 + $0x138] sm:$0xff]
    %v1005 = vld [vmem:[#allocation15 + $0x140] sm:$0xff]
    %v1006 = vld [vmem:[#allocation15 + $0x148] sm:$0xff]
    %v1007 = vld [vmem:[#allocation15 + $0x150] sm:$0xff]
    %v1008 = vld [vmem:[#allocation15 + $0x158] sm:$0xff]
    %v1009 = vld [vmem:[#allocation15 + $0x160] sm:$0xff]
    %v1010 = vld [vmem:[#allocation15 + $0x168] sm:$0xff]
    %v1011 = vld [vmem:[#allocation15 + $0x170] sm:$0xff]
    %v1012 = vld [vmem:[#allocation15 + $0x178] sm:$0xff]
    %1013 = vmatprep.subr.mxu0 %v966
    %1014 = vmatpush1.msra.mxu0 %v965
    %1015 = vmatprep.subr.mxu0 %v969
    %1016 = vmatpush1.msra.mxu0 %v968
    %1017 = vmatprep.subr.mxu0 %v972
    %1018 = vmatpush1.msra.mxu0 %v971
    %1019 = vmatprep.subr.mxu0 %v975
    %1020 = vmatpush1.msra.mxu0 %v974
    %1021 = vmatprep.subr.mxu0 %v978
    %1022 = vmatpush1.msra.mxu0 %v977
    %1023 = vmatprep.subr.mxu0 %v981
    %1024 = vmatpush1.msra.mxu0 %v980
    %1025 = vmatprep.subr.mxu0 %v984
    %1026 = vmatpush1.msra.mxu0 %v983
    %1027 = vmatprep.subr.mxu0 %v987
    %1028 = vmatpush1.msra.mxu0 %v986
    %1029 = vmatprep.subr.mxu0 %v990
    %1030 = vmatpush1.msra.mxu0 %v989
    %1031 = vmatprep.subr.mxu0 %v993
    %1032 = vmatpush1.msra.mxu0 %v992
    %1033 = vmatprep.subr.mxu0 %v996
    %1034 = vmatpush1.msra.mxu0 %v995
    %1035 = vmatprep.subr.mxu0 %v999
    %1036 = vmatpush1.msra.mxu0 %v998
    %1037 = vmatprep.subr.mxu0 %v1002
    %1038 = vmatpush1.msra.mxu0 %v1001
    %1039 = vmatprep.subr.mxu0 %v1005
    %1040 = vmatpush1.msra.mxu0 %v1004
    %1041 = vmatprep.subr.mxu0 %v1008
    %1042 = vmatpush1.msra.mxu0 %v1007
    %1043 = vmatprep.subr.mxu0 %v1011
    %1044 = vmatpush1.msra.mxu0 %v1010
    %1045 = vmatprep.subr.mxu0 0.0
    %1046 = vmatpush1.msra.mxu0 0.0
    %1047 = vmatprep.subr.mxu0 0.0
    %1048 = vmatpush1.msra.mxu0 0.0
    %1049 = vmatprep.subr.mxu0 0.0
    %1050 = vmatpush1.msra.mxu0 0.0
    %1051 = vmatprep.subr.mxu0 0.0
    %1052 = vmatpush1.msra.mxu0 0.0
    %1053 = vmatprep.subr.mxu0 0.0
    %1054 = vmatpush1.msra.mxu0 0.0
    %1055 = vmatprep.subr.mxu0 0.0
    %1056 = vmatpush1.msra.mxu0 0.0
    %1057 = vmatprep.subr.mxu0 0.0
    %1058 = vmatpush1.msra.mxu0 0.0
    %1059 = vmatprep.subr.mxu0 0.0
    %1060 = vmatpush1.msra.mxu0 0.0
    %1061 = vmatprep.subr.mxu0 0.0
    %1062 = vmatpush1.msra.mxu0 0.0
    %1063 = vmatprep.subr.mxu0 0.0
    %1064 = vmatpush1.msra.mxu0 0.0
    %1065 = vmatprep.subr.mxu0 0.0
    %1066 = vmatpush1.msra.mxu0 0.0
    %1067 = vmatprep.subr.mxu0 0.0
    %1068 = vmatpush1.msra.mxu0 0.0
    %1069 = vmatprep.subr.mxu0 0.0
    %1070 = vmatpush1.msra.mxu0 0.0
    %1071 = vmatprep.subr.mxu0 0.0
    %1072 = vmatpush1.msra.mxu0 0.0
    %1073 = vmatprep.subr.mxu0 0.0
    %1074 = vmatpush1.msra.mxu0 0.0
    %1075 = vmatprep.subr.mxu0 0.0
    %1076 = vmatpush1.msra.mxu0 0.0
    %1077 = vmatprep.mubr.f32.mxu0 0.0
    %1078 = vmatmul.mubr.f32.gmra.mrb[0].mxu0 0.0
    %v1079 = vpop.f32.mrb[0].mxu0
    %v1080 = vadd.f32 0.0, %v1079
    %v1081 = vpop.f32.mrb[0].mxu0
    %v1082 = vadd.f32 0.0, %v1081
    %1083 = vdwg.mxu0
    %1084 = vmatprep.subr.mxu0 0.0
    %1085 = vmatpush1.msra.mxu0 %v967
    %1086 = vmatprep.subr.mxu0 0.0
    %1087 = vmatpush1.msra.mxu0 %v970
    %1088 = vmatprep.subr.mxu0 0.0
    %1089 = vmatpush1.msra.mxu0 %v973
    %1090 = vmatprep.subr.mxu0 0.0
    %1091 = vmatpush1.msra.mxu0 %v976
    %1092 = vmatprep.subr.mxu0 0.0
    %1093 = vmatpush1.msra.mxu0 %v979
    %1094 = vmatprep.subr.mxu0 0.0
    %1095 = vmatpush1.msra.mxu0 %v982
    %1096 = vmatprep.subr.mxu0 0.0
    %1097 = vmatpush1.msra.mxu0 %v985
    %1098 = vmatprep.subr.mxu0 0.0
    %1099 = vmatpush1.msra.mxu0 %v988
    %1100 = vmatprep.subr.mxu0 0.0
    %1101 = vmatpush1.msra.mxu0 %v991
    %1102 = vmatprep.subr.mxu0 0.0
    %1103 = vmatpush1.msra.mxu0 %v994
    %1104 = vmatprep.subr.mxu0 0.0
    %1105 = vmatpush1.msra.mxu0 %v997
    %1106 = vmatprep.subr.mxu0 0.0
    %1107 = vmatpush1.msra.mxu0 %v1000
    %1108 = vmatprep.subr.mxu0 0.0
    %1109 = vmatpush1.msra.mxu0 %v1003
    %1110 = vmatprep.subr.mxu0 0.0
    %1111 = vmatpush1.msra.mxu0 %v1006
    %1112 = vmatprep.subr.mxu0 0.0
    %1113 = vmatpush1.msra.mxu0 %v1009
    %1114 = vmatprep.subr.mxu0 0.0
    %1115 = vmatpush1.msra.mxu0 %v1012
    %1116 = vmatprep.subr.mxu0 0.0
    %1117 = vmatpush1.msra.mxu0 0.0
    %1118 = vmatprep.subr.mxu0 0.0
    %1119 = vmatpush1.msra.mxu0 0.0
    %1120 = vmatprep.subr.mxu0 0.0
    %1121 = vmatpush1.msra.mxu0 0.0
    %1122 = vmatprep.subr.mxu0 0.0
    %1123 = vmatpush1.msra.mxu0 0.0
    %1124 = vmatprep.subr.mxu0 0.0
    %1125 = vmatpush1.msra.mxu0 0.0
    %1126 = vmatprep.subr.mxu0 0.0
    %1127 = vmatpush1.msra.mxu0 0.0
    %1128 = vmatprep.subr.mxu0 0.0
    %1129 = vmatpush1.msra.mxu0 0.0
    %1130 = vmatprep.subr.mxu0 0.0
    %1131 = vmatpush1.msra.mxu0 0.0
    %1132 = vmatprep.subr.mxu0 0.0
    %1133 = vmatpush1.msra.mxu0 0.0
    %1134 = vmatprep.subr.mxu0 0.0
    %1135 = vmatpush1.msra.mxu0 0.0
    %1136 = vmatprep.subr.mxu0 0.0
    %1137 = vmatpush1.msra.mxu0 0.0
    %1138 = vmatprep.subr.mxu0 0.0
    %1139 = vmatpush1.msra.mxu0 0.0
    %1140 = vmatprep.subr.mxu0 0.0
    %1141 = vmatpush1.msra.mxu0 0.0
    %1142 = vmatprep.subr.mxu0 0.0
    %1143 = vmatpush1.msra.mxu0 0.0
    %1144 = vmatprep.subr.mxu0 0.0
    %1145 = vmatpush1.msra.mxu0 0.0
    %1146 = vmatprep.subr.mxu0 0.0
    %1147 = vmatpush1.msra.mxu0 0.0
    %1148 = vmatprep.mubr.f32.mxu0 0.0
    %1149 = vmatmul.mubr.f32.gmra.mrb[0].mxu0 0.0
    %v1150 = vpop.f32.mrb[0].mxu0
    %v1151 = vadd.f32 0.0, %v1150
    %v1152 = vpop.f32.mrb[0].mxu0
    %1153 = vdwg.mxu0
    %v1154 = vadd.f32 %v799, %v1080
    %v1155 = vxor.u32 %v1154, 2147483648
    %v1156 = vmul.f32 %v1155, 1.442695
    %v1157 = vpow.pop %v1156
    %v1158 = vadd.f32 %v1157, 1.0
    %v1159 = vrcp.pop %v1158
    %v1160 = vmul.f32 1.0, %v1159
    %v1161 = vadd.f32 %v801, %v1082
    %v1162 = vxor.u32 %v1161, 2147483648
    %v1163 = vmul.f32 %v1162, 1.442695
    %v1164 = vpow.pop %v1163
    %v1165 = vadd.f32 %v1164, 1.0
    %v1166 = vrcp.pop %v1165
    %v1167 = vmul.f32 1.0, %v1166
    %v1169 = vlaneseq
    %v1170 = vshrl.u32 %v1169, 7
    %v1171 = vsub.s32 0, %v1170
    %v1172 = vrot.slane %v963, %v1171
    %v1174 = vadd.f32 %v1151, %v1172
    %v1175 = vmul.f32 %v1160, %v1174
    %v1176 = vadd.f32 %v876, %v1175
    %v1177 = vtanh.pop %v1176
    %v1178 = vsub.f32 1.0, %v1167
    %v1179 = vmul.f32 %v1178, %v1177
    %v1180 = vmul.f32 %v1167, 0.0
    %v1181 = vadd.f32 %v1179, %v1180
    %v1182 = vld [vmem:[#allocation17] sm:$0xff]
    %v1183 = vld [vmem:[#allocation17 + $0x8] sm:$0xff]
    %v1184 = vld [vmem:[#allocation17 + $0x10] sm:$0xff]
    %v1185 = vld [vmem:[#allocation17 + $0x18] sm:$0xff]
    %v1186 = vld [vmem:[#allocation17 + $0x20] sm:$0xff]
    %v1187 = vld [vmem:[#allocation17 + $0x28] sm:$0xff]
    %v1188 = vld [vmem:[#allocation17 + $0x30] sm:$0xff]
    %v1189 = vld [vmem:[#allocation17 + $0x38] sm:$0xff]
    %v1190 = vld [vmem:[#allocation17 + $0x40] sm:$0xff]
    %v1191 = vld [vmem:[#allocation17 + $0x48] sm:$0xff]
    %v1192 = vld [vmem:[#allocation17 + $0x50] sm:$0xff]
    %v1193 = vld [vmem:[#allocation17 + $0x58] sm:$0xff]
    %v1194 = vld [vmem:[#allocation17 + $0x60] sm:$0xff]
    %v1195 = vld [vmem:[#allocation17 + $0x68] sm:$0xff]
    %v1196 = vld [vmem:[#allocation17 + $0x70] sm:$0xff]
    %v1197 = vld [vmem:[#allocation17 + $0x78] sm:$0xff]
    %v1198 = vld [vmem:[#allocation17 + $0x80] sm:$0xff]
    %v1199 = vld [vmem:[#allocation17 + $0x88] sm:$0xff]
    %v1200 = vld [vmem:[#allocation17 + $0x90] sm:$0xff]
    %v1201 = vld [vmem:[#allocation17 + $0x98] sm:$0xff]
    %v1202 = vld [vmem:[#allocation17 + $0xa0] sm:$0xff]
    %v1203 = vld [vmem:[#allocation17 + $0xa8] sm:$0xff]
    %v1204 = vld [vmem:[#allocation17 + $0xb0] sm:$0xff]
    %v1205 = vld [vmem:[#allocation17 + $0xb8] sm:$0xff]
    %v1206 = vld [vmem:[#allocation17 + $0xc0] sm:$0xff]
    %v1207 = vld [vmem:[#allocation17 + $0xc8] sm:$0xff]
    %v1208 = vld [vmem:[#allocation17 + $0xd0] sm:$0xff]
    %v1209 = vld [vmem:[#allocation17 + $0xd8] sm:$0xff]
    %v1210 = vld [vmem:[#allocation17 + $0xe0] sm:$0xff]
    %v1211 = vld [vmem:[#allocation17 + $0xe8] sm:$0xff]
    %v1212 = vld [vmem:[#allocation17 + $0xf0] sm:$0xff]
    %v1213 = vld [vmem:[#allocation17 + $0xf8] sm:$0xff]
    %v1214 = vld [vmem:[#allocation17 + $0x100] sm:$0xff]
    %v1215 = vld [vmem:[#allocation17 + $0x108] sm:$0xff]
    %v1216 = vld [vmem:[#allocation17 + $0x110] sm:$0xff]
    %v1217 = vld [vmem:[#allocation17 + $0x118] sm:$0xff]
    %v1218 = vld [vmem:[#allocation17 + $0x120] sm:$0xff]
    %v1219 = vld [vmem:[#allocation17 + $0x128] sm:$0xff]
    %v1220 = vld [vmem:[#allocation17 + $0x130] sm:$0xff]
    %v1221 = vld [vmem:[#allocation17 + $0x138] sm:$0xff]
    %v1222 = vld [vmem:[#allocation17 + $0x140] sm:$0xff]
    %v1223 = vld [vmem:[#allocation17 + $0x148] sm:$0xff]
    %v1224 = vld [vmem:[#allocation17 + $0x150] sm:$0xff]
    %v1225 = vld [vmem:[#allocation17 + $0x158] sm:$0xff]
    %v1226 = vld [vmem:[#allocation17 + $0x160] sm:$0xff]
    %v1227 = vld [vmem:[#allocation17 + $0x168] sm:$0xff]
    %v1228 = vld [vmem:[#allocation17 + $0x170] sm:$0xff]
    %v1229 = vld [vmem:[#allocation17 + $0x178] sm:$0xff]
    %1230 = vmatprep.subr.mxu0 %v1183
    %1231 = vmatpush1.msra.mxu0 %v1182
    %1232 = vmatprep.subr.mxu0 %v1186
    %1233 = vmatpush1.msra.mxu0 %v1185
    %1234 = vmatprep.subr.mxu0 %v1189
    %1235 = vmatpush1.msra.mxu0 %v1188
    %1236 = vmatprep.subr.mxu0 %v1192
    %1237 = vmatpush1.msra.mxu0 %v1191
    %1238 = vmatprep.subr.mxu0 %v1195
    %1239 = vmatpush1.msra.mxu0 %v1194
    %1240 = vmatprep.subr.mxu0 %v1198
    %1241 = vmatpush1.msra.mxu0 %v1197
    %1242 = vmatprep.subr.mxu0 %v1201
    %1243 = vmatpush1.msra.mxu0 %v1200
    %1244 = vmatprep.subr.mxu0 %v1204
    %1245 = vmatpush1.msra.mxu0 %v1203
    %1246 = vmatprep.subr.mxu0 %v1207
    %1247 = vmatpush1.msra.mxu0 %v1206
    %1248 = vmatprep.subr.mxu0 %v1210
    %1249 = vmatpush1.msra.mxu0 %v1209
    %1250 = vmatprep.subr.mxu0 %v1213
    %1251 = vmatpush1.msra.mxu0 %v1212
    %1252 = vmatprep.subr.mxu0 %v1216
    %1253 = vmatpush1.msra.mxu0 %v1215
    %1254 = vmatprep.subr.mxu0 %v1219
    %1255 = vmatpush1.msra.mxu0 %v1218
    %1256 = vmatprep.subr.mxu0 %v1222
    %1257 = vmatpush1.msra.mxu0 %v1221
    %1258 = vmatprep.subr.mxu0 %v1225
    %1259 = vmatpush1.msra.mxu0 %v1224
    %1260 = vmatprep.subr.mxu0 %v1228
    %1261 = vmatpush1.msra.mxu0 %v1227
    %1262 = vmatprep.subr.mxu0 0.0
    %1263 = vmatpush1.msra.mxu0 0.0
    %1264 = vmatprep.subr.mxu0 0.0
    %1265 = vmatpush1.msra.mxu0 0.0
    %1266 = vmatprep.subr.mxu0 0.0
    %1267 = vmatpush1.msra.mxu0 0.0
    %1268 = vmatprep.subr.mxu0 0.0
    %1269 = vmatpush1.msra.mxu0 0.0
    %1270 = vmatprep.subr.mxu0 0.0
    %1271 = vmatpush1.msra.mxu0 0.0
    %1272 = vmatprep.subr.mxu0 0.0
    %1273 = vmatpush1.msra.mxu0 0.0
    %1274 = vmatprep.subr.mxu0 0.0
    %1275 = vmatpush1.msra.mxu0 0.0
    %1276 = vmatprep.subr.mxu0 0.0
    %1277 = vmatpush1.msra.mxu0 0.0
    %1278 = vmatprep.subr.mxu0 0.0
    %1279 = vmatpush1.msra.mxu0 0.0
    %1280 = vmatprep.subr.mxu0 0.0
    %1281 = vmatpush1.msra.mxu0 0.0
    %1282 = vmatprep.subr.mxu0 0.0
    %1283 = vmatpush1.msra.mxu0 0.0
    %1284 = vmatprep.subr.mxu0 0.0
    %1285 = vmatpush1.msra.mxu0 0.0
    %1286 = vmatprep.subr.mxu0 0.0
    %1287 = vmatpush1.msra.mxu0 0.0
    %1288 = vmatprep.subr.mxu0 0.0
    %1289 = vmatpush1.msra.mxu0 0.0
    %1290 = vmatprep.subr.mxu0 0.0
    %1291 = vmatpush1.msra.mxu0 0.0
    %1292 = vmatprep.subr.mxu0 0.0
    %1293 = vmatpush1.msra.mxu0 0.0
    %1294 = vmatprep.mubr.f32.mxu0 0.0
    %1295 = vmatmul.mubr.f32.gmra.mrb[0].mxu0 0.0
    %v1296 = vpop.f32.mrb[0].mxu0
    %v1297 = vadd.f32 0.0, %v1296
    %v1298 = vpop.f32.mrb[0].mxu0
    %v1299 = vadd.f32 0.0, %v1298
    %1300 = vdwg.mxu0
    %1301 = vmatprep.subr.mxu0 0.0
    %1302 = vmatpush1.msra.mxu0 %v1184
    %1303 = vmatprep.subr.mxu0 0.0
    %1304 = vmatpush1.msra.mxu0 %v1187
    %1305 = vmatprep.subr.mxu0 0.0
    %1306 = vmatpush1.msra.mxu0 %v1190
    %1307 = vmatprep.subr.mxu0 0.0
    %1308 = vmatpush1.msra.mxu0 %v1193
    %1309 = vmatprep.subr.mxu0 0.0
    %1310 = vmatpush1.msra.mxu0 %v1196
    %1311 = vmatprep.subr.mxu0 0.0
    %1312 = vmatpush1.msra.mxu0 %v1199
    %1313 = vmatprep.subr.mxu0 0.0
    %1314 = vmatpush1.msra.mxu0 %v1202
    %1315 = vmatprep.subr.mxu0 0.0
    %1316 = vmatpush1.msra.mxu0 %v1205
    %1317 = vmatprep.subr.mxu0 0.0
    %1318 = vmatpush1.msra.mxu0 %v1208
    %1319 = vmatprep.subr.mxu0 0.0
    %1320 = vmatpush1.msra.mxu0 %v1211
    %1321 = vmatprep.subr.mxu0 0.0
    %1322 = vmatpush1.msra.mxu0 %v1214
    %1323 = vmatprep.subr.mxu0 0.0
    %1324 = vmatpush1.msra.mxu0 %v1217
    %1325 = vmatprep.subr.mxu0 0.0
    %1326 = vmatpush1.msra.mxu0 %v1220
    %1327 = vmatprep.subr.mxu0 0.0
    %1328 = vmatpush1.msra.mxu0 %v1223
    %1329 = vmatprep.subr.mxu0 0.0
    %1330 = vmatpush1.msra.mxu0 %v1226
    %1331 = vmatprep.subr.mxu0 0.0
    %1332 = vmatpush1.msra.mxu0 %v1229
    %1333 = vmatprep.subr.mxu0 0.0
    %1334 = vmatpush1.msra.mxu0 0.0
    %1335 = vmatprep.subr.mxu0 0.0
    %1336 = vmatpush1.msra.mxu0 0.0
    %1337 = vmatprep.subr.mxu0 0.0
    %1338 = vmatpush1.msra.mxu0 0.0
    %1339 = vmatprep.subr.mxu0 0.0
    %1340 = vmatpush1.msra.mxu0 0.0
    %1341 = vmatprep.subr.mxu0 0.0
    %1342 = vmatpush1.msra.mxu0 0.0
    %1343 = vmatprep.subr.mxu0 0.0
    %1344 = vmatpush1.msra.mxu0 0.0
    %1345 = vmatprep.subr.mxu0 0.0
    %1346 = vmatpush1.msra.mxu0 0.0
    %1347 = vmatprep.subr.mxu0 0.0
    %1348 = vmatpush1.msra.mxu0 0.0
    %1349 = vmatprep.subr.mxu0 0.0
    %1350 = vmatpush1.msra.mxu0 0.0
    %1351 = vmatprep.subr.mxu0 0.0
    %1352 = vmatpush1.msra.mxu0 0.0
    %1353 = vmatprep.subr.mxu0 0.0
    %1354 = vmatpush1.msra.mxu0 0.0
    %1355 = vmatprep.subr.mxu0 0.0
    %1356 = vmatpush1.msra.mxu0 0.0
    %1357 = vmatprep.subr.mxu0 0.0
    %1358 = vmatpush1.msra.mxu0 0.0
    %1359 = vmatprep.subr.mxu0 0.0
    %1360 = vmatpush1.msra.mxu0 0.0
    %1361 = vmatprep.subr.mxu0 0.0
    %1362 = vmatpush1.msra.mxu0 0.0
    %1363 = vmatprep.subr.mxu0 0.0
    %1364 = vmatpush1.msra.mxu0 0.0
    %1365 = vmatprep.mubr.f32.mxu0 0.0
    %1366 = vmatmul.mubr.f32.gmra.mrb[0].mxu0 0.0
    %v1367 = vpop.f32.mrb[0].mxu0
    %v1368 = vadd.f32 0.0, %v1367
    %v1369 = vpop.f32.mrb[0].mxu0
    %1370 = vdwg.mxu0
    %v1372 = vrot.slane %v1297, 2
    %v1374 = vadd.f32 %v884, %v1372
    %v1375 = vxor.u32 %v1374, 2147483648
    %v1376 = vmul.f32 %v1375, 1.442695
    %v1377 = vpow.pop %v1376
    %v1378 = vadd.f32 %v1377, 1.0
    %v1379 = vrcp.pop %v1378
    %v1380 = vmul.f32 1.0, %v1379
    %v1382 = vrot.slane %v1299, 2
    %v1384 = vadd.f32 %v959, %v1382
    %v1385 = vxor.u32 %v1384, 2147483648
    %v1386 = vmul.f32 %v1385, 1.442695
    %v1387 = vpow.pop %v1386
    %v1388 = vadd.f32 %v1387, 1.0
    %v1389 = vrcp.pop %v1388
    %v1390 = vmul.f32 1.0, %v1389
    %v1392 = vlaneseq
    %v1393 = vshrl.u32 %v1392, 7
    %v1394 = vsub.s32 0, %v1393
    %v1395 = vrot.slane %v964, %v1394
    %v1397 = vadd.f32 %v1368, %v1395
    %v1399 = vrot.slane %v1397, 2
    %v1401 = vmul.f32 %v1380, %v1399
    %v1402 = vadd.f32 %v961, %v1401
    %v1403 = vtanh.pop %v1402
    %v1404 = vsub.f32 1.0, %v1390
    %v1405 = vmul.f32 %v1404, %v1403
    %v1406 = vmul.f32 %v1390, 0.0
    %v1407 = vadd.f32 %v1405, %v1406
    %1408 = vst [vmem:[#allocation2] sm:$0x3] %v1181
    %1409 = vst [vmem:[#allocation2 + $0x18] sm:$0xc0] %v1407
    %v1410 = vld [vmem:[#allocation15] sm:$0xff]
    %v1411 = vld [vmem:[#allocation15 + $0x8] sm:$0xff]
    %v1412 = vld [vmem:[#allocation15 + $0x10] sm:$0xff]
    %v1413 = vld [vmem:[#allocation15 + $0x18] sm:$0xff]
    %v1414 = vld [vmem:[#allocation15 + $0x20] sm:$0xff]
    %v1415 = vld [vmem:[#allocation15 + $0x28] sm:$0xff]
    %v1416 = vld [vmem:[#allocation15 + $0x30] sm:$0xff]
    %v1417 = vld [vmem:[#allocation15 + $0x38] sm:$0xff]
    %v1418 = vld [vmem:[#allocation15 + $0x40] sm:$0xff]
    %v1419 = vld [vmem:[#allocation15 + $0x48] sm:$0xff]
    %v1420 = vld [vmem:[#allocation15 + $0x50] sm:$0xff]
    %v1421 = vld [vmem:[#allocation15 + $0x58] sm:$0xff]
    %v1422 = vld [vmem:[#allocation15 + $0x60] sm:$0xff]
    %v1423 = vld [vmem:[#allocation15 + $0x68] sm:$0xff]
    %v1424 = vld [vmem:[#allocation15 + $0x70] sm:$0xff]
    %v1425 = vld [vmem:[#allocation15 + $0x78] sm:$0xff]
    %v1426 = vld [vmem:[#allocation15 + $0x80] sm:$0xff]
    %v1427 = vld [vmem:[#allocation15 + $0x88] sm:$0xff]
    %v1428 = vld [vmem:[#allocation15 + $0x90] sm:$0xff]
    %v1429 = vld [vmem:[#allocation15 + $0x98] sm:$0xff]
    %v1430 = vld [vmem:[#allocation15 + $0xa0] sm:$0xff]
    %v1431 = vld [vmem:[#allocation15 + $0xa8] sm:$0xff]
    %v1432 = vld [vmem:[#allocation15 + $0xb0] sm:$0xff]
    %v1433 = vld [vmem:[#allocation15 + $0xb8] sm:$0xff]
    %v1434 = vld [vmem:[#allocation15 + $0xc0] sm:$0xff]
    %v1435 = vld [vmem:[#allocation15 + $0xc8] sm:$0xff]
    %v1436 = vld [vmem:[#allocation15 + $0xd0] sm:$0xff]
    %v1437 = vld [vmem:[#allocation15 + $0xd8] sm:$0xff]
    %v1438 = vld [vmem:[#allocation15 + $0xe0] sm:$0xff]
    %v1439 = vld [vmem:[#allocation15 + $0xe8] sm:$0xff]
    %v1440 = vld [vmem:[#allocation15 + $0xf0] sm:$0xff]
    %v1441 = vld [vmem:[#allocation15 + $0xf8] sm:$0xff]
    %v1442 = vld [vmem:[#allocation15 + $0x100] sm:$0xff]
    %v1443 = vld [vmem:[#allocation15 + $0x108] sm:$0xff]
    %v1444 = vld [vmem:[#allocation15 + $0x110] sm:$0xff]
    %v1445 = vld [vmem:[#allocation15 + $0x118] sm:$0xff]
    %v1446 = vld [vmem:[#allocation15 + $0x120] sm:$0xff]
    %v1447 = vld [vmem:[#allocation15 + $0x128] sm:$0xff]
    %v1448 = vld [vmem:[#allocation15 + $0x130] sm:$0xff]
    %v1449 = vld [vmem:[#allocation15 + $0x138] sm:$0xff]
    %v1450 = vld [vmem:[#allocation15 + $0x140] sm:$0xff]
    %v1451 = vld [vmem:[#allocation15 + $0x148] sm:$0xff]
    %v1452 = vld [vmem:[#allocation15 + $0x150] sm:$0xff]
    %v1453 = vld [vmem:[#allocation15 + $0x158] sm:$0xff]
    %v1454 = vld [vmem:[#allocation15 + $0x160] sm:$0xff]
    %v1455 = vld [vmem:[#allocation15 + $0x168] sm:$0xff]
    %v1456 = vld [vmem:[#allocation15 + $0x170] sm:$0xff]
    %v1457 = vld [vmem:[#allocation15 + $0x178] sm:$0xff]
    %1458 = vmatprep.subr.mxu0 %v1411
    %1459 = vmatpush1.msra.mxu0 %v1410
    %1460 = vmatprep.subr.mxu0 %v1414
    %1461 = vmatpush1.msra.mxu0 %v1413
    %1462 = vmatprep.subr.mxu0 %v1417
    %1463 = vmatpush1.msra.mxu0 %v1416
    %1464 = vmatprep.subr.mxu0 %v1420
    %1465 = vmatpush1.msra.mxu0 %v1419
    %1466 = vmatprep.subr.mxu0 %v1423
    %1467 = vmatpush1.msra.mxu0 %v1422
    %1468 = vmatprep.subr.mxu0 %v1426
    %1469 = vmatpush1.msra.mxu0 %v1425
    %1470 = vmatprep.subr.mxu0 %v1429
    %1471 = vmatpush1.msra.mxu0 %v1428
    %1472 = vmatprep.subr.mxu0 %v1432
    %1473 = vmatpush1.msra.mxu0 %v1431
    %1474 = vmatprep.subr.mxu0 %v1435
    %1475 = vmatpush1.msra.mxu0 %v1434
    %1476 = vmatprep.subr.mxu0 %v1438
    %1477 = vmatpush1.msra.mxu0 %v1437
    %1478 = vmatprep.subr.mxu0 %v1441
    %1479 = vmatpush1.msra.mxu0 %v1440
    %1480 = vmatprep.subr.mxu0 %v1444
    %1481 = vmatpush1.msra.mxu0 %v1443
    %1482 = vmatprep.subr.mxu0 %v1447
    %1483 = vmatpush1.msra.mxu0 %v1446
    %1484 = vmatprep.subr.mxu0 %v1450
    %1485 = vmatpush1.msra.mxu0 %v1449
    %1486 = vmatprep.subr.mxu0 %v1453
    %1487 = vmatpush1.msra.mxu0 %v1452
    %1488 = vmatprep.subr.mxu0 %v1456
    %1489 = vmatpush1.msra.mxu0 %v1455
    %1490 = vmatprep.subr.mxu0 0.0
    %1491 = vmatpush1.msra.mxu0 0.0
    %1492 = vmatprep.subr.mxu0 0.0
    %1493 = vmatpush1.msra.mxu0 0.0
    %1494 = vmatprep.subr.mxu0 0.0
    %1495 = vmatpush1.msra.mxu0 0.0
    %1496 = vmatprep.subr.mxu0 0.0
    %1497 = vmatpush1.msra.mxu0 0.0
    %1498 = vmatprep.subr.mxu0 0.0
    %1499 = vmatpush1.msra.mxu0 0.0
    %1500 = vmatprep.subr.mxu0 0.0
    %1501 = vmatpush1.msra.mxu0 0.0
    %1502 = vmatprep.subr.mxu0 0.0
    %1503 = vmatpush1.msra.mxu0 0.0
    %1504 = vmatprep.subr.mxu0 0.0
    %1505 = vmatpush1.msra.mxu0 0.0
    %1506 = vmatprep.subr.mxu0 0.0
    %1507 = vmatpush1.msra.mxu0 0.0
    %1508 = vmatprep.subr.mxu0 0.0
    %1509 = vmatpush1.msra.mxu0 0.0
    %1510 = vmatprep.subr.mxu0 0.0
    %1511 = vmatpush1.msra.mxu0 0.0
    %1512 = vmatprep.subr.mxu0 0.0
    %1513 = vmatpush1.msra.mxu0 0.0
    %1514 = vmatprep.subr.mxu0 0.0
    %1515 = vmatpush1.msra.mxu0 0.0
    %1516 = vmatprep.subr.mxu0 0.0
    %1517 = vmatpush1.msra.mxu0 0.0
    %1518 = vmatprep.subr.mxu0 0.0
    %1519 = vmatpush1.msra.mxu0 0.0
    %1520 = vmatprep.subr.mxu0 0.0
    %1521 = vmatpush1.msra.mxu0 0.0
    %1522 = vmatprep.mubr.f32.mxu0 0.0
    %1523 = vmatmul.mubr.f32.gmra.mrb[0].mxu0 %v1181
    %v1524 = vpop.f32.mrb[0].mxu0
    %v1525 = vadd.f32 0.0, %v1524
    %v1526 = vpop.f32.mrb[0].mxu0
    %v1527 = vadd.f32 0.0, %v1526
    %1528 = vdwg.mxu0
    %1529 = vmatprep.subr.mxu0 0.0
    %1530 = vmatpush1.msra.mxu0 %v1412
    %1531 = vmatprep.subr.mxu0 0.0
    %1532 = vmatpush1.msra.mxu0 %v1415
    %1533 = vmatprep.subr.mxu0 0.0
    %1534 = vmatpush1.msra.mxu0 %v1418
    %1535 = vmatprep.subr.mxu0 0.0
    %1536 = vmatpush1.msra.mxu0 %v1421
    %1537 = vmatprep.subr.mxu0 0.0
    %1538 = vmatpush1.msra.mxu0 %v1424
    %1539 = vmatprep.subr.mxu0 0.0
    %1540 = vmatpush1.msra.mxu0 %v1427
    %1541 = vmatprep.subr.mxu0 0.0
    %1542 = vmatpush1.msra.mxu0 %v1430
    %1543 = vmatprep.subr.mxu0 0.0
    %1544 = vmatpush1.msra.mxu0 %v1433
    %1545 = vmatprep.subr.mxu0 0.0
    %1546 = vmatpush1.msra.mxu0 %v1436
    %1547 = vmatprep.subr.mxu0 0.0
    %1548 = vmatpush1.msra.mxu0 %v1439
    %1549 = vmatprep.subr.mxu0 0.0
    %1550 = vmatpush1.msra.mxu0 %v1442
    %1551 = vmatprep.subr.mxu0 0.0
    %1552 = vmatpush1.msra.mxu0 %v1445
    %1553 = vmatprep.subr.mxu0 0.0
    %1554 = vmatpush1.msra.mxu0 %v1448
    %1555 = vmatprep.subr.mxu0 0.0
    %1556 = vmatpush1.msra.mxu0 %v1451
    %1557 = vmatprep.subr.mxu0 0.0
    %1558 = vmatpush1.msra.mxu0 %v1454
    %1559 = vmatprep.subr.mxu0 0.0
    %1560 = vmatpush1.msra.mxu0 %v1457
    %1561 = vmatprep.subr.mxu0 0.0
    %1562 = vmatpush1.msra.mxu0 0.0
    %1563 = vmatprep.subr.mxu0 0.0
    %1564 = vmatpush1.msra.mxu0 0.0
    %1565 = vmatprep.subr.mxu0 0.0
    %1566 = vmatpush1.msra.mxu0 0.0
    %1567 = vmatprep.subr.mxu0 0.0
    %1568 = vmatpush1.msra.mxu0 0.0
    %1569 = vmatprep.subr.mxu0 0.0
    %1570 = vmatpush1.msra.mxu0 0.0
    %1571 = vmatprep.subr.mxu0 0.0
    %1572 = vmatpush1.msra.mxu0 0.0
    %1573 = vmatprep.subr.mxu0 0.0
    %1574 = vmatpush1.msra.mxu0 0.0
    %1575 = vmatprep.subr.mxu0 0.0
    %1576 = vmatpush1.msra.mxu0 0.0
    %1577 = vmatprep.subr.mxu0 0.0
    %1578 = vmatpush1.msra.mxu0 0.0
    %1579 = vmatprep.subr.mxu0 0.0
    %1580 = vmatpush1.msra.mxu0 0.0
    %1581 = vmatprep.subr.mxu0 0.0
    %1582 = vmatpush1.msra.mxu0 0.0
    %1583 = vmatprep.subr.mxu0 0.0
    %1584 = vmatpush1.msra.mxu0 0.0
    %1585 = vmatprep.subr.mxu0 0.0
    %1586 = vmatpush1.msra.mxu0 0.0
    %1587 = vmatprep.subr.mxu0 0.0
    %1588 = vmatpush1.msra.mxu0 0.0
    %1589 = vmatprep.subr.mxu0 0.0
    %1590 = vmatpush1.msra.mxu0 0.0
    %1591 = vmatprep.subr.mxu0 0.0
    %1592 = vmatpush1.msra.mxu0 0.0
    %1593 = vmatprep.mubr.f32.mxu0 0.0
    %1594 = vmatmul.mubr.f32.gmra.mrb[0].mxu0 %v1181
    %v1595 = vpop.f32.mrb[0].mxu0
    %v1596 = vadd.f32 0.0, %v1595
    %v1597 = vpop.f32.mrb[0].mxu0
    %1598 = vdwg.mxu0
    %v1600 = vrot.slane %v1525, 6
    %v1602 = vadd.f32 %v799, %v1600
    %v1603 = vxor.u32 %v1602, 2147483648
    %v1604 = vmul.f32 %v1603, 1.442695
    %v1605 = vpow.pop %v1604
    %v1606 = vadd.f32 %v1605, 1.0
    %v1607 = vrcp.pop %v1606
    %v1608 = vmul.f32 1.0, %v1607
    %v1610 = vrot.slane %v1527, 6
    %v1612 = vadd.f32 %v801, %v1610
    %v1613 = vxor.u32 %v1612, 2147483648
    %v1614 = vmul.f32 %v1613, 1.442695
    %v1615 = vpow.pop %v1614
    %v1616 = vadd.f32 %v1615, 1.0
    %v1617 = vrcp.pop %v1616
    %v1618 = vmul.f32 1.0, %v1617
    %v1619 = vadd.f32 %v1596, %v1172
    %v1621 = vrot.slane %v1619, 6
    %v1623 = vmul.f32 %v1608, %v1621
    %v1624 = vadd.f32 %v876, %v1623
    %v1625 = vtanh.pop %v1624
    %v1626 = vsub.f32 1.0, %v1618
    %v1627 = vmul.f32 %v1626, %v1625
    %v1629 = vrot.slane %v1181, 6
    %v1631 = vmul.f32 %v1618, %v1629
    %v1632 = vadd.f32 %v1627, %v1631
    %v1633 = vld [vmem:[#allocation17] sm:$0xff]
    %v1634 = vld [vmem:[#allocation17 + $0x8] sm:$0xff]
    %v1635 = vld [vmem:[#allocation17 + $0x10] sm:$0xff]
    %v1636 = vld [vmem:[#allocation17 + $0x18] sm:$0xff]
    %v1637 = vld [vmem:[#allocation17 + $0x20] sm:$0xff]
    %v1638 = vld [vmem:[#allocation17 + $0x28] sm:$0xff]
    %v1639 = vld [vmem:[#allocation17 + $0x30] sm:$0xff]
    %v1640 = vld [vmem:[#allocation17 + $0x38] sm:$0xff]
    %v1641 = vld [vmem:[#allocation17 + $0x40] sm:$0xff]
    %v1642 = vld [vmem:[#allocation17 + $0x48] sm:$0xff]
    %v1643 = vld [vmem:[#allocation17 + $0x50] sm:$0xff]
    %v1644 = vld [vmem:[#allocation17 + $0x58] sm:$0xff]
    %v1645 = vld [vmem:[#allocation17 + $0x60] sm:$0xff]
    %v1646 = vld [vmem:[#allocation17 + $0x68] sm:$0xff]
    %v1647 = vld [vmem:[#allocation17 + $0x70] sm:$0xff]
    %v1648 = vld [vmem:[#allocation17 + $0x78] sm:$0xff]
    %v1649 = vld [vmem:[#allocation17 + $0x80] sm:$0xff]
    %v1650 = vld [vmem:[#allocation17 + $0x88] sm:$0xff]
    %v1651 = vld [vmem:[#allocation17 + $0x90] sm:$0xff]
    %v1652 = vld [vmem:[#allocation17 + $0x98] sm:$0xff]
    %v1653 = vld [vmem:[#allocation17 + $0xa0] sm:$0xff]
    %v1654 = vld [vmem:[#allocation17 + $0xa8] sm:$0xff]
    %v1655 = vld [vmem:[#allocation17 + $0xb0] sm:$0xff]
    %v1656 = vld [vmem:[#allocation17 + $0xb8] sm:$0xff]
    %v1657 = vld [vmem:[#allocation17 + $0xc0] sm:$0xff]
    %v1658 = vld [vmem:[#allocation17 + $0xc8] sm:$0xff]
    %v1659 = vld [vmem:[#allocation17 + $0xd0] sm:$0xff]
    %v1660 = vld [vmem:[#allocation17 + $0xd8] sm:$0xff]
    %v1661 = vld [vmem:[#allocation17 + $0xe0] sm:$0xff]
    %v1662 = vld [vmem:[#allocation17 + $0xe8] sm:$0xff]
    %v1663 = vld [vmem:[#allocation17 + $0xf0] sm:$0xff]
    %v1664 = vld [vmem:[#allocation17 + $0xf8] sm:$0xff]
    %v1665 = vld [vmem:[#allocation17 + $0x100] sm:$0xff]
    %v1666 = vld [vmem:[#allocation17 + $0x108] sm:$0xff]
    %v1667 = vld [vmem:[#allocation17 + $0x110] sm:$0xff]
    %v1668 = vld [vmem:[#allocation17 + $0x118] sm:$0xff]
    %v1669 = vld [vmem:[#allocation17 + $0x120] sm:$0xff]
    %v1670 = vld [vmem:[#allocation17 + $0x128] sm:$0xff]
    %v1671 = vld [vmem:[#allocation17 + $0x130] sm:$0xff]
    %v1672 = vld [vmem:[#allocation17 + $0x138] sm:$0xff]
    %v1673 = vld [vmem:[#allocation17 + $0x140] sm:$0xff]
    %v1674 = vld [vmem:[#allocation17 + $0x148] sm:$0xff]
    %v1675 = vld [vmem:[#allocation17 + $0x150] sm:$0xff]
    %v1676 = vld [vmem:[#allocation17 + $0x158] sm:$0xff]
    %v1677 = vld [vmem:[#allocation17 + $0x160] sm:$0xff]
    %v1678 = vld [vmem:[#allocation17 + $0x168] sm:$0xff]
    %v1679 = vld [vmem:[#allocation17 + $0x170] sm:$0xff]
    %v1680 = vld [vmem:[#allocation17 + $0x178] sm:$0xff]
    %v1682 = vrot.slane %v1407, 6
    %1684 = vmatprep.subr.mxu0 %v1634
    %1685 = vmatpush1.msra.mxu0 %v1633
    %1686 = vmatprep.subr.mxu0 %v1637
    %1687 = vmatpush1.msra.mxu0 %v1636
    %1688 = vmatprep.subr.mxu0 %v1640
    %1689 = vmatpush1.msra.mxu0 %v1639
    %1690 = vmatprep.subr.mxu0 %v1643
    %1691 = vmatpush1.msra.mxu0 %v1642
    %1692 = vmatprep.subr.mxu0 %v1646
    %1693 = vmatpush1.msra.mxu0 %v1645
    %1694 = vmatprep.subr.mxu0 %v1649
    %1695 = vmatpush1.msra.mxu0 %v1648
    %1696 = vmatprep.subr.mxu0 %v1652
    %1697 = vmatpush1.msra.mxu0 %v1651
    %1698 = vmatprep.subr.mxu0 %v1655
    %1699 = vmatpush1.msra.mxu0 %v1654
    %1700 = vmatprep.subr.mxu0 %v1658
    %1701 = vmatpush1.msra.mxu0 %v1657
    %1702 = vmatprep.subr.mxu0 %v1661
    %1703 = vmatpush1.msra.mxu0 %v1660
    %1704 = vmatprep.subr.mxu0 %v1664
    %1705 = vmatpush1.msra.mxu0 %v1663
    %1706 = vmatprep.subr.mxu0 %v1667
    %1707 = vmatpush1.msra.mxu0 %v1666
    %1708 = vmatprep.subr.mxu0 %v1670
    %1709 = vmatpush1.msra.mxu0 %v1669
    %1710 = vmatprep.subr.mxu0 %v1673
    %1711 = vmatpush1.msra.mxu0 %v1672
    %1712 = vmatprep.subr.mxu0 %v1676
    %1713 = vmatpush1.msra.mxu0 %v1675
    %1714 = vmatprep.subr.mxu0 %v1679
    %1715 = vmatpush1.msra.mxu0 %v1678
    %1716 = vmatprep.subr.mxu0 0.0
    %1717 = vmatpush1.msra.mxu0 0.0
    %1718 = vmatprep.subr.mxu0 0.0
    %1719 = vmatpush1.msra.mxu0 0.0
    %1720 = vmatprep.subr.mxu0 0.0
    %1721 = vmatpush1.msra.mxu0 0.0
    %1722 = vmatprep.subr.mxu0 0.0
    %1723 = vmatpush1.msra.mxu0 0.0
    %1724 = vmatprep.subr.mxu0 0.0
    %1725 = vmatpush1.msra.mxu0 0.0
    %1726 = vmatprep.subr.mxu0 0.0
    %1727 = vmatpush1.msra.mxu0 0.0
    %1728 = vmatprep.subr.mxu0 0.0
    %1729 = vmatpush1.msra.mxu0 0.0
    %1730 = vmatprep.subr.mxu0 0.0
    %1731 = vmatpush1.msra.mxu0 0.0
    %1732 = vmatprep.subr.mxu0 0.0
    %1733 = vmatpush1.msra.mxu0 0.0
    %1734 = vmatprep.subr.mxu0 0.0
    %1735 = vmatpush1.msra.mxu0 0.0
    %1736 = vmatprep.subr.mxu0 0.0
    %1737 = vmatpush1.msra.mxu0 0.0
    %1738 = vmatprep.subr.mxu0 0.0
    %1739 = vmatpush1.msra.mxu0 0.0
    %1740 = vmatprep.subr.mxu0 0.0
    %1741 = vmatpush1.msra.mxu0 0.0
    %1742 = vmatprep.subr.mxu0 0.0
    %1743 = vmatpush1.msra.mxu0 0.0
    %1744 = vmatprep.subr.mxu0 0.0
    %1745 = vmatpush1.msra.mxu0 0.0
    %1746 = vmatprep.subr.mxu0 0.0
    %1747 = vmatpush1.msra.mxu0 0.0
    %1748 = vmatprep.mubr.f32.mxu0 0.0
    %1749 = vmatmul.mubr.f32.gmra.mrb[0].mxu0 %v1682
    %v1750 = vpop.f32.mrb[0].mxu0
    %v1751 = vadd.f32 0.0, %v1750
    %v1752 = vpop.f32.mrb[0].mxu0
    %v1753 = vadd.f32 0.0, %v1752
    %1754 = vdwg.mxu0
    %1755 = vmatprep.subr.mxu0 0.0
    %1756 = vmatpush1.msra.mxu0 %v1635
    %1757 = vmatprep.subr.mxu0 0.0
    %1758 = vmatpush1.msra.mxu0 %v1638
    %1759 = vmatprep.subr.mxu0 0.0
    %1760 = vmatpush1.msra.mxu0 %v1641
    %1761 = vmatprep.subr.mxu0 0.0
    %1762 = vmatpush1.msra.mxu0 %v1644
    %1763 = vmatprep.subr.mxu0 0.0
    %1764 = vmatpush1.msra.mxu0 %v1647
    %1765 = vmatprep.subr.mxu0 0.0
    %1766 = vmatpush1.msra.mxu0 %v1650
    %1767 = vmatprep.subr.mxu0 0.0
    %1768 = vmatpush1.msra.mxu0 %v1653
    %1769 = vmatprep.subr.mxu0 0.0
    %1770 = vmatpush1.msra.mxu0 %v1656
    %1771 = vmatprep.subr.mxu0 0.0
    %1772 = vmatpush1.msra.mxu0 %v1659
    %1773 = vmatprep.subr.mxu0 0.0
    %1774 = vmatpush1.msra.mxu0 %v1662
    %1775 = vmatprep.subr.mxu0 0.0
    %1776 = vmatpush1.msra.mxu0 %v1665
    %1777 = vmatprep.subr.mxu0 0.0
    %1778 = vmatpush1.msra.mxu0 %v1668
    %1779 = vmatprep.subr.mxu0 0.0
    %1780 = vmatpush1.msra.mxu0 %v1671
    %1781 = vmatprep.subr.mxu0 0.0
    %1782 = vmatpush1.msra.mxu0 %v1674
    %1783 = vmatprep.subr.mxu0 0.0
    %1784 = vmatpush1.msra.mxu0 %v1677
    %1785 = vmatprep.subr.mxu0 0.0
    %1786 = vmatpush1.msra.mxu0 %v1680
    %1787 = vmatprep.subr.mxu0 0.0
    %1788 = vmatpush1.msra.mxu0 0.0
    %1789 = vmatprep.subr.mxu0 0.0
    %1790 = vmatpush1.msra.mxu0 0.0
    %1791 = vmatprep.subr.mxu0 0.0
    %1792 = vmatpush1.msra.mxu0 0.0
    %1793 = vmatprep.subr.mxu0 0.0
    %1794 = vmatpush1.msra.mxu0 0.0
    %1795 = vmatprep.subr.mxu0 0.0
    %1796 = vmatpush1.msra.mxu0 0.0
    %1797 = vmatprep.subr.mxu0 0.0
    %1798 = vmatpush1.msra.mxu0 0.0
    %1799 = vmatprep.subr.mxu0 0.0
    %1800 = vmatpush1.msra.mxu0 0.0
    %1801 = vmatprep.subr.mxu0 0.0
    %1802 = vmatpush1.msra.mxu0 0.0
    %1803 = vmatprep.subr.mxu0 0.0
    %1804 = vmatpush1.msra.mxu0 0.0
    %1805 = vmatprep.subr.mxu0 0.0
    %1806 = vmatpush1.msra.mxu0 0.0
    %1807 = vmatprep.subr.mxu0 0.0
    %1808 = vmatpush1.msra.mxu0 0.0
    %1809 = vmatprep.subr.mxu0 0.0
    %1810 = vmatpush1.msra.mxu0 0.0
    %1811 = vmatprep.subr.mxu0 0.0
    %1812 = vmatpush1.msra.mxu0 0.0
    %1813 = vmatprep.subr.mxu0 0.0
    %1814 = vmatpush1.msra.mxu0 0.0
    %1815 = vmatprep.subr.mxu0 0.0
    %1816 = vmatpush1.msra.mxu0 0.0
    %1817 = vmatprep.subr.mxu0 0.0
    %1818 = vmatpush1.msra.mxu0 0.0
    %1819 = vmatprep.mubr.f32.mxu0 0.0
    %1820 = vmatmul.mubr.f32.gmra.mrb[0].mxu0 %v1682
    %v1821 = vpop.f32.mrb[0].mxu0
    %v1822 = vadd.f32 0.0, %v1821
    %v1823 = vpop.f32.mrb[0].mxu0
    %1824 = vdwg.mxu0
    %v1826 = vrot.slane %v1751, 4
    %v1828 = vadd.f32 %v884, %v1826
    %v1829 = vxor.u32 %v1828, 2147483648
    %v1830 = vmul.f32 %v1829, 1.442695
    %v1831 = vpow.pop %v1830
    %v1832 = vadd.f32 %v1831, 1.0
    %v1833 = vrcp.pop %v1832
    %v1834 = vmul.f32 1.0, %v1833
    %v1836 = vrot.slane %v1753, 4
    %v1838 = vadd.f32 %v959, %v1836
    %v1839 = vxor.u32 %v1838, 2147483648
    %v1840 = vmul.f32 %v1839, 1.442695
    %v1841 = vpow.pop %v1840
    %v1842 = vadd.f32 %v1841, 1.0
    %v1843 = vrcp.pop %v1842
    %v1844 = vmul.f32 1.0, %v1843
    %v1845 = vadd.f32 %v1822, %v1395
    %v1847 = vrot.slane %v1845, 4
    %v1849 = vmul.f32 %v1834, %v1847
    %v1850 = vadd.f32 %v961, %v1849
    %v1851 = vtanh.pop %v1850
    %v1852 = vsub.f32 1.0, %v1844
    %v1853 = vmul.f32 %v1852, %v1851
    %v1854 = vrot.slane %v1407, 2
    %v1856 = vmul.f32 %v1844, %v1854
    %v1857 = vadd.f32 %v1853, %v1856
    %1858 = vst [vmem:[#allocation2] sm:$0xc] %v1632
    %1859 = vst [vmem:[#allocation2 + $0x18] sm:$0x30] %v1857
    %v1860 = vld [vmem:[#allocation15] sm:$0xff]
    %v1861 = vld [vmem:[#allocation15 + $0x8] sm:$0xff]
    %v1862 = vld [vmem:[#allocation15 + $0x10] sm:$0xff]
    %v1863 = vld [vmem:[#allocation15 + $0x18] sm:$0xff]
    %v1864 = vld [vmem:[#allocation15 + $0x20] sm:$0xff]
    %v1865 = vld [vmem:[#allocation15 + $0x28] sm:$0xff]
    %v1866 = vld [vmem:[#allocation15 + $0x30] sm:$0xff]
    %v1867 = vld [vmem:[#allocation15 + $0x38] sm:$0xff]
    %v1868 = vld [vmem:[#allocation15 + $0x40] sm:$0xff]
    %v1869 = vld [vmem:[#allocation15 + $0x48] sm:$0xff]
    %v1870 = vld [vmem:[#allocation15 + $0x50] sm:$0xff]
    %v1871 = vld [vmem:[#allocation15 + $0x58] sm:$0xff]
    %v1872 = vld [vmem:[#allocation15 + $0x60] sm:$0xff]
    %v1873 = vld [vmem:[#allocation15 + $0x68] sm:$0xff]
    %v1874 = vld [vmem:[#allocation15 + $0x70] sm:$0xff]
    %v1875 = vld [vmem:[#allocation15 + $0x78] sm:$0xff]
    %v1876 = vld [vmem:[#allocation15 + $0x80] sm:$0xff]
    %v1877 = vld [vmem:[#allocation15 + $0x88] sm:$0xff]
    %v1878 = vld [vmem:[#allocation15 + $0x90] sm:$0xff]
    %v1879 = vld [vmem:[#allocation15 + $0x98] sm:$0xff]
    %v1880 = vld [vmem:[#allocation15 + $0xa0] sm:$0xff]
    %v1881 = vld [vmem:[#allocation15 + $0xa8] sm:$0xff]
    %v1882 = vld [vmem:[#allocation15 + $0xb0] sm:$0xff]
    %v1883 = vld [vmem:[#allocation15 + $0xb8] sm:$0xff]
    %v1884 = vld [vmem:[#allocation15 + $0xc0] sm:$0xff]
    %v1885 = vld [vmem:[#allocation15 + $0xc8] sm:$0xff]
    %v1886 = vld [vmem:[#allocation15 + $0xd0] sm:$0xff]
    %v1887 = vld [vmem:[#allocation15 + $0xd8] sm:$0xff]
    %v1888 = vld [vmem:[#allocation15 + $0xe0] sm:$0xff]
    %v1889 = vld [vmem:[#allocation15 + $0xe8] sm:$0xff]
    %v1890 = vld [vmem:[#allocation15 + $0xf0] sm:$0xff]
    %v1891 = vld [vmem:[#allocation15 + $0xf8] sm:$0xff]
    %v1892 = vld [vmem:[#allocation15 + $0x100] sm:$0xff]
    %v1893 = vld [vmem:[#allocation15 + $0x108] sm:$0xff]
    %v1894 = vld [vmem:[#allocation15 + $0x110] sm:$0xff]
    %v1895 = vld [vmem:[#allocation15 + $0x118] sm:$0xff]
    %v1896 = vld [vmem:[#allocation15 + $0x120] sm:$0xff]
    %v1897 = vld [vmem:[#allocation15 + $0x128] sm:$0xff]
    %v1898 = vld [vmem:[#allocation15 + $0x130] sm:$0xff]
    %v1899 = vld [vmem:[#allocation15 + $0x138] sm:$0xff]
    %v1900 = vld [vmem:[#allocation15 + $0x140] sm:$0xff]
    %v1901 = vld [vmem:[#allocation15 + $0x148] sm:$0xff]
    %v1902 = vld [vmem:[#allocation15 + $0x150] sm:$0xff]
    %v1903 = vld [vmem:[#allocation15 + $0x158] sm:$0xff]
    %v1904 = vld [vmem:[#allocation15 + $0x160] sm:$0xff]
    %v1905 = vld [vmem:[#allocation15 + $0x168] sm:$0xff]
    %v1906 = vld [vmem:[#allocation15 + $0x170] sm:$0xff]
    %v1907 = vld [vmem:[#allocation15 + $0x178] sm:$0xff]
    %v1909 = vrot.slane %v1632, 2
    %1911 = vmatprep.subr.mxu0 %v1861
    %1912 = vmatpush1.msra.mxu0 %v1860
    %1913 = vmatprep.subr.mxu0 %v1864
    %1914 = vmatpush1.msra.mxu0 %v1863
    %1915 = vmatprep.subr.mxu0 %v1867
    %1916 = vmatpush1.msra.mxu0 %v1866
    %1917 = vmatprep.subr.mxu0 %v1870
    %1918 = vmatpush1.msra.mxu0 %v1869
    %1919 = vmatprep.subr.mxu0 %v1873
    %1920 = vmatpush1.msra.mxu0 %v1872
    %1921 = vmatprep.subr.mxu0 %v1876
    %1922 = vmatpush1.msra.mxu0 %v1875
    %1923 = vmatprep.subr.mxu0 %v1879
    %1924 = vmatpush1.msra.mxu0 %v1878
    %1925 = vmatprep.subr.mxu0 %v1882
    %1926 = vmatpush1.msra.mxu0 %v1881
    %1927 = vmatprep.subr.mxu0 %v1885
    %1928 = vmatpush1.msra.mxu0 %v1884
    %1929 = vmatprep.subr.mxu0 %v1888
    %1930 = vmatpush1.msra.mxu0 %v1887
    %1931 = vmatprep.subr.mxu0 %v1891
    %1932 = vmatpush1.msra.mxu0 %v1890
    %1933 = vmatprep.subr.mxu0 %v1894
    %1934 = vmatpush1.msra.mxu0 %v1893
    %1935 = vmatprep.subr.mxu0 %v1897
    %1936 = vmatpush1.msra.mxu0 %v1896
    %1937 = vmatprep.subr.mxu0 %v1900
    %1938 = vmatpush1.msra.mxu0 %v1899
    %1939 = vmatprep.subr.mxu0 %v1903
    %1940 = vmatpush1.msra.mxu0 %v1902
    %1941 = vmatprep.subr.mxu0 %v1906
    %1942 = vmatpush1.msra.mxu0 %v1905
    %1943 = vmatprep.subr.mxu0 0.0
    %1944 = vmatpush1.msra.mxu0 0.0
    %1945 = vmatprep.subr.mxu0 0.0
    %1946 = vmatpush1.msra.mxu0 0.0
    %1947 = vmatprep.subr.mxu0 0.0
    %1948 = vmatpush1.msra.mxu0 0.0
    %1949 = vmatprep.subr.mxu0 0.0
    %1950 = vmatpush1.msra.mxu0 0.0
    %1951 = vmatprep.subr.mxu0 0.0
    %1952 = vmatpush1.msra.mxu0 0.0
    %1953 = vmatprep.subr.mxu0 0.0
    %1954 = vmatpush1.msra.mxu0 0.0
    %1955 = vmatprep.subr.mxu0 0.0
    %1956 = vmatpush1.msra.mxu0 0.0
    %1957 = vmatprep.subr.mxu0 0.0
    %1958 = vmatpush1.msra.mxu0 0.0
    %1959 = vmatprep.subr.mxu0 0.0
    %1960 = vmatpush1.msra.mxu0 0.0
    %1961 = vmatprep.subr.mxu0 0.0
    %1962 = vmatpush1.msra.mxu0 0.0
    %1963 = vmatprep.subr.mxu0 0.0
    %1964 = vmatpush1.msra.mxu0 0.0
    %1965 = vmatprep.subr.mxu0 0.0
    %1966 = vmatpush1.msra.mxu0 0.0
    %1967 = vmatprep.subr.mxu0 0.0
    %1968 = vmatpush1.msra.mxu0 0.0
    %1969 = vmatprep.subr.mxu0 0.0
    %1970 = vmatpush1.msra.mxu0 0.0
    %1971 = vmatprep.subr.mxu0 0.0
    %1972 = vmatpush1.msra.mxu0 0.0
    %1973 = vmatprep.subr.mxu0 0.0
    %1974 = vmatpush1.msra.mxu0 0.0
    %1975 = vmatprep.mubr.f32.mxu0 0.0
    %1976 = vmatmul.mubr.f32.gmra.mrb[0].mxu0 %v1909
    %v1977 = vpop.f32.mrb[0].mxu0
    %v1978 = vadd.f32 0.0, %v1977
    %v1979 = vpop.f32.mrb[0].mxu0
    %v1980 = vadd.f32 0.0, %v1979
    %1981 = vdwg.mxu0
    %1982 = vmatprep.subr.mxu0 0.0
    %1983 = vmatpush1.msra.mxu0 %v1862
    %1984 = vmatprep.subr.mxu0 0.0
    %1985 = vmatpush1.msra.mxu0 %v1865
    %1986 = vmatprep.subr.mxu0 0.0
    %1987 = vmatpush1.msra.mxu0 %v1868
    %1988 = vmatprep.subr.mxu0 0.0
    %1989 = vmatpush1.msra.mxu0 %v1871
    %1990 = vmatprep.subr.mxu0 0.0
    %1991 = vmatpush1.msra.mxu0 %v1874
    %1992 = vmatprep.subr.mxu0 0.0
    %1993 = vmatpush1.msra.mxu0 %v1877
    %1994 = vmatprep.subr.mxu0 0.0
    %1995 = vmatpush1.msra.mxu0 %v1880
    %1996 = vmatprep.subr.mxu0 0.0
    %1997 = vmatpush1.msra.mxu0 %v1883
    %1998 = vmatprep.subr.mxu0 0.0
    %1999 = vmatpush1.msra.mxu0 %v1886
    %2000 = vmatprep.subr.mxu0 0.0
    %2001 = vmatpush1.msra.mxu0 %v1889
    %2002 = vmatprep.subr.mxu0 0.0
    %2003 = vmatpush1.msra.mxu0 %v1892
    %2004 = vmatprep.subr.mxu0 0.0
    %2005 = vmatpush1.msra.mxu0 %v1895
    %2006 = vmatprep.subr.mxu0 0.0
    %2007 = vmatpush1.msra.mxu0 %v1898
    %2008 = vmatprep.subr.mxu0 0.0
    %2009 = vmatpush1.msra.mxu0 %v1901
    %2010 = vmatprep.subr.mxu0 0.0
    %2011 = vmatpush1.msra.mxu0 %v1904
    %2012 = vmatprep.subr.mxu0 0.0
    %2013 = vmatpush1.msra.mxu0 %v1907
    %2014 = vmatprep.subr.mxu0 0.0
    %2015 = vmatpush1.msra.mxu0 0.0
    %2016 = vmatprep.subr.mxu0 0.0
    %2017 = vmatpush1.msra.mxu0 0.0
    %2018 = vmatprep.subr.mxu0 0.0
    %2019 = vmatpush1.msra.mxu0 0.0
    %2020 = vmatprep.subr.mxu0 0.0
    %2021 = vmatpush1.msra.mxu0 0.0
    %2022 = vmatprep.subr.mxu0 0.0
    %2023 = vmatpush1.msra.mxu0 0.0
    %2024 = vmatprep.subr.mxu0 0.0
    %2025 = vmatpush1.msra.mxu0 0.0
    %2026 = vmatprep.subr.mxu0 0.0
    %2027 = vmatpush1.msra.mxu0 0.0
    %2028 = vmatprep.subr.mxu0 0.0
    %2029 = vmatpush1.msra.mxu0 0.0
    %2030 = vmatprep.subr.mxu0 0.0
    %2031 = vmatpush1.msra.mxu0 0.0
    %2032 = vmatprep.subr.mxu0 0.0
    %2033 = vmatpush1.msra.mxu0 0.0
    %2034 = vmatprep.subr.mxu0 0.0
    %2035 = vmatpush1.msra.mxu0 0.0
    %2036 = vmatprep.subr.mxu0 0.0
    %2037 = vmatpush1.msra.mxu0 0.0
    %2038 = vmatprep.subr.mxu0 0.0
    %2039 = vmatpush1.msra.mxu0 0.0
    %2040 = vmatprep.subr.mxu0 0.0
    %2041 = vmatpush1.msra.mxu0 0.0
    %2042 = vmatprep.subr.mxu0 0.0
    %2043 = vmatpush1.msra.mxu0 0.0
    %2044 = vmatprep.subr.mxu0 0.0
    %2045 = vmatpush1.msra.mxu0 0.0
    %2046 = vmatprep.mubr.f32.mxu0 0.0
    %2047 = vmatmul.mubr.f32.gmra.mrb[0].mxu0 %v1909
    %v2048 = vpop.f32.mrb[0].mxu0
    %v2049 = vadd.f32 0.0, %v2048
    %v2050 = vpop.f32.mrb[0].mxu0
    %2051 = vdwg.mxu0
    %v2053 = vrot.slane %v1978, 4
    %v2055 = vadd.f32 %v799, %v2053
    %v2056 = vxor.u32 %v2055, 2147483648
    %v2057 = vmul.f32 %v2056, 1.442695
    %v2058 = vpow.pop %v2057
    %v2059 = vadd.f32 %v2058, 1.0
    %v2060 = vrcp.pop %v2059
    %v2061 = vmul.f32 1.0, %v2060
    %v2063 = vrot.slane %v1980, 4
    %v2065 = vadd.f32 %v801, %v2063
    %v2066 = vxor.u32 %v2065, 2147483648
    %v2067 = vmul.f32 %v2066, 1.442695
    %v2068 = vpow.pop %v2067
    %v2069 = vadd.f32 %v2068, 1.0
    %v2070 = vrcp.pop %v2069
    %v2071 = vmul.f32 1.0, %v2070
    %v2072 = vadd.f32 %v2049, %v1172
    %v2074 = vrot.slane %v2072, 4
    %v2076 = vmul.f32 %v2061, %v2074
    %v2077 = vadd.f32 %v876, %v2076
    %v2078 = vtanh.pop %v2077
    %v2079 = vsub.f32 1.0, %v2071
    %v2080 = vmul.f32 %v2079, %v2078
    %v2081 = vrot.slane %v1632, 6
    %v2083 = vmul.f32 %v2071, %v2081
    %v2084 = vadd.f32 %v2080, %v2083
    %v2085 = vld [vmem:[#allocation17] sm:$0xff]
    %v2086 = vld [vmem:[#allocation17 + $0x8] sm:$0xff]
    %v2087 = vld [vmem:[#allocation17 + $0x10] sm:$0xff]
    %v2088 = vld [vmem:[#allocation17 + $0x18] sm:$0xff]
    %v2089 = vld [vmem:[#allocation17 + $0x20] sm:$0xff]
    %v2090 = vld [vmem:[#allocation17 + $0x28] sm:$0xff]
    %v2091 = vld [vmem:[#allocation17 + $0x30] sm:$0xff]
    %v2092 = vld [vmem:[#allocation17 + $0x38] sm:$0xff]
    %v2093 = vld [vmem:[#allocation17 + $0x40] sm:$0xff]
    %v2094 = vld [vmem:[#allocation17 + $0x48] sm:$0xff]
    %v2095 = vld [vmem:[#allocation17 + $0x50] sm:$0xff]
    %v2096 = vld [vmem:[#allocation17 + $0x58] sm:$0xff]
    %v2097 = vld [vmem:[#allocation17 + $0x60] sm:$0xff]
    %v2098 = vld [vmem:[#allocation17 + $0x68] sm:$0xff]
    %v2099 = vld [vmem:[#allocation17 + $0x70] sm:$0xff]
    %v2100 = vld [vmem:[#allocation17 + $0x78] sm:$0xff]
    %v2101 = vld [vmem:[#allocation17 + $0x80] sm:$0xff]
    %v2102 = vld [vmem:[#allocation17 + $0x88] sm:$0xff]
    %v2103 = vld [vmem:[#allocation17 + $0x90] sm:$0xff]
    %v2104 = vld [vmem:[#allocation17 + $0x98] sm:$0xff]
    %v2105 = vld [vmem:[#allocation17 + $0xa0] sm:$0xff]
    %v2106 = vld [vmem:[#allocation17 + $0xa8] sm:$0xff]
    %v2107 = vld [vmem:[#allocation17 + $0xb0] sm:$0xff]
    %v2108 = vld [vmem:[#allocation17 + $0xb8] sm:$0xff]
    %v2109 = vld [vmem:[#allocation17 + $0xc0] sm:$0xff]
    %v2110 = vld [vmem:[#allocation17 + $0xc8] sm:$0xff]
    %v2111 = vld [vmem:[#allocation17 + $0xd0] sm:$0xff]
    %v2112 = vld [vmem:[#allocation17 + $0xd8] sm:$0xff]
    %v2113 = vld [vmem:[#allocation17 + $0xe0] sm:$0xff]
    %v2114 = vld [vmem:[#allocation17 + $0xe8] sm:$0xff]
    %v2115 = vld [vmem:[#allocation17 + $0xf0] sm:$0xff]
    %v2116 = vld [vmem:[#allocation17 + $0xf8] sm:$0xff]
    %v2117 = vld [vmem:[#allocation17 + $0x100] sm:$0xff]
    %v2118 = vld [vmem:[#allocation17 + $0x108] sm:$0xff]
    %v2119 = vld [vmem:[#allocation17 + $0x110] sm:$0xff]
    %v2120 = vld [vmem:[#allocation17 + $0x118] sm:$0xff]
    %v2121 = vld [vmem:[#allocation17 + $0x120] sm:$0xff]
    %v2122 = vld [vmem:[#allocation17 + $0x128] sm:$0xff]
    %v2123 = vld [vmem:[#allocation17 + $0x130] sm:$0xff]
    %v2124 = vld [vmem:[#allocation17 + $0x138] sm:$0xff]
    %v2125 = vld [vmem:[#allocation17 + $0x140] sm:$0xff]
    %v2126 = vld [vmem:[#allocation17 + $0x148] sm:$0xff]
    %v2127 = vld [vmem:[#allocation17 + $0x150] sm:$0xff]
    %v2128 = vld [vmem:[#allocation17 + $0x158] sm:$0xff]
    %v2129 = vld [vmem:[#allocation17 + $0x160] sm:$0xff]
    %v2130 = vld [vmem:[#allocation17 + $0x168] sm:$0xff]
    %v2131 = vld [vmem:[#allocation17 + $0x170] sm:$0xff]
    %v2132 = vld [vmem:[#allocation17 + $0x178] sm:$0xff]
    %v2134 = vrot.slane %v1857, 4
    %2136 = vmatprep.subr.mxu0 %v2086
    %2137 = vmatpush1.msra.mxu0 %v2085
    %2138 = vmatprep.subr.mxu0 %v2089
    %2139 = vmatpush1.msra.mxu0 %v2088
    %2140 = vmatprep.subr.mxu0 %v2092
    %2141 = vmatpush1.msra.mxu0 %v2091
    %2142 = vmatprep.subr.mxu0 %v2095
    %2143 = vmatpush1.msra.mxu0 %v2094
    %2144 = vmatprep.subr.mxu0 %v2098
    %2145 = vmatpush1.msra.mxu0 %v2097
    %2146 = vmatprep.subr.mxu0 %v2101
    %2147 = vmatpush1.msra.mxu0 %v2100
    %2148 = vmatprep.subr.mxu0 %v2104
    %2149 = vmatpush1.msra.mxu0 %v2103
    %2150 = vmatprep.subr.mxu0 %v2107
    %2151 = vmatpush1.msra.mxu0 %v2106
    %2152 = vmatprep.subr.mxu0 %v2110
    %2153 = vmatpush1.msra.mxu0 %v2109
    %2154 = vmatprep.subr.mxu0 %v2113
    %2155 = vmatpush1.msra.mxu0 %v2112
    %2156 = vmatprep.subr.mxu0 %v2116
    %2157 = vmatpush1.msra.mxu0 %v2115
    %2158 = vmatprep.subr.mxu0 %v2119
    %2159 = vmatpush1.msra.mxu0 %v2118
    %2160 = vmatprep.subr.mxu0 %v2122
    %2161 = vmatpush1.msra.mxu0 %v2121
    %2162 = vmatprep.subr.mxu0 %v2125
    %2163 = vmatpush1.msra.mxu0 %v2124
    %2164 = vmatprep.subr.mxu0 %v2128
    %2165 = vmatpush1.msra.mxu0 %v2127
    %2166 = vmatprep.subr.mxu0 %v2131
    %2167 = vmatpush1.msra.mxu0 %v2130
    %2168 = vmatprep.subr.mxu0 0.0
    %2169 = vmatpush1.msra.mxu0 0.0
    %2170 = vmatprep.subr.mxu0 0.0
    %2171 = vmatpush1.msra.mxu0 0.0
    %2172 = vmatprep.subr.mxu0 0.0
    %2173 = vmatpush1.msra.mxu0 0.0
    %2174 = vmatprep.subr.mxu0 0.0
    %2175 = vmatpush1.msra.mxu0 0.0
    %2176 = vmatprep.subr.mxu0 0.0
    %2177 = vmatpush1.msra.mxu0 0.0
    %2178 = vmatprep.subr.mxu0 0.0
    %2179 = vmatpush1.msra.mxu0 0.0
    %2180 = vmatprep.subr.mxu0 0.0
    %2181 = vmatpush1.msra.mxu0 0.0
    %2182 = vmatprep.subr.mxu0 0.0
    %2183 = vmatpush1.msra.mxu0 0.0
    %2184 = vmatprep.subr.mxu0 0.0
    %2185 = vmatpush1.msra.mxu0 0.0
    %2186 = vmatprep.subr.mxu0 0.0
    %2187 = vmatpush1.msra.mxu0 0.0
    %2188 = vmatprep.subr.mxu0 0.0
    %2189 = vmatpush1.msra.mxu0 0.0
    %2190 = vmatprep.subr.mxu0 0.0
    %2191 = vmatpush1.msra.mxu0 0.0
    %2192 = vmatprep.subr.mxu0 0.0
    %2193 = vmatpush1.msra.mxu0 0.0
    %2194 = vmatprep.subr.mxu0 0.0
    %2195 = vmatpush1.msra.mxu0 0.0
    %2196 = vmatprep.subr.mxu0 0.0
    %2197 = vmatpush1.msra.mxu0 0.0
    %2198 = vmatprep.subr.mxu0 0.0
    %2199 = vmatpush1.msra.mxu0 0.0
    %2200 = vmatprep.mubr.f32.mxu0 0.0
    %2201 = vmatmul.mubr.f32.gmra.mrb[0].mxu0 %v2134
    %v2202 = vpop.f32.mrb[0].mxu0
    %v2203 = vadd.f32 0.0, %v2202
    %v2204 = vpop.f32.mrb[0].mxu0
    %v2205 = vadd.f32 0.0, %v2204
    %2206 = vdwg.mxu0
    %2207 = vmatprep.subr.mxu0 0.0
    %2208 = vmatpush1.msra.mxu0 %v2087
    %2209 = vmatprep.subr.mxu0 0.0
    %2210 = vmatpush1.msra.mxu0 %v2090
    %2211 = vmatprep.subr.mxu0 0.0
    %2212 = vmatpush1.msra.mxu0 %v2093
    %2213 = vmatprep.subr.mxu0 0.0
    %2214 = vmatpush1.msra.mxu0 %v2096
    %2215 = vmatprep.subr.mxu0 0.0
    %2216 = vmatpush1.msra.mxu0 %v2099
    %2217 = vmatprep.subr.mxu0 0.0
    %2218 = vmatpush1.msra.mxu0 %v2102
    %2219 = vmatprep.subr.mxu0 0.0
    %2220 = vmatpush1.msra.mxu0 %v2105
    %2221 = vmatprep.subr.mxu0 0.0
    %2222 = vmatpush1.msra.mxu0 %v2108
    %2223 = vmatprep.subr.mxu0 0.0
    %2224 = vmatpush1.msra.mxu0 %v2111
    %2225 = vmatprep.subr.mxu0 0.0
    %2226 = vmatpush1.msra.mxu0 %v2114
    %2227 = vmatprep.subr.mxu0 0.0
    %2228 = vmatpush1.msra.mxu0 %v2117
    %2229 = vmatprep.subr.mxu0 0.0
    %2230 = vmatpush1.msra.mxu0 %v2120
    %2231 = vmatprep.subr.mxu0 0.0
    %2232 = vmatpush1.msra.mxu0 %v2123
    %2233 = vmatprep.subr.mxu0 0.0
    %2234 = vmatpush1.msra.mxu0 %v2126
    %2235 = vmatprep.subr.mxu0 0.0
    %2236 = vmatpush1.msra.mxu0 %v2129
    %2237 = vmatprep.subr.mxu0 0.0
    %2238 = vmatpush1.msra.mxu0 %v2132
    %2239 = vmatprep.subr.mxu0 0.0
    %2240 = vmatpush1.msra.mxu0 0.0
    %2241 = vmatprep.subr.mxu0 0.0
    %2242 = vmatpush1.msra.mxu0 0.0
    %2243 = vmatprep.subr.mxu0 0.0
    %2244 = vmatpush1.msra.mxu0 0.0
    %2245 = vmatprep.subr.mxu0 0.0
    %2246 = vmatpush1.msra.mxu0 0.0
    %2247 = vmatprep.subr.mxu0 0.0
    %2248 = vmatpush1.msra.mxu0 0.0
    %2249 = vmatprep.subr.mxu0 0.0
    %2250 = vmatpush1.msra.mxu0 0.0
    %2251 = vmatprep.subr.mxu0 0.0
    %2252 = vmatpush1.msra.mxu0 0.0
    %2253 = vmatprep.subr.mxu0 0.0
    %2254 = vmatpush1.msra.mxu0 0.0
    %2255 = vmatprep.subr.mxu0 0.0
    %2256 = vmatpush1.msra.mxu0 0.0
    %2257 = vmatprep.subr.mxu0 0.0
    %2258 = vmatpush1.msra.mxu0 0.0
    %2259 = vmatprep.subr.mxu0 0.0
    %2260 = vmatpush1.msra.mxu0 0.0
    %2261 = vmatprep.subr.mxu0 0.0
    %2262 = vmatpush1.msra.mxu0 0.0
    %2263 = vmatprep.subr.mxu0 0.0
    %2264 = vmatpush1.msra.mxu0 0.0
    %2265 = vmatprep.subr.mxu0 0.0
    %2266 = vmatpush1.msra.mxu0 0.0
    %2267 = vmatprep.subr.mxu0 0.0
    %2268 = vmatpush1.msra.mxu0 0.0
    %2269 = vmatprep.subr.mxu0 0.0
    %2270 = vmatpush1.msra.mxu0 0.0
    %2271 = vmatprep.mubr.f32.mxu0 0.0
    %2272 = vmatmul.mubr.f32.gmra.mrb[0].mxu0 %v2134
    %v2273 = vpop.f32.mrb[0].mxu0
    %v2274 = vadd.f32 0.0, %v2273
    %v2275 = vpop.f32.mrb[0].mxu0
    %2276 = vdwg.mxu0
    %v2278 = vrot.slane %v2203, 6
    %v2280 = vadd.f32 %v884, %v2278
    %v2281 = vxor.u32 %v2280, 2147483648
    %v2282 = vmul.f32 %v2281, 1.442695
    %v2283 = vpow.pop %v2282
    %v2284 = vadd.f32 %v2283, 1.0
    %v2285 = vrcp.pop %v2284
    %v2286 = vmul.f32 1.0, %v2285
    %v2288 = vrot.slane %v2205, 6
    %v2290 = vadd.f32 %v959, %v2288
    %v2291 = vxor.u32 %v2290, 2147483648
    %v2292 = vmul.f32 %v2291, 1.442695
    %v2293 = vpow.pop %v2292
    %v2294 = vadd.f32 %v2293, 1.0
    %v2295 = vrcp.pop %v2294
    %v2296 = vmul.f32 1.0, %v2295
    %v2297 = vadd.f32 %v2274, %v1395
    %v2299 = vrot.slane %v2297, 6
    %v2301 = vmul.f32 %v2286, %v2299
    %v2302 = vadd.f32 %v961, %v2301
    %v2303 = vtanh.pop %v2302
    %v2304 = vsub.f32 1.0, %v2296
    %v2305 = vmul.f32 %v2304, %v2303
    %v2306 = vrot.slane %v1857, 2
    %v2308 = vmul.f32 %v2296, %v2306
    %v2309 = vadd.f32 %v2305, %v2308
    %2310 = vst [vmem:[#allocation2] sm:$0x30] %v2084
    %2311 = vst [vmem:[#allocation2 + $0x18] sm:$0xc] %v2309
    %v2312 = vld [vmem:[#allocation15] sm:$0xff]
    %v2313 = vld [vmem:[#allocation15 + $0x8] sm:$0xff]
    %v2314 = vld [vmem:[#allocation15 + $0x10] sm:$0xff]
    %v2315 = vld [vmem:[#allocation15 + $0x18] sm:$0xff]
    %v2316 = vld [vmem:[#allocation15 + $0x20] sm:$0xff]
    %v2317 = vld [vmem:[#allocation15 + $0x28] sm:$0xff]
    %v2318 = vld [vmem:[#allocation15 + $0x30] sm:$0xff]
    %v2319 = vld [vmem:[#allocation15 + $0x38] sm:$0xff]
    %v2320 = vld [vmem:[#allocation15 + $0x40] sm:$0xff]
    %v2321 = vld [vmem:[#allocation15 + $0x48] sm:$0xff]
    %v2322 = vld [vmem:[#allocation15 + $0x50] sm:$0xff]
    %v2323 = vld [vmem:[#allocation15 + $0x58] sm:$0xff]
    %v2324 = vld [vmem:[#allocation15 + $0x60] sm:$0xff]
    %v2325 = vld [vmem:[#allocation15 + $0x68] sm:$0xff]
    %v2326 = vld [vmem:[#allocation15 + $0x70] sm:$0xff]
    %v2327 = vld [vmem:[#allocation15 + $0x78] sm:$0xff]
    %v2328 = vld [vmem:[#allocation15 + $0x80] sm:$0xff]
    %v2329 = vld [vmem:[#allocation15 + $0x88] sm:$0xff]
    %v2330 = vld [vmem:[#allocation15 + $0x90] sm:$0xff]
    %v2331 = vld [vmem:[#allocation15 + $0x98] sm:$0xff]
    %v2332 = vld [vmem:[#allocation15 + $0xa0] sm:$0xff]
    %v2333 = vld [vmem:[#allocation15 + $0xa8] sm:$0xff]
    %v2334 = vld [vmem:[#allocation15 + $0xb0] sm:$0xff]
    %v2335 = vld [vmem:[#allocation15 + $0xb8] sm:$0xff]
    %v2336 = vld [vmem:[#allocation15 + $0xc0] sm:$0xff]
    %v2337 = vld [vmem:[#allocation15 + $0xc8] sm:$0xff]
    %v2338 = vld [vmem:[#allocation15 + $0xd0] sm:$0xff]
    %v2339 = vld [vmem:[#allocation15 + $0xd8] sm:$0xff]
    %v2340 = vld [vmem:[#allocation15 + $0xe0] sm:$0xff]
    %v2341 = vld [vmem:[#allocation15 + $0xe8] sm:$0xff]
    %v2342 = vld [vmem:[#allocation15 + $0xf0] sm:$0xff]
    %v2343 = vld [vmem:[#allocation15 + $0xf8] sm:$0xff]
    %v2344 = vld [vmem:[#allocation15 + $0x100] sm:$0xff]
    %v2345 = vld [vmem:[#allocation15 + $0x108] sm:$0xff]
    %v2346 = vld [vmem:[#allocation15 + $0x110] sm:$0xff]
    %v2347 = vld [vmem:[#allocation15 + $0x118] sm:$0xff]
    %v2348 = vld [vmem:[#allocation15 + $0x120] sm:$0xff]
    %v2349 = vld [vmem:[#allocation15 + $0x128] sm:$0xff]
    %v2350 = vld [vmem:[#allocation15 + $0x130] sm:$0xff]
    %v2351 = vld [vmem:[#allocation15 + $0x138] sm:$0xff]
    %v2352 = vld [vmem:[#allocation15 + $0x140] sm:$0xff]
    %v2353 = vld [vmem:[#allocation15 + $0x148] sm:$0xff]
    %v2354 = vld [vmem:[#allocation15 + $0x150] sm:$0xff]
    %v2355 = vld [vmem:[#allocation15 + $0x158] sm:$0xff]
    %v2356 = vld [vmem:[#allocation15 + $0x160] sm:$0xff]
    %v2357 = vld [vmem:[#allocation15 + $0x168] sm:$0xff]
    %v2358 = vld [vmem:[#allocation15 + $0x170] sm:$0xff]
    %v2359 = vld [vmem:[#allocation15 + $0x178] sm:$0xff]
    %v2361 = vrot.slane %v2084, 4
    %2363 = vmatprep.subr.mxu0 %v2313
    %2364 = vmatpush1.msra.mxu0 %v2312
    %2365 = vmatprep.subr.mxu0 %v2316
    %2366 = vmatpush1.msra.mxu0 %v2315
    %2367 = vmatprep.subr.mxu0 %v2319
    %2368 = vmatpush1.msra.mxu0 %v2318
    %2369 = vmatprep.subr.mxu0 %v2322
    %2370 = vmatpush1.msra.mxu0 %v2321
    %2371 = vmatprep.subr.mxu0 %v2325
    %2372 = vmatpush1.msra.mxu0 %v2324
    %2373 = vmatprep.subr.mxu0 %v2328
    %2374 = vmatpush1.msra.mxu0 %v2327
    %2375 = vmatprep.subr.mxu0 %v2331
    %2376 = vmatpush1.msra.mxu0 %v2330
    %2377 = vmatprep.subr.mxu0 %v2334
    %2378 = vmatpush1.msra.mxu0 %v2333
    %2379 = vmatprep.subr.mxu0 %v2337
    %2380 = vmatpush1.msra.mxu0 %v2336
    %2381 = vmatprep.subr.mxu0 %v2340
    %2382 = vmatpush1.msra.mxu0 %v2339
    %2383 = vmatprep.subr.mxu0 %v2343
    %2384 = vmatpush1.msra.mxu0 %v2342
    %2385 = vmatprep.subr.mxu0 %v2346
    %2386 = vmatpush1.msra.mxu0 %v2345
    %2387 = vmatprep.subr.mxu0 %v2349
    %2388 = vmatpush1.msra.mxu0 %v2348
    %2389 = vmatprep.subr.mxu0 %v2352
    %2390 = vmatpush1.msra.mxu0 %v2351
    %2391 = vmatprep.subr.mxu0 %v2355
    %2392 = vmatpush1.msra.mxu0 %v2354
    %2393 = vmatprep.subr.mxu0 %v2358
    %2394 = vmatpush1.msra.mxu0 %v2357
    %2395 = vmatprep.subr.mxu0 0.0
    %2396 = vmatpush1.msra.mxu0 0.0
    %2397 = vmatprep.subr.mxu0 0.0
    %2398 = vmatpush1.msra.mxu0 0.0
    %2399 = vmatprep.subr.mxu0 0.0
    %2400 = vmatpush1.msra.mxu0 0.0
    %2401 = vmatprep.subr.mxu0 0.0
    %2402 = vmatpush1.msra.mxu0 0.0
    %2403 = vmatprep.subr.mxu0 0.0
    %2404 = vmatpush1.msra.mxu0 0.0
    %2405 = vmatprep.subr.mxu0 0.0
    %2406 = vmatpush1.msra.mxu0 0.0
    %2407 = vmatprep.subr.mxu0 0.0
    %2408 = vmatpush1.msra.mxu0 0.0
    %2409 = vmatprep.subr.mxu0 0.0
    %2410 = vmatpush1.msra.mxu0 0.0
    %2411 = vmatprep.subr.mxu0 0.0
    %2412 = vmatpush1.msra.mxu0 0.0
    %2413 = vmatprep.subr.mxu0 0.0
    %2414 = vmatpush1.msra.mxu0 0.0
    %2415 = vmatprep.subr.mxu0 0.0
    %2416 = vmatpush1.msra.mxu0 0.0
    %2417 = vmatprep.subr.mxu0 0.0
    %2418 = vmatpush1.msra.mxu0 0.0
    %2419 = vmatprep.subr.mxu0 0.0
    %2420 = vmatpush1.msra.mxu0 0.0
    %2421 = vmatprep.subr.mxu0 0.0
    %2422 = vmatpush1.msra.mxu0 0.0
    %2423 = vmatprep.subr.mxu0 0.0
    %2424 = vmatpush1.msra.mxu0 0.0
    %2425 = vmatprep.subr.mxu0 0.0
    %2426 = vmatpush1.msra.mxu0 0.0
    %2427 = vmatprep.mubr.f32.mxu0 0.0
    %2428 = vmatmul.mubr.f32.gmra.mrb[0].mxu0 %v2361
    %v2429 = vpop.f32.mrb[0].mxu0
    %v2430 = vadd.f32 0.0, %v2429
    %v2431 = vpop.f32.mrb[0].mxu0
    %v2432 = vadd.f32 0.0, %v2431
    %2433 = vdwg.mxu0
    %2434 = vmatprep.subr.mxu0 0.0
    %2435 = vmatpush1.msra.mxu0 %v2314
    %2436 = vmatprep.subr.mxu0 0.0
    %2437 = vmatpush1.msra.mxu0 %v2317
    %2438 = vmatprep.subr.mxu0 0.0
    %2439 = vmatpush1.msra.mxu0 %v2320
    %2440 = vmatprep.subr.mxu0 0.0
    %2441 = vmatpush1.msra.mxu0 %v2323
    %2442 = vmatprep.subr.mxu0 0.0
    %2443 = vmatpush1.msra.mxu0 %v2326
    %2444 = vmatprep.subr.mxu0 0.0
    %2445 = vmatpush1.msra.mxu0 %v2329
    %2446 = vmatprep.subr.mxu0 0.0
    %2447 = vmatpush1.msra.mxu0 %v2332
    %2448 = vmatprep.subr.mxu0 0.0
    %2449 = vmatpush1.msra.mxu0 %v2335
    %2450 = vmatprep.subr.mxu0 0.0
    %2451 = vmatpush1.msra.mxu0 %v2338
    %2452 = vmatprep.subr.mxu0 0.0
    %2453 = vmatpush1.msra.mxu0 %v2341
    %2454 = vmatprep.subr.mxu0 0.0
    %2455 = vmatpush1.msra.mxu0 %v2344
    %2456 = vmatprep.subr.mxu0 0.0
    %2457 = vmatpush1.msra.mxu0 %v2347
    %2458 = vmatprep.subr.mxu0 0.0
    %2459 = vmatpush1.msra.mxu0 %v2350
    %2460 = vmatprep.subr.mxu0 0.0
    %2461 = vmatpush1.msra.mxu0 %v2353
    %2462 = vmatprep.subr.mxu0 0.0
    %2463 = vmatpush1.msra.mxu0 %v2356
    %2464 = vmatprep.subr.mxu0 0.0
    %2465 = vmatpush1.msra.mxu0 %v2359
    %2466 = vmatprep.subr.mxu0 0.0
    %2467 = vmatpush1.msra.mxu0 0.0
    %2468 = vmatprep.subr.mxu0 0.0
    %2469 = vmatpush1.msra.mxu0 0.0
    %2470 = vmatprep.subr.mxu0 0.0
    %2471 = vmatpush1.msra.mxu0 0.0
    %2472 = vmatprep.subr.mxu0 0.0
    %2473 = vmatpush1.msra.mxu0 0.0
    %2474 = vmatprep.subr.mxu0 0.0
    %2475 = vmatpush1.msra.mxu0 0.0
    %2476 = vmatprep.subr.mxu0 0.0
    %2477 = vmatpush1.msra.mxu0 0.0
    %2478 = vmatprep.subr.mxu0 0.0
    %2479 = vmatpush1.msra.mxu0 0.0
    %2480 = vmatprep.subr.mxu0 0.0
    %2481 = vmatpush1.msra.mxu0 0.0
    %2482 = vmatprep.subr.mxu0 0.0
    %2483 = vmatpush1.msra.mxu0 0.0
    %2484 = vmatprep.subr.mxu0 0.0
    %2485 = vmatpush1.msra.mxu0 0.0
    %2486 = vmatprep.subr.mxu0 0.0
    %2487 = vmatpush1.msra.mxu0 0.0
    %2488 = vmatprep.subr.mxu0 0.0
    %2489 = vmatpush1.msra.mxu0 0.0
    %2490 = vmatprep.subr.mxu0 0.0
    %2491 = vmatpush1.msra.mxu0 0.0
    %2492 = vmatprep.subr.mxu0 0.0
    %2493 = vmatpush1.msra.mxu0 0.0
    %2494 = vmatprep.subr.mxu0 0.0
    %2495 = vmatpush1.msra.mxu0 0.0
    %2496 = vmatprep.subr.mxu0 0.0
    %2497 = vmatpush1.msra.mxu0 0.0
    %2498 = vmatprep.mubr.f32.mxu0 0.0
    %2499 = vmatmul.mubr.f32.gmra.mrb[0].mxu0 %v2361
    %v2500 = vpop.f32.mrb[0].mxu0
    %v2501 = vadd.f32 0.0, %v2500
    %v2502 = vpop.f32.mrb[0].mxu0
    %2503 = vdwg.mxu0
    %v2505 = vrot.slane %v2430, 2
    %v2507 = vadd.f32 %v799, %v2505
    %v2508 = vxor.u32 %v2507, 2147483648
    %v2509 = vmul.f32 %v2508, 1.442695
    %v2510 = vpow.pop %v2509
    %v2511 = vadd.f32 %v2510, 1.0
    %v2512 = vrcp.pop %v2511
    %v2513 = vmul.f32 1.0, %v2512
    %v2515 = vrot.slane %v2432, 2
    %v2517 = vadd.f32 %v801, %v2515
    %v2518 = vxor.u32 %v2517, 2147483648
    %v2519 = vmul.f32 %v2518, 1.442695
    %v2520 = vpow.pop %v2519
    %v2521 = vadd.f32 %v2520, 1.0
    %v2522 = vrcp.pop %v2521
    %v2523 = vmul.f32 1.0, %v2522
    %v2524 = vadd.f32 %v2501, %v1172
    %v2526 = vrot.slane %v2524, 2
    %v2528 = vmul.f32 %v2513, %v2526
    %v2529 = vadd.f32 %v876, %v2528
    %v2530 = vtanh.pop %v2529
    %v2531 = vsub.f32 1.0, %v2523
    %v2532 = vmul.f32 %v2531, %v2530
    %v2533 = vrot.slane %v2084, 6
    %v2535 = vmul.f32 %v2523, %v2533
    %v2536 = vadd.f32 %v2532, %v2535
    %v2537 = vld [vmem:[#allocation17] sm:$0xff]
    %v2538 = vld [vmem:[#allocation17 + $0x8] sm:$0xff]
    %v2539 = vld [vmem:[#allocation17 + $0x10] sm:$0xff]
    %v2540 = vld [vmem:[#allocation17 + $0x18] sm:$0xff]
    %v2541 = vld [vmem:[#allocation17 + $0x20] sm:$0xff]
    %v2542 = vld [vmem:[#allocation17 + $0x28] sm:$0xff]
    %v2543 = vld [vmem:[#allocation17 + $0x30] sm:$0xff]
    %v2544 = vld [vmem:[#allocation17 + $0x38] sm:$0xff]
    %v2545 = vld [vmem:[#allocation17 + $0x40] sm:$0xff]
    %v2546 = vld [vmem:[#allocation17 + $0x48] sm:$0xff]
    %v2547 = vld [vmem:[#allocation17 + $0x50] sm:$0xff]
    %v2548 = vld [vmem:[#allocation17 + $0x58] sm:$0xff]
    %v2549 = vld [vmem:[#allocation17 + $0x60] sm:$0xff]
    %v2550 = vld [vmem:[#allocation17 + $0x68] sm:$0xff]
    %v2551 = vld [vmem:[#allocation17 + $0x70] sm:$0xff]
    %v2552 = vld [vmem:[#allocation17 + $0x78] sm:$0xff]
    %v2553 = vld [vmem:[#allocation17 + $0x80] sm:$0xff]
    %v2554 = vld [vmem:[#allocation17 + $0x88] sm:$0xff]
    %v2555 = vld [vmem:[#allocation17 + $0x90] sm:$0xff]
    %v2556 = vld [vmem:[#allocation17 + $0x98] sm:$0xff]
    %v2557 = vld [vmem:[#allocation17 + $0xa0] sm:$0xff]
    %v2558 = vld [vmem:[#allocation17 + $0xa8] sm:$0xff]
    %v2559 = vld [vmem:[#allocation17 + $0xb0] sm:$0xff]
    %v2560 = vld [vmem:[#allocation17 + $0xb8] sm:$0xff]
    %v2561 = vld [vmem:[#allocation17 + $0xc0] sm:$0xff]
    %v2562 = vld [vmem:[#allocation17 + $0xc8] sm:$0xff]
    %v2563 = vld [vmem:[#allocation17 + $0xd0] sm:$0xff]
    %v2564 = vld [vmem:[#allocation17 + $0xd8] sm:$0xff]
    %v2565 = vld [vmem:[#allocation17 + $0xe0] sm:$0xff]
    %v2566 = vld [vmem:[#allocation17 + $0xe8] sm:$0xff]
    %v2567 = vld [vmem:[#allocation17 + $0xf0] sm:$0xff]
    %v2568 = vld [vmem:[#allocation17 + $0xf8] sm:$0xff]
    %v2569 = vld [vmem:[#allocation17 + $0x100] sm:$0xff]
    %v2570 = vld [vmem:[#allocation17 + $0x108] sm:$0xff]
    %v2571 = vld [vmem:[#allocation17 + $0x110] sm:$0xff]
    %v2572 = vld [vmem:[#allocation17 + $0x118] sm:$0xff]
    %v2573 = vld [vmem:[#allocation17 + $0x120] sm:$0xff]
    %v2574 = vld [vmem:[#allocation17 + $0x128] sm:$0xff]
    %v2575 = vld [vmem:[#allocation17 + $0x130] sm:$0xff]
    %v2576 = vld [vmem:[#allocation17 + $0x138] sm:$0xff]
    %v2577 = vld [vmem:[#allocation17 + $0x140] sm:$0xff]
    %v2578 = vld [vmem:[#allocation17 + $0x148] sm:$0xff]
    %v2579 = vld [vmem:[#allocation17 + $0x150] sm:$0xff]
    %v2580 = vld [vmem:[#allocation17 + $0x158] sm:$0xff]
    %v2581 = vld [vmem:[#allocation17 + $0x160] sm:$0xff]
    %v2582 = vld [vmem:[#allocation17 + $0x168] sm:$0xff]
    %v2583 = vld [vmem:[#allocation17 + $0x170] sm:$0xff]
    %v2584 = vld [vmem:[#allocation17 + $0x178] sm:$0xff]
    %v2586 = vrot.slane %v2309, 2
    %2588 = vmatprep.subr.mxu0 %v2538
    %2589 = vmatpush1.msra.mxu0 %v2537
    %2590 = vmatprep.subr.mxu0 %v2541
    %2591 = vmatpush1.msra.mxu0 %v2540
    %2592 = vmatprep.subr.mxu0 %v2544
    %2593 = vmatpush1.msra.mxu0 %v2543
    %2594 = vmatprep.subr.mxu0 %v2547
    %2595 = vmatpush1.msra.mxu0 %v2546
    %2596 = vmatprep.subr.mxu0 %v2550
    %2597 = vmatpush1.msra.mxu0 %v2549
    %2598 = vmatprep.subr.mxu0 %v2553
    %2599 = vmatpush1.msra.mxu0 %v2552
    %2600 = vmatprep.subr.mxu0 %v2556
    %2601 = vmatpush1.msra.mxu0 %v2555
    %2602 = vmatprep.subr.mxu0 %v2559
    %2603 = vmatpush1.msra.mxu0 %v2558
    %2604 = vmatprep.subr.mxu0 %v2562
    %2605 = vmatpush1.msra.mxu0 %v2561
    %2606 = vmatprep.subr.mxu0 %v2565
    %2607 = vmatpush1.msra.mxu0 %v2564
    %2608 = vmatprep.subr.mxu0 %v2568
    %2609 = vmatpush1.msra.mxu0 %v2567
    %2610 = vmatprep.subr.mxu0 %v2571
    %2611 = vmatpush1.msra.mxu0 %v2570
    %2612 = vmatprep.subr.mxu0 %v2574
    %2613 = vmatpush1.msra.mxu0 %v2573
    %2614 = vmatprep.subr.mxu0 %v2577
    %2615 = vmatpush1.msra.mxu0 %v2576
    %2616 = vmatprep.subr.mxu0 %v2580
    %2617 = vmatpush1.msra.mxu0 %v2579
    %2618 = vmatprep.subr.mxu0 %v2583
    %2619 = vmatpush1.msra.mxu0 %v2582
    %2620 = vmatprep.subr.mxu0 0.0
    %2621 = vmatpush1.msra.mxu0 0.0
    %2622 = vmatprep.subr.mxu0 0.0
    %2623 = vmatpush1.msra.mxu0 0.0
    %2624 = vmatprep.subr.mxu0 0.0
    %2625 = vmatpush1.msra.mxu0 0.0
    %2626 = vmatprep.subr.mxu0 0.0
    %2627 = vmatpush1.msra.mxu0 0.0
    %2628 = vmatprep.subr.mxu0 0.0
    %2629 = vmatpush1.msra.mxu0 0.0
    %2630 = vmatprep.subr.mxu0 0.0
    %2631 = vmatpush1.msra.mxu0 0.0
    %2632 = vmatprep.subr.mxu0 0.0
    %2633 = vmatpush1.msra.mxu0 0.0
    %2634 = vmatprep.subr.mxu0 0.0
    %2635 = vmatpush1.msra.mxu0 0.0
    %2636 = vmatprep.subr.mxu0 0.0
    %2637 = vmatpush1.msra.mxu0 0.0
    %2638 = vmatprep.subr.mxu0 0.0
    %2639 = vmatpush1.msra.mxu0 0.0
    %2640 = vmatprep.subr.mxu0 0.0
    %2641 = vmatpush1.msra.mxu0 0.0
    %2642 = vmatprep.subr.mxu0 0.0
    %2643 = vmatpush1.msra.mxu0 0.0
    %2644 = vmatprep.subr.mxu0 0.0
    %2645 = vmatpush1.msra.mxu0 0.0
    %2646 = vmatprep.subr.mxu0 0.0
    %2647 = vmatpush1.msra.mxu0 0.0
    %2648 = vmatprep.subr.mxu0 0.0
    %2649 = vmatpush1.msra.mxu0 0.0
    %2650 = vmatprep.subr.mxu0 0.0
    %2651 = vmatpush1.msra.mxu0 0.0
    %2652 = vmatprep.mubr.f32.mxu0 0.0
    %2653 = vmatmul.mubr.f32.gmra.mrb[0].mxu0 %v2586
    %v2654 = vpop.f32.mrb[0].mxu0
    %v2655 = vadd.f32 0.0, %v2654
    %v2656 = vpop.f32.mrb[0].mxu0
    %v2657 = vadd.f32 0.0, %v2656
    %2658 = vdwg.mxu0
    %2659 = vmatprep.subr.mxu0 0.0
    %2660 = vmatpush1.msra.mxu0 %v2539
    %2661 = vmatprep.subr.mxu0 0.0
    %2662 = vmatpush1.msra.mxu0 %v2542
    %2663 = vmatprep.subr.mxu0 0.0
    %2664 = vmatpush1.msra.mxu0 %v2545
    %2665 = vmatprep.subr.mxu0 0.0
    %2666 = vmatpush1.msra.mxu0 %v2548
    %2667 = vmatprep.subr.mxu0 0.0
    %2668 = vmatpush1.msra.mxu0 %v2551
    %2669 = vmatprep.subr.mxu0 0.0
    %2670 = vmatpush1.msra.mxu0 %v2554
    %2671 = vmatprep.subr.mxu0 0.0
    %2672 = vmatpush1.msra.mxu0 %v2557
    %2673 = vmatprep.subr.mxu0 0.0
    %2674 = vmatpush1.msra.mxu0 %v2560
    %2675 = vmatprep.subr.mxu0 0.0
    %2676 = vmatpush1.msra.mxu0 %v2563
    %2677 = vmatprep.subr.mxu0 0.0
    %2678 = vmatpush1.msra.mxu0 %v2566
    %2679 = vmatprep.subr.mxu0 0.0
    %2680 = vmatpush1.msra.mxu0 %v2569
    %2681 = vmatprep.subr.mxu0 0.0
    %2682 = vmatpush1.msra.mxu0 %v2572
    %2683 = vmatprep.subr.mxu0 0.0
    %2684 = vmatpush1.msra.mxu0 %v2575
    %2685 = vmatprep.subr.mxu0 0.0
    %2686 = vmatpush1.msra.mxu0 %v2578
    %2687 = vmatprep.subr.mxu0 0.0
    %2688 = vmatpush1.msra.mxu0 %v2581
    %2689 = vmatprep.subr.mxu0 0.0
    %2690 = vmatpush1.msra.mxu0 %v2584
    %2691 = vmatprep.subr.mxu0 0.0
    %2692 = vmatpush1.msra.mxu0 0.0
    %2693 = vmatprep.subr.mxu0 0.0
    %2694 = vmatpush1.msra.mxu0 0.0
    %2695 = vmatprep.subr.mxu0 0.0
    %2696 = vmatpush1.msra.mxu0 0.0
    %2697 = vmatprep.subr.mxu0 0.0
    %2698 = vmatpush1.msra.mxu0 0.0
    %2699 = vmatprep.subr.mxu0 0.0
    %2700 = vmatpush1.msra.mxu0 0.0
    %2701 = vmatprep.subr.mxu0 0.0
    %2702 = vmatpush1.msra.mxu0 0.0
    %2703 = vmatprep.subr.mxu0 0.0
    %2704 = vmatpush1.msra.mxu0 0.0
    %2705 = vmatprep.subr.mxu0 0.0
    %2706 = vmatpush1.msra.mxu0 0.0
    %2707 = vmatprep.subr.mxu0 0.0
    %2708 = vmatpush1.msra.mxu0 0.0
    %2709 = vmatprep.subr.mxu0 0.0
    %2710 = vmatpush1.msra.mxu0 0.0
    %2711 = vmatprep.subr.mxu0 0.0
    %2712 = vmatpush1.msra.mxu0 0.0
    %2713 = vmatprep.subr.mxu0 0.0
    %2714 = vmatpush1.msra.mxu0 0.0
    %2715 = vmatprep.subr.mxu0 0.0
    %2716 = vmatpush1.msra.mxu0 0.0
    %2717 = vmatprep.subr.mxu0 0.0
    %2718 = vmatpush1.msra.mxu0 0.0
    %2719 = vmatprep.subr.mxu0 0.0
    %2720 = vmatpush1.msra.mxu0 0.0
    %2721 = vmatprep.subr.mxu0 0.0
    %2722 = vmatpush1.msra.mxu0 0.0
    %2723 = vmatprep.mubr.f32.mxu0 0.0
    %2724 = vmatmul.mubr.f32.gmra.mrb[0].mxu0 %v2586
    %v2725 = vpop.f32.mrb[0].mxu0
    %v2726 = vadd.f32 0.0, %v2725
    %v2727 = vpop.f32.mrb[0].mxu0
    %2728 = vdwg.mxu0
    %v2729 = vadd.f32 %v884, %v2655
    %v2730 = vxor.u32 %v2729, 2147483648
    %v2731 = vmul.f32 %v2730, 1.442695
    %v2732 = vpow.pop %v2731
    %v2733 = vadd.f32 %v2732, 1.0
    %v2734 = vrcp.pop %v2733
    %v2735 = vmul.f32 1.0, %v2734
    %v2736 = vadd.f32 %v959, %v2657
    %v2737 = vxor.u32 %v2736, 2147483648
    %v2738 = vmul.f32 %v2737, 1.442695
    %v2739 = vpow.pop %v2738
    %v2740 = vadd.f32 %v2739, 1.0
    %v2741 = vrcp.pop %v2740
    %v2742 = vmul.f32 1.0, %v2741
    %v2743 = vadd.f32 %v2726, %v1395
    %v2744 = vmul.f32 %v2735, %v2743
    %v2745 = vadd.f32 %v961, %v2744
    %v2746 = vtanh.pop %v2745
    %v2747 = vsub.f32 1.0, %v2742
    %v2748 = vmul.f32 %v2747, %v2746
    %v2749 = vmul.f32 %v2742, %v2586
    %v2750 = vadd.f32 %v2748, %v2749
    %2751 = vst [vmem:[#allocation2] sm:$0xc0] %v2536
    %2752 = vst [vmem:[#allocation2 + $0x18] sm:$0x3] %v2750
    %v2753 = vld [vmem:[#allocation15] sm:$0xff]
    %v2754 = vld [vmem:[#allocation15 + $0x8] sm:$0xff]
    %v2755 = vld [vmem:[#allocation15 + $0x10] sm:$0xff]
    %v2756 = vld [vmem:[#allocation15 + $0x18] sm:$0xff]
    %v2757 = vld [vmem:[#allocation15 + $0x20] sm:$0xff]
    %v2758 = vld [vmem:[#allocation15 + $0x28] sm:$0xff]
    %v2759 = vld [vmem:[#allocation15 + $0x30] sm:$0xff]
    %v2760 = vld [vmem:[#allocation15 + $0x38] sm:$0xff]
    %v2761 = vld [vmem:[#allocation15 + $0x40] sm:$0xff]
    %v2762 = vld [vmem:[#allocation15 + $0x48] sm:$0xff]
    %v2763 = vld [vmem:[#allocation15 + $0x50] sm:$0xff]
    %v2764 = vld [vmem:[#allocation15 + $0x58] sm:$0xff]
    %v2765 = vld [vmem:[#allocation15 + $0x60] sm:$0xff]
    %v2766 = vld [vmem:[#allocation15 + $0x68] sm:$0xff]
    %v2767 = vld [vmem:[#allocation15 + $0x70] sm:$0xff]
    %v2768 = vld [vmem:[#allocation15 + $0x78] sm:$0xff]
    %v2769 = vld [vmem:[#allocation15 + $0x80] sm:$0xff]
    %v2770 = vld [vmem:[#allocation15 + $0x88] sm:$0xff]
    %v2771 = vld [vmem:[#allocation15 + $0x90] sm:$0xff]
    %v2772 = vld [vmem:[#allocation15 + $0x98] sm:$0xff]
    %v2773 = vld [vmem:[#allocation15 + $0xa0] sm:$0xff]
    %v2774 = vld [vmem:[#allocation15 + $0xa8] sm:$0xff]
    %v2775 = vld [vmem:[#allocation15 + $0xb0] sm:$0xff]
    %v2776 = vld [vmem:[#allocation15 + $0xb8] sm:$0xff]
    %v2777 = vld [vmem:[#allocation15 + $0xc0] sm:$0xff]
    %v2778 = vld [vmem:[#allocation15 + $0xc8] sm:$0xff]
    %v2779 = vld [vmem:[#allocation15 + $0xd0] sm:$0xff]
    %v2780 = vld [vmem:[#allocation15 + $0xd8] sm:$0xff]
    %v2781 = vld [vmem:[#allocation15 + $0xe0] sm:$0xff]
    %v2782 = vld [vmem:[#allocation15 + $0xe8] sm:$0xff]
    %v2783 = vld [vmem:[#allocation15 + $0xf0] sm:$0xff]
    %v2784 = vld [vmem:[#allocation15 + $0xf8] sm:$0xff]
    %v2785 = vld [vmem:[#allocation15 + $0x100] sm:$0xff]
    %v2786 = vld [vmem:[#allocation15 + $0x108] sm:$0xff]
    %v2787 = vld [vmem:[#allocation15 + $0x110] sm:$0xff]
    %v2788 = vld [vmem:[#allocation15 + $0x118] sm:$0xff]
    %v2789 = vld [vmem:[#allocation15 + $0x120] sm:$0xff]
    %v2790 = vld [vmem:[#allocation15 + $0x128] sm:$0xff]
    %v2791 = vld [vmem:[#allocation15 + $0x130] sm:$0xff]
    %v2792 = vld [vmem:[#allocation15 + $0x138] sm:$0xff]
    %v2793 = vld [vmem:[#allocation15 + $0x140] sm:$0xff]
    %v2794 = vld [vmem:[#allocation15 + $0x148] sm:$0xff]
    %v2795 = vld [vmem:[#allocation15 + $0x150] sm:$0xff]
    %v2796 = vld [vmem:[#allocation15 + $0x158] sm:$0xff]
    %v2797 = vld [vmem:[#allocation15 + $0x160] sm:$0xff]
    %v2798 = vld [vmem:[#allocation15 + $0x168] sm:$0xff]
    %v2799 = vld [vmem:[#allocation15 + $0x170] sm:$0xff]
    %v2800 = vld [vmem:[#allocation15 + $0x178] sm:$0xff]
    %v2802 = vrot.slane %v2536, 6
    %2804 = vmatprep.subr.mxu0 %v2754
    %2805 = vmatpush1.msra.mxu0 %v2753
    %2806 = vmatprep.subr.mxu0 %v2757
    %2807 = vmatpush1.msra.mxu0 %v2756
    %2808 = vmatprep.subr.mxu0 %v2760
    %2809 = vmatpush1.msra.mxu0 %v2759
    %2810 = vmatprep.subr.mxu0 %v2763
    %2811 = vmatpush1.msra.mxu0 %v2762
    %2812 = vmatprep.subr.mxu0 %v2766
    %2813 = vmatpush1.msra.mxu0 %v2765
    %2814 = vmatprep.subr.mxu0 %v2769
    %2815 = vmatpush1.msra.mxu0 %v2768
    %2816 = vmatprep.subr.mxu0 %v2772
    %2817 = vmatpush1.msra.mxu0 %v2771
    %2818 = vmatprep.subr.mxu0 %v2775
    %2819 = vmatpush1.msra.mxu0 %v2774
    %2820 = vmatprep.subr.mxu0 %v2778
    %2821 = vmatpush1.msra.mxu0 %v2777
    %2822 = vmatprep.subr.mxu0 %v2781
    %2823 = vmatpush1.msra.mxu0 %v2780
    %2824 = vmatprep.subr.mxu0 %v2784
    %2825 = vmatpush1.msra.mxu0 %v2783
    %2826 = vmatprep.subr.mxu0 %v2787
    %2827 = vmatpush1.msra.mxu0 %v2786
    %2828 = vmatprep.subr.mxu0 %v2790
    %2829 = vmatpush1.msra.mxu0 %v2789
    %2830 = vmatprep.subr.mxu0 %v2793
    %2831 = vmatpush1.msra.mxu0 %v2792
    %2832 = vmatprep.subr.mxu0 %v2796
    %2833 = vmatpush1.msra.mxu0 %v2795
    %2834 = vmatprep.subr.mxu0 %v2799
    %2835 = vmatpush1.msra.mxu0 %v2798
    %2836 = vmatprep.subr.mxu0 0.0
    %2837 = vmatpush1.msra.mxu0 0.0
    %2838 = vmatprep.subr.mxu0 0.0
    %2839 = vmatpush1.msra.mxu0 0.0
    %2840 = vmatprep.subr.mxu0 0.0
    %2841 = vmatpush1.msra.mxu0 0.0
    %2842 = vmatprep.subr.mxu0 0.0
    %2843 = vmatpush1.msra.mxu0 0.0
    %2844 = vmatprep.subr.mxu0 0.0
    %2845 = vmatpush1.msra.mxu0 0.0
    %2846 = vmatprep.subr.mxu0 0.0
    %2847 = vmatpush1.msra.mxu0 0.0
    %2848 = vmatprep.subr.mxu0 0.0
    %2849 = vmatpush1.msra.mxu0 0.0
    %2850 = vmatprep.subr.mxu0 0.0
    %2851 = vmatpush1.msra.mxu0 0.0
    %2852 = vmatprep.subr.mxu0 0.0
    %2853 = vmatpush1.msra.mxu0 0.0
    %2854 = vmatprep.subr.mxu0 0.0
    %2855 = vmatpush1.msra.mxu0 0.0
    %2856 = vmatprep.subr.mxu0 0.0
    %2857 = vmatpush1.msra.mxu0 0.0
    %2858 = vmatprep.subr.mxu0 0.0
    %2859 = vmatpush1.msra.mxu0 0.0
    %2860 = vmatprep.subr.mxu0 0.0
    %2861 = vmatpush1.msra.mxu0 0.0
    %2862 = vmatprep.subr.mxu0 0.0
    %2863 = vmatpush1.msra.mxu0 0.0
    %2864 = vmatprep.subr.mxu0 0.0
    %2865 = vmatpush1.msra.mxu0 0.0
    %2866 = vmatprep.subr.mxu0 0.0
    %2867 = vmatpush1.msra.mxu0 0.0
    %2868 = vmatprep.mubr.f32.mxu0 0.0
    %2869 = vmatmul.mubr.f32.gmra.mrb[0].mxu0 %v2802
    %v2870 = vpop.f32.mrb[0].mxu0
    %v2871 = vadd.f32 0.0, %v2870
    %v2872 = vpop.f32.mrb[0].mxu0
    %v2873 = vadd.f32 0.0, %v2872
    %2874 = vdwg.mxu0
    %2875 = vmatprep.subr.mxu0 0.0
    %2876 = vmatpush1.msra.mxu0 %v2755
    %2877 = vmatprep.subr.mxu0 0.0
    %2878 = vmatpush1.msra.mxu0 %v2758
    %2879 = vmatprep.subr.mxu0 0.0
    %2880 = vmatpush1.msra.mxu0 %v2761
    %2881 = vmatprep.subr.mxu0 0.0
    %2882 = vmatpush1.msra.mxu0 %v2764
    %2883 = vmatprep.subr.mxu0 0.0
    %2884 = vmatpush1.msra.mxu0 %v2767
    %2885 = vmatprep.subr.mxu0 0.0
    %2886 = vmatpush1.msra.mxu0 %v2770
    %2887 = vmatprep.subr.mxu0 0.0
    %2888 = vmatpush1.msra.mxu0 %v2773
    %2889 = vmatprep.subr.mxu0 0.0
    %2890 = vmatpush1.msra.mxu0 %v2776
    %2891 = vmatprep.subr.mxu0 0.0
    %2892 = vmatpush1.msra.mxu0 %v2779
    %2893 = vmatprep.subr.mxu0 0.0
    %2894 = vmatpush1.msra.mxu0 %v2782
    %2895 = vmatprep.subr.mxu0 0.0
    %2896 = vmatpush1.msra.mxu0 %v2785
    %2897 = vmatprep.subr.mxu0 0.0
    %2898 = vmatpush1.msra.mxu0 %v2788
    %2899 = vmatprep.subr.mxu0 0.0
    %2900 = vmatpush1.msra.mxu0 %v2791
    %2901 = vmatprep.subr.mxu0 0.0
    %2902 = vmatpush1.msra.mxu0 %v2794
    %2903 = vmatprep.subr.mxu0 0.0
    %2904 = vmatpush1.msra.mxu0 %v2797
    %2905 = vmatprep.subr.mxu0 0.0
    %2906 = vmatpush1.msra.mxu0 %v2800
    %2907 = vmatprep.subr.mxu0 0.0
    %2908 = vmatpush1.msra.mxu0 0.0
    %2909 = vmatprep.subr.mxu0 0.0
    %2910 = vmatpush1.msra.mxu0 0.0
    %2911 = vmatprep.subr.mxu0 0.0
    %2912 = vmatpush1.msra.mxu0 0.0
    %2913 = vmatprep.subr.mxu0 0.0
    %2914 = vmatpush1.msra.mxu0 0.0
    %2915 = vmatprep.subr.mxu0 0.0
    %2916 = vmatpush1.msra.mxu0 0.0
    %2917 = vmatprep.subr.mxu0 0.0
    %2918 = vmatpush1.msra.mxu0 0.0
    %2919 = vmatprep.subr.mxu0 0.0
    %2920 = vmatpush1.msra.mxu0 0.0
    %2921 = vmatprep.subr.mxu0 0.0
    %2922 = vmatpush1.msra.mxu0 0.0
    %2923 = vmatprep.subr.mxu0 0.0
    %2924 = vmatpush1.msra.mxu0 0.0
    %2925 = vmatprep.subr.mxu0 0.0
    %2926 = vmatpush1.msra.mxu0 0.0
    %2927 = vmatprep.subr.mxu0 0.0
    %2928 = vmatpush1.msra.mxu0 0.0
    %2929 = vmatprep.subr.mxu0 0.0
    %2930 = vmatpush1.msra.mxu0 0.0
    %2931 = vmatprep.subr.mxu0 0.0
    %2932 = vmatpush1.msra.mxu0 0.0
    %2933 = vmatprep.subr.mxu0 0.0
    %2934 = vmatpush1.msra.mxu0 0.0
    %2935 = vmatprep.subr.mxu0 0.0
    %2936 = vmatpush1.msra.mxu0 0.0
    %2937 = vmatprep.subr.mxu0 0.0
    %2938 = vmatpush1.msra.mxu0 0.0
    %2939 = vmatprep.mubr.f32.mxu0 0.0
    %2940 = vmatmul.mubr.f32.gmra.mrb[0].mxu0 %v2802
    %v2941 = vpop.f32.mrb[0].mxu0
    %v2942 = vadd.f32 0.0, %v2941
    %v2943 = vpop.f32.mrb[0].mxu0
    %2944 = vdwg.mxu0
    %v2945 = vadd.f32 %v805, %v2871
    %v2946 = vxor.u32 %v2945, 2147483648
    %v2947 = vmul.f32 %v2946, 1.442695
    %v2948 = vpow.pop %v2947
    %v2949 = vadd.f32 %v2948, 1.0
    %v2950 = vrcp.pop %v2949
    %v2951 = vmul.f32 1.0, %v2950
    %v2952 = vadd.f32 %v807, %v2873
    %v2953 = vxor.u32 %v2952, 2147483648
    %v2954 = vmul.f32 %v2953, 1.442695
    %v2955 = vpow.pop %v2954
    %v2956 = vadd.f32 %v2955, 1.0
    %v2957 = vrcp.pop %v2956
    %v2958 = vmul.f32 1.0, %v2957
    %v2959 = vadd.f32 %v2942, %v1172
    %v2960 = vmul.f32 %v2951, %v2959
    %v2961 = vadd.f32 %v882, %v2960
    %v2962 = vtanh.pop %v2961
    %v2963 = vsub.f32 1.0, %v2958
    %v2964 = vmul.f32 %v2963, %v2962
    %v2965 = vmul.f32 %v2958, %v2802
    %v2966 = vadd.f32 %v2964, %v2965
    %v2967 = vld [vmem:[#allocation17] sm:$0xff]
    %v2968 = vld [vmem:[#allocation17 + $0x8] sm:$0xff]
    %v2969 = vld [vmem:[#allocation17 + $0x10] sm:$0xff]
    %v2970 = vld [vmem:[#allocation17 + $0x18] sm:$0xff]
    %v2971 = vld [vmem:[#allocation17 + $0x20] sm:$0xff]
    %v2972 = vld [vmem:[#allocation17 + $0x28] sm:$0xff]
    %v2973 = vld [vmem:[#allocation17 + $0x30] sm:$0xff]
    %v2974 = vld [vmem:[#allocation17 + $0x38] sm:$0xff]
    %v2975 = vld [vmem:[#allocation17 + $0x40] sm:$0xff]
    %v2976 = vld [vmem:[#allocation17 + $0x48] sm:$0xff]
    %v2977 = vld [vmem:[#allocation17 + $0x50] sm:$0xff]
    %v2978 = vld [vmem:[#allocation17 + $0x58] sm:$0xff]
    %v2979 = vld [vmem:[#allocation17 + $0x60] sm:$0xff]
    %v2980 = vld [vmem:[#allocation17 + $0x68] sm:$0xff]
    %v2981 = vld [vmem:[#allocation17 + $0x70] sm:$0xff]
    %v2982 = vld [vmem:[#allocation17 + $0x78] sm:$0xff]
    %v2983 = vld [vmem:[#allocation17 + $0x80] sm:$0xff]
    %v2984 = vld [vmem:[#allocation17 + $0x88] sm:$0xff]
    %v2985 = vld [vmem:[#allocation17 + $0x90] sm:$0xff]
    %v2986 = vld [vmem:[#allocation17 + $0x98] sm:$0xff]
    %v2987 = vld [vmem:[#allocation17 + $0xa0] sm:$0xff]
    %v2988 = vld [vmem:[#allocation17 + $0xa8] sm:$0xff]
    %v2989 = vld [vmem:[#allocation17 + $0xb0] sm:$0xff]
    %v2990 = vld [vmem:[#allocation17 + $0xb8] sm:$0xff]
    %v2991 = vld [vmem:[#allocation17 + $0xc0] sm:$0xff]
    %v2992 = vld [vmem:[#allocation17 + $0xc8] sm:$0xff]
    %v2993 = vld [vmem:[#allocation17 + $0xd0] sm:$0xff]
    %v2994 = vld [vmem:[#allocation17 + $0xd8] sm:$0xff]
    %v2995 = vld [vmem:[#allocation17 + $0xe0] sm:$0xff]
    %v2996 = vld [vmem:[#allocation17 + $0xe8] sm:$0xff]
    %v2997 = vld [vmem:[#allocation17 + $0xf0] sm:$0xff]
    %v2998 = vld [vmem:[#allocation17 + $0xf8] sm:$0xff]
    %v2999 = vld [vmem:[#allocation17 + $0x100] sm:$0xff]
    %v3000 = vld [vmem:[#allocation17 + $0x108] sm:$0xff]
    %v3001 = vld [vmem:[#allocation17 + $0x110] sm:$0xff]
    %v3002 = vld [vmem:[#allocation17 + $0x118] sm:$0xff]
    %v3003 = vld [vmem:[#allocation17 + $0x120] sm:$0xff]
    %v3004 = vld [vmem:[#allocation17 + $0x128] sm:$0xff]
    %v3005 = vld [vmem:[#allocation17 + $0x130] sm:$0xff]
    %v3006 = vld [vmem:[#allocation17 + $0x138] sm:$0xff]
    %v3007 = vld [vmem:[#allocation17 + $0x140] sm:$0xff]
    %v3008 = vld [vmem:[#allocation17 + $0x148] sm:$0xff]
    %v3009 = vld [vmem:[#allocation17 + $0x150] sm:$0xff]
    %v3010 = vld [vmem:[#allocation17 + $0x158] sm:$0xff]
    %v3011 = vld [vmem:[#allocation17 + $0x160] sm:$0xff]
    %v3012 = vld [vmem:[#allocation17 + $0x168] sm:$0xff]
    %v3013 = vld [vmem:[#allocation17 + $0x170] sm:$0xff]
    %v3014 = vld [vmem:[#allocation17 + $0x178] sm:$0xff]
    %3015 = vmatprep.subr.mxu0 %v2968
    %3016 = vmatpush1.msra.mxu0 %v2967
    %3017 = vmatprep.subr.mxu0 %v2971
    %3018 = vmatpush1.msra.mxu0 %v2970
    %3019 = vmatprep.subr.mxu0 %v2974
    %3020 = vmatpush1.msra.mxu0 %v2973
    %3021 = vmatprep.subr.mxu0 %v2977
    %3022 = vmatpush1.msra.mxu0 %v2976
    %3023 = vmatprep.subr.mxu0 %v2980
    %3024 = vmatpush1.msra.mxu0 %v2979
    %3025 = vmatprep.subr.mxu0 %v2983
    %3026 = vmatpush1.msra.mxu0 %v2982
    %3027 = vmatprep.subr.mxu0 %v2986
    %3028 = vmatpush1.msra.mxu0 %v2985
    %3029 = vmatprep.subr.mxu0 %v2989
    %3030 = vmatpush1.msra.mxu0 %v2988
    %3031 = vmatprep.subr.mxu0 %v2992
    %3032 = vmatpush1.msra.mxu0 %v2991
    %3033 = vmatprep.subr.mxu0 %v2995
    %3034 = vmatpush1.msra.mxu0 %v2994
    %3035 = vmatprep.subr.mxu0 %v2998
    %3036 = vmatpush1.msra.mxu0 %v2997
    %3037 = vmatprep.subr.mxu0 %v3001
    %3038 = vmatpush1.msra.mxu0 %v3000
    %3039 = vmatprep.subr.mxu0 %v3004
    %3040 = vmatpush1.msra.mxu0 %v3003
    %3041 = vmatprep.subr.mxu0 %v3007
    %3042 = vmatpush1.msra.mxu0 %v3006
    %3043 = vmatprep.subr.mxu0 %v3010
    %3044 = vmatpush1.msra.mxu0 %v3009
    %3045 = vmatprep.subr.mxu0 %v3013
    %3046 = vmatpush1.msra.mxu0 %v3012
    %3047 = vmatprep.subr.mxu0 0.0
    %3048 = vmatpush1.msra.mxu0 0.0
    %3049 = vmatprep.subr.mxu0 0.0
    %3050 = vmatpush1.msra.mxu0 0.0
    %3051 = vmatprep.subr.mxu0 0.0
    %3052 = vmatpush1.msra.mxu0 0.0
    %3053 = vmatprep.subr.mxu0 0.0
    %3054 = vmatpush1.msra.mxu0 0.0
    %3055 = vmatprep.subr.mxu0 0.0
    %3056 = vmatpush1.msra.mxu0 0.0
    %3057 = vmatprep.subr.mxu0 0.0
    %3058 = vmatpush1.msra.mxu0 0.0
    %3059 = vmatprep.subr.mxu0 0.0
    %3060 = vmatpush1.msra.mxu0 0.0
    %3061 = vmatprep.subr.mxu0 0.0
    %3062 = vmatpush1.msra.mxu0 0.0
    %3063 = vmatprep.subr.mxu0 0.0
    %3064 = vmatpush1.msra.mxu0 0.0
    %3065 = vmatprep.subr.mxu0 0.0
    %3066 = vmatpush1.msra.mxu0 0.0
    %3067 = vmatprep.subr.mxu0 0.0
    %3068 = vmatpush1.msra.mxu0 0.0
    %3069 = vmatprep.subr.mxu0 0.0
    %3070 = vmatpush1.msra.mxu0 0.0
    %3071 = vmatprep.subr.mxu0 0.0
    %3072 = vmatpush1.msra.mxu0 0.0
    %3073 = vmatprep.subr.mxu0 0.0
    %3074 = vmatpush1.msra.mxu0 0.0
    %3075 = vmatprep.subr.mxu0 0.0
    %3076 = vmatpush1.msra.mxu0 0.0
    %3077 = vmatprep.subr.mxu0 0.0
    %3078 = vmatpush1.msra.mxu0 0.0
    %3079 = vmatprep.mubr.f32.mxu0 0.0
    %3080 = vmatmul.mubr.f32.gmra.mrb[0].mxu0 %v2750
    %v3081 = vpop.f32.mrb[0].mxu0
    %v3082 = vadd.f32 0.0, %v3081
    %v3083 = vpop.f32.mrb[0].mxu0
    %v3084 = vadd.f32 0.0, %v3083
    %3085 = vdwg.mxu0
    %3086 = vmatprep.subr.mxu0 0.0
    %3087 = vmatpush1.msra.mxu0 %v2969
    %3088 = vmatprep.subr.mxu0 0.0
    %3089 = vmatpush1.msra.mxu0 %v2972
    %3090 = vmatprep.subr.mxu0 0.0
    %3091 = vmatpush1.msra.mxu0 %v2975
    %3092 = vmatprep.subr.mxu0 0.0
    %3093 = vmatpush1.msra.mxu0 %v2978
    %3094 = vmatprep.subr.mxu0 0.0
    %3095 = vmatpush1.msra.mxu0 %v2981
    %3096 = vmatprep.subr.mxu0 0.0
    %3097 = vmatpush1.msra.mxu0 %v2984
    %3098 = vmatprep.subr.mxu0 0.0
    %3099 = vmatpush1.msra.mxu0 %v2987
    %3100 = vmatprep.subr.mxu0 0.0
    %3101 = vmatpush1.msra.mxu0 %v2990
    %3102 = vmatprep.subr.mxu0 0.0
    %3103 = vmatpush1.msra.mxu0 %v2993
    %3104 = vmatprep.subr.mxu0 0.0
    %3105 = vmatpush1.msra.mxu0 %v2996
    %3106 = vmatprep.subr.mxu0 0.0
    %3107 = vmatpush1.msra.mxu0 %v2999
    %3108 = vmatprep.subr.mxu0 0.0
    %3109 = vmatpush1.msra.mxu0 %v3002
    %3110 = vmatprep.subr.mxu0 0.0
    %3111 = vmatpush1.msra.mxu0 %v3005
    %3112 = vmatprep.subr.mxu0 0.0
    %3113 = vmatpush1.msra.mxu0 %v3008
    %3114 = vmatprep.subr.mxu0 0.0
    %3115 = vmatpush1.msra.mxu0 %v3011
    %3116 = vmatprep.subr.mxu0 0.0
    %3117 = vmatpush1.msra.mxu0 %v3014
    %3118 = vmatprep.subr.mxu0 0.0
    %3119 = vmatpush1.msra.mxu0 0.0
    %3120 = vmatprep.subr.mxu0 0.0
    %3121 = vmatpush1.msra.mxu0 0.0
    %3122 = vmatprep.subr.mxu0 0.0
    %3123 = vmatpush1.msra.mxu0 0.0
    %3124 = vmatprep.subr.mxu0 0.0
    %3125 = vmatpush1.msra.mxu0 0.0
    %3126 = vmatprep.subr.mxu0 0.0
    %3127 = vmatpush1.msra.mxu0 0.0
    %3128 = vmatprep.subr.mxu0 0.0
    %3129 = vmatpush1.msra.mxu0 0.0
    %3130 = vmatprep.subr.mxu0 0.0
    %3131 = vmatpush1.msra.mxu0 0.0
    %3132 = vmatprep.subr.mxu0 0.0
    %3133 = vmatpush1.msra.mxu0 0.0
    %3134 = vmatprep.subr.mxu0 0.0
    %3135 = vmatpush1.msra.mxu0 0.0
    %3136 = vmatprep.subr.mxu0 0.0
    %3137 = vmatpush1.msra.mxu0 0.0
    %3138 = vmatprep.subr.mxu0 0.0
    %3139 = vmatpush1.msra.mxu0 0.0
    %3140 = vmatprep.subr.mxu0 0.0
    %3141 = vmatpush1.msra.mxu0 0.0
    %3142 = vmatprep.subr.mxu0 0.0
    %3143 = vmatpush1.msra.mxu0 0.0
    %3144 = vmatprep.subr.mxu0 0.0
    %3145 = vmatpush1.msra.mxu0 0.0
    %3146 = vmatprep.subr.mxu0 0.0
    %3147 = vmatpush1.msra.mxu0 0.0
    %3148 = vmatprep.subr.mxu0 0.0
    %3149 = vmatpush1.msra.mxu0 0.0
    %3150 = vmatprep.mubr.f32.mxu0 0.0
    %3151 = vmatmul.mubr.f32.gmra.mrb[0].mxu0 %v2750
    %v3152 = vpop.f32.mrb[0].mxu0
    %v3153 = vadd.f32 0.0, %v3152
    %v3154 = vpop.f32.mrb[0].mxu0
    %3155 = vdwg.mxu0
    %v3157 = vrot.slane %v3082, 2
    %v3159 = vadd.f32 %v878, %v3157
    %v3160 = vxor.u32 %v3159, 2147483648
    %v3161 = vmul.f32 %v3160, 1.442695
    %v3162 = vpow.pop %v3161
    %v3163 = vadd.f32 %v3162, 1.0
    %v3164 = vrcp.pop %v3163
    %v3165 = vmul.f32 1.0, %v3164
    %v3167 = vrot.slane %v3084, 2
    %v3169 = vadd.f32 %v953, %v3167
    %v3170 = vxor.u32 %v3169, 2147483648
    %v3171 = vmul.f32 %v3170, 1.442695
    %v3172 = vpow.pop %v3171
    %v3173 = vadd.f32 %v3172, 1.0
    %v3174 = vrcp.pop %v3173
    %v3175 = vmul.f32 1.0, %v3174
    %v3176 = vadd.f32 %v3153, %v1395
    %v3178 = vrot.slane %v3176, 2
    %v3180 = vmul.f32 %v3165, %v3178
    %v3181 = vadd.f32 %v955, %v3180
    %v3182 = vtanh.pop %v3181
    %v3183 = vsub.f32 1.0, %v3175
    %v3184 = vmul.f32 %v3183, %v3182
    %v3186 = vrot.slane %v2750, 2
    %v3188 = vmul.f32 %v3175, %v3186
    %v3189 = vadd.f32 %v3184, %v3188
    %3190 = vst [vmem:[#allocation2 + $0x10] sm:$0x3] %v2966
    %3191 = vst [vmem:[#allocation2 + $0x8] sm:$0xc0] %v3189
    %v3192 = vld [vmem:[#allocation15] sm:$0xff]
    %v3193 = vld [vmem:[#allocation15 + $0x8] sm:$0xff]
    %v3194 = vld [vmem:[#allocation15 + $0x10] sm:$0xff]
    %v3195 = vld [vmem:[#allocation15 + $0x18] sm:$0xff]
    %v3196 = vld [vmem:[#allocation15 + $0x20] sm:$0xff]
    %v3197 = vld [vmem:[#allocation15 + $0x28] sm:$0xff]
    %v3198 = vld [vmem:[#allocation15 + $0x30] sm:$0xff]
    %v3199 = vld [vmem:[#allocation15 + $0x38] sm:$0xff]
    %v3200 = vld [vmem:[#allocation15 + $0x40] sm:$0xff]
    %v3201 = vld [vmem:[#allocation15 + $0x48] sm:$0xff]
    %v3202 = vld [vmem:[#allocation15 + $0x50] sm:$0xff]
    %v3203 = vld [vmem:[#allocation15 + $0x58] sm:$0xff]
    %v3204 = vld [vmem:[#allocation15 + $0x60] sm:$0xff]
    %v3205 = vld [vmem:[#allocation15 + $0x68] sm:$0xff]
    %v3206 = vld [vmem:[#allocation15 + $0x70] sm:$0xff]
    %v3207 = vld [vmem:[#allocation15 + $0x78] sm:$0xff]
    %v3208 = vld [vmem:[#allocation15 + $0x80] sm:$0xff]
    %v3209 = vld [vmem:[#allocation15 + $0x88] sm:$0xff]
    %v3210 = vld [vmem:[#allocation15 + $0x90] sm:$0xff]
    %v3211 = vld [vmem:[#allocation15 + $0x98] sm:$0xff]
    %v3212 = vld [vmem:[#allocation15 + $0xa0] sm:$0xff]
    %v3213 = vld [vmem:[#allocation15 + $0xa8] sm:$0xff]
    %v3214 = vld [vmem:[#allocation15 + $0xb0] sm:$0xff]
    %v3215 = vld [vmem:[#allocation15 + $0xb8] sm:$0xff]
    %v3216 = vld [vmem:[#allocation15 + $0xc0] sm:$0xff]
    %v3217 = vld [vmem:[#allocation15 + $0xc8] sm:$0xff]
    %v3218 = vld [vmem:[#allocation15 + $0xd0] sm:$0xff]
    %v3219 = vld [vmem:[#allocation15 + $0xd8] sm:$0xff]
    %v3220 = vld [vmem:[#allocation15 + $0xe0] sm:$0xff]
    %v3221 = vld [vmem:[#allocation15 + $0xe8] sm:$0xff]
    %v3222 = vld [vmem:[#allocation15 + $0xf0] sm:$0xff]
    %v3223 = vld [vmem:[#allocation15 + $0xf8] sm:$0xff]
    %v3224 = vld [vmem:[#allocation15 + $0x100] sm:$0xff]
    %v3225 = vld [vmem:[#allocation15 + $0x108] sm:$0xff]
    %v3226 = vld [vmem:[#allocation15 + $0x110] sm:$0xff]
    %v3227 = vld [vmem:[#allocation15 + $0x118] sm:$0xff]
    %v3228 = vld [vmem:[#allocation15 + $0x120] sm:$0xff]
    %v3229 = vld [vmem:[#allocation15 + $0x128] sm:$0xff]
    %v3230 = vld [vmem:[#allocation15 + $0x130] sm:$0xff]
    %v3231 = vld [vmem:[#allocation15 + $0x138] sm:$0xff]
    %v3232 = vld [vmem:[#allocation15 + $0x140] sm:$0xff]
    %v3233 = vld [vmem:[#allocation15 + $0x148] sm:$0xff]
    %v3234 = vld [vmem:[#allocation15 + $0x150] sm:$0xff]
    %v3235 = vld [vmem:[#allocation15 + $0x158] sm:$0xff]
    %v3236 = vld [vmem:[#allocation15 + $0x160] sm:$0xff]
    %v3237 = vld [vmem:[#allocation15 + $0x168] sm:$0xff]
    %v3238 = vld [vmem:[#allocation15 + $0x170] sm:$0xff]
    %v3239 = vld [vmem:[#allocation15 + $0x178] sm:$0xff]
    %3240 = vmatprep.subr.mxu0 %v3193
    %3241 = vmatpush1.msra.mxu0 %v3192
    %3242 = vmatprep.subr.mxu0 %v3196
    %3243 = vmatpush1.msra.mxu0 %v3195
    %3244 = vmatprep.subr.mxu0 %v3199
    %3245 = vmatpush1.msra.mxu0 %v3198
    %3246 = vmatprep.subr.mxu0 %v3202
    %3247 = vmatpush1.msra.mxu0 %v3201
    %3248 = vmatprep.subr.mxu0 %v3205
    %3249 = vmatpush1.msra.mxu0 %v3204
    %3250 = vmatprep.subr.mxu0 %v3208
    %3251 = vmatpush1.msra.mxu0 %v3207
    %3252 = vmatprep.subr.mxu0 %v3211
    %3253 = vmatpush1.msra.mxu0 %v3210
    %3254 = vmatprep.subr.mxu0 %v3214
    %3255 = vmatpush1.msra.mxu0 %v3213
    %3256 = vmatprep.subr.mxu0 %v3217
    %3257 = vmatpush1.msra.mxu0 %v3216
    %3258 = vmatprep.subr.mxu0 %v3220
    %3259 = vmatpush1.msra.mxu0 %v3219
    %3260 = vmatprep.subr.mxu0 %v3223
    %3261 = vmatpush1.msra.mxu0 %v3222
    %3262 = vmatprep.subr.mxu0 %v3226
    %3263 = vmatpush1.msra.mxu0 %v3225
    %3264 = vmatprep.subr.mxu0 %v3229
    %3265 = vmatpush1.msra.mxu0 %v3228
    %3266 = vmatprep.subr.mxu0 %v3232
    %3267 = vmatpush1.msra.mxu0 %v3231
    %3268 = vmatprep.subr.mxu0 %v3235
    %3269 = vmatpush1.msra.mxu0 %v3234
    %3270 = vmatprep.subr.mxu0 %v3238
    %3271 = vmatpush1.msra.mxu0 %v3237
    %3272 = vmatprep.subr.mxu0 0.0
    %3273 = vmatpush1.msra.mxu0 0.0
    %3274 = vmatprep.subr.mxu0 0.0
    %3275 = vmatpush1.msra.mxu0 0.0
    %3276 = vmatprep.subr.mxu0 0.0
    %3277 = vmatpush1.msra.mxu0 0.0
    %3278 = vmatprep.subr.mxu0 0.0
    %3279 = vmatpush1.msra.mxu0 0.0
    %3280 = vmatprep.subr.mxu0 0.0
    %3281 = vmatpush1.msra.mxu0 0.0
    %3282 = vmatprep.subr.mxu0 0.0
    %3283 = vmatpush1.msra.mxu0 0.0
    %3284 = vmatprep.subr.mxu0 0.0
    %3285 = vmatpush1.msra.mxu0 0.0
    %3286 = vmatprep.subr.mxu0 0.0
    %3287 = vmatpush1.msra.mxu0 0.0
    %3288 = vmatprep.subr.mxu0 0.0
    %3289 = vmatpush1.msra.mxu0 0.0
    %3290 = vmatprep.subr.mxu0 0.0
    %3291 = vmatpush1.msra.mxu0 0.0
    %3292 = vmatprep.subr.mxu0 0.0
    %3293 = vmatpush1.msra.mxu0 0.0
    %3294 = vmatprep.subr.mxu0 0.0
    %3295 = vmatpush1.msra.mxu0 0.0
    %3296 = vmatprep.subr.mxu0 0.0
    %3297 = vmatpush1.msra.mxu0 0.0
    %3298 = vmatprep.subr.mxu0 0.0
    %3299 = vmatpush1.msra.mxu0 0.0
    %3300 = vmatprep.subr.mxu0 0.0
    %3301 = vmatpush1.msra.mxu0 0.0
    %3302 = vmatprep.subr.mxu0 0.0
    %3303 = vmatpush1.msra.mxu0 0.0
    %3304 = vmatprep.mubr.f32.mxu0 0.0
    %3305 = vmatmul.mubr.f32.gmra.mrb[0].mxu0 %v2966
    %v3306 = vpop.f32.mrb[0].mxu0
    %v3307 = vadd.f32 0.0, %v3306
    %v3308 = vpop.f32.mrb[0].mxu0
    %v3309 = vadd.f32 0.0, %v3308
    %3310 = vdwg.mxu0
    %3311 = vmatprep.subr.mxu0 0.0
    %3312 = vmatpush1.msra.mxu0 %v3194
    %3313 = vmatprep.subr.mxu0 0.0
    %3314 = vmatpush1.msra.mxu0 %v3197
    %3315 = vmatprep.subr.mxu0 0.0
    %3316 = vmatpush1.msra.mxu0 %v3200
    %3317 = vmatprep.subr.mxu0 0.0
    %3318 = vmatpush1.msra.mxu0 %v3203
    %3319 = vmatprep.subr.mxu0 0.0
    %3320 = vmatpush1.msra.mxu0 %v3206
    %3321 = vmatprep.subr.mxu0 0.0
    %3322 = vmatpush1.msra.mxu0 %v3209
    %3323 = vmatprep.subr.mxu0 0.0
    %3324 = vmatpush1.msra.mxu0 %v3212
    %3325 = vmatprep.subr.mxu0 0.0
    %3326 = vmatpush1.msra.mxu0 %v3215
    %3327 = vmatprep.subr.mxu0 0.0
    %3328 = vmatpush1.msra.mxu0 %v3218
    %3329 = vmatprep.subr.mxu0 0.0
    %3330 = vmatpush1.msra.mxu0 %v3221
    %3331 = vmatprep.subr.mxu0 0.0
    %3332 = vmatpush1.msra.mxu0 %v3224
    %3333 = vmatprep.subr.mxu0 0.0
    %3334 = vmatpush1.msra.mxu0 %v3227
    %3335 = vmatprep.subr.mxu0 0.0
    %3336 = vmatpush1.msra.mxu0 %v3230
    %3337 = vmatprep.subr.mxu0 0.0
    %3338 = vmatpush1.msra.mxu0 %v3233
    %3339 = vmatprep.subr.mxu0 0.0
    %3340 = vmatpush1.msra.mxu0 %v3236
    %3341 = vmatprep.subr.mxu0 0.0
    %3342 = vmatpush1.msra.mxu0 %v3239
    %3343 = vmatprep.subr.mxu0 0.0
    %3344 = vmatpush1.msra.mxu0 0.0
    %3345 = vmatprep.subr.mxu0 0.0
    %3346 = vmatpush1.msra.mxu0 0.0
    %3347 = vmatprep.subr.mxu0 0.0
    %3348 = vmatpush1.msra.mxu0 0.0
    %3349 = vmatprep.subr.mxu0 0.0
    %3350 = vmatpush1.msra.mxu0 0.0
    %3351 = vmatprep.subr.mxu0 0.0
    %3352 = vmatpush1.msra.mxu0 0.0
    %3353 = vmatprep.subr.mxu0 0.0
    %3354 = vmatpush1.msra.mxu0 0.0
    %3355 = vmatprep.subr.mxu0 0.0
    %3356 = vmatpush1.msra.mxu0 0.0
    %3357 = vmatprep.subr.mxu0 0.0
    %3358 = vmatpush1.msra.mxu0 0.0
    %3359 = vmatprep.subr.mxu0 0.0
    %3360 = vmatpush1.msra.mxu0 0.0
    %3361 = vmatprep.subr.mxu0 0.0
    %3362 = vmatpush1.msra.mxu0 0.0
    %3363 = vmatprep.subr.mxu0 0.0
    %3364 = vmatpush1.msra.mxu0 0.0
    %3365 = vmatprep.subr.mxu0 0.0
    %3366 = vmatpush1.msra.mxu0 0.0
    %3367 = vmatprep.subr.mxu0 0.0
    %3368 = vmatpush1.msra.mxu0 0.0
    %3369 = vmatprep.subr.mxu0 0.0
    %3370 = vmatpush1.msra.mxu0 0.0
    %3371 = vmatprep.subr.mxu0 0.0
    %3372 = vmatpush1.msra.mxu0 0.0
    %3373 = vmatprep.subr.mxu0 0.0
    %3374 = vmatpush1.msra.mxu0 0.0
    %3375 = vmatprep.mubr.f32.mxu0 0.0
    %3376 = vmatmul.mubr.f32.gmra.mrb[0].mxu0 %v2966
    %v3377 = vpop.f32.mrb[0].mxu0
    %v3378 = vadd.f32 0.0, %v3377
    %v3379 = vpop.f32.mrb[0].mxu0
    %3380 = vdwg.mxu0
    %v3382 = vrot.slane %v3307, 6
    %v3384 = vadd.f32 %v805, %v3382
    %v3385 = vxor.u32 %v3384, 2147483648
    %v3386 = vmul.f32 %v3385, 1.442695
    %v3387 = vpow.pop %v3386
    %v3388 = vadd.f32 %v3387, 1.0
    %v3389 = vrcp.pop %v3388
    %v3390 = vmul.f32 1.0, %v3389
    %v3392 = vrot.slane %v3309, 6
    %v3394 = vadd.f32 %v807, %v3392
    %v3395 = vxor.u32 %v3394, 2147483648
    %v3396 = vmul.f32 %v3395, 1.442695
    %v3397 = vpow.pop %v3396
    %v3398 = vadd.f32 %v3397, 1.0
    %v3399 = vrcp.pop %v3398
    %v3400 = vmul.f32 1.0, %v3399
    %v3401 = vadd.f32 %v3378, %v1172
    %v3403 = vrot.slane %v3401, 6
    %v3405 = vmul.f32 %v3390, %v3403
    %v3406 = vadd.f32 %v882, %v3405
    %v3407 = vtanh.pop %v3406
    %v3408 = vsub.f32 1.0, %v3400
    %v3409 = vmul.f32 %v3408, %v3407
    %v3411 = vrot.slane %v2966, 6
    %v3413 = vmul.f32 %v3400, %v3411
    %v3414 = vadd.f32 %v3409, %v3413
    %v3415 = vld [vmem:[#allocation17] sm:$0xff]
    %v3416 = vld [vmem:[#allocation17 + $0x8] sm:$0xff]
    %v3417 = vld [vmem:[#allocation17 + $0x10] sm:$0xff]
    %v3418 = vld [vmem:[#allocation17 + $0x18] sm:$0xff]
    %v3419 = vld [vmem:[#allocation17 + $0x20] sm:$0xff]
    %v3420 = vld [vmem:[#allocation17 + $0x28] sm:$0xff]
    %v3421 = vld [vmem:[#allocation17 + $0x30] sm:$0xff]
    %v3422 = vld [vmem:[#allocation17 + $0x38] sm:$0xff]
    %v3423 = vld [vmem:[#allocation17 + $0x40] sm:$0xff]
    %v3424 = vld [vmem:[#allocation17 + $0x48] sm:$0xff]
    %v3425 = vld [vmem:[#allocation17 + $0x50] sm:$0xff]
    %v3426 = vld [vmem:[#allocation17 + $0x58] sm:$0xff]
    %v3427 = vld [vmem:[#allocation17 + $0x60] sm:$0xff]
    %v3428 = vld [vmem:[#allocation17 + $0x68] sm:$0xff]
    %v3429 = vld [vmem:[#allocation17 + $0x70] sm:$0xff]
    %v3430 = vld [vmem:[#allocation17 + $0x78] sm:$0xff]
    %v3431 = vld [vmem:[#allocation17 + $0x80] sm:$0xff]
    %v3432 = vld [vmem:[#allocation17 + $0x88] sm:$0xff]
    %v3433 = vld [vmem:[#allocation17 + $0x90] sm:$0xff]
    %v3434 = vld [vmem:[#allocation17 + $0x98] sm:$0xff]
    %v3435 = vld [vmem:[#allocation17 + $0xa0] sm:$0xff]
    %v3436 = vld [vmem:[#allocation17 + $0xa8] sm:$0xff]
    %v3437 = vld [vmem:[#allocation17 + $0xb0] sm:$0xff]
    %v3438 = vld [vmem:[#allocation17 + $0xb8] sm:$0xff]
    %v3439 = vld [vmem:[#allocation17 + $0xc0] sm:$0xff]
    %v3440 = vld [vmem:[#allocation17 + $0xc8] sm:$0xff]
    %v3441 = vld [vmem:[#allocation17 + $0xd0] sm:$0xff]
    %v3442 = vld [vmem:[#allocation17 + $0xd8] sm:$0xff]
    %v3443 = vld [vmem:[#allocation17 + $0xe0] sm:$0xff]
    %v3444 = vld [vmem:[#allocation17 + $0xe8] sm:$0xff]
    %v3445 = vld [vmem:[#allocation17 + $0xf0] sm:$0xff]
    %v3446 = vld [vmem:[#allocation17 + $0xf8] sm:$0xff]
    %v3447 = vld [vmem:[#allocation17 + $0x100] sm:$0xff]
    %v3448 = vld [vmem:[#allocation17 + $0x108] sm:$0xff]
    %v3449 = vld [vmem:[#allocation17 + $0x110] sm:$0xff]
    %v3450 = vld [vmem:[#allocation17 + $0x118] sm:$0xff]
    %v3451 = vld [vmem:[#allocation17 + $0x120] sm:$0xff]
    %v3452 = vld [vmem:[#allocation17 + $0x128] sm:$0xff]
    %v3453 = vld [vmem:[#allocation17 + $0x130] sm:$0xff]
    %v3454 = vld [vmem:[#allocation17 + $0x138] sm:$0xff]
    %v3455 = vld [vmem:[#allocation17 + $0x140] sm:$0xff]
    %v3456 = vld [vmem:[#allocation17 + $0x148] sm:$0xff]
    %v3457 = vld [vmem:[#allocation17 + $0x150] sm:$0xff]
    %v3458 = vld [vmem:[#allocation17 + $0x158] sm:$0xff]
    %v3459 = vld [vmem:[#allocation17 + $0x160] sm:$0xff]
    %v3460 = vld [vmem:[#allocation17 + $0x168] sm:$0xff]
    %v3461 = vld [vmem:[#allocation17 + $0x170] sm:$0xff]
    %v3462 = vld [vmem:[#allocation17 + $0x178] sm:$0xff]
    %v3464 = vrot.slane %v3189, 6
    %3466 = vmatprep.subr.mxu0 %v3416
    %3467 = vmatpush1.msra.mxu0 %v3415
    %3468 = vmatprep.subr.mxu0 %v3419
    %3469 = vmatpush1.msra.mxu0 %v3418
    %3470 = vmatprep.subr.mxu0 %v3422
    %3471 = vmatpush1.msra.mxu0 %v3421
    %3472 = vmatprep.subr.mxu0 %v3425
    %3473 = vmatpush1.msra.mxu0 %v3424
    %3474 = vmatprep.subr.mxu0 %v3428
    %3475 = vmatpush1.msra.mxu0 %v3427
    %3476 = vmatprep.subr.mxu0 %v3431
    %3477 = vmatpush1.msra.mxu0 %v3430
    %3478 = vmatprep.subr.mxu0 %v3434
    %3479 = vmatpush1.msra.mxu0 %v3433
    %3480 = vmatprep.subr.mxu0 %v3437
    %3481 = vmatpush1.msra.mxu0 %v3436
    %3482 = vmatprep.subr.mxu0 %v3440
    %3483 = vmatpush1.msra.mxu0 %v3439
    %3484 = vmatprep.subr.mxu0 %v3443
    %3485 = vmatpush1.msra.mxu0 %v3442
    %3486 = vmatprep.subr.mxu0 %v3446
    %3487 = vmatpush1.msra.mxu0 %v3445
    %3488 = vmatprep.subr.mxu0 %v3449
    %3489 = vmatpush1.msra.mxu0 %v3448
    %3490 = vmatprep.subr.mxu0 %v3452
    %3491 = vmatpush1.msra.mxu0 %v3451
    %3492 = vmatprep.subr.mxu0 %v3455
    %3493 = vmatpush1.msra.mxu0 %v3454
    %3494 = vmatprep.subr.mxu0 %v3458
    %3495 = vmatpush1.msra.mxu0 %v3457
    %3496 = vmatprep.subr.mxu0 %v3461
    %3497 = vmatpush1.msra.mxu0 %v3460
    %3498 = vmatprep.subr.mxu0 0.0
    %3499 = vmatpush1.msra.mxu0 0.0
    %3500 = vmatprep.subr.mxu0 0.0
    %3501 = vmatpush1.msra.mxu0 0.0
    %3502 = vmatprep.subr.mxu0 0.0
    %3503 = vmatpush1.msra.mxu0 0.0
    %3504 = vmatprep.subr.mxu0 0.0
    %3505 = vmatpush1.msra.mxu0 0.0
    %3506 = vmatprep.subr.mxu0 0.0
    %3507 = vmatpush1.msra.mxu0 0.0
    %3508 = vmatprep.subr.mxu0 0.0
    %3509 = vmatpush1.msra.mxu0 0.0
    %3510 = vmatprep.subr.mxu0 0.0
    %3511 = vmatpush1.msra.mxu0 0.0
    %3512 = vmatprep.subr.mxu0 0.0
    %3513 = vmatpush1.msra.mxu0 0.0
    %3514 = vmatprep.subr.mxu0 0.0
    %3515 = vmatpush1.msra.mxu0 0.0
    %3516 = vmatprep.subr.mxu0 0.0
    %3517 = vmatpush1.msra.mxu0 0.0
    %3518 = vmatprep.subr.mxu0 0.0
    %3519 = vmatpush1.msra.mxu0 0.0
    %3520 = vmatprep.subr.mxu0 0.0
    %3521 = vmatpush1.msra.mxu0 0.0
    %3522 = vmatprep.subr.mxu0 0.0
    %3523 = vmatpush1.msra.mxu0 0.0
    %3524 = vmatprep.subr.mxu0 0.0
    %3525 = vmatpush1.msra.mxu0 0.0
    %3526 = vmatprep.subr.mxu0 0.0
    %3527 = vmatpush1.msra.mxu0 0.0
    %3528 = vmatprep.subr.mxu0 0.0
    %3529 = vmatpush1.msra.mxu0 0.0
    %3530 = vmatprep.mubr.f32.mxu0 0.0
    %3531 = vmatmul.mubr.f32.gmra.mrb[0].mxu0 %v3464
    %v3532 = vpop.f32.mrb[0].mxu0
    %v3533 = vadd.f32 0.0, %v3532
    %v3534 = vpop.f32.mrb[0].mxu0
    %v3535 = vadd.f32 0.0, %v3534
    %3536 = vdwg.mxu0
    %3537 = vmatprep.subr.mxu0 0.0
    %3538 = vmatpush1.msra.mxu0 %v3417
    %3539 = vmatprep.subr.mxu0 0.0
    %3540 = vmatpush1.msra.mxu0 %v3420
    %3541 = vmatprep.subr.mxu0 0.0
    %3542 = vmatpush1.msra.mxu0 %v3423
    %3543 = vmatprep.subr.mxu0 0.0
    %3544 = vmatpush1.msra.mxu0 %v3426
    %3545 = vmatprep.subr.mxu0 0.0
    %3546 = vmatpush1.msra.mxu0 %v3429
    %3547 = vmatprep.subr.mxu0 0.0
    %3548 = vmatpush1.msra.mxu0 %v3432
    %3549 = vmatprep.subr.mxu0 0.0
    %3550 = vmatpush1.msra.mxu0 %v3435
    %3551 = vmatprep.subr.mxu0 0.0
    %3552 = vmatpush1.msra.mxu0 %v3438
    %3553 = vmatprep.subr.mxu0 0.0
    %3554 = vmatpush1.msra.mxu0 %v3441
    %3555 = vmatprep.subr.mxu0 0.0
    %3556 = vmatpush1.msra.mxu0 %v3444
    %3557 = vmatprep.subr.mxu0 0.0
    %3558 = vmatpush1.msra.mxu0 %v3447
    %3559 = vmatprep.subr.mxu0 0.0
    %3560 = vmatpush1.msra.mxu0 %v3450
    %3561 = vmatprep.subr.mxu0 0.0
    %3562 = vmatpush1.msra.mxu0 %v3453
    %3563 = vmatprep.subr.mxu0 0.0
    %3564 = vmatpush1.msra.mxu0 %v3456
    %3565 = vmatprep.subr.mxu0 0.0
    %3566 = vmatpush1.msra.mxu0 %v3459
    %3567 = vmatprep.subr.mxu0 0.0
    %3568 = vmatpush1.msra.mxu0 %v3462
    %3569 = vmatprep.subr.mxu0 0.0
    %3570 = vmatpush1.msra.mxu0 0.0
    %3571 = vmatprep.subr.mxu0 0.0
    %3572 = vmatpush1.msra.mxu0 0.0
    %3573 = vmatprep.subr.mxu0 0.0
    %3574 = vmatpush1.msra.mxu0 0.0
    %3575 = vmatprep.subr.mxu0 0.0
    %3576 = vmatpush1.msra.mxu0 0.0
    %3577 = vmatprep.subr.mxu0 0.0
    %3578 = vmatpush1.msra.mxu0 0.0
    %3579 = vmatprep.subr.mxu0 0.0
    %3580 = vmatpush1.msra.mxu0 0.0
    %3581 = vmatprep.subr.mxu0 0.0
    %3582 = vmatpush1.msra.mxu0 0.0
    %3583 = vmatprep.subr.mxu0 0.0
    %3584 = vmatpush1.msra.mxu0 0.0
    %3585 = vmatprep.subr.mxu0 0.0
    %3586 = vmatpush1.msra.mxu0 0.0
    %3587 = vmatprep.subr.mxu0 0.0
    %3588 = vmatpush1.msra.mxu0 0.0
    %3589 = vmatprep.subr.mxu0 0.0
    %3590 = vmatpush1.msra.mxu0 0.0
    %3591 = vmatprep.subr.mxu0 0.0
    %3592 = vmatpush1.msra.mxu0 0.0
    %3593 = vmatprep.subr.mxu0 0.0
    %3594 = vmatpush1.msra.mxu0 0.0
    %3595 = vmatprep.subr.mxu0 0.0
    %3596 = vmatpush1.msra.mxu0 0.0
    %3597 = vmatprep.subr.mxu0 0.0
    %3598 = vmatpush1.msra.mxu0 0.0
    %3599 = vmatprep.subr.mxu0 0.0
    %3600 = vmatpush1.msra.mxu0 0.0
    %3601 = vmatprep.mubr.f32.mxu0 0.0
    %3602 = vmatmul.mubr.f32.gmra.mrb[0].mxu0 %v3464
    %v3603 = vpop.f32.mrb[0].mxu0
    %v3604 = vadd.f32 0.0, %v3603
    %v3605 = vpop.f32.mrb[0].mxu0
    %3606 = vdwg.mxu0
    %v3608 = vrot.slane %v3533, 4
    %v3610 = vadd.f32 %v878, %v3608
    %v3611 = vxor.u32 %v3610, 2147483648
    %v3612 = vmul.f32 %v3611, 1.442695
    %v3613 = vpow.pop %v3612
    %v3614 = vadd.f32 %v3613, 1.0
    %v3615 = vrcp.pop %v3614
    %v3616 = vmul.f32 1.0, %v3615
    %v3618 = vrot.slane %v3535, 4
    %v3620 = vadd.f32 %v953, %v3618
    %v3621 = vxor.u32 %v3620, 2147483648
    %v3622 = vmul.f32 %v3621, 1.442695
    %v3623 = vpow.pop %v3622
    %v3624 = vadd.f32 %v3623, 1.0
    %v3625 = vrcp.pop %v3624
    %v3626 = vmul.f32 1.0, %v3625
    %v3627 = vadd.f32 %v3604, %v1395
    %v3629 = vrot.slane %v3627, 4
    %v3631 = vmul.f32 %v3616, %v3629
    %v3632 = vadd.f32 %v955, %v3631
    %v3633 = vtanh.pop %v3632
    %v3634 = vsub.f32 1.0, %v3626
    %v3635 = vmul.f32 %v3634, %v3633
    %v3636 = vrot.slane %v3189, 2
    %v3638 = vmul.f32 %v3626, %v3636
    %v3639 = vadd.f32 %v3635, %v3638
    %3640 = vst [vmem:[#allocation2 + $0x10] sm:$0xc] %v3414
    %3641 = vst [vmem:[#allocation2 + $0x8] sm:$0x30] %v3639
    %v3642 = vld [vmem:[#allocation15] sm:$0xff]
    %v3643 = vld [vmem:[#allocation15 + $0x8] sm:$0xff]
    %v3644 = vld [vmem:[#allocation15 + $0x10] sm:$0xff]
    %v3645 = vld [vmem:[#allocation15 + $0x18] sm:$0xff]
    %v3646 = vld [vmem:[#allocation15 + $0x20] sm:$0xff]
    %v3647 = vld [vmem:[#allocation15 + $0x28] sm:$0xff]
    %v3648 = vld [vmem:[#allocation15 + $0x30] sm:$0xff]
    %v3649 = vld [vmem:[#allocation15 + $0x38] sm:$0xff]
    %v3650 = vld [vmem:[#allocation15 + $0x40] sm:$0xff]
    %v3651 = vld [vmem:[#allocation15 + $0x48] sm:$0xff]
    %v3652 = vld [vmem:[#allocation15 + $0x50] sm:$0xff]
    %v3653 = vld [vmem:[#allocation15 + $0x58] sm:$0xff]
    %v3654 = vld [vmem:[#allocation15 + $0x60] sm:$0xff]
    %v3655 = vld [vmem:[#allocation15 + $0x68] sm:$0xff]
    %v3656 = vld [vmem:[#allocation15 + $0x70] sm:$0xff]
    %v3657 = vld [vmem:[#allocation15 + $0x78] sm:$0xff]
    %v3658 = vld [vmem:[#allocation15 + $0x80] sm:$0xff]
    %v3659 = vld [vmem:[#allocation15 + $0x88] sm:$0xff]
    %v3660 = vld [vmem:[#allocation15 + $0x90] sm:$0xff]
    %v3661 = vld [vmem:[#allocation15 + $0x98] sm:$0xff]
    %v3662 = vld [vmem:[#allocation15 + $0xa0] sm:$0xff]
    %v3663 = vld [vmem:[#allocation15 + $0xa8] sm:$0xff]
    %v3664 = vld [vmem:[#allocation15 + $0xb0] sm:$0xff]
    %v3665 = vld [vmem:[#allocation15 + $0xb8] sm:$0xff]
    %v3666 = vld [vmem:[#allocation15 + $0xc0] sm:$0xff]
    %v3667 = vld [vmem:[#allocation15 + $0xc8] sm:$0xff]
    %v3668 = vld [vmem:[#allocation15 + $0xd0] sm:$0xff]
    %v3669 = vld [vmem:[#allocation15 + $0xd8] sm:$0xff]
    %v3670 = vld [vmem:[#allocation15 + $0xe0] sm:$0xff]
    %v3671 = vld [vmem:[#allocation15 + $0xe8] sm:$0xff]
    %v3672 = vld [vmem:[#allocation15 + $0xf0] sm:$0xff]
    %v3673 = vld [vmem:[#allocation15 + $0xf8] sm:$0xff]
    %v3674 = vld [vmem:[#allocation15 + $0x100] sm:$0xff]
    %v3675 = vld [vmem:[#allocation15 + $0x108] sm:$0xff]
    %v3676 = vld [vmem:[#allocation15 + $0x110] sm:$0xff]
    %v3677 = vld [vmem:[#allocation15 + $0x118] sm:$0xff]
    %v3678 = vld [vmem:[#allocation15 + $0x120] sm:$0xff]
    %v3679 = vld [vmem:[#allocation15 + $0x128] sm:$0xff]
    %v3680 = vld [vmem:[#allocation15 + $0x130] sm:$0xff]
    %v3681 = vld [vmem:[#allocation15 + $0x138] sm:$0xff]
    %v3682 = vld [vmem:[#allocation15 + $0x140] sm:$0xff]
    %v3683 = vld [vmem:[#allocation15 + $0x148] sm:$0xff]
    %v3684 = vld [vmem:[#allocation15 + $0x150] sm:$0xff]
    %v3685 = vld [vmem:[#allocation15 + $0x158] sm:$0xff]
    %v3686 = vld [vmem:[#allocation15 + $0x160] sm:$0xff]
    %v3687 = vld [vmem:[#allocation15 + $0x168] sm:$0xff]
    %v3688 = vld [vmem:[#allocation15 + $0x170] sm:$0xff]
    %v3689 = vld [vmem:[#allocation15 + $0x178] sm:$0xff]
    %v3691 = vrot.slane %v3414, 2
    %3693 = vmatprep.subr.mxu0 %v3643
    %3694 = vmatpush1.msra.mxu0 %v3642
    %3695 = vmatprep.subr.mxu0 %v3646
    %3696 = vmatpush1.msra.mxu0 %v3645
    %3697 = vmatprep.subr.mxu0 %v3649
    %3698 = vmatpush1.msra.mxu0 %v3648
    %3699 = vmatprep.subr.mxu0 %v3652
    %3700 = vmatpush1.msra.mxu0 %v3651
    %3701 = vmatprep.subr.mxu0 %v3655
    %3702 = vmatpush1.msra.mxu0 %v3654
    %3703 = vmatprep.subr.mxu0 %v3658
    %3704 = vmatpush1.msra.mxu0 %v3657
    %3705 = vmatprep.subr.mxu0 %v3661
    %3706 = vmatpush1.msra.mxu0 %v3660
    %3707 = vmatprep.subr.mxu0 %v3664
    %3708 = vmatpush1.msra.mxu0 %v3663
    %3709 = vmatprep.subr.mxu0 %v3667
    %3710 = vmatpush1.msra.mxu0 %v3666
    %3711 = vmatprep.subr.mxu0 %v3670
    %3712 = vmatpush1.msra.mxu0 %v3669
    %3713 = vmatprep.subr.mxu0 %v3673
    %3714 = vmatpush1.msra.mxu0 %v3672
    %3715 = vmatprep.subr.mxu0 %v3676
    %3716 = vmatpush1.msra.mxu0 %v3675
    %3717 = vmatprep.subr.mxu0 %v3679
    %3718 = vmatpush1.msra.mxu0 %v3678
    %3719 = vmatprep.subr.mxu0 %v3682
    %3720 = vmatpush1.msra.mxu0 %v3681
    %3721 = vmatprep.subr.mxu0 %v3685
    %3722 = vmatpush1.msra.mxu0 %v3684
    %3723 = vmatprep.subr.mxu0 %v3688
    %3724 = vmatpush1.msra.mxu0 %v3687
    %3725 = vmatprep.subr.mxu0 0.0
    %3726 = vmatpush1.msra.mxu0 0.0
    %3727 = vmatprep.subr.mxu0 0.0
    %3728 = vmatpush1.msra.mxu0 0.0
    %3729 = vmatprep.subr.mxu0 0.0
    %3730 = vmatpush1.msra.mxu0 0.0
    %3731 = vmatprep.subr.mxu0 0.0
    %3732 = vmatpush1.msra.mxu0 0.0
    %3733 = vmatprep.subr.mxu0 0.0
    %3734 = vmatpush1.msra.mxu0 0.0
    %3735 = vmatprep.subr.mxu0 0.0
    %3736 = vmatpush1.msra.mxu0 0.0
    %3737 = vmatprep.subr.mxu0 0.0
    %3738 = vmatpush1.msra.mxu0 0.0
    %3739 = vmatprep.subr.mxu0 0.0
    %3740 = vmatpush1.msra.mxu0 0.0
    %3741 = vmatprep.subr.mxu0 0.0
    %3742 = vmatpush1.msra.mxu0 0.0
    %3743 = vmatprep.subr.mxu0 0.0
    %3744 = vmatpush1.msra.mxu0 0.0
    %3745 = vmatprep.subr.mxu0 0.0
    %3746 = vmatpush1.msra.mxu0 0.0
    %3747 = vmatprep.subr.mxu0 0.0
    %3748 = vmatpush1.msra.mxu0 0.0
    %3749 = vmatprep.subr.mxu0 0.0
    %3750 = vmatpush1.msra.mxu0 0.0
    %3751 = vmatprep.subr.mxu0 0.0
    %3752 = vmatpush1.msra.mxu0 0.0
    %3753 = vmatprep.subr.mxu0 0.0
    %3754 = vmatpush1.msra.mxu0 0.0
    %3755 = vmatprep.subr.mxu0 0.0
    %3756 = vmatpush1.msra.mxu0 0.0
    %3757 = vmatprep.mubr.f32.mxu0 0.0
    %3758 = vmatmul.mubr.f32.gmra.mrb[0].mxu0 %v3691
    %v3759 = vpop.f32.mrb[0].mxu0
    %v3760 = vadd.f32 0.0, %v3759
    %v3761 = vpop.f32.mrb[0].mxu0
    %v3762 = vadd.f32 0.0, %v3761
    %3763 = vdwg.mxu0
    %3764 = vmatprep.subr.mxu0 0.0
    %3765 = vmatpush1.msra.mxu0 %v3644
    %3766 = vmatprep.subr.mxu0 0.0
    %3767 = vmatpush1.msra.mxu0 %v3647
    %3768 = vmatprep.subr.mxu0 0.0
    %3769 = vmatpush1.msra.mxu0 %v3650
    %3770 = vmatprep.subr.mxu0 0.0
    %3771 = vmatpush1.msra.mxu0 %v3653
    %3772 = vmatprep.subr.mxu0 0.0
    %3773 = vmatpush1.msra.mxu0 %v3656
    %3774 = vmatprep.subr.mxu0 0.0
    %3775 = vmatpush1.msra.mxu0 %v3659
    %3776 = vmatprep.subr.mxu0 0.0
    %3777 = vmatpush1.msra.mxu0 %v3662
    %3778 = vmatprep.subr.mxu0 0.0
    %3779 = vmatpush1.msra.mxu0 %v3665
    %3780 = vmatprep.subr.mxu0 0.0
    %3781 = vmatpush1.msra.mxu0 %v3668
    %3782 = vmatprep.subr.mxu0 0.0
    %3783 = vmatpush1.msra.mxu0 %v3671
    %3784 = vmatprep.subr.mxu0 0.0
    %3785 = vmatpush1.msra.mxu0 %v3674
    %3786 = vmatprep.subr.mxu0 0.0
    %3787 = vmatpush1.msra.mxu0 %v3677
    %3788 = vmatprep.subr.mxu0 0.0
    %3789 = vmatpush1.msra.mxu0 %v3680
    %3790 = vmatprep.subr.mxu0 0.0
    %3791 = vmatpush1.msra.mxu0 %v3683
    %3792 = vmatprep.subr.mxu0 0.0
    %3793 = vmatpush1.msra.mxu0 %v3686
    %3794 = vmatprep.subr.mxu0 0.0
    %3795 = vmatpush1.msra.mxu0 %v3689
    %3796 = vmatprep.subr.mxu0 0.0
    %3797 = vmatpush1.msra.mxu0 0.0
    %3798 = vmatprep.subr.mxu0 0.0
    %3799 = vmatpush1.msra.mxu0 0.0
    %3800 = vmatprep.subr.mxu0 0.0
    %3801 = vmatpush1.msra.mxu0 0.0
    %3802 = vmatprep.subr.mxu0 0.0
    %3803 = vmatpush1.msra.mxu0 0.0
    %3804 = vmatprep.subr.mxu0 0.0
    %3805 = vmatpush1.msra.mxu0 0.0
    %3806 = vmatprep.subr.mxu0 0.0
    %3807 = vmatpush1.msra.mxu0 0.0
    %3808 = vmatprep.subr.mxu0 0.0
    %3809 = vmatpush1.msra.mxu0 0.0
    %3810 = vmatprep.subr.mxu0 0.0
    %3811 = vmatpush1.msra.mxu0 0.0
    %3812 = vmatprep.subr.mxu0 0.0
    %3813 = vmatpush1.msra.mxu0 0.0
    %3814 = vmatprep.subr.mxu0 0.0
    %3815 = vmatpush1.msra.mxu0 0.0
    %3816 = vmatprep.subr.mxu0 0.0
    %3817 = vmatpush1.msra.mxu0 0.0
    %3818 = vmatprep.subr.mxu0 0.0
    %3819 = vmatpush1.msra.mxu0 0.0
    %3820 = vmatprep.subr.mxu0 0.0
    %3821 = vmatpush1.msra.mxu0 0.0
    %3822 = vmatprep.subr.mxu0 0.0
    %3823 = vmatpush1.msra.mxu0 0.0
    %3824 = vmatprep.subr.mxu0 0.0
    %3825 = vmatpush1.msra.mxu0 0.0
    %3826 = vmatprep.subr.mxu0 0.0
    %3827 = vmatpush1.msra.mxu0 0.0
    %3828 = vmatprep.mubr.f32.mxu0 0.0
    %3829 = vmatmul.mubr.f32.gmra.mrb[0].mxu0 %v3691
    %v3830 = vpop.f32.mrb[0].mxu0
    %v3831 = vadd.f32 0.0, %v3830
    %v3832 = vpop.f32.mrb[0].mxu0
    %3833 = vdwg.mxu0
    %v3835 = vrot.slane %v3760, 4
    %v3837 = vadd.f32 %v805, %v3835
    %v3838 = vxor.u32 %v3837, 2147483648
    %v3839 = vmul.f32 %v3838, 1.442695
    %v3840 = vpow.pop %v3839
    %v3841 = vadd.f32 %v3840, 1.0
    %v3842 = vrcp.pop %v3841
    %v3843 = vmul.f32 1.0, %v3842
    %v3845 = vrot.slane %v3762, 4
    %v3847 = vadd.f32 %v807, %v3845
    %v3848 = vxor.u32 %v3847, 2147483648
    %v3849 = vmul.f32 %v3848, 1.442695
    %v3850 = vpow.pop %v3849
    %v3851 = vadd.f32 %v3850, 1.0
    %v3852 = vrcp.pop %v3851
    %v3853 = vmul.f32 1.0, %v3852
    %v3854 = vadd.f32 %v3831, %v1172
    %v3856 = vrot.slane %v3854, 4
    %v3858 = vmul.f32 %v3843, %v3856
    %v3859 = vadd.f32 %v882, %v3858
    %v3860 = vtanh.pop %v3859
    %v3861 = vsub.f32 1.0, %v3853
    %v3862 = vmul.f32 %v3861, %v3860
    %v3863 = vrot.slane %v3414, 6
    %v3865 = vmul.f32 %v3853, %v3863
    %v3866 = vadd.f32 %v3862, %v3865
    %v3867 = vld [vmem:[#allocation17] sm:$0xff]
    %v3868 = vld [vmem:[#allocation17 + $0x8] sm:$0xff]
    %v3869 = vld [vmem:[#allocation17 + $0x10] sm:$0xff]
    %v3870 = vld [vmem:[#allocation17 + $0x18] sm:$0xff]
    %v3871 = vld [vmem:[#allocation17 + $0x20] sm:$0xff]
    %v3872 = vld [vmem:[#allocation17 + $0x28] sm:$0xff]
    %v3873 = vld [vmem:[#allocation17 + $0x30] sm:$0xff]
    %v3874 = vld [vmem:[#allocation17 + $0x38] sm:$0xff]
    %v3875 = vld [vmem:[#allocation17 + $0x40] sm:$0xff]
    %v3876 = vld [vmem:[#allocation17 + $0x48] sm:$0xff]
    %v3877 = vld [vmem:[#allocation17 + $0x50] sm:$0xff]
    %v3878 = vld [vmem:[#allocation17 + $0x58] sm:$0xff]
    %v3879 = vld [vmem:[#allocation17 + $0x60] sm:$0xff]
    %v3880 = vld [vmem:[#allocation17 + $0x68] sm:$0xff]
    %v3881 = vld [vmem:[#allocation17 + $0x70] sm:$0xff]
    %v3882 = vld [vmem:[#allocation17 + $0x78] sm:$0xff]
    %v3883 = vld [vmem:[#allocation17 + $0x80] sm:$0xff]
    %v3884 = vld [vmem:[#allocation17 + $0x88] sm:$0xff]
    %v3885 = vld [vmem:[#allocation17 + $0x90] sm:$0xff]
    %v3886 = vld [vmem:[#allocation17 + $0x98] sm:$0xff]
    %v3887 = vld [vmem:[#allocation17 + $0xa0] sm:$0xff]
    %v3888 = vld [vmem:[#allocation17 + $0xa8] sm:$0xff]
    %v3889 = vld [vmem:[#allocation17 + $0xb0] sm:$0xff]
    %v3890 = vld [vmem:[#allocation17 + $0xb8] sm:$0xff]
    %v3891 = vld [vmem:[#allocation17 + $0xc0] sm:$0xff]
    %v3892 = vld [vmem:[#allocation17 + $0xc8] sm:$0xff]
    %v3893 = vld [vmem:[#allocation17 + $0xd0] sm:$0xff]
    %v3894 = vld [vmem:[#allocation17 + $0xd8] sm:$0xff]
    %v3895 = vld [vmem:[#allocation17 + $0xe0] sm:$0xff]
    %v3896 = vld [vmem:[#allocation17 + $0xe8] sm:$0xff]
    %v3897 = vld [vmem:[#allocation17 + $0xf0] sm:$0xff]
    %v3898 = vld [vmem:[#allocation17 + $0xf8] sm:$0xff]
    %v3899 = vld [vmem:[#allocation17 + $0x100] sm:$0xff]
    %v3900 = vld [vmem:[#allocation17 + $0x108] sm:$0xff]
    %v3901 = vld [vmem:[#allocation17 + $0x110] sm:$0xff]
    %v3902 = vld [vmem:[#allocation17 + $0x118] sm:$0xff]
    %v3903 = vld [vmem:[#allocation17 + $0x120] sm:$0xff]
    %v3904 = vld [vmem:[#allocation17 + $0x128] sm:$0xff]
    %v3905 = vld [vmem:[#allocation17 + $0x130] sm:$0xff]
    %v3906 = vld [vmem:[#allocation17 + $0x138] sm:$0xff]
    %v3907 = vld [vmem:[#allocation17 + $0x140] sm:$0xff]
    %v3908 = vld [vmem:[#allocation17 + $0x148] sm:$0xff]
    %v3909 = vld [vmem:[#allocation17 + $0x150] sm:$0xff]
    %v3910 = vld [vmem:[#allocation17 + $0x158] sm:$0xff]
    %v3911 = vld [vmem:[#allocation17 + $0x160] sm:$0xff]
    %v3912 = vld [vmem:[#allocation17 + $0x168] sm:$0xff]
    %v3913 = vld [vmem:[#allocation17 + $0x170] sm:$0xff]
    %v3914 = vld [vmem:[#allocation17 + $0x178] sm:$0xff]
    %v3916 = vrot.slane %v3639, 4
    %3918 = vmatprep.subr.mxu0 %v3868
    %3919 = vmatpush1.msra.mxu0 %v3867
    %3920 = vmatprep.subr.mxu0 %v3871
    %3921 = vmatpush1.msra.mxu0 %v3870
    %3922 = vmatprep.subr.mxu0 %v3874
    %3923 = vmatpush1.msra.mxu0 %v3873
    %3924 = vmatprep.subr.mxu0 %v3877
    %3925 = vmatpush1.msra.mxu0 %v3876
    %3926 = vmatprep.subr.mxu0 %v3880
    %3927 = vmatpush1.msra.mxu0 %v3879
    %3928 = vmatprep.subr.mxu0 %v3883
    %3929 = vmatpush1.msra.mxu0 %v3882
    %3930 = vmatprep.subr.mxu0 %v3886
    %3931 = vmatpush1.msra.mxu0 %v3885
    %3932 = vmatprep.subr.mxu0 %v3889
    %3933 = vmatpush1.msra.mxu0 %v3888
    %3934 = vmatprep.subr.mxu0 %v3892
    %3935 = vmatpush1.msra.mxu0 %v3891
    %3936 = vmatprep.subr.mxu0 %v3895
    %3937 = vmatpush1.msra.mxu0 %v3894
    %3938 = vmatprep.subr.mxu0 %v3898
    %3939 = vmatpush1.msra.mxu0 %v3897
    %3940 = vmatprep.subr.mxu0 %v3901
    %3941 = vmatpush1.msra.mxu0 %v3900
    %3942 = vmatprep.subr.mxu0 %v3904
    %3943 = vmatpush1.msra.mxu0 %v3903
    %3944 = vmatprep.subr.mxu0 %v3907
    %3945 = vmatpush1.msra.mxu0 %v3906
    %3946 = vmatprep.subr.mxu0 %v3910
    %3947 = vmatpush1.msra.mxu0 %v3909
    %3948 = vmatprep.subr.mxu0 %v3913
    %3949 = vmatpush1.msra.mxu0 %v3912
    %3950 = vmatprep.subr.mxu0 0.0
    %3951 = vmatpush1.msra.mxu0 0.0
    %3952 = vmatprep.subr.mxu0 0.0
    %3953 = vmatpush1.msra.mxu0 0.0
    %3954 = vmatprep.subr.mxu0 0.0
    %3955 = vmatpush1.msra.mxu0 0.0
    %3956 = vmatprep.subr.mxu0 0.0
    %3957 = vmatpush1.msra.mxu0 0.0
    %3958 = vmatprep.subr.mxu0 0.0
    %3959 = vmatpush1.msra.mxu0 0.0
    %3960 = vmatprep.subr.mxu0 0.0
    %3961 = vmatpush1.msra.mxu0 0.0
    %3962 = vmatprep.subr.mxu0 0.0
    %3963 = vmatpush1.msra.mxu0 0.0
    %3964 = vmatprep.subr.mxu0 0.0
    %3965 = vmatpush1.msra.mxu0 0.0
    %3966 = vmatprep.subr.mxu0 0.0
    %3967 = vmatpush1.msra.mxu0 0.0
    %3968 = vmatprep.subr.mxu0 0.0
    %3969 = vmatpush1.msra.mxu0 0.0
    %3970 = vmatprep.subr.mxu0 0.0
    %3971 = vmatpush1.msra.mxu0 0.0
    %3972 = vmatprep.subr.mxu0 0.0
    %3973 = vmatpush1.msra.mxu0 0.0
    %3974 = vmatprep.subr.mxu0 0.0
    %3975 = vmatpush1.msra.mxu0 0.0
    %3976 = vmatprep.subr.mxu0 0.0
    %3977 = vmatpush1.msra.mxu0 0.0
    %3978 = vmatprep.subr.mxu0 0.0
    %3979 = vmatpush1.msra.mxu0 0.0
    %3980 = vmatprep.subr.mxu0 0.0
    %3981 = vmatpush1.msra.mxu0 0.0
    %3982 = vmatprep.mubr.f32.mxu0 0.0
    %3983 = vmatmul.mubr.f32.gmra.mrb[0].mxu0 %v3916
    %v3984 = vpop.f32.mrb[0].mxu0
    %v3985 = vadd.f32 0.0, %v3984
    %v3986 = vpop.f32.mrb[0].mxu0
    %v3987 = vadd.f32 0.0, %v3986
    %3988 = vdwg.mxu0
    %3989 = vmatprep.subr.mxu0 0.0
    %3990 = vmatpush1.msra.mxu0 %v3869
    %3991 = vmatprep.subr.mxu0 0.0
    %3992 = vmatpush1.msra.mxu0 %v3872
    %3993 = vmatprep.subr.mxu0 0.0
    %3994 = vmatpush1.msra.mxu0 %v3875
    %3995 = vmatprep.subr.mxu0 0.0
    %3996 = vmatpush1.msra.mxu0 %v3878
    %3997 = vmatprep.subr.mxu0 0.0
    %3998 = vmatpush1.msra.mxu0 %v3881
    %3999 = vmatprep.subr.mxu0 0.0
    %4000 = vmatpush1.msra.mxu0 %v3884
    %4001 = vmatprep.subr.mxu0 0.0
    %4002 = vmatpush1.msra.mxu0 %v3887
    %4003 = vmatprep.subr.mxu0 0.0
    %4004 = vmatpush1.msra.mxu0 %v3890
    %4005 = vmatprep.subr.mxu0 0.0
    %4006 = vmatpush1.msra.mxu0 %v3893
    %4007 = vmatprep.subr.mxu0 0.0
    %4008 = vmatpush1.msra.mxu0 %v3896
    %4009 = vmatprep.subr.mxu0 0.0
    %4010 = vmatpush1.msra.mxu0 %v3899
    %4011 = vmatprep.subr.mxu0 0.0
    %4012 = vmatpush1.msra.mxu0 %v3902
    %4013 = vmatprep.subr.mxu0 0.0
    %4014 = vmatpush1.msra.mxu0 %v3905
    %4015 = vmatprep.subr.mxu0 0.0
    %4016 = vmatpush1.msra.mxu0 %v3908
    %4017 = vmatprep.subr.mxu0 0.0
    %4018 = vmatpush1.msra.mxu0 %v3911
    %4019 = vmatprep.subr.mxu0 0.0
    %4020 = vmatpush1.msra.mxu0 %v3914
    %4021 = vmatprep.subr.mxu0 0.0
    %4022 = vmatpush1.msra.mxu0 0.0
    %4023 = vmatprep.subr.mxu0 0.0
    %4024 = vmatpush1.msra.mxu0 0.0
    %4025 = vmatprep.subr.mxu0 0.0
    %4026 = vmatpush1.msra.mxu0 0.0
    %4027 = vmatprep.subr.mxu0 0.0
    %4028 = vmatpush1.msra.mxu0 0.0
    %4029 = vmatprep.subr.mxu0 0.0
    %4030 = vmatpush1.msra.mxu0 0.0
    %4031 = vmatprep.subr.mxu0 0.0
    %4032 = vmatpush1.msra.mxu0 0.0
    %4033 = vmatprep.subr.mxu0 0.0
    %4034 = vmatpush1.msra.mxu0 0.0
    %4035 = vmatprep.subr.mxu0 0.0
    %4036 = vmatpush1.msra.mxu0 0.0
    %4037 = vmatprep.subr.mxu0 0.0
    %4038 = vmatpush1.msra.mxu0 0.0
    %4039 = vmatprep.subr.mxu0 0.0
    %4040 = vmatpush1.msra.mxu0 0.0
    %4041 = vmatprep.subr.mxu0 0.0
    %4042 = vmatpush1.msra.mxu0 0.0
    %4043 = vmatprep.subr.mxu0 0.0
    %4044 = vmatpush1.msra.mxu0 0.0
    %4045 = vmatprep.subr.mxu0 0.0
    %4046 = vmatpush1.msra.mxu0 0.0
    %4047 = vmatprep.subr.mxu0 0.0
    %4048 = vmatpush1.msra.mxu0 0.0
    %4049 = vmatprep.subr.mxu0 0.0
    %4050 = vmatpush1.msra.mxu0 0.0
    %4051 = vmatprep.subr.mxu0 0.0
    %4052 = vmatpush1.msra.mxu0 0.0
    %4053 = vmatprep.mubr.f32.mxu0 0.0
    %4054 = vmatmul.mubr.f32.gmra.mrb[0].mxu0 %v3916
    %v4055 = vpop.f32.mrb[0].mxu0
    %v4056 = vadd.f32 0.0, %v4055
    %v4057 = vpop.f32.mrb[0].mxu0
    %4058 = vdwg.mxu0
    %v4060 = vrot.slane %v3985, 6
    %v4062 = vadd.f32 %v878, %v4060
    %v4063 = vxor.u32 %v4062, 2147483648
    %v4064 = vmul.f32 %v4063, 1.442695
    %v4065 = vpow.pop %v4064
    %v4066 = vadd.f32 %v4065, 1.0
    %v4067 = vrcp.pop %v4066
    %v4068 = vmul.f32 1.0, %v4067
    %v4070 = vrot.slane %v3987, 6
    %v4072 = vadd.f32 %v953, %v4070
    %v4073 = vxor.u32 %v4072, 2147483648
    %v4074 = vmul.f32 %v4073, 1.442695
    %v4075 = vpow.pop %v4074
    %v4076 = vadd.f32 %v4075, 1.0
    %v4077 = vrcp.pop %v4076
    %v4078 = vmul.f32 1.0, %v4077
    %v4079 = vadd.f32 %v4056, %v1395
    %v4081 = vrot.slane %v4079, 6
    %v4083 = vmul.f32 %v4068, %v4081
    %v4084 = vadd.f32 %v955, %v4083
    %v4085 = vtanh.pop %v4084
    %v4086 = vsub.f32 1.0, %v4078
    %v4087 = vmul.f32 %v4086, %v4085
    %v4088 = vrot.slane %v3639, 2
    %v4090 = vmul.f32 %v4078, %v4088
    %v4091 = vadd.f32 %v4087, %v4090
    %4092 = vst [vmem:[#allocation2 + $0x10] sm:$0x30] %v3866
    %4093 = vst [vmem:[#allocation2 + $0x8] sm:$0xc] %v4091
    %v4094 = vld [vmem:[#allocation15] sm:$0xff]
    %v4095 = vld [vmem:[#allocation15 + $0x8] sm:$0xff]
    %v4096 = vld [vmem:[#allocation15 + $0x10] sm:$0xff]
    %v4097 = vld [vmem:[#allocation15 + $0x18] sm:$0xff]
    %v4098 = vld [vmem:[#allocation15 + $0x20] sm:$0xff]
    %v4099 = vld [vmem:[#allocation15 + $0x28] sm:$0xff]
    %v4100 = vld [vmem:[#allocation15 + $0x30] sm:$0xff]
    %v4101 = vld [vmem:[#allocation15 + $0x38] sm:$0xff]
    %v4102 = vld [vmem:[#allocation15 + $0x40] sm:$0xff]
    %v4103 = vld [vmem:[#allocation15 + $0x48] sm:$0xff]
    %v4104 = vld [vmem:[#allocation15 + $0x50] sm:$0xff]
    %v4105 = vld [vmem:[#allocation15 + $0x58] sm:$0xff]
    %v4106 = vld [vmem:[#allocation15 + $0x60] sm:$0xff]
    %v4107 = vld [vmem:[#allocation15 + $0x68] sm:$0xff]
    %v4108 = vld [vmem:[#allocation15 + $0x70] sm:$0xff]
    %v4109 = vld [vmem:[#allocation15 + $0x78] sm:$0xff]
    %v4110 = vld [vmem:[#allocation15 + $0x80] sm:$0xff]
    %v4111 = vld [vmem:[#allocation15 + $0x88] sm:$0xff]
    %v4112 = vld [vmem:[#allocation15 + $0x90] sm:$0xff]
    %v4113 = vld [vmem:[#allocation15 + $0x98] sm:$0xff]
    %v4114 = vld [vmem:[#allocation15 + $0xa0] sm:$0xff]
    %v4115 = vld [vmem:[#allocation15 + $0xa8] sm:$0xff]
    %v4116 = vld [vmem:[#allocation15 + $0xb0] sm:$0xff]
    %v4117 = vld [vmem:[#allocation15 + $0xb8] sm:$0xff]
    %v4118 = vld [vmem:[#allocation15 + $0xc0] sm:$0xff]
    %v4119 = vld [vmem:[#allocation15 + $0xc8] sm:$0xff]
    %v4120 = vld [vmem:[#allocation15 + $0xd0] sm:$0xff]
    %v4121 = vld [vmem:[#allocation15 + $0xd8] sm:$0xff]
    %v4122 = vld [vmem:[#allocation15 + $0xe0] sm:$0xff]
    %v4123 = vld [vmem:[#allocation15 + $0xe8] sm:$0xff]
    %v4124 = vld [vmem:[#allocation15 + $0xf0] sm:$0xff]
    %v4125 = vld [vmem:[#allocation15 + $0xf8] sm:$0xff]
    %v4126 = vld [vmem:[#allocation15 + $0x100] sm:$0xff]
    %v4127 = vld [vmem:[#allocation15 + $0x108] sm:$0xff]
    %v4128 = vld [vmem:[#allocation15 + $0x110] sm:$0xff]
    %v4129 = vld [vmem:[#allocation15 + $0x118] sm:$0xff]
    %v4130 = vld [vmem:[#allocation15 + $0x120] sm:$0xff]
    %v4131 = vld [vmem:[#allocation15 + $0x128] sm:$0xff]
    %v4132 = vld [vmem:[#allocation15 + $0x130] sm:$0xff]
    %v4133 = vld [vmem:[#allocation15 + $0x138] sm:$0xff]
    %v4134 = vld [vmem:[#allocation15 + $0x140] sm:$0xff]
    %v4135 = vld [vmem:[#allocation15 + $0x148] sm:$0xff]
    %v4136 = vld [vmem:[#allocation15 + $0x150] sm:$0xff]
    %v4137 = vld [vmem:[#allocation15 + $0x158] sm:$0xff]
    %v4138 = vld [vmem:[#allocation15 + $0x160] sm:$0xff]
    %v4139 = vld [vmem:[#allocation15 + $0x168] sm:$0xff]
    %v4140 = vld [vmem:[#allocation15 + $0x170] sm:$0xff]
    %v4141 = vld [vmem:[#allocation15 + $0x178] sm:$0xff]
    %v4143 = vrot.slane %v3866, 4
    %4145 = vmatprep.subr.mxu0 %v4095
    %4146 = vmatpush1.msra.mxu0 %v4094
    %4147 = vmatprep.subr.mxu0 %v4098
    %4148 = vmatpush1.msra.mxu0 %v4097
    %4149 = vmatprep.subr.mxu0 %v4101
    %4150 = vmatpush1.msra.mxu0 %v4100
    %4151 = vmatprep.subr.mxu0 %v4104
    %4152 = vmatpush1.msra.mxu0 %v4103
    %4153 = vmatprep.subr.mxu0 %v4107
    %4154 = vmatpush1.msra.mxu0 %v4106
    %4155 = vmatprep.subr.mxu0 %v4110
    %4156 = vmatpush1.msra.mxu0 %v4109
    %4157 = vmatprep.subr.mxu0 %v4113
    %4158 = vmatpush1.msra.mxu0 %v4112
    %4159 = vmatprep.subr.mxu0 %v4116
    %4160 = vmatpush1.msra.mxu0 %v4115
    %4161 = vmatprep.subr.mxu0 %v4119
    %4162 = vmatpush1.msra.mxu0 %v4118
    %4163 = vmatprep.subr.mxu0 %v4122
    %4164 = vmatpush1.msra.mxu0 %v4121
    %4165 = vmatprep.subr.mxu0 %v4125
    %4166 = vmatpush1.msra.mxu0 %v4124
    %4167 = vmatprep.subr.mxu0 %v4128
    %4168 = vmatpush1.msra.mxu0 %v4127
    %4169 = vmatprep.subr.mxu0 %v4131
    %4170 = vmatpush1.msra.mxu0 %v4130
    %4171 = vmatprep.subr.mxu0 %v4134
    %4172 = vmatpush1.msra.mxu0 %v4133
    %4173 = vmatprep.subr.mxu0 %v4137
    %4174 = vmatpush1.msra.mxu0 %v4136
    %4175 = vmatprep.subr.mxu0 %v4140
    %4176 = vmatpush1.msra.mxu0 %v4139
    %4177 = vmatprep.subr.mxu0 0.0
    %4178 = vmatpush1.msra.mxu0 0.0
    %4179 = vmatprep.subr.mxu0 0.0
    %4180 = vmatpush1.msra.mxu0 0.0
    %4181 = vmatprep.subr.mxu0 0.0
    %4182 = vmatpush1.msra.mxu0 0.0
    %4183 = vmatprep.subr.mxu0 0.0
    %4184 = vmatpush1.msra.mxu0 0.0
    %4185 = vmatprep.subr.mxu0 0.0
    %4186 = vmatpush1.msra.mxu0 0.0
    %4187 = vmatprep.subr.mxu0 0.0
    %4188 = vmatpush1.msra.mxu0 0.0
    %4189 = vmatprep.subr.mxu0 0.0
    %4190 = vmatpush1.msra.mxu0 0.0
    %4191 = vmatprep.subr.mxu0 0.0
    %4192 = vmatpush1.msra.mxu0 0.0
    %4193 = vmatprep.subr.mxu0 0.0
    %4194 = vmatpush1.msra.mxu0 0.0
    %4195 = vmatprep.subr.mxu0 0.0
    %4196 = vmatpush1.msra.mxu0 0.0
    %4197 = vmatprep.subr.mxu0 0.0
    %4198 = vmatpush1.msra.mxu0 0.0
    %4199 = vmatprep.subr.mxu0 0.0
    %4200 = vmatpush1.msra.mxu0 0.0
    %4201 = vmatprep.subr.mxu0 0.0
    %4202 = vmatpush1.msra.mxu0 0.0
    %4203 = vmatprep.subr.mxu0 0.0
    %4204 = vmatpush1.msra.mxu0 0.0
    %4205 = vmatprep.subr.mxu0 0.0
    %4206 = vmatpush1.msra.mxu0 0.0
    %4207 = vmatprep.subr.mxu0 0.0
    %4208 = vmatpush1.msra.mxu0 0.0
    %4209 = vmatprep.mubr.f32.mxu0 0.0
    %4210 = vmatmul.mubr.f32.gmra.mrb[0].mxu0 %v4143
    %v4211 = vpop.f32.mrb[0].mxu0
    %v4212 = vadd.f32 0.0, %v4211
    %v4213 = vpop.f32.mrb[0].mxu0
    %v4214 = vadd.f32 0.0, %v4213
    %4215 = vdwg.mxu0
    %4216 = vmatprep.subr.mxu0 0.0
    %4217 = vmatpush1.msra.mxu0 %v4096
    %4218 = vmatprep.subr.mxu0 0.0
    %4219 = vmatpush1.msra.mxu0 %v4099
    %4220 = vmatprep.subr.mxu0 0.0
    %4221 = vmatpush1.msra.mxu0 %v4102
    %4222 = vmatprep.subr.mxu0 0.0
    %4223 = vmatpush1.msra.mxu0 %v4105
    %4224 = vmatprep.subr.mxu0 0.0
    %4225 = vmatpush1.msra.mxu0 %v4108
    %4226 = vmatprep.subr.mxu0 0.0
    %4227 = vmatpush1.msra.mxu0 %v4111
    %4228 = vmatprep.subr.mxu0 0.0
    %4229 = vmatpush1.msra.mxu0 %v4114
    %4230 = vmatprep.subr.mxu0 0.0
    %4231 = vmatpush1.msra.mxu0 %v4117
    %4232 = vmatprep.subr.mxu0 0.0
    %4233 = vmatpush1.msra.mxu0 %v4120
    %4234 = vmatprep.subr.mxu0 0.0
    %4235 = vmatpush1.msra.mxu0 %v4123
    %4236 = vmatprep.subr.mxu0 0.0
    %4237 = vmatpush1.msra.mxu0 %v4126
    %4238 = vmatprep.subr.mxu0 0.0
    %4239 = vmatpush1.msra.mxu0 %v4129
    %4240 = vmatprep.subr.mxu0 0.0
    %4241 = vmatpush1.msra.mxu0 %v4132
    %4242 = vmatprep.subr.mxu0 0.0
    %4243 = vmatpush1.msra.mxu0 %v4135
    %4244 = vmatprep.subr.mxu0 0.0
    %4245 = vmatpush1.msra.mxu0 %v4138
    %4246 = vmatprep.subr.mxu0 0.0
    %4247 = vmatpush1.msra.mxu0 %v4141
    %4248 = vmatprep.subr.mxu0 0.0
    %4249 = vmatpush1.msra.mxu0 0.0
    %4250 = vmatprep.subr.mxu0 0.0
    %4251 = vmatpush1.msra.mxu0 0.0
    %4252 = vmatprep.subr.mxu0 0.0
    %4253 = vmatpush1.msra.mxu0 0.0
    %4254 = vmatprep.subr.mxu0 0.0
    %4255 = vmatpush1.msra.mxu0 0.0
    %4256 = vmatprep.subr.mxu0 0.0
    %4257 = vmatpush1.msra.mxu0 0.0
    %4258 = vmatprep.subr.mxu0 0.0
    %4259 = vmatpush1.msra.mxu0 0.0
    %4260 = vmatprep.subr.mxu0 0.0
    %4261 = vmatpush1.msra.mxu0 0.0
    %4262 = vmatprep.subr.mxu0 0.0
    %4263 = vmatpush1.msra.mxu0 0.0
    %4264 = vmatprep.subr.mxu0 0.0
    %4265 = vmatpush1.msra.mxu0 0.0
    %4266 = vmatprep.subr.mxu0 0.0
    %4267 = vmatpush1.msra.mxu0 0.0
    %4268 = vmatprep.subr.mxu0 0.0
    %4269 = vmatpush1.msra.mxu0 0.0
    %4270 = vmatprep.subr.mxu0 0.0
    %4271 = vmatpush1.msra.mxu0 0.0
    %4272 = vmatprep.subr.mxu0 0.0
    %4273 = vmatpush1.msra.mxu0 0.0
    %4274 = vmatprep.subr.mxu0 0.0
    %4275 = vmatpush1.msra.mxu0 0.0
    %4276 = vmatprep.subr.mxu0 0.0
    %4277 = vmatpush1.msra.mxu0 0.0
    %4278 = vmatprep.subr.mxu0 0.0
    %4279 = vmatpush1.msra.mxu0 0.0
    %4280 = vmatprep.mubr.f32.mxu0 0.0
    %4281 = vmatmul.mubr.f32.gmra.mrb[0].mxu0 %v4143
    %v4282 = vpop.f32.mrb[0].mxu0
    %v4283 = vadd.f32 0.0, %v4282
    %v4284 = vpop.f32.mrb[0].mxu0
    %4285 = vdwg.mxu0
    %v4287 = vrot.slane %v4212, 2
    %v4289 = vadd.f32 %v805, %v4287
    %v4290 = vxor.u32 %v4289, 2147483648
    %v4291 = vmul.f32 %v4290, 1.442695
    %v4292 = vpow.pop %v4291
    %v4293 = vadd.f32 %v4292, 1.0
    %v4294 = vrcp.pop %v4293
    %v4295 = vmul.f32 1.0, %v4294
    %v4297 = vrot.slane %v4214, 2
    %v4299 = vadd.f32 %v807, %v4297
    %v4300 = vxor.u32 %v4299, 2147483648
    %v4301 = vmul.f32 %v4300, 1.442695
    %v4302 = vpow.pop %v4301
    %v4303 = vadd.f32 %v4302, 1.0
    %v4304 = vrcp.pop %v4303
    %v4305 = vmul.f32 1.0, %v4304
    %v4306 = vadd.f32 %v4283, %v1172
    %v4308 = vrot.slane %v4306, 2
    %v4310 = vmul.f32 %v4295, %v4308
    %v4311 = vadd.f32 %v882, %v4310
    %v4312 = vtanh.pop %v4311
    %v4313 = vsub.f32 1.0, %v4305
    %v4314 = vmul.f32 %v4313, %v4312
    %v4315 = vrot.slane %v3866, 6
    %v4317 = vmul.f32 %v4305, %v4315
    %v4318 = vadd.f32 %v4314, %v4317
    %v4319 = vld [vmem:[#allocation17] sm:$0xff]
    %v4320 = vld [vmem:[#allocation17 + $0x8] sm:$0xff]
    %v4321 = vld [vmem:[#allocation17 + $0x10] sm:$0xff]
    %v4322 = vld [vmem:[#allocation17 + $0x18] sm:$0xff]
    %v4323 = vld [vmem:[#allocation17 + $0x20] sm:$0xff]
    %v4324 = vld [vmem:[#allocation17 + $0x28] sm:$0xff]
    %v4325 = vld [vmem:[#allocation17 + $0x30] sm:$0xff]
    %v4326 = vld [vmem:[#allocation17 + $0x38] sm:$0xff]
    %v4327 = vld [vmem:[#allocation17 + $0x40] sm:$0xff]
    %v4328 = vld [vmem:[#allocation17 + $0x48] sm:$0xff]
    %v4329 = vld [vmem:[#allocation17 + $0x50] sm:$0xff]
    %v4330 = vld [vmem:[#allocation17 + $0x58] sm:$0xff]
    %v4331 = vld [vmem:[#allocation17 + $0x60] sm:$0xff]
    %v4332 = vld [vmem:[#allocation17 + $0x68] sm:$0xff]
    %v4333 = vld [vmem:[#allocation17 + $0x70] sm:$0xff]
    %v4334 = vld [vmem:[#allocation17 + $0x78] sm:$0xff]
    %v4335 = vld [vmem:[#allocation17 + $0x80] sm:$0xff]
    %v4336 = vld [vmem:[#allocation17 + $0x88] sm:$0xff]
    %v4337 = vld [vmem:[#allocation17 + $0x90] sm:$0xff]
    %v4338 = vld [vmem:[#allocation17 + $0x98] sm:$0xff]
    %v4339 = vld [vmem:[#allocation17 + $0xa0] sm:$0xff]
    %v4340 = vld [vmem:[#allocation17 + $0xa8] sm:$0xff]
    %v4341 = vld [vmem:[#allocation17 + $0xb0] sm:$0xff]
    %v4342 = vld [vmem:[#allocation17 + $0xb8] sm:$0xff]
    %v4343 = vld [vmem:[#allocation17 + $0xc0] sm:$0xff]
    %v4344 = vld [vmem:[#allocation17 + $0xc8] sm:$0xff]
    %v4345 = vld [vmem:[#allocation17 + $0xd0] sm:$0xff]
    %v4346 = vld [vmem:[#allocation17 + $0xd8] sm:$0xff]
    %v4347 = vld [vmem:[#allocation17 + $0xe0] sm:$0xff]
    %v4348 = vld [vmem:[#allocation17 + $0xe8] sm:$0xff]
    %v4349 = vld [vmem:[#allocation17 + $0xf0] sm:$0xff]
    %v4350 = vld [vmem:[#allocation17 + $0xf8] sm:$0xff]
    %v4351 = vld [vmem:[#allocation17 + $0x100] sm:$0xff]
    %v4352 = vld [vmem:[#allocation17 + $0x108] sm:$0xff]
    %v4353 = vld [vmem:[#allocation17 + $0x110] sm:$0xff]
    %v4354 = vld [vmem:[#allocation17 + $0x118] sm:$0xff]
    %v4355 = vld [vmem:[#allocation17 + $0x120] sm:$0xff]
    %v4356 = vld [vmem:[#allocation17 + $0x128] sm:$0xff]
    %v4357 = vld [vmem:[#allocation17 + $0x130] sm:$0xff]
    %v4358 = vld [vmem:[#allocation17 + $0x138] sm:$0xff]
    %v4359 = vld [vmem:[#allocation17 + $0x140] sm:$0xff]
    %v4360 = vld [vmem:[#allocation17 + $0x148] sm:$0xff]
    %v4361 = vld [vmem:[#allocation17 + $0x150] sm:$0xff]
    %v4362 = vld [vmem:[#allocation17 + $0x158] sm:$0xff]
    %v4363 = vld [vmem:[#allocation17 + $0x160] sm:$0xff]
    %v4364 = vld [vmem:[#allocation17 + $0x168] sm:$0xff]
    %v4365 = vld [vmem:[#allocation17 + $0x170] sm:$0xff]
    %v4366 = vld [vmem:[#allocation17 + $0x178] sm:$0xff]
    %v4368 = vrot.slane %v4091, 2
    %4370 = vmatprep.subr.mxu0 %v4320
    %4371 = vmatpush1.msra.mxu0 %v4319
    %4372 = vmatprep.subr.mxu0 %v4323
    %4373 = vmatpush1.msra.mxu0 %v4322
    %4374 = vmatprep.subr.mxu0 %v4326
    %4375 = vmatpush1.msra.mxu0 %v4325
    %4376 = vmatprep.subr.mxu0 %v4329
    %4377 = vmatpush1.msra.mxu0 %v4328
    %4378 = vmatprep.subr.mxu0 %v4332
    %4379 = vmatpush1.msra.mxu0 %v4331
    %4380 = vmatprep.subr.mxu0 %v4335
    %4381 = vmatpush1.msra.mxu0 %v4334
    %4382 = vmatprep.subr.mxu0 %v4338
    %4383 = vmatpush1.msra.mxu0 %v4337
    %4384 = vmatprep.subr.mxu0 %v4341
    %4385 = vmatpush1.msra.mxu0 %v4340
    %4386 = vmatprep.subr.mxu0 %v4344
    %4387 = vmatpush1.msra.mxu0 %v4343
    %4388 = vmatprep.subr.mxu0 %v4347
    %4389 = vmatpush1.msra.mxu0 %v4346
    %4390 = vmatprep.subr.mxu0 %v4350
    %4391 = vmatpush1.msra.mxu0 %v4349
    %4392 = vmatprep.subr.mxu0 %v4353
    %4393 = vmatpush1.msra.mxu0 %v4352
    %4394 = vmatprep.subr.mxu0 %v4356
    %4395 = vmatpush1.msra.mxu0 %v4355
    %4396 = vmatprep.subr.mxu0 %v4359
    %4397 = vmatpush1.msra.mxu0 %v4358
    %4398 = vmatprep.subr.mxu0 %v4362
    %4399 = vmatpush1.msra.mxu0 %v4361
    %4400 = vmatprep.subr.mxu0 %v4365
    %4401 = vmatpush1.msra.mxu0 %v4364
    %4402 = vmatprep.subr.mxu0 0.0
    %4403 = vmatpush1.msra.mxu0 0.0
    %4404 = vmatprep.subr.mxu0 0.0
    %4405 = vmatpush1.msra.mxu0 0.0
    %4406 = vmatprep.subr.mxu0 0.0
    %4407 = vmatpush1.msra.mxu0 0.0
    %4408 = vmatprep.subr.mxu0 0.0
    %4409 = vmatpush1.msra.mxu0 0.0
    %4410 = vmatprep.subr.mxu0 0.0
    %4411 = vmatpush1.msra.mxu0 0.0
    %4412 = vmatprep.subr.mxu0 0.0
    %4413 = vmatpush1.msra.mxu0 0.0
    %4414 = vmatprep.subr.mxu0 0.0
    %4415 = vmatpush1.msra.mxu0 0.0
    %4416 = vmatprep.subr.mxu0 0.0
    %4417 = vmatpush1.msra.mxu0 0.0
    %4418 = vmatprep.subr.mxu0 0.0
    %4419 = vmatpush1.msra.mxu0 0.0
    %4420 = vmatprep.subr.mxu0 0.0
    %4421 = vmatpush1.msra.mxu0 0.0
    %4422 = vmatprep.subr.mxu0 0.0
    %4423 = vmatpush1.msra.mxu0 0.0
    %4424 = vmatprep.subr.mxu0 0.0
    %4425 = vmatpush1.msra.mxu0 0.0
    %4426 = vmatprep.subr.mxu0 0.0
    %4427 = vmatpush1.msra.mxu0 0.0
    %4428 = vmatprep.subr.mxu0 0.0
    %4429 = vmatpush1.msra.mxu0 0.0
    %4430 = vmatprep.subr.mxu0 0.0
    %4431 = vmatpush1.msra.mxu0 0.0
    %4432 = vmatprep.subr.mxu0 0.0
    %4433 = vmatpush1.msra.mxu0 0.0
    %4434 = vmatprep.mubr.f32.mxu0 0.0
    %4435 = vmatmul.mubr.f32.gmra.mrb[0].mxu0 %v4368
    %v4436 = vpop.f32.mrb[0].mxu0
    %v4437 = vadd.f32 0.0, %v4436
    %v4438 = vpop.f32.mrb[0].mxu0
    %v4439 = vadd.f32 0.0, %v4438
    %4440 = vdwg.mxu0
    %4441 = vmatprep.subr.mxu0 0.0
    %4442 = vmatpush1.msra.mxu0 %v4321
    %4443 = vmatprep.subr.mxu0 0.0
    %4444 = vmatpush1.msra.mxu0 %v4324
    %4445 = vmatprep.subr.mxu0 0.0
    %4446 = vmatpush1.msra.mxu0 %v4327
    %4447 = vmatprep.subr.mxu0 0.0
    %4448 = vmatpush1.msra.mxu0 %v4330
    %4449 = vmatprep.subr.mxu0 0.0
    %4450 = vmatpush1.msra.mxu0 %v4333
    %4451 = vmatprep.subr.mxu0 0.0
    %4452 = vmatpush1.msra.mxu0 %v4336
    %4453 = vmatprep.subr.mxu0 0.0
    %4454 = vmatpush1.msra.mxu0 %v4339
    %4455 = vmatprep.subr.mxu0 0.0
    %4456 = vmatpush1.msra.mxu0 %v4342
    %4457 = vmatprep.subr.mxu0 0.0
    %4458 = vmatpush1.msra.mxu0 %v4345
    %4459 = vmatprep.subr.mxu0 0.0
    %4460 = vmatpush1.msra.mxu0 %v4348
    %4461 = vmatprep.subr.mxu0 0.0
    %4462 = vmatpush1.msra.mxu0 %v4351
    %4463 = vmatprep.subr.mxu0 0.0
    %4464 = vmatpush1.msra.mxu0 %v4354
    %4465 = vmatprep.subr.mxu0 0.0
    %4466 = vmatpush1.msra.mxu0 %v4357
    %4467 = vmatprep.subr.mxu0 0.0
    %4468 = vmatpush1.msra.mxu0 %v4360
    %4469 = vmatprep.subr.mxu0 0.0
    %4470 = vmatpush1.msra.mxu0 %v4363
    %4471 = vmatprep.subr.mxu0 0.0
    %4472 = vmatpush1.msra.mxu0 %v4366
    %4473 = vmatprep.subr.mxu0 0.0
    %4474 = vmatpush1.msra.mxu0 0.0
    %4475 = vmatprep.subr.mxu0 0.0
    %4476 = vmatpush1.msra.mxu0 0.0
    %4477 = vmatprep.subr.mxu0 0.0
    %4478 = vmatpush1.msra.mxu0 0.0
    %4479 = vmatprep.subr.mxu0 0.0
    %4480 = vmatpush1.msra.mxu0 0.0
    %4481 = vmatprep.subr.mxu0 0.0
    %4482 = vmatpush1.msra.mxu0 0.0
    %4483 = vmatprep.subr.mxu0 0.0
    %4484 = vmatpush1.msra.mxu0 0.0
    %4485 = vmatprep.subr.mxu0 0.0
    %4486 = vmatpush1.msra.mxu0 0.0
    %4487 = vmatprep.subr.mxu0 0.0
    %4488 = vmatpush1.msra.mxu0 0.0
    %4489 = vmatprep.subr.mxu0 0.0
    %4490 = vmatpush1.msra.mxu0 0.0
    %4491 = vmatprep.subr.mxu0 0.0
    %4492 = vmatpush1.msra.mxu0 0.0
    %4493 = vmatprep.subr.mxu0 0.0
    %4494 = vmatpush1.msra.mxu0 0.0
    %4495 = vmatprep.subr.mxu0 0.0
    %4496 = vmatpush1.msra.mxu0 0.0
    %4497 = vmatprep.subr.mxu0 0.0
    %4498 = vmatpush1.msra.mxu0 0.0
    %4499 = vmatprep.subr.mxu0 0.0
    %4500 = vmatpush1.msra.mxu0 0.0
    %4501 = vmatprep.subr.mxu0 0.0
    %4502 = vmatpush1.msra.mxu0 0.0
    %4503 = vmatprep.subr.mxu0 0.0
    %4504 = vmatpush1.msra.mxu0 0.0
    %4505 = vmatprep.mubr.f32.mxu0 0.0
    %4506 = vmatmul.mubr.f32.gmra.mrb[0].mxu0 %v4368
    %v4507 = vpop.f32.mrb[0].mxu0
    %v4508 = vadd.f32 0.0, %v4507
    %v4509 = vpop.f32.mrb[0].mxu0
    %4510 = vdwg.mxu0
    %v4511 = vadd.f32 %v878, %v4437
    %v4512 = vxor.u32 %v4511, 2147483648
    %v4513 = vmul.f32 %v4512, 1.442695
    %v4514 = vpow.pop %v4513
    %v4515 = vadd.f32 %v4514, 1.0
    %v4516 = vrcp.pop %v4515
    %v4517 = vmul.f32 1.0, %v4516
    %v4518 = vadd.f32 %v953, %v4439
    %v4519 = vxor.u32 %v4518, 2147483648
    %v4520 = vmul.f32 %v4519, 1.442695
    %v4521 = vpow.pop %v4520
    %v4522 = vadd.f32 %v4521, 1.0
    %v4523 = vrcp.pop %v4522
    %v4524 = vmul.f32 1.0, %v4523
    %v4525 = vadd.f32 %v4508, %v1395
    %v4526 = vmul.f32 %v4517, %v4525
    %v4527 = vadd.f32 %v955, %v4526
    %v4528 = vtanh.pop %v4527
    %v4529 = vsub.f32 1.0, %v4524
    %v4530 = vmul.f32 %v4529, %v4528
    %v4531 = vmul.f32 %v4524, %v4368
    %v4532 = vadd.f32 %v4530, %v4531
    %4533 = vst [vmem:[#allocation2 + $0x10] sm:$0xc0] %v4318
    %4534 = vst [vmem:[#allocation2 + $0x8] sm:$0x3] %v4532
    %v4535 = vld [vmem:[#allocation2] sm:$0xff]
    %v4536 = vld [vmem:[#allocation2 + $0x8] sm:$0xff]
    %v4537 = vld [vmem:[#allocation2 + $0x10] sm:$0xff]
    %v4538 = vld [vmem:[#allocation2 + $0x18] sm:$0xff]
    %v4539 = vld [vmem:[#allocation21] sm:$0xff]
    %v4540 = vld [vmem:[#allocation21 + $0x8] sm:$0xff]
    %v4541 = vld [vmem:[#allocation21 + $0x10] sm:$0xff]
    %v4542 = vld [vmem:[#allocation21 + $0x18] sm:$0xff]
    %v4543 = vld [vmem:[#allocation21 + $0x20] sm:$0xff]
    %v4544 = vld [vmem:[#allocation21 + $0x28] sm:$0xff]
    %v4545 = vld [vmem:[#allocation21 + $0x30] sm:$0xff]
    %v4546 = vld [vmem:[#allocation21 + $0x38] sm:$0xff]
    %v4547 = vld [vmem:[#allocation21 + $0x40] sm:$0xff]
    %v4548 = vld [vmem:[#allocation21 + $0x48] sm:$0xff]
    %v4549 = vld [vmem:[#allocation21 + $0x50] sm:$0xff]
    %v4550 = vld [vmem:[#allocation21 + $0x58] sm:$0xff]
    %v4551 = vld [vmem:[#allocation21 + $0x60] sm:$0xff]
    %v4552 = vld [vmem:[#allocation21 + $0x68] sm:$0xff]
    %v4553 = vld [vmem:[#allocation21 + $0x70] sm:$0xff]
    %v4554 = vld [vmem:[#allocation21 + $0x78] sm:$0xff]
    %v4555 = vld [vmem:[#allocation21 + $0x80] sm:$0xff]
    %v4556 = vld [vmem:[#allocation21 + $0x88] sm:$0xff]
    %v4557 = vld [vmem:[#allocation21 + $0x90] sm:$0xff]
    %v4558 = vld [vmem:[#allocation21 + $0x98] sm:$0xff]
    %v4559 = vld [vmem:[#allocation21 + $0xa0] sm:$0xff]
    %v4560 = vld [vmem:[#allocation21 + $0xa8] sm:$0xff]
    %v4561 = vld [vmem:[#allocation21 + $0xb0] sm:$0xff]
    %v4562 = vld [vmem:[#allocation21 + $0xb8] sm:$0xff]
    %v4563 = vld [vmem:[#allocation21 + $0xc0] sm:$0xff]
    %v4564 = vld [vmem:[#allocation21 + $0xc8] sm:$0xff]
    %v4565 = vld [vmem:[#allocation21 + $0xd0] sm:$0xff]
    %v4566 = vld [vmem:[#allocation21 + $0xd8] sm:$0xff]
    %v4567 = vld [vmem:[#allocation21 + $0xe0] sm:$0xff]
    %v4568 = vld [vmem:[#allocation21 + $0xe8] sm:$0xff]
    %v4569 = vld [vmem:[#allocation21 + $0xf0] sm:$0xff]
    %v4570 = vld [vmem:[#allocation21 + $0xf8] sm:$0xff]
    %v4571 = vld [vmem:[#allocation21 + $0x100] sm:$0xff]
    %v4572 = vld [vmem:[#allocation21 + $0x108] sm:$0xff]
    %v4573 = vld [vmem:[#allocation21 + $0x110] sm:$0xff]
    %v4574 = vld [vmem:[#allocation21 + $0x118] sm:$0xff]
    %v4575 = vld [vmem:[#allocation21 + $0x120] sm:$0xff]
    %v4576 = vld [vmem:[#allocation21 + $0x128] sm:$0xff]
    %v4577 = vld [vmem:[#allocation21 + $0x130] sm:$0xff]
    %v4578 = vld [vmem:[#allocation21 + $0x138] sm:$0xff]
    %v4579 = vld [vmem:[#allocation21 + $0x140] sm:$0xff]
    %v4580 = vld [vmem:[#allocation21 + $0x148] sm:$0xff]
    %v4581 = vld [vmem:[#allocation21 + $0x150] sm:$0xff]
    %v4582 = vld [vmem:[#allocation21 + $0x158] sm:$0xff]
    %v4583 = vld [vmem:[#allocation21 + $0x160] sm:$0xff]
    %v4584 = vld [vmem:[#allocation21 + $0x168] sm:$0xff]
    %v4585 = vld [vmem:[#allocation21 + $0x170] sm:$0xff]
    %v4586 = vld [vmem:[#allocation21 + $0x178] sm:$0xff]
    %v4587 = vld [vmem:[#allocation21 + $0x180] sm:$0xff]
    %v4588 = vld [vmem:[#allocation21 + $0x188] sm:$0xff]
    %v4589 = vld [vmem:[#allocation21 + $0x190] sm:$0xff]
    %v4590 = vld [vmem:[#allocation21 + $0x198] sm:$0xff]
    %v4591 = vld [vmem:[#allocation21 + $0x1a0] sm:$0xff]
    %v4592 = vld [vmem:[#allocation21 + $0x1a8] sm:$0xff]
    %v4593 = vld [vmem:[#allocation21 + $0x1b0] sm:$0xff]
    %v4594 = vld [vmem:[#allocation21 + $0x1b8] sm:$0xff]
    %v4595 = vld [vmem:[#allocation21 + $0x1c0] sm:$0xff]
    %v4596 = vld [vmem:[#allocation21 + $0x1c8] sm:$0xff]
    %v4597 = vld [vmem:[#allocation21 + $0x1d0] sm:$0xff]
    %v4598 = vld [vmem:[#allocation21 + $0x1d8] sm:$0xff]
    %v4599 = vld [vmem:[#allocation21 + $0x1e0] sm:$0xff]
    %v4600 = vld [vmem:[#allocation21 + $0x1e8] sm:$0xff]
    %v4601 = vld [vmem:[#allocation21 + $0x1f0] sm:$0xff]
    %v4602 = vld [vmem:[#allocation21 + $0x1f8] sm:$0xff]
    %v4603 = vld [vmem:[#allocation21 + $0x200] sm:$0xff]
    %v4604 = vld [vmem:[#allocation21 + $0x208] sm:$0xff]
    %v4605 = vld [vmem:[#allocation21 + $0x210] sm:$0xff]
    %v4606 = vld [vmem:[#allocation21 + $0x218] sm:$0xff]
    %v4607 = vld [vmem:[#allocation21 + $0x220] sm:$0xff]
    %v4608 = vld [vmem:[#allocation21 + $0x228] sm:$0xff]
    %v4609 = vld [vmem:[#allocation21 + $0x230] sm:$0xff]
    %v4610 = vld [vmem:[#allocation21 + $0x238] sm:$0xff]
    %v4611 = vld [vmem:[#allocation21 + $0x240] sm:$0xff]
    %v4612 = vld [vmem:[#allocation21 + $0x248] sm:$0xff]
    %v4613 = vld [vmem:[#allocation21 + $0x250] sm:$0xff]
    %v4614 = vld [vmem:[#allocation21 + $0x258] sm:$0xff]
    %v4615 = vld [vmem:[#allocation21 + $0x260] sm:$0xff]
    %v4616 = vld [vmem:[#allocation21 + $0x268] sm:$0xff]
    %v4617 = vld [vmem:[#allocation21 + $0x270] sm:$0xff]
    %v4618 = vld [vmem:[#allocation21 + $0x278] sm:$0xff]
    %v4619 = vld [vmem:[#allocation21 + $0x280] sm:$0xff]
    %v4620 = vld [vmem:[#allocation21 + $0x288] sm:$0xff]
    %v4621 = vld [vmem:[#allocation21 + $0x290] sm:$0xff]
    %v4622 = vld [vmem:[#allocation21 + $0x298] sm:$0xff]
    %v4623 = vld [vmem:[#allocation21 + $0x2a0] sm:$0xff]
    %v4624 = vld [vmem:[#allocation21 + $0x2a8] sm:$0xff]
    %v4625 = vld [vmem:[#allocation21 + $0x2b0] sm:$0xff]
    %v4626 = vld [vmem:[#allocation21 + $0x2b8] sm:$0xff]
    %v4627 = vld [vmem:[#allocation21 + $0x2c0] sm:$0xff]
    %v4628 = vld [vmem:[#allocation21 + $0x2c8] sm:$0xff]
    %v4629 = vld [vmem:[#allocation21 + $0x2d0] sm:$0xff]
    %v4630 = vld [vmem:[#allocation21 + $0x2d8] sm:$0xff]
    %v4631 = vld [vmem:[#allocation21 + $0x2e0] sm:$0xff]
    %v4632 = vld [vmem:[#allocation21 + $0x2e8] sm:$0xff]
    %v4633 = vld [vmem:[#allocation21 + $0x2f0] sm:$0xff]
    %v4634 = vld [vmem:[#allocation21 + $0x2f8] sm:$0xff]
    %v4635 = vld [vmem:[#allocation21 + $0x300] sm:$0xff]
    %v4636 = vld [vmem:[#allocation21 + $0x308] sm:$0xff]
    %v4637 = vld [vmem:[#allocation21 + $0x310] sm:$0xff]
    %v4638 = vld [vmem:[#allocation21 + $0x318] sm:$0xff]
    %v4639 = vld [vmem:[#allocation21 + $0x320] sm:$0xff]
    %v4640 = vld [vmem:[#allocation21 + $0x328] sm:$0xff]
    %v4641 = vld [vmem:[#allocation21 + $0x330] sm:$0xff]
    %v4642 = vld [vmem:[#allocation21 + $0x338] sm:$0xff]
    %v4643 = vld [vmem:[#allocation21 + $0x340] sm:$0xff]
    %v4644 = vld [vmem:[#allocation21 + $0x348] sm:$0xff]
    %v4645 = vld [vmem:[#allocation21 + $0x350] sm:$0xff]
    %v4646 = vld [vmem:[#allocation21 + $0x358] sm:$0xff]
    %v4647 = vld [vmem:[#allocation21 + $0x360] sm:$0xff]
    %v4648 = vld [vmem:[#allocation21 + $0x368] sm:$0xff]
    %v4649 = vld [vmem:[#allocation21 + $0x370] sm:$0xff]
    %v4650 = vld [vmem:[#allocation21 + $0x378] sm:$0xff]
    %v4651 = vld [vmem:[#allocation21 + $0x380] sm:$0xff]
    %v4652 = vld [vmem:[#allocation21 + $0x388] sm:$0xff]
    %v4653 = vld [vmem:[#allocation21 + $0x390] sm:$0xff]
    %v4654 = vld [vmem:[#allocation21 + $0x398] sm:$0xff]
    %v4655 = vld [vmem:[#allocation21 + $0x3a0] sm:$0xff]
    %v4656 = vld [vmem:[#allocation21 + $0x3a8] sm:$0xff]
    %v4657 = vld [vmem:[#allocation21 + $0x3b0] sm:$0xff]
    %v4658 = vld [vmem:[#allocation21 + $0x3b8] sm:$0xff]
    %v4659 = vld [vmem:[#allocation21 + $0x3c0] sm:$0xff]
    %v4660 = vld [vmem:[#allocation21 + $0x3c8] sm:$0xff]
    %v4661 = vld [vmem:[#allocation21 + $0x3d0] sm:$0xff]
    %v4662 = vld [vmem:[#allocation21 + $0x3d8] sm:$0xff]
    %v4663 = vld [vmem:[#allocation21 + $0x3e0] sm:$0xff]
    %v4664 = vld [vmem:[#allocation21 + $0x3e8] sm:$0xff]
    %v4665 = vld [vmem:[#allocation21 + $0x3f0] sm:$0xff]
    %v4666 = vld [vmem:[#allocation21 + $0x3f8] sm:$0xff]
    %v4667 = vld [vmem:[#allocation21 + $0x400] sm:$0xff]
    %v4668 = vld [vmem:[#allocation21 + $0x408] sm:$0xff]
    %v4669 = vld [vmem:[#allocation21 + $0x410] sm:$0xff]
    %v4670 = vld [vmem:[#allocation21 + $0x418] sm:$0xff]
    %v4671 = vld [vmem:[#allocation21 + $0x420] sm:$0xff]
    %v4672 = vld [vmem:[#allocation21 + $0x428] sm:$0xff]
    %v4673 = vld [vmem:[#allocation21 + $0x430] sm:$0xff]
    %v4674 = vld [vmem:[#allocation21 + $0x438] sm:$0xff]
    %v4675 = vld [vmem:[#allocation21 + $0x440] sm:$0xff]
    %v4676 = vld [vmem:[#allocation21 + $0x448] sm:$0xff]
    %v4677 = vld [vmem:[#allocation21 + $0x450] sm:$0xff]
    %v4678 = vld [vmem:[#allocation21 + $0x458] sm:$0xff]
    %v4679 = vld [vmem:[#allocation21 + $0x460] sm:$0xff]
    %v4680 = vld [vmem:[#allocation21 + $0x468] sm:$0xff]
    %v4681 = vld [vmem:[#allocation21 + $0x470] sm:$0xff]
    %v4682 = vld [vmem:[#allocation21 + $0x478] sm:$0xff]
    %v4683 = vld [vmem:[#allocation21 + $0x480] sm:$0xff]
    %v4684 = vld [vmem:[#allocation21 + $0x488] sm:$0xff]
    %v4685 = vld [vmem:[#allocation21 + $0x490] sm:$0xff]
    %v4686 = vld [vmem:[#allocation21 + $0x498] sm:$0xff]
    %v4687 = vld [vmem:[#allocation21 + $0x4a0] sm:$0xff]
    %v4688 = vld [vmem:[#allocation21 + $0x4a8] sm:$0xff]
    %v4689 = vld [vmem:[#allocation21 + $0x4b0] sm:$0xff]
    %v4690 = vld [vmem:[#allocation21 + $0x4b8] sm:$0xff]
    %v4691 = vld [vmem:[#allocation21 + $0x4c0] sm:$0xff]
    %v4692 = vld [vmem:[#allocation21 + $0x4c8] sm:$0xff]
    %v4693 = vld [vmem:[#allocation21 + $0x4d0] sm:$0xff]
    %v4694 = vld [vmem:[#allocation21 + $0x4d8] sm:$0xff]
    %v4695 = vld [vmem:[#allocation21 + $0x4e0] sm:$0xff]
    %v4696 = vld [vmem:[#allocation21 + $0x4e8] sm:$0xff]
    %v4697 = vld [vmem:[#allocation21 + $0x4f0] sm:$0xff]
    %v4698 = vld [vmem:[#allocation21 + $0x4f8] sm:$0xff]
    %v4699 = vld [vmem:[#allocation21 + $0x500] sm:$0xff]
    %v4700 = vld [vmem:[#allocation21 + $0x508] sm:$0xff]
    %v4701 = vld [vmem:[#allocation21 + $0x510] sm:$0xff]
    %v4702 = vld [vmem:[#allocation21 + $0x518] sm:$0xff]
    %v4703 = vld [vmem:[#allocation21 + $0x520] sm:$0xff]
    %v4704 = vld [vmem:[#allocation21 + $0x528] sm:$0xff]
    %v4705 = vld [vmem:[#allocation21 + $0x530] sm:$0xff]
    %v4706 = vld [vmem:[#allocation21 + $0x538] sm:$0xff]
    %v4707 = vld [vmem:[#allocation21 + $0x540] sm:$0xff]
    %v4708 = vld [vmem:[#allocation21 + $0x548] sm:$0xff]
    %v4709 = vld [vmem:[#allocation21 + $0x550] sm:$0xff]
    %v4710 = vld [vmem:[#allocation21 + $0x558] sm:$0xff]
    %v4711 = vld [vmem:[#allocation21 + $0x560] sm:$0xff]
    %v4712 = vld [vmem:[#allocation21 + $0x568] sm:$0xff]
    %v4713 = vld [vmem:[#allocation21 + $0x570] sm:$0xff]
    %v4714 = vld [vmem:[#allocation21 + $0x578] sm:$0xff]
    %v4715 = vld [vmem:[#allocation21 + $0x580] sm:$0xff]
    %v4716 = vld [vmem:[#allocation21 + $0x588] sm:$0xff]
    %v4717 = vld [vmem:[#allocation21 + $0x590] sm:$0xff]
    %v4718 = vld [vmem:[#allocation21 + $0x598] sm:$0xff]
    %v4719 = vld [vmem:[#allocation21 + $0x5a0] sm:$0xff]
    %v4720 = vld [vmem:[#allocation21 + $0x5a8] sm:$0xff]
    %v4721 = vld [vmem:[#allocation21 + $0x5b0] sm:$0xff]
    %v4722 = vld [vmem:[#allocation21 + $0x5b8] sm:$0xff]
    %v4723 = vld [vmem:[#allocation21 + $0x5c0] sm:$0xff]
    %v4724 = vld [vmem:[#allocation21 + $0x5c8] sm:$0xff]
    %v4725 = vld [vmem:[#allocation21 + $0x5d0] sm:$0xff]
    %v4726 = vld [vmem:[#allocation21 + $0x5d8] sm:$0xff]
    %v4727 = vld [vmem:[#allocation21 + $0x5e0] sm:$0xff]
    %v4728 = vld [vmem:[#allocation21 + $0x5e8] sm:$0xff]
    %v4729 = vld [vmem:[#allocation21 + $0x5f0] sm:$0xff]
    %v4730 = vld [vmem:[#allocation21 + $0x5f8] sm:$0xff]
    %v4731 = vld [vmem:[#allocation23] sm:$0x3f]
    %v4733 = vlaneseq
    %v4734 = vshrl.u32 %v4733, 7
    %v4735 = vsub.s32 0, %v4734
    %v4736 = vrot.slane %v4731, %v4735
    %v4737 = vlaneseq
    %v4738 = vshrl.u32 %v4737, 7
    %v4739 = vsub.s32 1, %v4738
    %v4740 = vrot.slane %v4731, %v4739
    %v4741 = vlaneseq
    %v4742 = vshrl.u32 %v4741, 7
    %v4743 = vsub.s32 2, %v4742
    %v4744 = vrot.slane %v4731, %v4743
    %v4745 = vlaneseq
    %v4746 = vshrl.u32 %v4745, 7
    %v4747 = vsub.s32 3, %v4746
    %v4748 = vrot.slane %v4731, %v4747
    %v4749 = vlaneseq
    %v4750 = vshrl.u32 %v4749, 7
    %v4751 = vsub.s32 4, %v4750
    %v4752 = vrot.slane %v4731, %v4751
    %v4753 = vlaneseq
    %v4754 = vshrl.u32 %v4753, 7
    %v4755 = vsub.s32 5, %v4754
    %v4756 = vrot.slane %v4731, %v4755
    %4763 = vmatprep.subr.mxu0 %v4540
    %4764 = vmatpush1.msra.mxu0 %v4539
    %4765 = vmatprep.subr.mxu0 %v4546
    %4766 = vmatpush1.msra.mxu0 %v4545
    %4767 = vmatprep.subr.mxu0 %v4552
    %4768 = vmatpush1.msra.mxu0 %v4551
    %4769 = vmatprep.subr.mxu0 %v4558
    %4770 = vmatpush1.msra.mxu0 %v4557
    %4771 = vmatprep.subr.mxu0 %v4564
    %4772 = vmatpush1.msra.mxu0 %v4563
    %4773 = vmatprep.subr.mxu0 %v4570
    %4774 = vmatpush1.msra.mxu0 %v4569
    %4775 = vmatprep.subr.mxu0 %v4576
    %4776 = vmatpush1.msra.mxu0 %v4575
    %4777 = vmatprep.subr.mxu0 %v4582
    %4778 = vmatpush1.msra.mxu0 %v4581
    %4779 = vmatprep.subr.mxu0 %v4588
    %4780 = vmatpush1.msra.mxu0 %v4587
    %4781 = vmatprep.subr.mxu0 %v4594
    %4782 = vmatpush1.msra.mxu0 %v4593
    %4783 = vmatprep.subr.mxu0 %v4600
    %4784 = vmatpush1.msra.mxu0 %v4599
    %4785 = vmatprep.subr.mxu0 %v4606
    %4786 = vmatpush1.msra.mxu0 %v4605
    %4787 = vmatprep.subr.mxu0 %v4612
    %4788 = vmatpush1.msra.mxu0 %v4611
    %4789 = vmatprep.subr.mxu0 %v4618
    %4790 = vmatpush1.msra.mxu0 %v4617
    %4791 = vmatprep.subr.mxu0 %v4624
    %4792 = vmatpush1.msra.mxu0 %v4623
    %4793 = vmatprep.subr.mxu0 %v4630
    %4794 = vmatpush1.msra.mxu0 %v4629
    %4795 = vmatprep.subr.mxu0 %v4636
    %4796 = vmatpush1.msra.mxu0 %v4635
    %4797 = vmatprep.subr.mxu0 %v4642
    %4798 = vmatpush1.msra.mxu0 %v4641
    %4799 = vmatprep.subr.mxu0 %v4648
    %4800 = vmatpush1.msra.mxu0 %v4647
    %4801 = vmatprep.subr.mxu0 %v4654
    %4802 = vmatpush1.msra.mxu0 %v4653
    %4803 = vmatprep.subr.mxu0 %v4660
    %4804 = vmatpush1.msra.mxu0 %v4659
    %4805 = vmatprep.subr.mxu0 %v4666
    %4806 = vmatpush1.msra.mxu0 %v4665
    %4807 = vmatprep.subr.mxu0 %v4672
    %4808 = vmatpush1.msra.mxu0 %v4671
    %4809 = vmatprep.subr.mxu0 %v4678
    %4810 = vmatpush1.msra.mxu0 %v4677
    %4811 = vmatprep.subr.mxu0 %v4684
    %4812 = vmatpush1.msra.mxu0 %v4683
    %4813 = vmatprep.subr.mxu0 %v4690
    %4814 = vmatpush1.msra.mxu0 %v4689
    %4815 = vmatprep.subr.mxu0 %v4696
    %4816 = vmatpush1.msra.mxu0 %v4695
    %4817 = vmatprep.subr.mxu0 %v4702
    %4818 = vmatpush1.msra.mxu0 %v4701
    %4819 = vmatprep.subr.mxu0 %v4708
    %4820 = vmatpush1.msra.mxu0 %v4707
    %4821 = vmatprep.subr.mxu0 %v4714
    %4822 = vmatpush1.msra.mxu0 %v4713
    %4823 = vmatprep.subr.mxu0 %v4720
    %4824 = vmatpush1.msra.mxu0 %v4719
    %4825 = vmatprep.subr.mxu0 %v4726
    %4826 = vmatpush1.msra.mxu0 %v4725
    %4827 = vmatprep.mubr.f32.mxu0 %v4536
    %4828 = vmatmul.mubr.f32.gmra.mrb[0].mxu0 %v4535
    %v4829 = vpop.f32.mrb[0].mxu0
    %v4830 = vadd.f32 %v4736, %v4829
    %v4831 = vpop.f32.mrb[0].mxu0
    %v4832 = vadd.f32 %v4740, %v4831
    %4833 = vmatprep.mubr.f32.mxu0 %v4538
    %4834 = vmatmul.mubr.f32.gmra.mrb[0].mxu0 %v4537
    %v4835 = vpop.f32.mrb[0].mxu0
    %v4836 = vadd.f32 %v4736, %v4835
    %v4837 = vpop.f32.mrb[0].mxu0
    %v4838 = vadd.f32 %v4740, %v4837
    %4839 = vdwg.mxu0
    %4840 = vmatprep.subr.mxu0 %v4542
    %4841 = vmatpush1.msra.mxu0 %v4541
    %4842 = vmatprep.subr.mxu0 %v4548
    %4843 = vmatpush1.msra.mxu0 %v4547
    %4844 = vmatprep.subr.mxu0 %v4554
    %4845 = vmatpush1.msra.mxu0 %v4553
    %4846 = vmatprep.subr.mxu0 %v4560
    %4847 = vmatpush1.msra.mxu0 %v4559
    %4848 = vmatprep.subr.mxu0 %v4566
    %4849 = vmatpush1.msra.mxu0 %v4565
    %4850 = vmatprep.subr.mxu0 %v4572
    %4851 = vmatpush1.msra.mxu0 %v4571
    %4852 = vmatprep.subr.mxu0 %v4578
    %4853 = vmatpush1.msra.mxu0 %v4577
    %4854 = vmatprep.subr.mxu0 %v4584
    %4855 = vmatpush1.msra.mxu0 %v4583
    %4856 = vmatprep.subr.mxu0 %v4590
    %4857 = vmatpush1.msra.mxu0 %v4589
    %4858 = vmatprep.subr.mxu0 %v4596
    %4859 = vmatpush1.msra.mxu0 %v4595
    %4860 = vmatprep.subr.mxu0 %v4602
    %4861 = vmatpush1.msra.mxu0 %v4601
    %4862 = vmatprep.subr.mxu0 %v4608
    %4863 = vmatpush1.msra.mxu0 %v4607
    %4864 = vmatprep.subr.mxu0 %v4614
    %4865 = vmatpush1.msra.mxu0 %v4613
    %4866 = vmatprep.subr.mxu0 %v4620
    %4867 = vmatpush1.msra.mxu0 %v4619
    %4868 = vmatprep.subr.mxu0 %v4626
    %4869 = vmatpush1.msra.mxu0 %v4625
    %4870 = vmatprep.subr.mxu0 %v4632
    %4871 = vmatpush1.msra.mxu0 %v4631
    %4872 = vmatprep.subr.mxu0 %v4638
    %4873 = vmatpush1.msra.mxu0 %v4637
    %4874 = vmatprep.subr.mxu0 %v4644
    %4875 = vmatpush1.msra.mxu0 %v4643
    %4876 = vmatprep.subr.mxu0 %v4650
    %4877 = vmatpush1.msra.mxu0 %v4649
    %4878 = vmatprep.subr.mxu0 %v4656
    %4879 = vmatpush1.msra.mxu0 %v4655
    %4880 = vmatprep.subr.mxu0 %v4662
    %4881 = vmatpush1.msra.mxu0 %v4661
    %4882 = vmatprep.subr.mxu0 %v4668
    %4883 = vmatpush1.msra.mxu0 %v4667
    %4884 = vmatprep.subr.mxu0 %v4674
    %4885 = vmatpush1.msra.mxu0 %v4673
    %4886 = vmatprep.subr.mxu0 %v4680
    %4887 = vmatpush1.msra.mxu0 %v4679
    %4888 = vmatprep.subr.mxu0 %v4686
    %4889 = vmatpush1.msra.mxu0 %v4685
    %4890 = vmatprep.subr.mxu0 %v4692
    %4891 = vmatpush1.msra.mxu0 %v4691
    %4892 = vmatprep.subr.mxu0 %v4698
    %4893 = vmatpush1.msra.mxu0 %v4697
    %4894 = vmatprep.subr.mxu0 %v4704
    %4895 = vmatpush1.msra.mxu0 %v4703
    %4896 = vmatprep.subr.mxu0 %v4710
    %4897 = vmatpush1.msra.mxu0 %v4709
    %4898 = vmatprep.subr.mxu0 %v4716
    %4899 = vmatpush1.msra.mxu0 %v4715
    %4900 = vmatprep.subr.mxu0 %v4722
    %4901 = vmatpush1.msra.mxu0 %v4721
    %4902 = vmatprep.subr.mxu0 %v4728
    %4903 = vmatpush1.msra.mxu0 %v4727
    %4904 = vmatprep.mubr.f32.mxu0 %v4536
    %4905 = vmatmul.mubr.f32.gmra.mrb[0].mxu0 %v4535
    %v4906 = vpop.f32.mrb[0].mxu0
    %v4907 = vadd.f32 %v4744, %v4906
    %v4908 = vpop.f32.mrb[0].mxu0
    %4909 = vmatprep.mubr.f32.mxu0 %v4538
    %4910 = vmatmul.mubr.f32.gmra.mrb[0].mxu0 %v4537
    %v4911 = vpop.f32.mrb[0].mxu0
    %v4912 = vadd.f32 %v4744, %v4911
    %v4913 = vpop.f32.mrb[0].mxu0
    %v4914 = vadd.f32 %v4748, %v4913
    %4915 = vdwg.mxu0
    %4916 = vmatprep.subr.mxu0 %v4544
    %4917 = vmatpush1.msra.mxu0 %v4543
    %4918 = vmatprep.subr.mxu0 %v4550
    %4919 = vmatpush1.msra.mxu0 %v4549
    %4920 = vmatprep.subr.mxu0 %v4556
    %4921 = vmatpush1.msra.mxu0 %v4555
    %4922 = vmatprep.subr.mxu0 %v4562
    %4923 = vmatpush1.msra.mxu0 %v4561
    %4924 = vmatprep.subr.mxu0 %v4568
    %4925 = vmatpush1.msra.mxu0 %v4567
    %4926 = vmatprep.subr.mxu0 %v4574
    %4927 = vmatpush1.msra.mxu0 %v4573
    %4928 = vmatprep.subr.mxu0 %v4580
    %4929 = vmatpush1.msra.mxu0 %v4579
    %4930 = vmatprep.subr.mxu0 %v4586
    %4931 = vmatpush1.msra.mxu0 %v4585
    %4932 = vmatprep.subr.mxu0 %v4592
    %4933 = vmatpush1.msra.mxu0 %v4591
    %4934 = vmatprep.subr.mxu0 %v4598
    %4935 = vmatpush1.msra.mxu0 %v4597
    %4936 = vmatprep.subr.mxu0 %v4604
    %4937 = vmatpush1.msra.mxu0 %v4603
    %4938 = vmatprep.subr.mxu0 %v4610
    %4939 = vmatpush1.msra.mxu0 %v4609
    %4940 = vmatprep.subr.mxu0 %v4616
    %4941 = vmatpush1.msra.mxu0 %v4615
    %4942 = vmatprep.subr.mxu0 %v4622
    %4943 = vmatpush1.msra.mxu0 %v4621
    %4944 = vmatprep.subr.mxu0 %v4628
    %4945 = vmatpush1.msra.mxu0 %v4627
    %4946 = vmatprep.subr.mxu0 %v4634
    %4947 = vmatpush1.msra.mxu0 %v4633
    %4948 = vmatprep.subr.mxu0 %v4640
    %4949 = vmatpush1.msra.mxu0 %v4639
    %4950 = vmatprep.subr.mxu0 %v4646
    %4951 = vmatpush1.msra.mxu0 %v4645
    %4952 = vmatprep.subr.mxu0 %v4652
    %4953 = vmatpush1.msra.mxu0 %v4651
    %4954 = vmatprep.subr.mxu0 %v4658
    %4955 = vmatpush1.msra.mxu0 %v4657
    %4956 = vmatprep.subr.mxu0 %v4664
    %4957 = vmatpush1.msra.mxu0 %v4663
    %4958 = vmatprep.subr.mxu0 %v4670
    %4959 = vmatpush1.msra.mxu0 %v4669
    %4960 = vmatprep.subr.mxu0 %v4676
    %4961 = vmatpush1.msra.mxu0 %v4675
    %4962 = vmatprep.subr.mxu0 %v4682
    %4963 = vmatpush1.msra.mxu0 %v4681
    %4964 = vmatprep.subr.mxu0 %v4688
    %4965 = vmatpush1.msra.mxu0 %v4687
    %4966 = vmatprep.subr.mxu0 %v4694
    %4967 = vmatpush1.msra.mxu0 %v4693
    %4968 = vmatprep.subr.mxu0 %v4700
    %4969 = vmatpush1.msra.mxu0 %v4699
    %4970 = vmatprep.subr.mxu0 %v4706
    %4971 = vmatpush1.msra.mxu0 %v4705
    %4972 = vmatprep.subr.mxu0 %v4712
    %4973 = vmatpush1.msra.mxu0 %v4711
    %4974 = vmatprep.subr.mxu0 %v4718
    %4975 = vmatpush1.msra.mxu0 %v4717
    %4976 = vmatprep.subr.mxu0 %v4724
    %4977 = vmatpush1.msra.mxu0 %v4723
    %4978 = vmatprep.subr.mxu0 %v4730
    %4979 = vmatpush1.msra.mxu0 %v4729
    %4980 = vmatprep.mubr.f32.mxu0 %v4536
    %4981 = vmatmul.mubr.f32.gmra.mrb[0].mxu0 %v4535
    %v4982 = vpop.f32.mrb[0].mxu0
    %v4983 = vpop.f32.mrb[0].mxu0
    %4984 = vmatprep.mubr.f32.mxu0 %v4538
    %4985 = vmatmul.mubr.f32.gmra.mrb[0].mxu0 %v4537
    %v4986 = vpop.f32.mrb[0].mxu0
    %v4987 = vadd.f32 %v4752, %v4986
    %v4988 = vpop.f32.mrb[0].mxu0
    %v4989 = vadd.f32 %v4756, %v4988
    %4990 = vdwg.mxu0
    %v4991 = vld [vmem:[#allocation27] sm:$0x1]
    %v4992 = vld [vmem:[#allocation29] sm:$0x1]
    %v4993 = vld [vmem:[#allocation24] sm:$0xff]
    %v4994 = vld [vmem:[#allocation24 + $0x8] sm:$0xff]
    %v4995 = vld [vmem:[#allocation24 + $0x10] sm:$0xff]
    %v4996 = vld [vmem:[#allocation24 + $0x18] sm:$0xff]
    %v4997 = vld [vmem:[#allocation24 + $0x20] sm:$0xff]
    %v4998 = vld [vmem:[#allocation24 + $0x28] sm:$0xff]
    %v4999 = vld [vmem:[#allocation24 + $0x30] sm:$0xff]
    %v5000 = vld [vmem:[#allocation24 + $0x38] sm:$0xff]
    %v5001 = vld [vmem:[#allocation24 + $0x40] sm:$0xff]
    %v5002 = vld [vmem:[#allocation24 + $0x48] sm:$0xff]
    %v5003 = vld [vmem:[#allocation24 + $0x50] sm:$0xff]
    %v5004 = vld [vmem:[#allocation24 + $0x58] sm:$0xff]
    %v5005 = vld [vmem:[#allocation24 + $0x60] sm:$0xff]
    %v5006 = vld [vmem:[#allocation24 + $0x68] sm:$0xff]
    %v5007 = vld [vmem:[#allocation24 + $0x70] sm:$0xff]
    %v5008 = vld [vmem:[#allocation24 + $0x78] sm:$0xff]
    %v5009 = vld [vmem:[#allocation24 + $0x80] sm:$0xff]
    %v5010 = vld [vmem:[#allocation24 + $0x88] sm:$0xff]
    %v5011 = vld [vmem:[#allocation24 + $0x90] sm:$0xff]
    %v5012 = vld [vmem:[#allocation24 + $0x98] sm:$0xff]
    %v5013 = vld [vmem:[#allocation24 + $0xa0] sm:$0xff]
    %v5014 = vld [vmem:[#allocation24 + $0xa8] sm:$0xff]
    %v5015 = vld [vmem:[#allocation24 + $0xb0] sm:$0xff]
    %v5016 = vld [vmem:[#allocation24 + $0xb8] sm:$0xff]
    %v5017 = vld [vmem:[#allocation24 + $0xc0] sm:$0xff]
    %v5018 = vld [vmem:[#allocation24 + $0xc8] sm:$0xff]
    %v5019 = vld [vmem:[#allocation24 + $0xd0] sm:$0xff]
    %v5020 = vld [vmem:[#allocation24 + $0xd8] sm:$0xff]
    %v5021 = vld [vmem:[#allocation24 + $0xe0] sm:$0xff]
    %v5022 = vld [vmem:[#allocation24 + $0xe8] sm:$0xff]
    %v5023 = vld [vmem:[#allocation24 + $0xf0] sm:$0xff]
    %v5024 = vld [vmem:[#allocation24 + $0xf8] sm:$0xff]
    %v5025 = vld [vmem:[#allocation24 + $0x100] sm:$0xff]
    %v5026 = vld [vmem:[#allocation24 + $0x108] sm:$0xff]
    %v5027 = vld [vmem:[#allocation24 + $0x110] sm:$0xff]
    %v5028 = vld [vmem:[#allocation24 + $0x118] sm:$0xff]
    %v5029 = vld [vmem:[#allocation24 + $0x120] sm:$0xff]
    %v5030 = vld [vmem:[#allocation24 + $0x128] sm:$0xff]
    %v5031 = vld [vmem:[#allocation24 + $0x130] sm:$0xff]
    %v5032 = vld [vmem:[#allocation24 + $0x138] sm:$0xff]
    %v5033 = vld [vmem:[#allocation24 + $0x140] sm:$0xff]
    %v5034 = vld [vmem:[#allocation24 + $0x148] sm:$0xff]
    %v5035 = vld [vmem:[#allocation24 + $0x150] sm:$0xff]
    %v5036 = vld [vmem:[#allocation24 + $0x158] sm:$0xff]
    %v5037 = vld [vmem:[#allocation24 + $0x160] sm:$0xff]
    %v5038 = vld [vmem:[#allocation24 + $0x168] sm:$0xff]
    %v5039 = vld [vmem:[#allocation24 + $0x170] sm:$0xff]
    %v5040 = vld [vmem:[#allocation24 + $0x178] sm:$0xff]
    %5041 = vmatprep.subr.mxu0 %v4994
    %5042 = vmatpush1.msra.mxu0 %v4993
    %5043 = vmatprep.subr.mxu0 %v4997
    %5044 = vmatpush1.msra.mxu0 %v4996
    %5045 = vmatprep.subr.mxu0 %v5000
    %5046 = vmatpush1.msra.mxu0 %v4999
    %5047 = vmatprep.subr.mxu0 %v5003
    %5048 = vmatpush1.msra.mxu0 %v5002
    %5049 = vmatprep.subr.mxu0 %v5006
    %5050 = vmatpush1.msra.mxu0 %v5005
    %5051 = vmatprep.subr.mxu0 %v5009
    %5052 = vmatpush1.msra.mxu0 %v5008
    %5053 = vmatprep.subr.mxu0 %v5012
    %5054 = vmatpush1.msra.mxu0 %v5011
    %5055 = vmatprep.subr.mxu0 %v5015
    %5056 = vmatpush1.msra.mxu0 %v5014
    %5057 = vmatprep.subr.mxu0 %v5018
    %5058 = vmatpush1.msra.mxu0 %v5017
    %5059 = vmatprep.subr.mxu0 %v5021
    %5060 = vmatpush1.msra.mxu0 %v5020
    %5061 = vmatprep.subr.mxu0 %v5024
    %5062 = vmatpush1.msra.mxu0 %v5023
    %5063 = vmatprep.subr.mxu0 %v5027
    %5064 = vmatpush1.msra.mxu0 %v5026
    %5065 = vmatprep.subr.mxu0 %v5030
    %5066 = vmatpush1.msra.mxu0 %v5029
    %5067 = vmatprep.subr.mxu0 %v5033
    %5068 = vmatpush1.msra.mxu0 %v5032
    %5069 = vmatprep.subr.mxu0 %v5036
    %5070 = vmatpush1.msra.mxu0 %v5035
    %5071 = vmatprep.subr.mxu0 %v5039
    %5072 = vmatpush1.msra.mxu0 %v5038
    %5073 = vmatprep.subr.mxu0 0.0
    %5074 = vmatpush1.msra.mxu0 0.0
    %5075 = vmatprep.subr.mxu0 0.0
    %5076 = vmatpush1.msra.mxu0 0.0
    %5077 = vmatprep.subr.mxu0 0.0
    %5078 = vmatpush1.msra.mxu0 0.0
    %5079 = vmatprep.subr.mxu0 0.0
    %5080 = vmatpush1.msra.mxu0 0.0
    %5081 = vmatprep.subr.mxu0 0.0
    %5082 = vmatpush1.msra.mxu0 0.0
    %5083 = vmatprep.subr.mxu0 0.0
    %5084 = vmatpush1.msra.mxu0 0.0
    %5085 = vmatprep.subr.mxu0 0.0
    %5086 = vmatpush1.msra.mxu0 0.0
    %5087 = vmatprep.subr.mxu0 0.0
    %5088 = vmatpush1.msra.mxu0 0.0
    %5089 = vmatprep.subr.mxu0 0.0
    %5090 = vmatpush1.msra.mxu0 0.0
    %5091 = vmatprep.subr.mxu0 0.0
    %5092 = vmatpush1.msra.mxu0 0.0
    %5093 = vmatprep.subr.mxu0 0.0
    %5094 = vmatpush1.msra.mxu0 0.0
    %5095 = vmatprep.subr.mxu0 0.0
    %5096 = vmatpush1.msra.mxu0 0.0
    %5097 = vmatprep.subr.mxu0 0.0
    %5098 = vmatpush1.msra.mxu0 0.0
    %5099 = vmatprep.subr.mxu0 0.0
    %5100 = vmatpush1.msra.mxu0 0.0
    %5101 = vmatprep.subr.mxu0 0.0
    %5102 = vmatpush1.msra.mxu0 0.0
    %5103 = vmatprep.subr.mxu0 0.0
    %5104 = vmatpush1.msra.mxu0 0.0
    %5105 = vmatprep.mubr.f32.mxu0 0.0
    %5106 = vmatmul.mubr.f32.gmra.mrb[0].mxu0 0.0
    %v5107 = vpop.f32.mrb[0].mxu0
    %v5108 = vadd.f32 0.0, %v5107
    %v5109 = vpop.f32.mrb[0].mxu0
    %v5110 = vadd.f32 0.0, %v5109
    %5111 = vdwg.mxu0
    %5112 = vmatprep.subr.mxu0 0.0
    %5113 = vmatpush1.msra.mxu0 %v4995
    %5114 = vmatprep.subr.mxu0 0.0
    %5115 = vmatpush1.msra.mxu0 %v4998
    %5116 = vmatprep.subr.mxu0 0.0
    %5117 = vmatpush1.msra.mxu0 %v5001
    %5118 = vmatprep.subr.mxu0 0.0
    %5119 = vmatpush1.msra.mxu0 %v5004
    %5120 = vmatprep.subr.mxu0 0.0
    %5121 = vmatpush1.msra.mxu0 %v5007
    %5122 = vmatprep.subr.mxu0 0.0
    %5123 = vmatpush1.msra.mxu0 %v5010
    %5124 = vmatprep.subr.mxu0 0.0
    %5125 = vmatpush1.msra.mxu0 %v5013
    %5126 = vmatprep.subr.mxu0 0.0
    %5127 = vmatpush1.msra.mxu0 %v5016
    %5128 = vmatprep.subr.mxu0 0.0
    %5129 = vmatpush1.msra.mxu0 %v5019
    %5130 = vmatprep.subr.mxu0 0.0
    %5131 = vmatpush1.msra.mxu0 %v5022
    %5132 = vmatprep.subr.mxu0 0.0
    %5133 = vmatpush1.msra.mxu0 %v5025
    %5134 = vmatprep.subr.mxu0 0.0
    %5135 = vmatpush1.msra.mxu0 %v5028
    %5136 = vmatprep.subr.mxu0 0.0
    %5137 = vmatpush1.msra.mxu0 %v5031
    %5138 = vmatprep.subr.mxu0 0.0
    %5139 = vmatpush1.msra.mxu0 %v5034
    %5140 = vmatprep.subr.mxu0 0.0
    %5141 = vmatpush1.msra.mxu0 %v5037
    %5142 = vmatprep.subr.mxu0 0.0
    %5143 = vmatpush1.msra.mxu0 %v5040
    %5144 = vmatprep.subr.mxu0 0.0
    %5145 = vmatpush1.msra.mxu0 0.0
    %5146 = vmatprep.subr.mxu0 0.0
    %5147 = vmatpush1.msra.mxu0 0.0
    %5148 = vmatprep.subr.mxu0 0.0
    %5149 = vmatpush1.msra.mxu0 0.0
    %5150 = vmatprep.subr.mxu0 0.0
    %5151 = vmatpush1.msra.mxu0 0.0
    %5152 = vmatprep.subr.mxu0 0.0
    %5153 = vmatpush1.msra.mxu0 0.0
    %5154 = vmatprep.subr.mxu0 0.0
    %5155 = vmatpush1.msra.mxu0 0.0
    %5156 = vmatprep.subr.mxu0 0.0
    %5157 = vmatpush1.msra.mxu0 0.0
    %5158 = vmatprep.subr.mxu0 0.0
    %5159 = vmatpush1.msra.mxu0 0.0
    %5160 = vmatprep.subr.mxu0 0.0
    %5161 = vmatpush1.msra.mxu0 0.0
    %5162 = vmatprep.subr.mxu0 0.0
    %5163 = vmatpush1.msra.mxu0 0.0
    %5164 = vmatprep.subr.mxu0 0.0
    %5165 = vmatpush1.msra.mxu0 0.0
    %5166 = vmatprep.subr.mxu0 0.0
    %5167 = vmatpush1.msra.mxu0 0.0
    %5168 = vmatprep.subr.mxu0 0.0
    %5169 = vmatpush1.msra.mxu0 0.0
    %5170 = vmatprep.subr.mxu0 0.0
    %5171 = vmatpush1.msra.mxu0 0.0
    %5172 = vmatprep.subr.mxu0 0.0
    %5173 = vmatpush1.msra.mxu0 0.0
    %5174 = vmatprep.subr.mxu0 0.0
    %5175 = vmatpush1.msra.mxu0 0.0
    %5176 = vmatprep.mubr.f32.mxu0 0.0
    %5177 = vmatmul.mubr.f32.gmra.mrb[0].mxu0 0.0
    %v5178 = vpop.f32.mrb[0].mxu0
    %v5179 = vadd.f32 0.0, %v5178
    %v5180 = vpop.f32.mrb[0].mxu0
    %5181 = vdwg.mxu0
    %v5182 = vadd.f32 %v4830, %v5108
    %v5183 = vxor.u32 %v5182, 2147483648
    %v5184 = vmul.f32 %v5183, 1.442695
    %v5185 = vpow.pop %v5184
    %v5186 = vadd.f32 %v5185, 1.0
    %v5187 = vrcp.pop %v5186
    %v5188 = vmul.f32 1.0, %v5187
    %v5189 = vadd.f32 %v4832, %v5110
    %v5190 = vxor.u32 %v5189, 2147483648
    %v5191 = vmul.f32 %v5190, 1.442695
    %v5192 = vpow.pop %v5191
    %v5193 = vadd.f32 %v5192, 1.0
    %v5194 = vrcp.pop %v5193
    %v5195 = vmul.f32 1.0, %v5194
    %v5197 = vlaneseq
    %v5198 = vshrl.u32 %v5197, 7
    %v5199 = vsub.s32 0, %v5198
    %v5200 = vrot.slane %v4991, %v5199
    %v5202 = vadd.f32 %v5179, %v5200
    %v5203 = vmul.f32 %v5188, %v5202
    %v5204 = vadd.f32 %v4907, %v5203
    %v5205 = vtanh.pop %v5204
    %v5206 = vsub.f32 1.0, %v5195
    %v5207 = vmul.f32 %v5206, %v5205
    %v5208 = vmul.f32 %v5195, 0.0
    %v5209 = vadd.f32 %v5207, %v5208
    %v5210 = vld [vmem:[#allocation26] sm:$0xff]
    %v5211 = vld [vmem:[#allocation26 + $0x8] sm:$0xff]
    %v5212 = vld [vmem:[#allocation26 + $0x10] sm:$0xff]
    %v5213 = vld [vmem:[#allocation26 + $0x18] sm:$0xff]
    %v5214 = vld [vmem:[#allocation26 + $0x20] sm:$0xff]
    %v5215 = vld [vmem:[#allocation26 + $0x28] sm:$0xff]
    %v5216 = vld [vmem:[#allocation26 + $0x30] sm:$0xff]
    %v5217 = vld [vmem:[#allocation26 + $0x38] sm:$0xff]
    %v5218 = vld [vmem:[#allocation26 + $0x40] sm:$0xff]
    %v5219 = vld [vmem:[#allocation26 + $0x48] sm:$0xff]
    %v5220 = vld [vmem:[#allocation26 + $0x50] sm:$0xff]
    %v5221 = vld [vmem:[#allocation26 + $0x58] sm:$0xff]
    %v5222 = vld [vmem:[#allocation26 + $0x60] sm:$0xff]
    %v5223 = vld [vmem:[#allocation26 + $0x68] sm:$0xff]
    %v5224 = vld [vmem:[#allocation26 + $0x70] sm:$0xff]
    %v5225 = vld [vmem:[#allocation26 + $0x78] sm:$0xff]
    %v5226 = vld [vmem:[#allocation26 + $0x80] sm:$0xff]
    %v5227 = vld [vmem:[#allocation26 + $0x88] sm:$0xff]
    %v5228 = vld [vmem:[#allocation26 + $0x90] sm:$0xff]
    %v5229 = vld [vmem:[#allocation26 + $0x98] sm:$0xff]
    %v5230 = vld [vmem:[#allocation26 + $0xa0] sm:$0xff]
    %v5231 = vld [vmem:[#allocation26 + $0xa8] sm:$0xff]
    %v5232 = vld [vmem:[#allocation26 + $0xb0] sm:$0xff]
    %v5233 = vld [vmem:[#allocation26 + $0xb8] sm:$0xff]
    %v5234 = vld [vmem:[#allocation26 + $0xc0] sm:$0xff]
    %v5235 = vld [vmem:[#allocation26 + $0xc8] sm:$0xff]
    %v5236 = vld [vmem:[#allocation26 + $0xd0] sm:$0xff]
    %v5237 = vld [vmem:[#allocation26 + $0xd8] sm:$0xff]
    %v5238 = vld [vmem:[#allocation26 + $0xe0] sm:$0xff]
    %v5239 = vld [vmem:[#allocation26 + $0xe8] sm:$0xff]
    %v5240 = vld [vmem:[#allocation26 + $0xf0] sm:$0xff]
    %v5241 = vld [vmem:[#allocation26 + $0xf8] sm:$0xff]
    %v5242 = vld [vmem:[#allocation26 + $0x100] sm:$0xff]
    %v5243 = vld [vmem:[#allocation26 + $0x108] sm:$0xff]
    %v5244 = vld [vmem:[#allocation26 + $0x110] sm:$0xff]
    %v5245 = vld [vmem:[#allocation26 + $0x118] sm:$0xff]
    %v5246 = vld [vmem:[#allocation26 + $0x120] sm:$0xff]
    %v5247 = vld [vmem:[#allocation26 + $0x128] sm:$0xff]
    %v5248 = vld [vmem:[#allocation26 + $0x130] sm:$0xff]
    %v5249 = vld [vmem:[#allocation26 + $0x138] sm:$0xff]
    %v5250 = vld [vmem:[#allocation26 + $0x140] sm:$0xff]
    %v5251 = vld [vmem:[#allocation26 + $0x148] sm:$0xff]
    %v5252 = vld [vmem:[#allocation26 + $0x150] sm:$0xff]
    %v5253 = vld [vmem:[#allocation26 + $0x158] sm:$0xff]
    %v5254 = vld [vmem:[#allocation26 + $0x160] sm:$0xff]
    %v5255 = vld [vmem:[#allocation26 + $0x168] sm:$0xff]
    %v5256 = vld [vmem:[#allocation26 + $0x170] sm:$0xff]
    %v5257 = vld [vmem:[#allocation26 + $0x178] sm:$0xff]
    %5258 = vmatprep.subr.mxu0 %v5211
    %5259 = vmatpush1.msra.mxu0 %v5210
    %5260 = vmatprep.subr.mxu0 %v5214
    %5261 = vmatpush1.msra.mxu0 %v5213
    %5262 = vmatprep.subr.mxu0 %v5217
    %5263 = vmatpush1.msra.mxu0 %v5216
    %5264 = vmatprep.subr.mxu0 %v5220
    %5265 = vmatpush1.msra.mxu0 %v5219
    %5266 = vmatprep.subr.mxu0 %v5223
    %5267 = vmatpush1.msra.mxu0 %v5222
    %5268 = vmatprep.subr.mxu0 %v5226
    %5269 = vmatpush1.msra.mxu0 %v5225
    %5270 = vmatprep.subr.mxu0 %v5229
    %5271 = vmatpush1.msra.mxu0 %v5228
    %5272 = vmatprep.subr.mxu0 %v5232
    %5273 = vmatpush1.msra.mxu0 %v5231
    %5274 = vmatprep.subr.mxu0 %v5235
    %5275 = vmatpush1.msra.mxu0 %v5234
    %5276 = vmatprep.subr.mxu0 %v5238
    %5277 = vmatpush1.msra.mxu0 %v5237
    %5278 = vmatprep.subr.mxu0 %v5241
    %5279 = vmatpush1.msra.mxu0 %v5240
    %5280 = vmatprep.subr.mxu0 %v5244
    %5281 = vmatpush1.msra.mxu0 %v5243
    %5282 = vmatprep.subr.mxu0 %v5247
    %5283 = vmatpush1.msra.mxu0 %v5246
    %5284 = vmatprep.subr.mxu0 %v5250
    %5285 = vmatpush1.msra.mxu0 %v5249
    %5286 = vmatprep.subr.mxu0 %v5253
    %5287 = vmatpush1.msra.mxu0 %v5252
    %5288 = vmatprep.subr.mxu0 %v5256
    %5289 = vmatpush1.msra.mxu0 %v5255
    %5290 = vmatprep.subr.mxu0 0.0
    %5291 = vmatpush1.msra.mxu0 0.0
    %5292 = vmatprep.subr.mxu0 0.0
    %5293 = vmatpush1.msra.mxu0 0.0
    %5294 = vmatprep.subr.mxu0 0.0
    %5295 = vmatpush1.msra.mxu0 0.0
    %5296 = vmatprep.subr.mxu0 0.0
    %5297 = vmatpush1.msra.mxu0 0.0
    %5298 = vmatprep.subr.mxu0 0.0
    %5299 = vmatpush1.msra.mxu0 0.0
    %5300 = vmatprep.subr.mxu0 0.0
    %5301 = vmatpush1.msra.mxu0 0.0
    %5302 = vmatprep.subr.mxu0 0.0
    %5303 = vmatpush1.msra.mxu0 0.0
    %5304 = vmatprep.subr.mxu0 0.0
    %5305 = vmatpush1.msra.mxu0 0.0
    %5306 = vmatprep.subr.mxu0 0.0
    %5307 = vmatpush1.msra.mxu0 0.0
    %5308 = vmatprep.subr.mxu0 0.0
    %5309 = vmatpush1.msra.mxu0 0.0
    %5310 = vmatprep.subr.mxu0 0.0
    %5311 = vmatpush1.msra.mxu0 0.0
    %5312 = vmatprep.subr.mxu0 0.0
    %5313 = vmatpush1.msra.mxu0 0.0
    %5314 = vmatprep.subr.mxu0 0.0
    %5315 = vmatpush1.msra.mxu0 0.0
    %5316 = vmatprep.subr.mxu0 0.0
    %5317 = vmatpush1.msra.mxu0 0.0
    %5318 = vmatprep.subr.mxu0 0.0
    %5319 = vmatpush1.msra.mxu0 0.0
    %5320 = vmatprep.subr.mxu0 0.0
    %5321 = vmatpush1.msra.mxu0 0.0
    %5322 = vmatprep.mubr.f32.mxu0 0.0
    %5323 = vmatmul.mubr.f32.gmra.mrb[0].mxu0 0.0
    %v5324 = vpop.f32.mrb[0].mxu0
    %v5325 = vadd.f32 0.0, %v5324
    %v5326 = vpop.f32.mrb[0].mxu0
    %v5327 = vadd.f32 0.0, %v5326
    %5328 = vdwg.mxu0
    %5329 = vmatprep.subr.mxu0 0.0
    %5330 = vmatpush1.msra.mxu0 %v5212
    %5331 = vmatprep.subr.mxu0 0.0
    %5332 = vmatpush1.msra.mxu0 %v5215
    %5333 = vmatprep.subr.mxu0 0.0
    %5334 = vmatpush1.msra.mxu0 %v5218
    %5335 = vmatprep.subr.mxu0 0.0
    %5336 = vmatpush1.msra.mxu0 %v5221
    %5337 = vmatprep.subr.mxu0 0.0
    %5338 = vmatpush1.msra.mxu0 %v5224
    %5339 = vmatprep.subr.mxu0 0.0
    %5340 = vmatpush1.msra.mxu0 %v5227
    %5341 = vmatprep.subr.mxu0 0.0
    %5342 = vmatpush1.msra.mxu0 %v5230
    %5343 = vmatprep.subr.mxu0 0.0
    %5344 = vmatpush1.msra.mxu0 %v5233
    %5345 = vmatprep.subr.mxu0 0.0
    %5346 = vmatpush1.msra.mxu0 %v5236
    %5347 = vmatprep.subr.mxu0 0.0
    %5348 = vmatpush1.msra.mxu0 %v5239
    %5349 = vmatprep.subr.mxu0 0.0
    %5350 = vmatpush1.msra.mxu0 %v5242
    %5351 = vmatprep.subr.mxu0 0.0
    %5352 = vmatpush1.msra.mxu0 %v5245
    %5353 = vmatprep.subr.mxu0 0.0
    %5354 = vmatpush1.msra.mxu0 %v5248
    %5355 = vmatprep.subr.mxu0 0.0
    %5356 = vmatpush1.msra.mxu0 %v5251
    %5357 = vmatprep.subr.mxu0 0.0
    %5358 = vmatpush1.msra.mxu0 %v5254
    %5359 = vmatprep.subr.mxu0 0.0
    %5360 = vmatpush1.msra.mxu0 %v5257
    %5361 = vmatprep.subr.mxu0 0.0
    %5362 = vmatpush1.msra.mxu0 0.0
    %5363 = vmatprep.subr.mxu0 0.0
    %5364 = vmatpush1.msra.mxu0 0.0
    %5365 = vmatprep.subr.mxu0 0.0
    %5366 = vmatpush1.msra.mxu0 0.0
    %5367 = vmatprep.subr.mxu0 0.0
    %5368 = vmatpush1.msra.mxu0 0.0
    %5369 = vmatprep.subr.mxu0 0.0
    %5370 = vmatpush1.msra.mxu0 0.0
    %5371 = vmatprep.subr.mxu0 0.0
    %5372 = vmatpush1.msra.mxu0 0.0
    %5373 = vmatprep.subr.mxu0 0.0
    %5374 = vmatpush1.msra.mxu0 0.0
    %5375 = vmatprep.subr.mxu0 0.0
    %5376 = vmatpush1.msra.mxu0 0.0
    %5377 = vmatprep.subr.mxu0 0.0
    %5378 = vmatpush1.msra.mxu0 0.0
    %5379 = vmatprep.subr.mxu0 0.0
    %5380 = vmatpush1.msra.mxu0 0.0
    %5381 = vmatprep.subr.mxu0 0.0
    %5382 = vmatpush1.msra.mxu0 0.0
    %5383 = vmatprep.subr.mxu0 0.0
    %5384 = vmatpush1.msra.mxu0 0.0
    %5385 = vmatprep.subr.mxu0 0.0
    %5386 = vmatpush1.msra.mxu0 0.0
    %5387 = vmatprep.subr.mxu0 0.0
    %5388 = vmatpush1.msra.mxu0 0.0
    %5389 = vmatprep.subr.mxu0 0.0
    %5390 = vmatpush1.msra.mxu0 0.0
    %5391 = vmatprep.subr.mxu0 0.0
    %5392 = vmatpush1.msra.mxu0 0.0
    %5393 = vmatprep.mubr.f32.mxu0 0.0
    %5394 = vmatmul.mubr.f32.gmra.mrb[0].mxu0 0.0
    %v5395 = vpop.f32.mrb[0].mxu0
    %v5396 = vadd.f32 0.0, %v5395
    %v5397 = vpop.f32.mrb[0].mxu0
    %5398 = vdwg.mxu0
    %v5400 = vrot.slane %v5325, 2
    %v5402 = vadd.f32 %v4914, %v5400
    %v5403 = vxor.u32 %v5402, 2147483648
    %v5404 = vmul.f32 %v5403, 1.442695
    %v5405 = vpow.pop %v5404
    %v5406 = vadd.f32 %v5405, 1.0
    %v5407 = vrcp.pop %v5406
    %v5408 = vmul.f32 1.0, %v5407
    %v5410 = vrot.slane %v5327, 2
    %v5412 = vadd.f32 %v4987, %v5410
    %v5413 = vxor.u32 %v5412, 2147483648
    %v5414 = vmul.f32 %v5413, 1.442695
    %v5415 = vpow.pop %v5414
    %v5416 = vadd.f32 %v5415, 1.0
    %v5417 = vrcp.pop %v5416
    %v5418 = vmul.f32 1.0, %v5417
    %v5420 = vlaneseq
    %v5421 = vshrl.u32 %v5420, 7
    %v5422 = vsub.s32 0, %v5421
    %v5423 = vrot.slane %v4992, %v5422
    %v5425 = vadd.f32 %v5396, %v5423
    %v5427 = vrot.slane %v5425, 2
    %v5429 = vmul.f32 %v5408, %v5427
    %v5430 = vadd.f32 %v4989, %v5429
    %v5431 = vtanh.pop %v5430
    %v5432 = vsub.f32 1.0, %v5418
    %v5433 = vmul.f32 %v5432, %v5431
    %v5434 = vmul.f32 %v5418, 0.0
    %v5435 = vadd.f32 %v5433, %v5434
    %5436 = vmatprep.subr.mxu0 %v4994
    %5437 = vmatpush1.msra.mxu0 %v4993
    %5438 = vmatprep.subr.mxu0 %v4997
    %5439 = vmatpush1.msra.mxu0 %v4996
    %5440 = vmatprep.subr.mxu0 %v5000
    %5441 = vmatpush1.msra.mxu0 %v4999
    %5442 = vmatprep.subr.mxu0 %v5003
    %5443 = vmatpush1.msra.mxu0 %v5002
    %5444 = vmatprep.subr.mxu0 %v5006
    %5445 = vmatpush1.msra.mxu0 %v5005
    %5446 = vmatprep.subr.mxu0 %v5009
    %5447 = vmatpush1.msra.mxu0 %v5008
    %5448 = vmatprep.subr.mxu0 %v5012
    %5449 = vmatpush1.msra.mxu0 %v5011
    %5450 = vmatprep.subr.mxu0 %v5015
    %5451 = vmatpush1.msra.mxu0 %v5014
    %5452 = vmatprep.subr.mxu0 %v5018
    %5453 = vmatpush1.msra.mxu0 %v5017
    %5454 = vmatprep.subr.mxu0 %v5021
    %5455 = vmatpush1.msra.mxu0 %v5020
    %5456 = vmatprep.subr.mxu0 %v5024
    %5457 = vmatpush1.msra.mxu0 %v5023
    %5458 = vmatprep.subr.mxu0 %v5027
    %5459 = vmatpush1.msra.mxu0 %v5026
    %5460 = vmatprep.subr.mxu0 %v5030
    %5461 = vmatpush1.msra.mxu0 %v5029
    %5462 = vmatprep.subr.mxu0 %v5033
    %5463 = vmatpush1.msra.mxu0 %v5032
    %5464 = vmatprep.subr.mxu0 %v5036
    %5465 = vmatpush1.msra.mxu0 %v5035
    %5466 = vmatprep.subr.mxu0 %v5039
    %5467 = vmatpush1.msra.mxu0 %v5038
    %5468 = vmatprep.subr.mxu0 0.0
    %5469 = vmatpush1.msra.mxu0 0.0
    %5470 = vmatprep.subr.mxu0 0.0
    %5471 = vmatpush1.msra.mxu0 0.0
    %5472 = vmatprep.subr.mxu0 0.0
    %5473 = vmatpush1.msra.mxu0 0.0
    %5474 = vmatprep.subr.mxu0 0.0
    %5475 = vmatpush1.msra.mxu0 0.0
    %5476 = vmatprep.subr.mxu0 0.0
    %5477 = vmatpush1.msra.mxu0 0.0
    %5478 = vmatprep.subr.mxu0 0.0
    %5479 = vmatpush1.msra.mxu0 0.0
    %5480 = vmatprep.subr.mxu0 0.0
    %5481 = vmatpush1.msra.mxu0 0.0
    %5482 = vmatprep.subr.mxu0 0.0
    %5483 = vmatpush1.msra.mxu0 0.0
    %5484 = vmatprep.subr.mxu0 0.0
    %5485 = vmatpush1.msra.mxu0 0.0
    %5486 = vmatprep.subr.mxu0 0.0
    %5487 = vmatpush1.msra.mxu0 0.0
    %5488 = vmatprep.subr.mxu0 0.0
    %5489 = vmatpush1.msra.mxu0 0.0
    %5490 = vmatprep.subr.mxu0 0.0
    %5491 = vmatpush1.msra.mxu0 0.0
    %5492 = vmatprep.subr.mxu0 0.0
    %5493 = vmatpush1.msra.mxu0 0.0
    %5494 = vmatprep.subr.mxu0 0.0
    %5495 = vmatpush1.msra.mxu0 0.0
    %5496 = vmatprep.subr.mxu0 0.0
    %5497 = vmatpush1.msra.mxu0 0.0
    %5498 = vmatprep.subr.mxu0 0.0
    %5499 = vmatpush1.msra.mxu0 0.0
    %5500 = vmatprep.mubr.f32.mxu0 0.0
    %5501 = vmatmul.mubr.f32.gmra.mrb[0].mxu0 %v5209
    %v5502 = vpop.f32.mrb[0].mxu0
    %v5503 = vadd.f32 0.0, %v5502
    %v5504 = vpop.f32.mrb[0].mxu0
    %v5505 = vadd.f32 0.0, %v5504
    %5506 = vdwg.mxu0
    %5507 = vmatprep.subr.mxu0 0.0
    %5508 = vmatpush1.msra.mxu0 %v4995
    %5509 = vmatprep.subr.mxu0 0.0
    %5510 = vmatpush1.msra.mxu0 %v4998
    %5511 = vmatprep.subr.mxu0 0.0
    %5512 = vmatpush1.msra.mxu0 %v5001
    %5513 = vmatprep.subr.mxu0 0.0
    %5514 = vmatpush1.msra.mxu0 %v5004
    %5515 = vmatprep.subr.mxu0 0.0
    %5516 = vmatpush1.msra.mxu0 %v5007
    %5517 = vmatprep.subr.mxu0 0.0
    %5518 = vmatpush1.msra.mxu0 %v5010
    %5519 = vmatprep.subr.mxu0 0.0
    %5520 = vmatpush1.msra.mxu0 %v5013
    %5521 = vmatprep.subr.mxu0 0.0
    %5522 = vmatpush1.msra.mxu0 %v5016
    %5523 = vmatprep.subr.mxu0 0.0
    %5524 = vmatpush1.msra.mxu0 %v5019
    %5525 = vmatprep.subr.mxu0 0.0
    %5526 = vmatpush1.msra.mxu0 %v5022
    %5527 = vmatprep.subr.mxu0 0.0
    %5528 = vmatpush1.msra.mxu0 %v5025
    %5529 = vmatprep.subr.mxu0 0.0
    %5530 = vmatpush1.msra.mxu0 %v5028
    %5531 = vmatprep.subr.mxu0 0.0
    %5532 = vmatpush1.msra.mxu0 %v5031
    %5533 = vmatprep.subr.mxu0 0.0
    %5534 = vmatpush1.msra.mxu0 %v5034
    %5535 = vmatprep.subr.mxu0 0.0
    %5536 = vmatpush1.msra.mxu0 %v5037
    %5537 = vmatprep.subr.mxu0 0.0
    %5538 = vmatpush1.msra.mxu0 %v5040
    %5539 = vmatprep.subr.mxu0 0.0
    %5540 = vmatpush1.msra.mxu0 0.0
    %5541 = vmatprep.subr.mxu0 0.0
    %5542 = vmatpush1.msra.mxu0 0.0
    %5543 = vmatprep.subr.mxu0 0.0
    %5544 = vmatpush1.msra.mxu0 0.0
    %5545 = vmatprep.subr.mxu0 0.0
    %5546 = vmatpush1.msra.mxu0 0.0
    %5547 = vmatprep.subr.mxu0 0.0
    %5548 = vmatpush1.msra.mxu0 0.0
    %5549 = vmatprep.subr.mxu0 0.0
    %5550 = vmatpush1.msra.mxu0 0.0
    %5551 = vmatprep.subr.mxu0 0.0
    %5552 = vmatpush1.msra.mxu0 0.0
    %5553 = vmatprep.subr.mxu0 0.0
    %5554 = vmatpush1.msra.mxu0 0.0
    %5555 = vmatprep.subr.mxu0 0.0
    %5556 = vmatpush1.msra.mxu0 0.0
    %5557 = vmatprep.subr.mxu0 0.0
    %5558 = vmatpush1.msra.mxu0 0.0
    %5559 = vmatprep.subr.mxu0 0.0
    %5560 = vmatpush1.msra.mxu0 0.0
    %5561 = vmatprep.subr.mxu0 0.0
    %5562 = vmatpush1.msra.mxu0 0.0
    %5563 = vmatprep.subr.mxu0 0.0
    %5564 = vmatpush1.msra.mxu0 0.0
    %5565 = vmatprep.subr.mxu0 0.0
    %5566 = vmatpush1.msra.mxu0 0.0
    %5567 = vmatprep.subr.mxu0 0.0
    %5568 = vmatpush1.msra.mxu0 0.0
    %5569 = vmatprep.subr.mxu0 0.0
    %5570 = vmatpush1.msra.mxu0 0.0
    %5571 = vmatprep.mubr.f32.mxu0 0.0
    %5572 = vmatmul.mubr.f32.gmra.mrb[0].mxu0 %v5209
    %v5573 = vpop.f32.mrb[0].mxu0
    %v5574 = vadd.f32 0.0, %v5573
    %v5575 = vpop.f32.mrb[0].mxu0
    %5576 = vdwg.mxu0
    %v5578 = vrot.slane %v5503, 6
    %v5580 = vadd.f32 %v4830, %v5578
    %v5581 = vxor.u32 %v5580, 2147483648
    %v5582 = vmul.f32 %v5581, 1.442695
    %v5583 = vpow.pop %v5582
    %v5584 = vadd.f32 %v5583, 1.0
    %v5585 = vrcp.pop %v5584
    %v5586 = vmul.f32 1.0, %v5585
    %v5588 = vrot.slane %v5505, 6
    %v5590 = vadd.f32 %v4832, %v5588
    %v5591 = vxor.u32 %v5590, 2147483648
    %v5592 = vmul.f32 %v5591, 1.442695
    %v5593 = vpow.pop %v5592
    %v5594 = vadd.f32 %v5593, 1.0
    %v5595 = vrcp.pop %v5594
    %v5596 = vmul.f32 1.0, %v5595
    %v5597 = vadd.f32 %v5574, %v5200
    %v5599 = vrot.slane %v5597, 6
    %v5601 = vmul.f32 %v5586, %v5599
    %v5602 = vadd.f32 %v4907, %v5601
    %v5603 = vtanh.pop %v5602
    %v5604 = vsub.f32 1.0, %v5596
    %v5605 = vmul.f32 %v5604, %v5603
    %v5607 = vrot.slane %v5209, 6
    %v5609 = vmul.f32 %v5596, %v5607
    %v5610 = vadd.f32 %v5605, %v5609
    %v5612 = vrot.slane %v5610, 2
    %5614 = vmatprep.subr.mxu0 %v4994
    %5615 = vmatpush1.msra.mxu0 %v4993
    %5616 = vmatprep.subr.mxu0 %v4997
    %5617 = vmatpush1.msra.mxu0 %v4996
    %5618 = vmatprep.subr.mxu0 %v5000
    %5619 = vmatpush1.msra.mxu0 %v4999
    %5620 = vmatprep.subr.mxu0 %v5003
    %5621 = vmatpush1.msra.mxu0 %v5002
    %5622 = vmatprep.subr.mxu0 %v5006
    %5623 = vmatpush1.msra.mxu0 %v5005
    %5624 = vmatprep.subr.mxu0 %v5009
    %5625 = vmatpush1.msra.mxu0 %v5008
    %5626 = vmatprep.subr.mxu0 %v5012
    %5627 = vmatpush1.msra.mxu0 %v5011
    %5628 = vmatprep.subr.mxu0 %v5015
    %5629 = vmatpush1.msra.mxu0 %v5014
    %5630 = vmatprep.subr.mxu0 %v5018
    %5631 = vmatpush1.msra.mxu0 %v5017
    %5632 = vmatprep.subr.mxu0 %v5021
    %5633 = vmatpush1.msra.mxu0 %v5020
    %5634 = vmatprep.subr.mxu0 %v5024
    %5635 = vmatpush1.msra.mxu0 %v5023
    %5636 = vmatprep.subr.mxu0 %v5027
    %5637 = vmatpush1.msra.mxu0 %v5026
    %5638 = vmatprep.subr.mxu0 %v5030
    %5639 = vmatpush1.msra.mxu0 %v5029
    %5640 = vmatprep.subr.mxu0 %v5033
    %5641 = vmatpush1.msra.mxu0 %v5032
    %5642 = vmatprep.subr.mxu0 %v5036
    %5643 = vmatpush1.msra.mxu0 %v5035
    %5644 = vmatprep.subr.mxu0 %v5039
    %5645 = vmatpush1.msra.mxu0 %v5038
    %5646 = vmatprep.subr.mxu0 0.0
    %5647 = vmatpush1.msra.mxu0 0.0
    %5648 = vmatprep.subr.mxu0 0.0
    %5649 = vmatpush1.msra.mxu0 0.0
    %5650 = vmatprep.subr.mxu0 0.0
    %5651 = vmatpush1.msra.mxu0 0.0
    %5652 = vmatprep.subr.mxu0 0.0
    %5653 = vmatpush1.msra.mxu0 0.0
    %5654 = vmatprep.subr.mxu0 0.0
    %5655 = vmatpush1.msra.mxu0 0.0
    %5656 = vmatprep.subr.mxu0 0.0
    %5657 = vmatpush1.msra.mxu0 0.0
    %5658 = vmatprep.subr.mxu0 0.0
    %5659 = vmatpush1.msra.mxu0 0.0
    %5660 = vmatprep.subr.mxu0 0.0
    %5661 = vmatpush1.msra.mxu0 0.0
    %5662 = vmatprep.subr.mxu0 0.0
    %5663 = vmatpush1.msra.mxu0 0.0
    %5664 = vmatprep.subr.mxu0 0.0
    %5665 = vmatpush1.msra.mxu0 0.0
    %5666 = vmatprep.subr.mxu0 0.0
    %5667 = vmatpush1.msra.mxu0 0.0
    %5668 = vmatprep.subr.mxu0 0.0
    %5669 = vmatpush1.msra.mxu0 0.0
    %5670 = vmatprep.subr.mxu0 0.0
    %5671 = vmatpush1.msra.mxu0 0.0
    %5672 = vmatprep.subr.mxu0 0.0
    %5673 = vmatpush1.msra.mxu0 0.0
    %5674 = vmatprep.subr.mxu0 0.0
    %5675 = vmatpush1.msra.mxu0 0.0
    %5676 = vmatprep.subr.mxu0 0.0
    %5677 = vmatpush1.msra.mxu0 0.0
    %5678 = vmatprep.mubr.f32.mxu0 0.0
    %5679 = vmatmul.mubr.f32.gmra.mrb[0].mxu0 %v5612
    %v5680 = vpop.f32.mrb[0].mxu0
    %v5681 = vadd.f32 0.0, %v5680
    %v5682 = vpop.f32.mrb[0].mxu0
    %v5683 = vadd.f32 0.0, %v5682
    %5684 = vdwg.mxu0
    %5685 = vmatprep.subr.mxu0 0.0
    %5686 = vmatpush1.msra.mxu0 %v4995
    %5687 = vmatprep.subr.mxu0 0.0
    %5688 = vmatpush1.msra.mxu0 %v4998
    %5689 = vmatprep.subr.mxu0 0.0
    %5690 = vmatpush1.msra.mxu0 %v5001
    %5691 = vmatprep.subr.mxu0 0.0
    %5692 = vmatpush1.msra.mxu0 %v5004
    %5693 = vmatprep.subr.mxu0 0.0
    %5694 = vmatpush1.msra.mxu0 %v5007
    %5695 = vmatprep.subr.mxu0 0.0
    %5696 = vmatpush1.msra.mxu0 %v5010
    %5697 = vmatprep.subr.mxu0 0.0
    %5698 = vmatpush1.msra.mxu0 %v5013
    %5699 = vmatprep.subr.mxu0 0.0
    %5700 = vmatpush1.msra.mxu0 %v5016
    %5701 = vmatprep.subr.mxu0 0.0
    %5702 = vmatpush1.msra.mxu0 %v5019
    %5703 = vmatprep.subr.mxu0 0.0
    %5704 = vmatpush1.msra.mxu0 %v5022
    %5705 = vmatprep.subr.mxu0 0.0
    %5706 = vmatpush1.msra.mxu0 %v5025
    %5707 = vmatprep.subr.mxu0 0.0
    %5708 = vmatpush1.msra.mxu0 %v5028
    %5709 = vmatprep.subr.mxu0 0.0
    %5710 = vmatpush1.msra.mxu0 %v5031
    %5711 = vmatprep.subr.mxu0 0.0
    %5712 = vmatpush1.msra.mxu0 %v5034
    %5713 = vmatprep.subr.mxu0 0.0
    %5714 = vmatpush1.msra.mxu0 %v5037
    %5715 = vmatprep.subr.mxu0 0.0
    %5716 = vmatpush1.msra.mxu0 %v5040
    %5717 = vmatprep.subr.mxu0 0.0
    %5718 = vmatpush1.msra.mxu0 0.0
    %5719 = vmatprep.subr.mxu0 0.0
    %5720 = vmatpush1.msra.mxu0 0.0
    %5721 = vmatprep.subr.mxu0 0.0
    %5722 = vmatpush1.msra.mxu0 0.0
    %5723 = vmatprep.subr.mxu0 0.0
    %5724 = vmatpush1.msra.mxu0 0.0
    %5725 = vmatprep.subr.mxu0 0.0
    %5726 = vmatpush1.msra.mxu0 0.0
    %5727 = vmatprep.subr.mxu0 0.0
    %5728 = vmatpush1.msra.mxu0 0.0
    %5729 = vmatprep.subr.mxu0 0.0
    %5730 = vmatpush1.msra.mxu0 0.0
    %5731 = vmatprep.subr.mxu0 0.0
    %5732 = vmatpush1.msra.mxu0 0.0
    %5733 = vmatprep.subr.mxu0 0.0
    %5734 = vmatpush1.msra.mxu0 0.0
    %5735 = vmatprep.subr.mxu0 0.0
    %5736 = vmatpush1.msra.mxu0 0.0
    %5737 = vmatprep.subr.mxu0 0.0
    %5738 = vmatpush1.msra.mxu0 0.0
    %5739 = vmatprep.subr.mxu0 0.0
    %5740 = vmatpush1.msra.mxu0 0.0
    %5741 = vmatprep.subr.mxu0 0.0
    %5742 = vmatpush1.msra.mxu0 0.0
    %5743 = vmatprep.subr.mxu0 0.0
    %5744 = vmatpush1.msra.mxu0 0.0
    %5745 = vmatprep.subr.mxu0 0.0
    %5746 = vmatpush1.msra.mxu0 0.0
    %5747 = vmatprep.subr.mxu0 0.0
    %5748 = vmatpush1.msra.mxu0 0.0
    %5749 = vmatprep.mubr.f32.mxu0 0.0
    %5750 = vmatmul.mubr.f32.gmra.mrb[0].mxu0 %v5612
    %v5751 = vpop.f32.mrb[0].mxu0
    %v5752 = vadd.f32 0.0, %v5751
    %v5753 = vpop.f32.mrb[0].mxu0
    %5754 = vdwg.mxu0
    %v5756 = vrot.slane %v5681, 4
    %v5758 = vadd.f32 %v4830, %v5756
    %v5759 = vxor.u32 %v5758, 2147483648
    %v5760 = vmul.f32 %v5759, 1.442695
    %v5761 = vpow.pop %v5760
    %v5762 = vadd.f32 %v5761, 1.0
    %v5763 = vrcp.pop %v5762
    %v5764 = vmul.f32 1.0, %v5763
    %v5766 = vrot.slane %v5683, 4
    %v5768 = vadd.f32 %v4832, %v5766
    %v5769 = vxor.u32 %v5768, 2147483648
    %v5770 = vmul.f32 %v5769, 1.442695
    %v5771 = vpow.pop %v5770
    %v5772 = vadd.f32 %v5771, 1.0
    %v5773 = vrcp.pop %v5772
    %v5774 = vmul.f32 1.0, %v5773
    %v5775 = vadd.f32 %v5752, %v5200
    %v5777 = vrot.slane %v5775, 4
    %v5779 = vmul.f32 %v5764, %v5777
    %v5780 = vadd.f32 %v4907, %v5779
    %v5781 = vtanh.pop %v5780
    %v5782 = vsub.f32 1.0, %v5774
    %v5783 = vmul.f32 %v5782, %v5781
    %v5784 = vrot.slane %v5610, 6
    %v5786 = vmul.f32 %v5774, %v5784
    %v5787 = vadd.f32 %v5783, %v5786
    %v5789 = vrot.slane %v5787, 4
    %5791 = vmatprep.subr.mxu0 %v4994
    %5792 = vmatpush1.msra.mxu0 %v4993
    %5793 = vmatprep.subr.mxu0 %v4997
    %5794 = vmatpush1.msra.mxu0 %v4996
    %5795 = vmatprep.subr.mxu0 %v5000
    %5796 = vmatpush1.msra.mxu0 %v4999
    %5797 = vmatprep.subr.mxu0 %v5003
    %5798 = vmatpush1.msra.mxu0 %v5002
    %5799 = vmatprep.subr.mxu0 %v5006
    %5800 = vmatpush1.msra.mxu0 %v5005
    %5801 = vmatprep.subr.mxu0 %v5009
    %5802 = vmatpush1.msra.mxu0 %v5008
    %5803 = vmatprep.subr.mxu0 %v5012
    %5804 = vmatpush1.msra.mxu0 %v5011
    %5805 = vmatprep.subr.mxu0 %v5015
    %5806 = vmatpush1.msra.mxu0 %v5014
    %5807 = vmatprep.subr.mxu0 %v5018
    %5808 = vmatpush1.msra.mxu0 %v5017
    %5809 = vmatprep.subr.mxu0 %v5021
    %5810 = vmatpush1.msra.mxu0 %v5020
    %5811 = vmatprep.subr.mxu0 %v5024
    %5812 = vmatpush1.msra.mxu0 %v5023
    %5813 = vmatprep.subr.mxu0 %v5027
    %5814 = vmatpush1.msra.mxu0 %v5026
    %5815 = vmatprep.subr.mxu0 %v5030
    %5816 = vmatpush1.msra.mxu0 %v5029
    %5817 = vmatprep.subr.mxu0 %v5033
    %5818 = vmatpush1.msra.mxu0 %v5032
    %5819 = vmatprep.subr.mxu0 %v5036
    %5820 = vmatpush1.msra.mxu0 %v5035
    %5821 = vmatprep.subr.mxu0 %v5039
    %5822 = vmatpush1.msra.mxu0 %v5038
    %5823 = vmatprep.subr.mxu0 0.0
    %5824 = vmatpush1.msra.mxu0 0.0
    %5825 = vmatprep.subr.mxu0 0.0
    %5826 = vmatpush1.msra.mxu0 0.0
    %5827 = vmatprep.subr.mxu0 0.0
    %5828 = vmatpush1.msra.mxu0 0.0
    %5829 = vmatprep.subr.mxu0 0.0
    %5830 = vmatpush1.msra.mxu0 0.0
    %5831 = vmatprep.subr.mxu0 0.0
    %5832 = vmatpush1.msra.mxu0 0.0
    %5833 = vmatprep.subr.mxu0 0.0
    %5834 = vmatpush1.msra.mxu0 0.0
    %5835 = vmatprep.subr.mxu0 0.0
    %5836 = vmatpush1.msra.mxu0 0.0
    %5837 = vmatprep.subr.mxu0 0.0
    %5838 = vmatpush1.msra.mxu0 0.0
    %5839 = vmatprep.subr.mxu0 0.0
    %5840 = vmatpush1.msra.mxu0 0.0
    %5841 = vmatprep.subr.mxu0 0.0
    %5842 = vmatpush1.msra.mxu0 0.0
    %5843 = vmatprep.subr.mxu0 0.0
    %5844 = vmatpush1.msra.mxu0 0.0
    %5845 = vmatprep.subr.mxu0 0.0
    %5846 = vmatpush1.msra.mxu0 0.0
    %5847 = vmatprep.subr.mxu0 0.0
    %5848 = vmatpush1.msra.mxu0 0.0
    %5849 = vmatprep.subr.mxu0 0.0
    %5850 = vmatpush1.msra.mxu0 0.0
    %5851 = vmatprep.subr.mxu0 0.0
    %5852 = vmatpush1.msra.mxu0 0.0
    %5853 = vmatprep.subr.mxu0 0.0
    %5854 = vmatpush1.msra.mxu0 0.0
    %5855 = vmatprep.mubr.f32.mxu0 0.0
    %5856 = vmatmul.mubr.f32.gmra.mrb[0].mxu0 %v5789
    %v5857 = vpop.f32.mrb[0].mxu0
    %v5858 = vadd.f32 0.0, %v5857
    %v5859 = vpop.f32.mrb[0].mxu0
    %v5860 = vadd.f32 0.0, %v5859
    %5861 = vdwg.mxu0
    %5862 = vmatprep.subr.mxu0 0.0
    %5863 = vmatpush1.msra.mxu0 %v4995
    %5864 = vmatprep.subr.mxu0 0.0
    %5865 = vmatpush1.msra.mxu0 %v4998
    %5866 = vmatprep.subr.mxu0 0.0
    %5867 = vmatpush1.msra.mxu0 %v5001
    %5868 = vmatprep.subr.mxu0 0.0
    %5869 = vmatpush1.msra.mxu0 %v5004
    %5870 = vmatprep.subr.mxu0 0.0
    %5871 = vmatpush1.msra.mxu0 %v5007
    %5872 = vmatprep.subr.mxu0 0.0
    %5873 = vmatpush1.msra.mxu0 %v5010
    %5874 = vmatprep.subr.mxu0 0.0
    %5875 = vmatpush1.msra.mxu0 %v5013
    %5876 = vmatprep.subr.mxu0 0.0
    %5877 = vmatpush1.msra.mxu0 %v5016
    %5878 = vmatprep.subr.mxu0 0.0
    %5879 = vmatpush1.msra.mxu0 %v5019
    %5880 = vmatprep.subr.mxu0 0.0
    %5881 = vmatpush1.msra.mxu0 %v5022
    %5882 = vmatprep.subr.mxu0 0.0
    %5883 = vmatpush1.msra.mxu0 %v5025
    %5884 = vmatprep.subr.mxu0 0.0
    %5885 = vmatpush1.msra.mxu0 %v5028
    %5886 = vmatprep.subr.mxu0 0.0
    %5887 = vmatpush1.msra.mxu0 %v5031
    %5888 = vmatprep.subr.mxu0 0.0
    %5889 = vmatpush1.msra.mxu0 %v5034
    %5890 = vmatprep.subr.mxu0 0.0
    %5891 = vmatpush1.msra.mxu0 %v5037
    %5892 = vmatprep.subr.mxu0 0.0
    %5893 = vmatpush1.msra.mxu0 %v5040
    %5894 = vmatprep.subr.mxu0 0.0
    %5895 = vmatpush1.msra.mxu0 0.0
    %5896 = vmatprep.subr.mxu0 0.0
    %5897 = vmatpush1.msra.mxu0 0.0
    %5898 = vmatprep.subr.mxu0 0.0
    %5899 = vmatpush1.msra.mxu0 0.0
    %5900 = vmatprep.subr.mxu0 0.0
    %5901 = vmatpush1.msra.mxu0 0.0
    %5902 = vmatprep.subr.mxu0 0.0
    %5903 = vmatpush1.msra.mxu0 0.0
    %5904 = vmatprep.subr.mxu0 0.0
    %5905 = vmatpush1.msra.mxu0 0.0
    %5906 = vmatprep.subr.mxu0 0.0
    %5907 = vmatpush1.msra.mxu0 0.0
    %5908 = vmatprep.subr.mxu0 0.0
    %5909 = vmatpush1.msra.mxu0 0.0
    %5910 = vmatprep.subr.mxu0 0.0
    %5911 = vmatpush1.msra.mxu0 0.0
    %5912 = vmatprep.subr.mxu0 0.0
    %5913 = vmatpush1.msra.mxu0 0.0
    %5914 = vmatprep.subr.mxu0 0.0
    %5915 = vmatpush1.msra.mxu0 0.0
    %5916 = vmatprep.subr.mxu0 0.0
    %5917 = vmatpush1.msra.mxu0 0.0
    %5918 = vmatprep.subr.mxu0 0.0
    %5919 = vmatpush1.msra.mxu0 0.0
    %5920 = vmatprep.subr.mxu0 0.0
    %5921 = vmatpush1.msra.mxu0 0.0
    %5922 = vmatprep.subr.mxu0 0.0
    %5923 = vmatpush1.msra.mxu0 0.0
    %5924 = vmatprep.subr.mxu0 0.0
    %5925 = vmatpush1.msra.mxu0 0.0
    %5926 = vmatprep.mubr.f32.mxu0 0.0
    %5927 = vmatmul.mubr.f32.gmra.mrb[0].mxu0 %v5789
    %v5928 = vpop.f32.mrb[0].mxu0
    %v5929 = vadd.f32 0.0, %v5928
    %v5930 = vpop.f32.mrb[0].mxu0
    %5931 = vdwg.mxu0
    %v5933 = vrot.slane %v5858, 2
    %v5935 = vadd.f32 %v4830, %v5933
    %v5936 = vxor.u32 %v5935, 2147483648
    %v5937 = vmul.f32 %v5936, 1.442695
    %v5938 = vpow.pop %v5937
    %v5939 = vadd.f32 %v5938, 1.0
    %v5940 = vrcp.pop %v5939
    %v5941 = vmul.f32 1.0, %v5940
    %v5943 = vrot.slane %v5860, 2
    %v5945 = vadd.f32 %v4832, %v5943
    %v5946 = vxor.u32 %v5945, 2147483648
    %v5947 = vmul.f32 %v5946, 1.442695
    %v5948 = vpow.pop %v5947
    %v5949 = vadd.f32 %v5948, 1.0
    %v5950 = vrcp.pop %v5949
    %v5951 = vmul.f32 1.0, %v5950
    %v5952 = vadd.f32 %v5929, %v5200
    %v5954 = vrot.slane %v5952, 2
    %v5956 = vmul.f32 %v5941, %v5954
    %v5957 = vadd.f32 %v4907, %v5956
    %v5958 = vtanh.pop %v5957
    %v5959 = vsub.f32 1.0, %v5951
    %v5960 = vmul.f32 %v5959, %v5958
    %v5961 = vrot.slane %v5787, 6
    %v5963 = vmul.f32 %v5951, %v5961
    %v5964 = vadd.f32 %v5960, %v5963
    %v5966 = vrot.slane %v5964, 6
    %5968 = vmatprep.subr.mxu0 %v4994
    %5969 = vmatpush1.msra.mxu0 %v4993
    %5970 = vmatprep.subr.mxu0 %v4997
    %5971 = vmatpush1.msra.mxu0 %v4996
    %5972 = vmatprep.subr.mxu0 %v5000
    %5973 = vmatpush1.msra.mxu0 %v4999
    %5974 = vmatprep.subr.mxu0 %v5003
    %5975 = vmatpush1.msra.mxu0 %v5002
    %5976 = vmatprep.subr.mxu0 %v5006
    %5977 = vmatpush1.msra.mxu0 %v5005
    %5978 = vmatprep.subr.mxu0 %v5009
    %5979 = vmatpush1.msra.mxu0 %v5008
    %5980 = vmatprep.subr.mxu0 %v5012
    %5981 = vmatpush1.msra.mxu0 %v5011
    %5982 = vmatprep.subr.mxu0 %v5015
    %5983 = vmatpush1.msra.mxu0 %v5014
    %5984 = vmatprep.subr.mxu0 %v5018
    %5985 = vmatpush1.msra.mxu0 %v5017
    %5986 = vmatprep.subr.mxu0 %v5021
    %5987 = vmatpush1.msra.mxu0 %v5020
    %5988 = vmatprep.subr.mxu0 %v5024
    %5989 = vmatpush1.msra.mxu0 %v5023
    %5990 = vmatprep.subr.mxu0 %v5027
    %5991 = vmatpush1.msra.mxu0 %v5026
    %5992 = vmatprep.subr.mxu0 %v5030
    %5993 = vmatpush1.msra.mxu0 %v5029
    %5994 = vmatprep.subr.mxu0 %v5033
    %5995 = vmatpush1.msra.mxu0 %v5032
    %5996 = vmatprep.subr.mxu0 %v5036
    %5997 = vmatpush1.msra.mxu0 %v5035
    %5998 = vmatprep.subr.mxu0 %v5039
    %5999 = vmatpush1.msra.mxu0 %v5038
    %6000 = vmatprep.subr.mxu0 0.0
    %6001 = vmatpush1.msra.mxu0 0.0
    %6002 = vmatprep.subr.mxu0 0.0
    %6003 = vmatpush1.msra.mxu0 0.0
    %6004 = vmatprep.subr.mxu0 0.0
    %6005 = vmatpush1.msra.mxu0 0.0
    %6006 = vmatprep.subr.mxu0 0.0
    %6007 = vmatpush1.msra.mxu0 0.0
    %6008 = vmatprep.subr.mxu0 0.0
    %6009 = vmatpush1.msra.mxu0 0.0
    %6010 = vmatprep.subr.mxu0 0.0
    %6011 = vmatpush1.msra.mxu0 0.0
    %6012 = vmatprep.subr.mxu0 0.0
    %6013 = vmatpush1.msra.mxu0 0.0
    %6014 = vmatprep.subr.mxu0 0.0
    %6015 = vmatpush1.msra.mxu0 0.0
    %6016 = vmatprep.subr.mxu0 0.0
    %6017 = vmatpush1.msra.mxu0 0.0
    %6018 = vmatprep.subr.mxu0 0.0
    %6019 = vmatpush1.msra.mxu0 0.0
    %6020 = vmatprep.subr.mxu0 0.0
    %6021 = vmatpush1.msra.mxu0 0.0
    %6022 = vmatprep.subr.mxu0 0.0
    %6023 = vmatpush1.msra.mxu0 0.0
    %6024 = vmatprep.subr.mxu0 0.0
    %6025 = vmatpush1.msra.mxu0 0.0
    %6026 = vmatprep.subr.mxu0 0.0
    %6027 = vmatpush1.msra.mxu0 0.0
    %6028 = vmatprep.subr.mxu0 0.0
    %6029 = vmatpush1.msra.mxu0 0.0
    %6030 = vmatprep.subr.mxu0 0.0
    %6031 = vmatpush1.msra.mxu0 0.0
    %6032 = vmatprep.mubr.f32.mxu0 0.0
    %6033 = vmatmul.mubr.f32.gmra.mrb[0].mxu0 %v5966
    %v6034 = vpop.f32.mrb[0].mxu0
    %v6035 = vadd.f32 0.0, %v6034
    %v6036 = vpop.f32.mrb[0].mxu0
    %v6037 = vadd.f32 0.0, %v6036
    %6038 = vdwg.mxu0
    %6039 = vmatprep.subr.mxu0 0.0
    %6040 = vmatpush1.msra.mxu0 %v4995
    %6041 = vmatprep.subr.mxu0 0.0
    %6042 = vmatpush1.msra.mxu0 %v4998
    %6043 = vmatprep.subr.mxu0 0.0
    %6044 = vmatpush1.msra.mxu0 %v5001
    %6045 = vmatprep.subr.mxu0 0.0
    %6046 = vmatpush1.msra.mxu0 %v5004
    %6047 = vmatprep.subr.mxu0 0.0
    %6048 = vmatpush1.msra.mxu0 %v5007
    %6049 = vmatprep.subr.mxu0 0.0
    %6050 = vmatpush1.msra.mxu0 %v5010
    %6051 = vmatprep.subr.mxu0 0.0
    %6052 = vmatpush1.msra.mxu0 %v5013
    %6053 = vmatprep.subr.mxu0 0.0
    %6054 = vmatpush1.msra.mxu0 %v5016
    %6055 = vmatprep.subr.mxu0 0.0
    %6056 = vmatpush1.msra.mxu0 %v5019
    %6057 = vmatprep.subr.mxu0 0.0
    %6058 = vmatpush1.msra.mxu0 %v5022
    %6059 = vmatprep.subr.mxu0 0.0
    %6060 = vmatpush1.msra.mxu0 %v5025
    %6061 = vmatprep.subr.mxu0 0.0
    %6062 = vmatpush1.msra.mxu0 %v5028
    %6063 = vmatprep.subr.mxu0 0.0
    %6064 = vmatpush1.msra.mxu0 %v5031
    %6065 = vmatprep.subr.mxu0 0.0
    %6066 = vmatpush1.msra.mxu0 %v5034
    %6067 = vmatprep.subr.mxu0 0.0
    %6068 = vmatpush1.msra.mxu0 %v5037
    %6069 = vmatprep.subr.mxu0 0.0
    %6070 = vmatpush1.msra.mxu0 %v5040
    %6071 = vmatprep.subr.mxu0 0.0
    %6072 = vmatpush1.msra.mxu0 0.0
    %6073 = vmatprep.subr.mxu0 0.0
    %6074 = vmatpush1.msra.mxu0 0.0
    %6075 = vmatprep.subr.mxu0 0.0
    %6076 = vmatpush1.msra.mxu0 0.0
    %6077 = vmatprep.subr.mxu0 0.0
    %6078 = vmatpush1.msra.mxu0 0.0
    %6079 = vmatprep.subr.mxu0 0.0
    %6080 = vmatpush1.msra.mxu0 0.0
    %6081 = vmatprep.subr.mxu0 0.0
    %6082 = vmatpush1.msra.mxu0 0.0
    %6083 = vmatprep.subr.mxu0 0.0
    %6084 = vmatpush1.msra.mxu0 0.0
    %6085 = vmatprep.subr.mxu0 0.0
    %6086 = vmatpush1.msra.mxu0 0.0
    %6087 = vmatprep.subr.mxu0 0.0
    %6088 = vmatpush1.msra.mxu0 0.0
    %6089 = vmatprep.subr.mxu0 0.0
    %6090 = vmatpush1.msra.mxu0 0.0
    %6091 = vmatprep.subr.mxu0 0.0
    %6092 = vmatpush1.msra.mxu0 0.0
    %6093 = vmatprep.subr.mxu0 0.0
    %6094 = vmatpush1.msra.mxu0 0.0
    %6095 = vmatprep.subr.mxu0 0.0
    %6096 = vmatpush1.msra.mxu0 0.0
    %6097 = vmatprep.subr.mxu0 0.0
    %6098 = vmatpush1.msra.mxu0 0.0
    %6099 = vmatprep.subr.mxu0 0.0
    %6100 = vmatpush1.msra.mxu0 0.0
    %6101 = vmatprep.subr.mxu0 0.0
    %6102 = vmatpush1.msra.mxu0 0.0
    %6103 = vmatprep.mubr.f32.mxu0 0.0
    %6104 = vmatmul.mubr.f32.gmra.mrb[0].mxu0 %v5966
    %v6105 = vpop.f32.mrb[0].mxu0
    %v6106 = vadd.f32 0.0, %v6105
    %v6107 = vpop.f32.mrb[0].mxu0
    %6108 = vdwg.mxu0
    %v6109 = vadd.f32 %v4836, %v6035
    %v6110 = vxor.u32 %v6109, 2147483648
    %v6111 = vmul.f32 %v6110, 1.442695
    %v6112 = vpow.pop %v6111
    %v6113 = vadd.f32 %v6112, 1.0
    %v6114 = vrcp.pop %v6113
    %v6115 = vmul.f32 1.0, %v6114
    %v6116 = vadd.f32 %v4838, %v6037
    %v6117 = vxor.u32 %v6116, 2147483648
    %v6118 = vmul.f32 %v6117, 1.442695
    %v6119 = vpow.pop %v6118
    %v6120 = vadd.f32 %v6119, 1.0
    %v6121 = vrcp.pop %v6120
    %v6122 = vmul.f32 1.0, %v6121
    %v6123 = vadd.f32 %v6106, %v5200
    %v6124 = vmul.f32 %v6115, %v6123
    %v6125 = vadd.f32 %v4912, %v6124
    %v6126 = vtanh.pop %v6125
    %v6127 = vsub.f32 1.0, %v6122
    %v6128 = vmul.f32 %v6127, %v6126
    %v6129 = vmul.f32 %v6122, %v5966
    %v6130 = vadd.f32 %v6128, %v6129
    %6131 = vmatprep.subr.mxu0 %v4994
    %6132 = vmatpush1.msra.mxu0 %v4993
    %6133 = vmatprep.subr.mxu0 %v4997
    %6134 = vmatpush1.msra.mxu0 %v4996
    %6135 = vmatprep.subr.mxu0 %v5000
    %6136 = vmatpush1.msra.mxu0 %v4999
    %6137 = vmatprep.subr.mxu0 %v5003
    %6138 = vmatpush1.msra.mxu0 %v5002
    %6139 = vmatprep.subr.mxu0 %v5006
    %6140 = vmatpush1.msra.mxu0 %v5005
    %6141 = vmatprep.subr.mxu0 %v5009
    %6142 = vmatpush1.msra.mxu0 %v5008
    %6143 = vmatprep.subr.mxu0 %v5012
    %6144 = vmatpush1.msra.mxu0 %v5011
    %6145 = vmatprep.subr.mxu0 %v5015
    %6146 = vmatpush1.msra.mxu0 %v5014
    %6147 = vmatprep.subr.mxu0 %v5018
    %6148 = vmatpush1.msra.mxu0 %v5017
    %6149 = vmatprep.subr.mxu0 %v5021
    %6150 = vmatpush1.msra.mxu0 %v5020
    %6151 = vmatprep.subr.mxu0 %v5024
    %6152 = vmatpush1.msra.mxu0 %v5023
    %6153 = vmatprep.subr.mxu0 %v5027
    %6154 = vmatpush1.msra.mxu0 %v5026
    %6155 = vmatprep.subr.mxu0 %v5030
    %6156 = vmatpush1.msra.mxu0 %v5029
    %6157 = vmatprep.subr.mxu0 %v5033
    %6158 = vmatpush1.msra.mxu0 %v5032
    %6159 = vmatprep.subr.mxu0 %v5036
    %6160 = vmatpush1.msra.mxu0 %v5035
    %6161 = vmatprep.subr.mxu0 %v5039
    %6162 = vmatpush1.msra.mxu0 %v5038
    %6163 = vmatprep.subr.mxu0 0.0
    %6164 = vmatpush1.msra.mxu0 0.0
    %6165 = vmatprep.subr.mxu0 0.0
    %6166 = vmatpush1.msra.mxu0 0.0
    %6167 = vmatprep.subr.mxu0 0.0
    %6168 = vmatpush1.msra.mxu0 0.0
    %6169 = vmatprep.subr.mxu0 0.0
    %6170 = vmatpush1.msra.mxu0 0.0
    %6171 = vmatprep.subr.mxu0 0.0
    %6172 = vmatpush1.msra.mxu0 0.0
    %6173 = vmatprep.subr.mxu0 0.0
    %6174 = vmatpush1.msra.mxu0 0.0
    %6175 = vmatprep.subr.mxu0 0.0
    %6176 = vmatpush1.msra.mxu0 0.0
    %6177 = vmatprep.subr.mxu0 0.0
    %6178 = vmatpush1.msra.mxu0 0.0
    %6179 = vmatprep.subr.mxu0 0.0
    %6180 = vmatpush1.msra.mxu0 0.0
    %6181 = vmatprep.subr.mxu0 0.0
    %6182 = vmatpush1.msra.mxu0 0.0
    %6183 = vmatprep.subr.mxu0 0.0
    %6184 = vmatpush1.msra.mxu0 0.0
    %6185 = vmatprep.subr.mxu0 0.0
    %6186 = vmatpush1.msra.mxu0 0.0
    %6187 = vmatprep.subr.mxu0 0.0
    %6188 = vmatpush1.msra.mxu0 0.0
    %6189 = vmatprep.subr.mxu0 0.0
    %6190 = vmatpush1.msra.mxu0 0.0
    %6191 = vmatprep.subr.mxu0 0.0
    %6192 = vmatpush1.msra.mxu0 0.0
    %6193 = vmatprep.subr.mxu0 0.0
    %6194 = vmatpush1.msra.mxu0 0.0
    %6195 = vmatprep.mubr.f32.mxu0 0.0
    %6196 = vmatmul.mubr.f32.gmra.mrb[0].mxu0 %v6130
    %v6197 = vpop.f32.mrb[0].mxu0
    %v6198 = vadd.f32 0.0, %v6197
    %v6199 = vpop.f32.mrb[0].mxu0
    %v6200 = vadd.f32 0.0, %v6199
    %6201 = vdwg.mxu0
    %6202 = vmatprep.subr.mxu0 0.0
    %6203 = vmatpush1.msra.mxu0 %v4995
    %6204 = vmatprep.subr.mxu0 0.0
    %6205 = vmatpush1.msra.mxu0 %v4998
    %6206 = vmatprep.subr.mxu0 0.0
    %6207 = vmatpush1.msra.mxu0 %v5001
    %6208 = vmatprep.subr.mxu0 0.0
    %6209 = vmatpush1.msra.mxu0 %v5004
    %6210 = vmatprep.subr.mxu0 0.0
    %6211 = vmatpush1.msra.mxu0 %v5007
    %6212 = vmatprep.subr.mxu0 0.0
    %6213 = vmatpush1.msra.mxu0 %v5010
    %6214 = vmatprep.subr.mxu0 0.0
    %6215 = vmatpush1.msra.mxu0 %v5013
    %6216 = vmatprep.subr.mxu0 0.0
    %6217 = vmatpush1.msra.mxu0 %v5016
    %6218 = vmatprep.subr.mxu0 0.0
    %6219 = vmatpush1.msra.mxu0 %v5019
    %6220 = vmatprep.subr.mxu0 0.0
    %6221 = vmatpush1.msra.mxu0 %v5022
    %6222 = vmatprep.subr.mxu0 0.0
    %6223 = vmatpush1.msra.mxu0 %v5025
    %6224 = vmatprep.subr.mxu0 0.0
    %6225 = vmatpush1.msra.mxu0 %v5028
    %6226 = vmatprep.subr.mxu0 0.0
    %6227 = vmatpush1.msra.mxu0 %v5031
    %6228 = vmatprep.subr.mxu0 0.0
    %6229 = vmatpush1.msra.mxu0 %v5034
    %6230 = vmatprep.subr.mxu0 0.0
    %6231 = vmatpush1.msra.mxu0 %v5037
    %6232 = vmatprep.subr.mxu0 0.0
    %6233 = vmatpush1.msra.mxu0 %v5040
    %6234 = vmatprep.subr.mxu0 0.0
    %6235 = vmatpush1.msra.mxu0 0.0
    %6236 = vmatprep.subr.mxu0 0.0
    %6237 = vmatpush1.msra.mxu0 0.0
    %6238 = vmatprep.subr.mxu0 0.0
    %6239 = vmatpush1.msra.mxu0 0.0
    %6240 = vmatprep.subr.mxu0 0.0
    %6241 = vmatpush1.msra.mxu0 0.0
    %6242 = vmatprep.subr.mxu0 0.0
    %6243 = vmatpush1.msra.mxu0 0.0
    %6244 = vmatprep.subr.mxu0 0.0
    %6245 = vmatpush1.msra.mxu0 0.0
    %6246 = vmatprep.subr.mxu0 0.0
    %6247 = vmatpush1.msra.mxu0 0.0
    %6248 = vmatprep.subr.mxu0 0.0
    %6249 = vmatpush1.msra.mxu0 0.0
    %6250 = vmatprep.subr.mxu0 0.0
    %6251 = vmatpush1.msra.mxu0 0.0
    %6252 = vmatprep.subr.mxu0 0.0
    %6253 = vmatpush1.msra.mxu0 0.0
    %6254 = vmatprep.subr.mxu0 0.0
    %6255 = vmatpush1.msra.mxu0 0.0
    %6256 = vmatprep.subr.mxu0 0.0
    %6257 = vmatpush1.msra.mxu0 0.0
    %6258 = vmatprep.subr.mxu0 0.0
    %6259 = vmatpush1.msra.mxu0 0.0
    %6260 = vmatprep.subr.mxu0 0.0
    %6261 = vmatpush1.msra.mxu0 0.0
    %6262 = vmatprep.subr.mxu0 0.0
    %6263 = vmatpush1.msra.mxu0 0.0
    %6264 = vmatprep.subr.mxu0 0.0
    %6265 = vmatpush1.msra.mxu0 0.0
    %6266 = vmatprep.mubr.f32.mxu0 0.0
    %6267 = vmatmul.mubr.f32.gmra.mrb[0].mxu0 %v6130
    %v6268 = vpop.f32.mrb[0].mxu0
    %v6269 = vadd.f32 0.0, %v6268
    %v6270 = vpop.f32.mrb[0].mxu0
    %6271 = vdwg.mxu0
    %v6273 = vrot.slane %v6198, 6
    %v6275 = vadd.f32 %v4836, %v6273
    %v6276 = vxor.u32 %v6275, 2147483648
    %v6277 = vmul.f32 %v6276, 1.442695
    %v6278 = vpow.pop %v6277
    %v6279 = vadd.f32 %v6278, 1.0
    %v6280 = vrcp.pop %v6279
    %v6281 = vmul.f32 1.0, %v6280
    %v6283 = vrot.slane %v6200, 6
    %v6285 = vadd.f32 %v4838, %v6283
    %v6286 = vxor.u32 %v6285, 2147483648
    %v6287 = vmul.f32 %v6286, 1.442695
    %v6288 = vpow.pop %v6287
    %v6289 = vadd.f32 %v6288, 1.0
    %v6290 = vrcp.pop %v6289
    %v6291 = vmul.f32 1.0, %v6290
    %v6292 = vadd.f32 %v6269, %v5200
    %v6294 = vrot.slane %v6292, 6
    %v6296 = vmul.f32 %v6281, %v6294
    %v6297 = vadd.f32 %v4912, %v6296
    %v6298 = vtanh.pop %v6297
    %v6299 = vsub.f32 1.0, %v6291
    %v6300 = vmul.f32 %v6299, %v6298
    %v6302 = vrot.slane %v6130, 6
    %v6304 = vmul.f32 %v6291, %v6302
    %v6305 = vadd.f32 %v6300, %v6304
    %v6307 = vrot.slane %v6305, 2
    %6309 = vmatprep.subr.mxu0 %v4994
    %6310 = vmatpush1.msra.mxu0 %v4993
    %6311 = vmatprep.subr.mxu0 %v4997
    %6312 = vmatpush1.msra.mxu0 %v4996
    %6313 = vmatprep.subr.mxu0 %v5000
    %6314 = vmatpush1.msra.mxu0 %v4999
    %6315 = vmatprep.subr.mxu0 %v5003
    %6316 = vmatpush1.msra.mxu0 %v5002
    %6317 = vmatprep.subr.mxu0 %v5006
    %6318 = vmatpush1.msra.mxu0 %v5005
    %6319 = vmatprep.subr.mxu0 %v5009
    %6320 = vmatpush1.msra.mxu0 %v5008
    %6321 = vmatprep.subr.mxu0 %v5012
    %6322 = vmatpush1.msra.mxu0 %v5011
    %6323 = vmatprep.subr.mxu0 %v5015
    %6324 = vmatpush1.msra.mxu0 %v5014
    %6325 = vmatprep.subr.mxu0 %v5018
    %6326 = vmatpush1.msra.mxu0 %v5017
    %6327 = vmatprep.subr.mxu0 %v5021
    %6328 = vmatpush1.msra.mxu0 %v5020
    %6329 = vmatprep.subr.mxu0 %v5024
    %6330 = vmatpush1.msra.mxu0 %v5023
    %6331 = vmatprep.subr.mxu0 %v5027
    %6332 = vmatpush1.msra.mxu0 %v5026
    %6333 = vmatprep.subr.mxu0 %v5030
    %6334 = vmatpush1.msra.mxu0 %v5029
    %6335 = vmatprep.subr.mxu0 %v5033
    %6336 = vmatpush1.msra.mxu0 %v5032
    %6337 = vmatprep.subr.mxu0 %v5036
    %6338 = vmatpush1.msra.mxu0 %v5035
    %6339 = vmatprep.subr.mxu0 %v5039
    %6340 = vmatpush1.msra.mxu0 %v5038
    %6341 = vmatprep.subr.mxu0 0.0
    %6342 = vmatpush1.msra.mxu0 0.0
    %6343 = vmatprep.subr.mxu0 0.0
    %6344 = vmatpush1.msra.mxu0 0.0
    %6345 = vmatprep.subr.mxu0 0.0
    %6346 = vmatpush1.msra.mxu0 0.0
    %6347 = vmatprep.subr.mxu0 0.0
    %6348 = vmatpush1.msra.mxu0 0.0
    %6349 = vmatprep.subr.mxu0 0.0
    %6350 = vmatpush1.msra.mxu0 0.0
    %6351 = vmatprep.subr.mxu0 0.0
    %6352 = vmatpush1.msra.mxu0 0.0
    %6353 = vmatprep.subr.mxu0 0.0
    %6354 = vmatpush1.msra.mxu0 0.0
    %6355 = vmatprep.subr.mxu0 0.0
    %6356 = vmatpush1.msra.mxu0 0.0
    %6357 = vmatprep.subr.mxu0 0.0
    %6358 = vmatpush1.msra.mxu0 0.0
    %6359 = vmatprep.subr.mxu0 0.0
    %6360 = vmatpush1.msra.mxu0 0.0
    %6361 = vmatprep.subr.mxu0 0.0
    %6362 = vmatpush1.msra.mxu0 0.0
    %6363 = vmatprep.subr.mxu0 0.0
    %6364 = vmatpush1.msra.mxu0 0.0
    %6365 = vmatprep.subr.mxu0 0.0
    %6366 = vmatpush1.msra.mxu0 0.0
    %6367 = vmatprep.subr.mxu0 0.0
    %6368 = vmatpush1.msra.mxu0 0.0
    %6369 = vmatprep.subr.mxu0 0.0
    %6370 = vmatpush1.msra.mxu0 0.0
    %6371 = vmatprep.subr.mxu0 0.0
    %6372 = vmatpush1.msra.mxu0 0.0
    %6373 = vmatprep.mubr.f32.mxu0 0.0
    %6374 = vmatmul.mubr.f32.gmra.mrb[0].mxu0 %v6307
    %v6375 = vpop.f32.mrb[0].mxu0
    %v6376 = vadd.f32 0.0, %v6375
    %v6377 = vpop.f32.mrb[0].mxu0
    %v6378 = vadd.f32 0.0, %v6377
    %6379 = vdwg.mxu0
    %6380 = vmatprep.subr.mxu0 0.0
    %6381 = vmatpush1.msra.mxu0 %v4995
    %6382 = vmatprep.subr.mxu0 0.0
    %6383 = vmatpush1.msra.mxu0 %v4998
    %6384 = vmatprep.subr.mxu0 0.0
    %6385 = vmatpush1.msra.mxu0 %v5001
    %6386 = vmatprep.subr.mxu0 0.0
    %6387 = vmatpush1.msra.mxu0 %v5004
    %6388 = vmatprep.subr.mxu0 0.0
    %6389 = vmatpush1.msra.mxu0 %v5007
    %6390 = vmatprep.subr.mxu0 0.0
    %6391 = vmatpush1.msra.mxu0 %v5010
    %6392 = vmatprep.subr.mxu0 0.0
    %6393 = vmatpush1.msra.mxu0 %v5013
    %6394 = vmatprep.subr.mxu0 0.0
    %6395 = vmatpush1.msra.mxu0 %v5016
    %6396 = vmatprep.subr.mxu0 0.0
    %6397 = vmatpush1.msra.mxu0 %v5019
    %6398 = vmatprep.subr.mxu0 0.0
    %6399 = vmatpush1.msra.mxu0 %v5022
    %6400 = vmatprep.subr.mxu0 0.0
    %6401 = vmatpush1.msra.mxu0 %v5025
    %6402 = vmatprep.subr.mxu0 0.0
    %6403 = vmatpush1.msra.mxu0 %v5028
    %6404 = vmatprep.subr.mxu0 0.0
    %6405 = vmatpush1.msra.mxu0 %v5031
    %6406 = vmatprep.subr.mxu0 0.0
    %6407 = vmatpush1.msra.mxu0 %v5034
    %6408 = vmatprep.subr.mxu0 0.0
    %6409 = vmatpush1.msra.mxu0 %v5037
    %6410 = vmatprep.subr.mxu0 0.0
    %6411 = vmatpush1.msra.mxu0 %v5040
    %6412 = vmatprep.subr.mxu0 0.0
    %6413 = vmatpush1.msra.mxu0 0.0
    %6414 = vmatprep.subr.mxu0 0.0
    %6415 = vmatpush1.msra.mxu0 0.0
    %6416 = vmatprep.subr.mxu0 0.0
    %6417 = vmatpush1.msra.mxu0 0.0
    %6418 = vmatprep.subr.mxu0 0.0
    %6419 = vmatpush1.msra.mxu0 0.0
    %6420 = vmatprep.subr.mxu0 0.0
    %6421 = vmatpush1.msra.mxu0 0.0
    %6422 = vmatprep.subr.mxu0 0.0
    %6423 = vmatpush1.msra.mxu0 0.0
    %6424 = vmatprep.subr.mxu0 0.0
    %6425 = vmatpush1.msra.mxu0 0.0
    %6426 = vmatprep.subr.mxu0 0.0
    %6427 = vmatpush1.msra.mxu0 0.0
    %6428 = vmatprep.subr.mxu0 0.0
    %6429 = vmatpush1.msra.mxu0 0.0
    %6430 = vmatprep.subr.mxu0 0.0
    %6431 = vmatpush1.msra.mxu0 0.0
    %6432 = vmatprep.subr.mxu0 0.0
    %6433 = vmatpush1.msra.mxu0 0.0
    %6434 = vmatprep.subr.mxu0 0.0
    %6435 = vmatpush1.msra.mxu0 0.0
    %6436 = vmatprep.subr.mxu0 0.0
    %6437 = vmatpush1.msra.mxu0 0.0
    %6438 = vmatprep.subr.mxu0 0.0
    %6439 = vmatpush1.msra.mxu0 0.0
    %6440 = vmatprep.subr.mxu0 0.0
    %6441 = vmatpush1.msra.mxu0 0.0
    %6442 = vmatprep.subr.mxu0 0.0
    %6443 = vmatpush1.msra.mxu0 0.0
    %6444 = vmatprep.mubr.f32.mxu0 0.0
    %6445 = vmatmul.mubr.f32.gmra.mrb[0].mxu0 %v6307
    %v6446 = vpop.f32.mrb[0].mxu0
    %v6447 = vadd.f32 0.0, %v6446
    %v6448 = vpop.f32.mrb[0].mxu0
    %6449 = vdwg.mxu0
    %v6451 = vrot.slane %v6376, 4
    %v6453 = vadd.f32 %v4836, %v6451
    %v6454 = vxor.u32 %v6453, 2147483648
    %v6455 = vmul.f32 %v6454, 1.442695
    %v6456 = vpow.pop %v6455
    %v6457 = vadd.f32 %v6456, 1.0
    %v6458 = vrcp.pop %v6457
    %v6459 = vmul.f32 1.0, %v6458
    %v6461 = vrot.slane %v6378, 4
    %v6463 = vadd.f32 %v4838, %v6461
    %v6464 = vxor.u32 %v6463, 2147483648
    %v6465 = vmul.f32 %v6464, 1.442695
    %v6466 = vpow.pop %v6465
    %v6467 = vadd.f32 %v6466, 1.0
    %v6468 = vrcp.pop %v6467
    %v6469 = vmul.f32 1.0, %v6468
    %v6470 = vadd.f32 %v6447, %v5200
    %v6472 = vrot.slane %v6470, 4
    %v6474 = vmul.f32 %v6459, %v6472
    %v6475 = vadd.f32 %v4912, %v6474
    %v6476 = vtanh.pop %v6475
    %v6477 = vsub.f32 1.0, %v6469
    %v6478 = vmul.f32 %v6477, %v6476
    %v6479 = vrot.slane %v6305, 6
    %v6481 = vmul.f32 %v6469, %v6479
    %v6482 = vadd.f32 %v6478, %v6481
    %v6484 = vrot.slane %v6482, 4
    %6486 = vmatprep.subr.mxu0 %v4994
    %6487 = vmatpush1.msra.mxu0 %v4993
    %6488 = vmatprep.subr.mxu0 %v4997
    %6489 = vmatpush1.msra.mxu0 %v4996
    %6490 = vmatprep.subr.mxu0 %v5000
    %6491 = vmatpush1.msra.mxu0 %v4999
    %6492 = vmatprep.subr.mxu0 %v5003
    %6493 = vmatpush1.msra.mxu0 %v5002
    %6494 = vmatprep.subr.mxu0 %v5006
    %6495 = vmatpush1.msra.mxu0 %v5005
    %6496 = vmatprep.subr.mxu0 %v5009
    %6497 = vmatpush1.msra.mxu0 %v5008
    %6498 = vmatprep.subr.mxu0 %v5012
    %6499 = vmatpush1.msra.mxu0 %v5011
    %6500 = vmatprep.subr.mxu0 %v5015
    %6501 = vmatpush1.msra.mxu0 %v5014
    %6502 = vmatprep.subr.mxu0 %v5018
    %6503 = vmatpush1.msra.mxu0 %v5017
    %6504 = vmatprep.subr.mxu0 %v5021
    %6505 = vmatpush1.msra.mxu0 %v5020
    %6506 = vmatprep.subr.mxu0 %v5024
    %6507 = vmatpush1.msra.mxu0 %v5023
    %6508 = vmatprep.subr.mxu0 %v5027
    %6509 = vmatpush1.msra.mxu0 %v5026
    %6510 = vmatprep.subr.mxu0 %v5030
    %6511 = vmatpush1.msra.mxu0 %v5029
    %6512 = vmatprep.subr.mxu0 %v5033
    %6513 = vmatpush1.msra.mxu0 %v5032
    %6514 = vmatprep.subr.mxu0 %v5036
    %6515 = vmatpush1.msra.mxu0 %v5035
    %6516 = vmatprep.subr.mxu0 %v5039
    %6517 = vmatpush1.msra.mxu0 %v5038
    %6518 = vmatprep.subr.mxu0 0.0
    %6519 = vmatpush1.msra.mxu0 0.0
    %6520 = vmatprep.subr.mxu0 0.0
    %6521 = vmatpush1.msra.mxu0 0.0
    %6522 = vmatprep.subr.mxu0 0.0
    %6523 = vmatpush1.msra.mxu0 0.0
    %6524 = vmatprep.subr.mxu0 0.0
    %6525 = vmatpush1.msra.mxu0 0.0
    %6526 = vmatprep.subr.mxu0 0.0
    %6527 = vmatpush1.msra.mxu0 0.0
    %6528 = vmatprep.subr.mxu0 0.0
    %6529 = vmatpush1.msra.mxu0 0.0
    %6530 = vmatprep.subr.mxu0 0.0
    %6531 = vmatpush1.msra.mxu0 0.0
    %6532 = vmatprep.subr.mxu0 0.0
    %6533 = vmatpush1.msra.mxu0 0.0
    %6534 = vmatprep.subr.mxu0 0.0
    %6535 = vmatpush1.msra.mxu0 0.0
    %6536 = vmatprep.subr.mxu0 0.0
    %6537 = vmatpush1.msra.mxu0 0.0
    %6538 = vmatprep.subr.mxu0 0.0
    %6539 = vmatpush1.msra.mxu0 0.0
    %6540 = vmatprep.subr.mxu0 0.0
    %6541 = vmatpush1.msra.mxu0 0.0
    %6542 = vmatprep.subr.mxu0 0.0
    %6543 = vmatpush1.msra.mxu0 0.0
    %6544 = vmatprep.subr.mxu0 0.0
    %6545 = vmatpush1.msra.mxu0 0.0
    %6546 = vmatprep.subr.mxu0 0.0
    %6547 = vmatpush1.msra.mxu0 0.0
    %6548 = vmatprep.subr.mxu0 0.0
    %6549 = vmatpush1.msra.mxu0 0.0
    %6550 = vmatprep.mubr.f32.mxu0 0.0
    %6551 = vmatmul.mubr.f32.gmra.mrb[0].mxu0 %v6484
    %v6552 = vpop.f32.mrb[0].mxu0
    %v6553 = vadd.f32 0.0, %v6552
    %v6554 = vpop.f32.mrb[0].mxu0
    %v6555 = vadd.f32 0.0, %v6554
    %6556 = vdwg.mxu0
    %6557 = vmatprep.subr.mxu0 0.0
    %6558 = vmatpush1.msra.mxu0 %v4995
    %6559 = vmatprep.subr.mxu0 0.0
    %6560 = vmatpush1.msra.mxu0 %v4998
    %6561 = vmatprep.subr.mxu0 0.0
    %6562 = vmatpush1.msra.mxu0 %v5001
    %6563 = vmatprep.subr.mxu0 0.0
    %6564 = vmatpush1.msra.mxu0 %v5004
    %6565 = vmatprep.subr.mxu0 0.0
    %6566 = vmatpush1.msra.mxu0 %v5007
    %6567 = vmatprep.subr.mxu0 0.0
    %6568 = vmatpush1.msra.mxu0 %v5010
    %6569 = vmatprep.subr.mxu0 0.0
    %6570 = vmatpush1.msra.mxu0 %v5013
    %6571 = vmatprep.subr.mxu0 0.0
    %6572 = vmatpush1.msra.mxu0 %v5016
    %6573 = vmatprep.subr.mxu0 0.0
    %6574 = vmatpush1.msra.mxu0 %v5019
    %6575 = vmatprep.subr.mxu0 0.0
    %6576 = vmatpush1.msra.mxu0 %v5022
    %6577 = vmatprep.subr.mxu0 0.0
    %6578 = vmatpush1.msra.mxu0 %v5025
    %6579 = vmatprep.subr.mxu0 0.0
    %6580 = vmatpush1.msra.mxu0 %v5028
    %6581 = vmatprep.subr.mxu0 0.0
    %6582 = vmatpush1.msra.mxu0 %v5031
    %6583 = vmatprep.subr.mxu0 0.0
    %6584 = vmatpush1.msra.mxu0 %v5034
    %6585 = vmatprep.subr.mxu0 0.0
    %6586 = vmatpush1.msra.mxu0 %v5037
    %6587 = vmatprep.subr.mxu0 0.0
    %6588 = vmatpush1.msra.mxu0 %v5040
    %6589 = vmatprep.subr.mxu0 0.0
    %6590 = vmatpush1.msra.mxu0 0.0
    %6591 = vmatprep.subr.mxu0 0.0
    %6592 = vmatpush1.msra.mxu0 0.0
    %6593 = vmatprep.subr.mxu0 0.0
    %6594 = vmatpush1.msra.mxu0 0.0
    %6595 = vmatprep.subr.mxu0 0.0
    %6596 = vmatpush1.msra.mxu0 0.0
    %6597 = vmatprep.subr.mxu0 0.0
    %6598 = vmatpush1.msra.mxu0 0.0
    %6599 = vmatprep.subr.mxu0 0.0
    %6600 = vmatpush1.msra.mxu0 0.0
    %6601 = vmatprep.subr.mxu0 0.0
    %6602 = vmatpush1.msra.mxu0 0.0
    %6603 = vmatprep.subr.mxu0 0.0
    %6604 = vmatpush1.msra.mxu0 0.0
    %6605 = vmatprep.subr.mxu0 0.0
    %6606 = vmatpush1.msra.mxu0 0.0
    %6607 = vmatprep.subr.mxu0 0.0
    %6608 = vmatpush1.msra.mxu0 0.0
    %6609 = vmatprep.subr.mxu0 0.0
    %6610 = vmatpush1.msra.mxu0 0.0
    %6611 = vmatprep.subr.mxu0 0.0
    %6612 = vmatpush1.msra.mxu0 0.0
    %6613 = vmatprep.subr.mxu0 0.0
    %6614 = vmatpush1.msra.mxu0 0.0
    %6615 = vmatprep.subr.mxu0 0.0
    %6616 = vmatpush1.msra.mxu0 0.0
    %6617 = vmatprep.subr.mxu0 0.0
    %6618 = vmatpush1.msra.mxu0 0.0
    %6619 = vmatprep.subr.mxu0 0.0
    %6620 = vmatpush1.msra.mxu0 0.0
    %6621 = vmatprep.mubr.f32.mxu0 0.0
    %6622 = vmatmul.mubr.f32.gmra.mrb[0].mxu0 %v6484
    %v6623 = vpop.f32.mrb[0].mxu0
    %v6624 = vadd.f32 0.0, %v6623
    %v6625 = vpop.f32.mrb[0].mxu0
    %6626 = vdwg.mxu0
    %v6628 = vrot.slane %v6553, 2
    %v6630 = vadd.f32 %v4836, %v6628
    %v6631 = vxor.u32 %v6630, 2147483648
    %v6632 = vmul.f32 %v6631, 1.442695
    %v6633 = vpow.pop %v6632
    %v6634 = vadd.f32 %v6633, 1.0
    %v6635 = vrcp.pop %v6634
    %v6636 = vmul.f32 1.0, %v6635
    %v6638 = vrot.slane %v6555, 2
    %v6640 = vadd.f32 %v4838, %v6638
    %v6641 = vxor.u32 %v6640, 2147483648
    %v6642 = vmul.f32 %v6641, 1.442695
    %v6643 = vpow.pop %v6642
    %v6644 = vadd.f32 %v6643, 1.0
    %v6645 = vrcp.pop %v6644
    %v6646 = vmul.f32 1.0, %v6645
    %v6647 = vadd.f32 %v6624, %v5200
    %v6649 = vrot.slane %v6647, 2
    %v6651 = vmul.f32 %v6636, %v6649
    %v6652 = vadd.f32 %v4912, %v6651
    %v6653 = vtanh.pop %v6652
    %v6654 = vsub.f32 1.0, %v6646
    %v6655 = vmul.f32 %v6654, %v6653
    %v6656 = vrot.slane %v6482, 6
    %v6658 = vmul.f32 %v6646, %v6656
    %v6659 = vadd.f32 %v6655, %v6658
    %v6660 = vld [vmem:[#allocation30] sm:$0xff]
    %v6661 = vld [vmem:[#allocation30 + $0x8] sm:$0xff]
    %v6662 = vld [vmem:[#allocation30 + $0x10] sm:$0xff]
    %v6663 = vld [vmem:[#allocation30 + $0x18] sm:$0xff]
    %v6664 = vld [vmem:[#allocation30 + $0x20] sm:$0xff]
    %v6665 = vld [vmem:[#allocation30 + $0x28] sm:$0xff]
    %v6666 = vld [vmem:[#allocation30 + $0x30] sm:$0xff]
    %v6667 = vld [vmem:[#allocation30 + $0x38] sm:$0xff]
    %v6668 = vld [vmem:[#allocation30 + $0x40] sm:$0xff]
    %v6669 = vld [vmem:[#allocation30 + $0x48] sm:$0xff]
    %v6670 = vld [vmem:[#allocation30 + $0x50] sm:$0xff]
    %v6671 = vld [vmem:[#allocation30 + $0x58] sm:$0xff]
    %v6672 = vld [vmem:[#allocation30 + $0x60] sm:$0xff]
    %v6673 = vld [vmem:[#allocation30 + $0x68] sm:$0xff]
    %v6674 = vld [vmem:[#allocation30 + $0x70] sm:$0xff]
    %v6675 = vld [vmem:[#allocation30 + $0x78] sm:$0xff]
    %v6676 = vld [vmem:[#allocation30 + $0x80] sm:$0xff]
    %v6677 = vld [vmem:[#allocation30 + $0x88] sm:$0xff]
    %v6678 = vld [vmem:[#allocation30 + $0x90] sm:$0xff]
    %v6679 = vld [vmem:[#allocation30 + $0x98] sm:$0xff]
    %v6680 = vld [vmem:[#allocation30 + $0xa0] sm:$0xff]
    %v6681 = vld [vmem:[#allocation30 + $0xa8] sm:$0xff]
    %v6682 = vld [vmem:[#allocation30 + $0xb0] sm:$0xff]
    %v6683 = vld [vmem:[#allocation30 + $0xb8] sm:$0xff]
    %v6684 = vld [vmem:[#allocation30 + $0xc0] sm:$0xff]
    %v6685 = vld [vmem:[#allocation30 + $0xc8] sm:$0xff]
    %v6686 = vld [vmem:[#allocation30 + $0xd0] sm:$0xff]
    %v6687 = vld [vmem:[#allocation30 + $0xd8] sm:$0xff]
    %v6688 = vld [vmem:[#allocation30 + $0xe0] sm:$0xff]
    %v6689 = vld [vmem:[#allocation30 + $0xe8] sm:$0xff]
    %v6690 = vld [vmem:[#allocation30 + $0xf0] sm:$0xff]
    %v6691 = vld [vmem:[#allocation30 + $0xf8] sm:$0xff]
    %v6692 = vld [vmem:[#allocation32] sm:$0x1]
    %v6694 = vlaneseq
    %v6695 = vshrl.u32 %v6694, 7
    %v6696 = vsub.s32 0, %v6695
    %v6697 = vrot.slane %v6692, %v6696
    %v6701 = vrot.slane %v6659, 6
    %v6702 = vrot.slane %v5435, 6
    %6705 = vmatprep.subr.mxu0 0.0
    %6706 = vmatpush1.msra.mxu0 %v6660
    %6707 = vmatprep.subr.mxu0 0.0
    %6708 = vmatpush1.msra.mxu0 %v6661
    %6709 = vmatprep.subr.mxu0 0.0
    %6710 = vmatpush1.msra.mxu0 %v6662
    %6711 = vmatprep.subr.mxu0 0.0
    %6712 = vmatpush1.msra.mxu0 %v6663
    %6713 = vmatprep.subr.mxu0 0.0
    %6714 = vmatpush1.msra.mxu0 %v6664
    %6715 = vmatprep.subr.mxu0 0.0
    %6716 = vmatpush1.msra.mxu0 %v6665
    %6717 = vmatprep.subr.mxu0 0.0
    %6718 = vmatpush1.msra.mxu0 %v6666
    %6719 = vmatprep.subr.mxu0 0.0
    %6720 = vmatpush1.msra.mxu0 %v6667
    %6721 = vmatprep.subr.mxu0 0.0
    %6722 = vmatpush1.msra.mxu0 %v6668
    %6723 = vmatprep.subr.mxu0 0.0
    %6724 = vmatpush1.msra.mxu0 %v6669
    %6725 = vmatprep.subr.mxu0 0.0
    %6726 = vmatpush1.msra.mxu0 %v6670
    %6727 = vmatprep.subr.mxu0 0.0
    %6728 = vmatpush1.msra.mxu0 %v6671
    %6729 = vmatprep.subr.mxu0 0.0
    %6730 = vmatpush1.msra.mxu0 %v6672
    %6731 = vmatprep.subr.mxu0 0.0
    %6732 = vmatpush1.msra.mxu0 %v6673
    %6733 = vmatprep.subr.mxu0 0.0
    %6734 = vmatpush1.msra.mxu0 %v6674
    %6735 = vmatprep.subr.mxu0 0.0
    %6736 = vmatpush1.msra.mxu0 %v6675
    %6737 = vmatprep.subr.mxu0 0.0
    %6738 = vmatpush1.msra.mxu0 %v6676
    %6739 = vmatprep.subr.mxu0 0.0
    %6740 = vmatpush1.msra.mxu0 %v6677
    %6741 = vmatprep.subr.mxu0 0.0
    %6742 = vmatpush1.msra.mxu0 %v6678
    %6743 = vmatprep.subr.mxu0 0.0
    %6744 = vmatpush1.msra.mxu0 %v6679
    %6745 = vmatprep.subr.mxu0 0.0
    %6746 = vmatpush1.msra.mxu0 %v6680
    %6747 = vmatprep.subr.mxu0 0.0
    %6748 = vmatpush1.msra.mxu0 %v6681
    %6749 = vmatprep.subr.mxu0 0.0
    %6750 = vmatpush1.msra.mxu0 %v6682
    %6751 = vmatprep.subr.mxu0 0.0
    %6752 = vmatpush1.msra.mxu0 %v6683
    %6753 = vmatprep.subr.mxu0 0.0
    %6754 = vmatpush1.msra.mxu0 %v6684
    %6755 = vmatprep.subr.mxu0 0.0
    %6756 = vmatpush1.msra.mxu0 %v6685
    %6757 = vmatprep.subr.mxu0 0.0
    %6758 = vmatpush1.msra.mxu0 %v6686
    %6759 = vmatprep.subr.mxu0 0.0
    %6760 = vmatpush1.msra.mxu0 %v6687
    %6761 = vmatprep.subr.mxu0 0.0
    %6762 = vmatpush1.msra.mxu0 %v6688
    %6763 = vmatprep.subr.mxu0 0.0
    %6764 = vmatpush1.msra.mxu0 %v6689
    %6765 = vmatprep.subr.mxu0 0.0
    %6766 = vmatpush1.msra.mxu0 %v6690
    %6767 = vmatprep.subr.mxu0 0.0
    %6768 = vmatpush1.msra.mxu0 %v6691
    %6769 = vmatprep.mubr.f32.mxu0 %v6702
    %6770 = vmatmul.mubr.f32.gmra.mrb[0].mxu0 %v6701
    %v6771 = vpop.f32.mrb[0].mxu0
    %v6772 = vadd.f32 %v6697, %v6771
    %v6773 = vpop.f32.mrb[0].mxu0
    %6774 = vdwg.mxu0
    %v6775 = vmax.f32 %v6772, 0.0
    %v6776 = vld [vmem:[#allocation33] sm:$0xff]
    %v6777 = vld [vmem:[#allocation33 + $0x8] sm:$0xff]
    %v6778 = vld [vmem:[#allocation33 + $0x10] sm:$0xff]
    %v6779 = vld [vmem:[#allocation33 + $0x18] sm:$0xff]
    %v6780 = vld [vmem:[#allocation33 + $0x20] sm:$0xff]
    %v6781 = vld [vmem:[#allocation33 + $0x28] sm:$0xff]
    %v6782 = vld [vmem:[#allocation33 + $0x30] sm:$0xff]
    %v6783 = vld [vmem:[#allocation33 + $0x38] sm:$0xff]
    %v6784 = vld [vmem:[#allocation35] sm:$0x1]
    %v6786 = vlaneseq
    %v6787 = vshrl.u32 %v6786, 7
    %v6788 = vsub.s32 0, %v6787
    %v6789 = vrot.slane %v6784, %v6788
    %vm6791 = vcmask 523264
    %v6793 = vsel %vm6791, %v6775, 0
    %6795 = vmatprep.subr.mxu0 0.0
    %6796 = vmatpush1.msra.mxu0 %v6776
    %6797 = vmatprep.subr.mxu0 0.0
    %6798 = vmatpush1.msra.mxu0 %v6777
    %6799 = vmatprep.subr.mxu0 0.0
    %6800 = vmatpush1.msra.mxu0 %v6778
    %6801 = vmatprep.subr.mxu0 0.0
    %6802 = vmatpush1.msra.mxu0 %v6779
    %6803 = vmatprep.subr.mxu0 0.0
    %6804 = vmatpush1.msra.mxu0 %v6780
    %6805 = vmatprep.subr.mxu0 0.0
    %6806 = vmatpush1.msra.mxu0 %v6781
    %6807 = vmatprep.subr.mxu0 0.0
    %6808 = vmatpush1.msra.mxu0 %v6782
    %6809 = vmatprep.subr.mxu0 0.0
    %6810 = vmatpush1.msra.mxu0 %v6783
    %6811 = vmatprep.subr.mxu0 0.0
    %6812 = vmatpush1.msra.mxu0 0.0
    %6813 = vmatprep.subr.mxu0 0.0
    %6814 = vmatpush1.msra.mxu0 0.0
    %6815 = vmatprep.subr.mxu0 0.0
    %6816 = vmatpush1.msra.mxu0 0.0
    %6817 = vmatprep.subr.mxu0 0.0
    %6818 = vmatpush1.msra.mxu0 0.0
    %6819 = vmatprep.subr.mxu0 0.0
    %6820 = vmatpush1.msra.mxu0 0.0
    %6821 = vmatprep.subr.mxu0 0.0
    %6822 = vmatpush1.msra.mxu0 0.0
    %6823 = vmatprep.subr.mxu0 0.0
    %6824 = vmatpush1.msra.mxu0 0.0
    %6825 = vmatprep.subr.mxu0 0.0
    %6826 = vmatpush1.msra.mxu0 0.0
    %6827 = vmatprep.subr.mxu0 0.0
    %6828 = vmatpush1.msra.mxu0 0.0
    %6829 = vmatprep.subr.mxu0 0.0
    %6830 = vmatpush1.msra.mxu0 0.0
    %6831 = vmatprep.subr.mxu0 0.0
    %6832 = vmatpush1.msra.mxu0 0.0
    %6833 = vmatprep.subr.mxu0 0.0
    %6834 = vmatpush1.msra.mxu0 0.0
    %6835 = vmatprep.subr.mxu0 0.0
    %6836 = vmatpush1.msra.mxu0 0.0
    %6837 = vmatprep.subr.mxu0 0.0
    %6838 = vmatpush1.msra.mxu0 0.0
    %6839 = vmatprep.subr.mxu0 0.0
    %6840 = vmatpush1.msra.mxu0 0.0
    %6841 = vmatprep.subr.mxu0 0.0
    %6842 = vmatpush1.msra.mxu0 0.0
    %6843 = vmatprep.subr.mxu0 0.0
    %6844 = vmatpush1.msra.mxu0 0.0
    %6845 = vmatprep.subr.mxu0 0.0
    %6846 = vmatpush1.msra.mxu0 0.0
    %6847 = vmatprep.subr.mxu0 0.0
    %6848 = vmatpush1.msra.mxu0 0.0
    %6849 = vmatprep.subr.mxu0 0.0
    %6850 = vmatpush1.msra.mxu0 0.0
    %6851 = vmatprep.subr.mxu0 0.0
    %6852 = vmatpush1.msra.mxu0 0.0
    %6853 = vmatprep.subr.mxu0 0.0
    %6854 = vmatpush1.msra.mxu0 0.0
    %6855 = vmatprep.subr.mxu0 0.0
    %6856 = vmatpush1.msra.mxu0 0.0
    %6857 = vmatprep.subr.mxu0 0.0
    %6858 = vmatpush1.msra.mxu0 0.0
    %6859 = vmatprep.mubr.f32.mxu0 0.0
    %6860 = vmatmul.mubr.f32.gmra.mrb[0].mxu0 %v6793
    %v6861 = vpop.f32.mrb[0].mxu0
    %v6862 = vadd.f32 %v6789, %v6861
    %v6863 = vpop.f32.mrb[0].mxu0
    %6864 = vdwg.mxu0
    %6865 = vst [vmem:[#allocation36] sm:$0x3] %v6862
    // Predicated region
    $region170: #{tpu_custom_call.1} parent=1 // pred_check
      _
    $region171: #{tpu_custom_call.1} parent=1 // pred_check_branch
      %6867 = sbr.rel (0) target = $region173
    $region172: #{tpu_custom_call.1} parent=1 // pred_region
      %s6869 = ssub.s32 32, 32
      %6870 = vsyncadd [#allocation5], %s6869
      %s6872 = sshll.u32 [#allocation36], 4
      %s6873 = int_to_ptr.vmem [resolvable:$true] %s6872
      %6875 = dma.vmem_to_hbm [thread:$0]  %s6873, 32, %s21, [#allocation5]
    $region173: #{tpu_custom_call.1} parent=1 // pred_fallthru
      _
    // Predicated region
    $region174: #{tpu_custom_call.1} parent=1 // pred_check
      _
    $region175: #{tpu_custom_call.1} parent=1 // pred_check_branch
      %6877 = sbr.rel (0) target = $region177
    $region176: #{tpu_custom_call.1} parent=1 // pred_region
      %6878 = dma.done [#allocation5], 32
    $region177: #{tpu_custom_call.1} parent=1 // pred_fallthru
      _
    %6879 = vsyncpa [#allocation4], 1
    %6880 = vsyncpa [#allocation7], 1
    %6881 = vsyncpa [#allocation10], 1
    %6882 = vsyncpa [#allocation13], 1
    %6883 = vsyncpa [#allocation16], 1
    %6884 = vsyncpa [#allocation19], 1
    %6885 = vsyncpa [#allocation22], 1
    %6886 = vsyncpa [#allocation25], 1
    %6887 = vsyncpa [#allocation28], 1
    %6888 = vsyncpa [#allocation31], 1
    %6889 = vsyncpa [#allocation34], 1
    %6890 = vsyncpa [#allocation5], 1

</llo_original>
